<compile_context>
chip_gen: v7x
topology: tpu7x:2x2x1
jax: 0.10.0
libtpu: 0.0.40
codegen_flags: <defaults>
</compile_context>

<pallas_src>
import numpy as np
import jax
import jax.numpy as jnp
from jax.experimental import pallas as pl
from jax.experimental.pallas import tpu as pltpu

# ---- module hyper-parameters (ResidualCouplingBlock(channels, hidden, ks, dil, n_layers)) ----
CHANNELS = 4          # must be even
HIDDEN = 32
KERNEL_SIZE = 5
DILATION_RATE = 1
N_LAYERS = 4
N_FLOWS = 4
HALF = CHANNELS // 2

B = 2                 # batch
T = 16                # time steps

# maximum conv padding (largest dilation) -> required zero halo width on the lane axis
MAX_PAD = (KERNEL_SIZE * DILATION_RATE ** (N_LAYERS - 1)
           - DILATION_RATE ** (N_LAYERS - 1)) // 2


# ---------------------------------------------------------------------------
# Kernel: one batch element per grid step, all flows / WN layers unrolled.
# ---------------------------------------------------------------------------
def coupling_block_kernel(x_ref, mask_ref,
                          pre_w_ref, pre_b_ref,
                          in_w_ref, in_b_ref,
                          rs_w_ref, rs_b_ref,
                          rsl_w_ref, rsl_b_ref,
                          post_w_ref, post_b_ref,
                          o_ref, stk_ref):
    S = x_ref.shape[-1]                 # lane width (multiple of 128, includes zero halo)
    mask = mask_ref[0]                  # (1, S) f32 -- zero over pad/halo lanes
    x0 = x_ref[0, :HALF, :]             # (HALF, S) f32
    x1 = x_ref[0, HALF:, :]             # (HALF, S) f32

    def mm(w_bf16, act_f32):            # MXU: bf16 x bf16, f32 accumulation
        return jnp.dot(w_bf16, act_f32.astype(jnp.bfloat16),
                       preferred_element_type=jnp.float32)

    for f in range(N_FLOWS):
        # Flip() folded into weights: even flows read x0 / update x1, odd flows read x1 /
        # update x0 with channel-reversed pre/post weights (done on the host).
        src = x0 if f % 2 == 0 else x1

        # pre: 1x1 conv == channel matmul; *mask zeroes the halo so rolled taps read zeros.
        h = (mm(pre_w_ref[f], src) + pre_b_ref[f]) * mask               # (HIDDEN, S) f32

        # WN stack (no conditioning, p_dropout=0)
        output = None
        for i in range(N_LAYERS):
            d = DILATION_RATE ** i
            pad = (KERNEL_SIZE * d - d) // 2
            # im2col: K lane-rolled copies of h written into a persistent bf16 VMEM scratch.
            # Roll wraparound lands in the zero halo (S - T >= pad), so no tap masks needed.
            for k in range(KERNEL_SIZE):
                o = k * d - pad
                tap = h if o == 0 else pltpu.roll(h, shift=(-o) % S, axis=1)
                stk_ref[k * HIDDEN:(k + 1) * HIDDEN, :] = tap.astype(jnp.bfloat16)
            # one fused matmul per layer: K*HIDDEN contraction axis
            x_in = jnp.dot(in_w_ref[f, i], stk_ref[...],
                           preferred_element_type=jnp.float32) + in_b_ref[f, i]

            # fused_add_tanh_sigmoid_multiply (g == 0); elementwise kept f32 (v5e-safe)
            acts = jnp.tanh(x_in[:HIDDEN, :]) * jax.nn.sigmoid(x_in[HIDDEN:, :])

            if i < N_LAYERS - 1:
                rs = mm(rs_w_ref[f, i], acts) + rs_b_ref[f, i]          # (2*HIDDEN, S)
                h = (h + rs[:HIDDEN, :]) * mask                         # residual (halo stays 0)
                skip = rs[HIDDEN:, :]
            else:
                # last layer contributes only skip channels: (HIDDEN, HIDDEN) matmul
                skip = mm(rsl_w_ref[f], acts) + rsl_b_ref[f]            # (HIDDEN, S)
            output = skip if output is None else output + skip

        # post: 1x1 conv -> mean only (logs == 0, exp(logs) == 1)
        m = (mm(post_w_ref[f], output * mask) + post_b_ref[f]) * mask   # (HALF, S)
        if f % 2 == 0:
            x1 = m + x1 * mask
        else:
            x0 = m + x0 * mask

    # store halves directly (no concatenate temporary); lane-dense 128-wide writeback
    o_ref[0, :HALF, :] = x0.astype(o_ref.dtype)
    o_ref[0, HALF:, :] = x1.astype(o_ref.dtype)


# ---------------------------------------------------------------------------
# Host-side weight preparation (Flip folding, tap fusion, bf16 cast) — run once.
# ---------------------------------------------------------------------------
def prepare_params(p):
    pre_w = np.asarray(p['pre_w'], np.float32)
    post_w = np.asarray(p['post_w'], np.float32)
    post_b = np.asarray(p['post_b'], np.float32)

    # Fold Flip() (channel reversal) into the per-flow weights: odd flows read the other half
    # with reversed channel order and write back in reversed order -> reverse pre_w input
    # columns / post_w+post_b output rows.
    odd = (np.arange(N_FLOWS) % 2 == 1)[:, None, None]
    pre_w_f = np.where(odd, pre_w[:, :, ::-1], pre_w)
    post_w_f = np.where(odd, post_w[:, ::-1, :], post_w)
    post_b_f = np.where(odd, post_b[:, ::-1, :], post_b)

    # Fuse the K dilated-conv taps into one contraction axis:
    # (F, L, K, 2H, H) -> (F, L, 2H, K*H), matching a stacked [tap0; tap1; ...] input.
    in_w = np.asarray(p['in_w'], np.float32).transpose(0, 1, 3, 2, 4).reshape(
        N_FLOWS, N_LAYERS, 2 * HIDDEN, KERNEL_SIZE * HIDDEN)

    bf = lambda a: jnp.asarray(a, jnp.bfloat16)   # MXU operands
    f32 = lambda a: jnp.asarray(a, jnp.float32)   # biases stay f32 (added post-matmul)
    return dict(
        pre_w=bf(pre_w_f), pre_b=f32(p['pre_b']),
        in_w=bf(in_w), in_b=f32(p['in_b']),
        rs_w=bf(p['rs_w']), rs_b=f32(p['rs_b']),
        rsl_w=bf(p['rsl_w']), rsl_b=f32(p['rsl_b']),
        post_w=bf(post_w_f), post_b=f32(post_b_f),
    )


def _const_spec(arr):
    """Whole-array block with a constant index map: DMA'd to VMEM once, resident over the grid."""
    nd = arr.ndim
    return pl.BlockSpec(arr.shape, lambda b, _n=nd: (0,) * _n)


# ---------------------------------------------------------------------------
# Wrapper (jit this): layout via BlockSpec (grid over batch), zero-pad T up to 128-multiple.
# ---------------------------------------------------------------------------
def residual_coupling_block(x, x_mask, prep):
    Bn, C, Tn = x.shape
    # lane width: multiple of 128 with at least MAX_PAD zero lanes of halo after the sequence
    S = pl.cdiv(Tn + MAX_PAD, 128) * 128
    x_p = jnp.pad(x, ((0, 0), (0, 0), (0, S - Tn)))
    mask_p = jnp.pad(x_mask, ((0, 0), (0, 0), (0, S - Tn)))

    weights = (prep['pre_w'], prep['pre_b'],
               prep['in_w'], prep['in_b'],
               prep['rs_w'], prep['rs_b'],
               prep['rsl_w'], prep['rsl_b'],
               prep['post_w'], prep['post_b'])

    out = pl.pallas_call(
        coupling_block_kernel,
        out_shape=jax.ShapeDtypeStruct((Bn, C, S), x.dtype),
        grid_spec=pltpu.PrefetchScalarGridSpec(
            num_scalar_prefetch=0,
            grid=(Bn,),
            in_specs=[pl.BlockSpec((1, C, S), lambda b: (b, 0, 0)),
                      pl.BlockSpec((1, 1, S), lambda b: (b, 0, 0))]
                     + [_const_spec(w) for w in weights],
            out_specs=pl.BlockSpec((1, C, S), lambda b: (b, 0, 0)),
            scratch_shapes=[pltpu.VMEM((KERNEL_SIZE * HIDDEN, S), jnp.bfloat16)],
        ),
        compiler_params=pltpu.CompilerParams(
            dimension_semantics=("parallel",)),   # batch shards across v7x's 2 TensorCores
    )(x_p, mask_p, *weights)

    out = out[:, :, :Tn]
    if N_FLOWS % 2 == 1:                          # odd flow count: residual global channel flip
        out = out[:, ::-1, :]
    return out


# ---------------------------------------------------------------------------
# Parameters & pure-JAX reference (mirrors the PyTorch forward, reverse=False)
# ---------------------------------------------------------------------------
def init_params(key):
    # NOTE: PyTorch zero-inits the `post` conv (identity flow at init); small deterministic
    # random values are used here so the kernel exercises a non-trivial coupling.
    # Weights are bf16-roundtripped so kernel (bf16 MXU) and reference (f32) share values.
    ks = jax.random.split(key, 10)
    s = 0.1

    def rnd(k, shape):
        w = s * jax.random.normal(k, shape, jnp.float32)
        return w.astype(jnp.bfloat16).astype(jnp.float32)

    return dict(
        pre_w=rnd(ks[0], (N_FLOWS, HIDDEN, HALF)),
        pre_b=rnd(ks[1], (N_FLOWS, HIDDEN, 1)),
        in_w=rnd(ks[2], (N_FLOWS, N_LAYERS, KERNEL_SIZE, 2 * HIDDEN, HIDDEN)),
        in_b=rnd(ks[3], (N_FLOWS, N_LAYERS, 2 * HIDDEN, 1)),
        rs_w=rnd(ks[4], (N_FLOWS, N_LAYERS - 1, 2 * HIDDEN, HIDDEN)),     # res+skip layers
        rs_b=rnd(ks[5], (N_FLOWS, N_LAYERS - 1, 2 * HIDDEN, 1)),
        rsl_w=rnd(ks[6], (N_FLOWS, HIDDEN, HIDDEN)),                      # last layer: skip only
        rsl_b=rnd(ks[7], (N_FLOWS, HIDDEN, 1)),
        post_w=rnd(ks[8], (N_FLOWS, HALF, HIDDEN)),
        post_b=rnd(ks[9], (N_FLOWS, HALF, 1)),
    )


def ref_forward(x, mask, p):
    Bn, C, Tn = x.shape
    for f in range(N_FLOWS):
        x0, x1 = x[:, :HALF], x[:, HALF:]
        h = jnp.einsum('oc,bct->bot', p['pre_w'][f], x0) + p['pre_b'][f][None]
        h = h * mask
        output = jnp.zeros((Bn, HIDDEN, Tn), jnp.float32)
        for i in range(N_LAYERS):
            d = DILATION_RATE ** i
            pad = (KERNEL_SIZE * d - d) // 2
            h_pad = jnp.pad(h, ((0, 0), (0, 0), (pad, pad)))
            x_in = jnp.broadcast_to(p['in_b'][f, i][None], (Bn, 2 * HIDDEN, Tn))
            for k in range(KERNEL_SIZE):
                x_in = x_in + jnp.einsum('oc,bct->bot', p['in_w'][f, i, k],
                                         h_pad[:, :, k * d:k * d + Tn])
            acts = jnp.tanh(x_in[:, :HIDDEN]) * jax.nn.sigmoid(x_in[:, HIDDEN:])
            if i < N_LAYERS - 1:
                rs = jnp.einsum('oc,bct->bot', p['rs_w'][f, i], acts) + p['rs_b'][f, i][None]
                h = (h + rs[:, :HIDDEN]) * mask
                output = output + rs[:, HIDDEN:]
            else:
                output = output + (jnp.einsum('oc,bct->bot', p['rsl_w'][f], acts)
                                   + p['rsl_b'][f][None])
        stats = (jnp.einsum('oc,bct->bot', p['post_w'][f], output * mask)
                 + p['post_b'][f][None]) * mask
        x1n = stats + x1 * mask
        x = jnp.concatenate([x0, x1n], axis=1)[:, ::-1]      # Flip()
    return x


if __name__ == "__main__":
    key = jax.random.PRNGKey(0)
    kx, kp = jax.random.split(key)
    x = jax.random.normal(kx, (B, CHANNELS, T), jnp.float32)
    lengths = jnp.array([T, T - 4], jnp.int32)
    x_mask = (jnp.arange(T)[None, None, :] < lengths[:, None, None]).astype(jnp.float32)

    params = init_params(kp)
    prep = prepare_params(params)           # one-time host prep (Flip fold, tap fuse, bf16)

    fwd = jax.jit(residual_coupling_block)
    out = jax.block_until_ready(fwd(x, x_mask, prep))

    ref = jax.block_until_ready(ref_forward(x, x_mask, params))
    # kernel runs bf16 MXU operands with f32 accumulation; reference is pure f32
    np.testing.assert_allclose(np.asarray(out), np.asarray(ref), rtol=3e-2, atol=3e-2)

    print("KERNEL_OK")
</pallas_src>

<mosaic_0001>
module attributes {stable_mosaic.version = 11 : i64} {
  func.func @coupling_block_kernel(%arg0: i32, %arg1: memref<1x4x128xf32, #tpu.memory_space<vmem>>, %arg2: memref<1x1x128xf32, #tpu.memory_space<vmem>>, %arg3: memref<4x32x2xbf16, #tpu.memory_space<vmem>>, %arg4: memref<4x32x1xf32, #tpu.memory_space<vmem>>, %arg5: memref<4x4x64x160xbf16, #tpu.memory_space<vmem>>, %arg6: memref<4x4x64x1xf32, #tpu.memory_space<vmem>>, %arg7: memref<4x3x64x32xbf16, #tpu.memory_space<vmem>>, %arg8: memref<4x3x64x1xf32, #tpu.memory_space<vmem>>, %arg9: memref<4x32x32xbf16, #tpu.memory_space<vmem>>, %arg10: memref<4x32x1xf32, #tpu.memory_space<vmem>>, %arg11: memref<4x2x32xbf16, #tpu.memory_space<vmem>>, %arg12: memref<4x2x1xf32, #tpu.memory_space<vmem>>, %arg13: memref<1x4x128xf32, #tpu.memory_space<vmem>>, %arg14: memref<160x128xbf16, #tpu.memory_space<vmem>>) attributes {dimension_semantics = [#tpu.dimension_semantics<parallel>], iteration_bounds = array<i64: 2>, scalar_prefetch = 0 : i64, scratch_operands = 1 : i64, tpu.core_type = #tpu.core_type<tc>, window_params = [{transform_indices = @transform_0, window_bounds = array<i64: 1, 4, 128>}, {transform_indices = @transform_1, window_bounds = array<i64: 1, 1, 128>}, {pipeline_mode = #tpu.pipeline_mode<synchronous>, transform_indices = @transform_2, window_bounds = array<i64: 4, 32, 2>}, {pipeline_mode = #tpu.pipeline_mode<synchronous>, transform_indices = @transform_3, window_bounds = array<i64: 4, 32, 1>}, {pipeline_mode = #tpu.pipeline_mode<synchronous>, transform_indices = @transform_4, window_bounds = array<i64: 4, 4, 64, 160>}, {pipeline_mode = #tpu.pipeline_mode<synchronous>, transform_indices = @transform_5, window_bounds = array<i64: 4, 4, 64, 1>}, {pipeline_mode = #tpu.pipeline_mode<synchronous>, transform_indices = @transform_6, window_bounds = array<i64: 4, 3, 64, 32>}, {pipeline_mode = #tpu.pipeline_mode<synchronous>, transform_indices = @transform_7, window_bounds = array<i64: 4, 3, 64, 1>}, {pipeline_mode = #tpu.pipeline_mode<synchronous>, transform_indices = @transform_8, window_bounds = array<i64: 4, 32, 32>}, {pipeline_mode = #tpu.pipeline_mode<synchronous>, transform_indices = @transform_9, window_bounds = array<i64: 4, 32, 1>}, {pipeline_mode = #tpu.pipeline_mode<synchronous>, transform_indices = @transform_10, window_bounds = array<i64: 4, 2, 32>}, {pipeline_mode = #tpu.pipeline_mode<synchronous>, transform_indices = @transform_11, window_bounds = array<i64: 4, 2, 1>}, {transform_indices = @transform_12, window_bounds = array<i64: 1, 4, 128>}]} {
    %c0 = arith.constant 0 : index
    %c0_0 = arith.constant 0 : index
    %c0_1 = arith.constant 0 : index
    %0 = vector.load %arg2[%c0, %c0_0, %c0_1] : memref<1x1x128xf32, #tpu.memory_space<vmem>>, vector<1x1x128xf32>
    %1 = vector.shape_cast %0 : vector<1x1x128xf32> to vector<1x128xf32>
    %c0_2 = arith.constant 0 : index
    %c0_3 = arith.constant 0 : index
    %c0_4 = arith.constant 0 : index
    %2 = vector.load %arg1[%c0_2, %c0_3, %c0_4] : memref<1x4x128xf32, #tpu.memory_space<vmem>>, vector<1x2x128xf32>
    %3 = vector.shape_cast %2 : vector<1x2x128xf32> to vector<2x128xf32>
    %c0_5 = arith.constant 0 : index
    %c2 = arith.constant 2 : index
    %c0_6 = arith.constant 0 : index
    %4 = vector.load %arg1[%c0_5, %c2, %c0_6] : memref<1x4x128xf32, #tpu.memory_space<vmem>>, vector<1x2x128xf32>
    %5 = vector.shape_cast %4 : vector<1x2x128xf32> to vector<2x128xf32>
    %c0_7 = arith.constant 0 : index
    %c0_8 = arith.constant 0 : index
    %c0_9 = arith.constant 0 : index
    %6 = vector.load %arg3[%c0_7, %c0_8, %c0_9] : memref<4x32x2xbf16, #tpu.memory_space<vmem>>, vector<1x32x2xbf16>
    %7 = vector.shape_cast %6 : vector<1x32x2xbf16> to vector<32x2xbf16>
    %8 = arith.truncf %3 : vector<2x128xf32> to vector<2x128xbf16>
    %cst = arith.constant dense<0.000000e+00> : vector<32x128xf32>
    %9 = tpu.matmul %7, %8, %cst {dimension_numbers = #tpu.dot_dimension_numbers<[1], [0], [0], [1], [0, 0, 1, 1], [], []>} : vector<32x2xbf16>, vector<2x128xbf16>, vector<32x128xf32> -> vector<32x128xf32>
    %c0_10 = arith.constant 0 : index
    %c0_11 = arith.constant 0 : index
    %c0_12 = arith.constant 0 : index
    %10 = vector.load %arg4[%c0_10, %c0_11, %c0_12] : memref<4x32x1xf32, #tpu.memory_space<vmem>>, vector<1x32x1xf32>
    %11 = vector.shape_cast %10 : vector<1x32x1xf32> to vector<32x1xf32>
    %12 = vector.broadcast %11 : vector<32x1xf32> to vector<32x128xf32>
    %13 = arith.addf %9, %12 : vector<32x128xf32>
    %14 = vector.broadcast %1 : vector<1x128xf32> to vector<32x128xf32>
    %15 = arith.mulf %13, %14 : vector<32x128xf32>
    %c2_i32 = arith.constant 2 : i32
    %16 = tpu.dynamic_rotate %15 by %c2_i32 dim 1 : vector<32x128xf32>, i32 -> vector<32x128xf32>
    %17 = arith.truncf %16 : vector<32x128xf32> to vector<32x128xbf16>
    %c0_13 = arith.constant 0 : index
    %c0_14 = arith.constant 0 : index
    %18 = vector.load %arg14[%c0_13, %c0_14] : memref<160x128xbf16, #tpu.memory_space<vmem>>, vector<32x128xbf16>
    tpu.vector_store %arg14[%c0_13, %c0_14], %17 {strides = array<i32>} : memref<160x128xbf16, #tpu.memory_space<vmem>>, vector<32x128xbf16>,
    %c1_i32 = arith.constant 1 : i32
    %19 = tpu.dynamic_rotate %15 by %c1_i32 dim 1 : vector<32x128xf32>, i32 -> vector<32x128xf32>
    %20 = arith.truncf %19 : vector<32x128xf32> to vector<32x128xbf16>
    %c32 = arith.constant 32 : index
    %c0_15 = arith.constant 0 : index
    %21 = vector.load %arg14[%c32, %c0_15] : memref<160x128xbf16, #tpu.memory_space<vmem>>, vector<32x128xbf16>
    tpu.vector_store %arg14[%c32, %c0_15], %20 {strides = array<i32>} : memref<160x128xbf16, #tpu.memory_space<vmem>>, vector<32x128xbf16>,
    %22 = arith.truncf %15 : vector<32x128xf32> to vector<32x128xbf16>
    %c64 = arith.constant 64 : index
    %c0_16 = arith.constant 0 : index
    %23 = vector.load %arg14[%c64, %c0_16] : memref<160x128xbf16, #tpu.memory_space<vmem>>, vector<32x128xbf16>
    tpu.vector_store %arg14[%c64, %c0_16], %22 {strides = array<i32>} : memref<160x128xbf16, #tpu.memory_space<vmem>>, vector<32x128xbf16>,
    %c127_i32 = arith.constant 127 : i32
    %24 = tpu.dynamic_rotate %15 by %c127_i32 dim 1 : vector<32x128xf32>, i32 -> vector<32x128xf32>
    %25 = arith.truncf %24 : vector<32x128xf32> to vector<32x128xbf16>
    %c96 = arith.constant 96 : index
    %c0_17 = arith.constant 0 : index
    %26 = vector.load %arg14[%c96, %c0_17] : memref<160x128xbf16, #tpu.memory_space<vmem>>, vector<32x128xbf16>
    tpu.vector_store %arg14[%c96, %c0_17], %25 {strides = array<i32>} : memref<160x128xbf16, #tpu.memory_space<vmem>>, vector<32x128xbf16>,
    %c126_i32 = arith.constant 126 : i32
    %27 = tpu.dynamic_rotate %15 by %c126_i32 dim 1 : vector<32x128xf32>, i32 -> vector<32x128xf32>
    %28 = arith.truncf %27 : vector<32x128xf32> to vector<32x128xbf16>
    %c128 = arith.constant 128 : index
    %c0_18 = arith.constant 0 : index
    %29 = vector.load %arg14[%c128, %c0_18] : memref<160x128xbf16, #tpu.memory_space<vmem>>, vector<32x128xbf16>
    tpu.vector_store %arg14[%c128, %c0_18], %28 {strides = array<i32>} : memref<160x128xbf16, #tpu.memory_space<vmem>>, vector<32x128xbf16>,
    %c0_19 = arith.constant 0 : index
    %c0_20 = arith.constant 0 : index
    %c0_21 = arith.constant 0 : index
    %c0_22 = arith.constant 0 : index
    %30 = vector.load %arg5[%c0_19, %c0_20, %c0_21, %c0_22] : memref<4x4x64x160xbf16, #tpu.memory_space<vmem>>, vector<1x1x64x160xbf16>
    %31 = vector.shape_cast %30 : vector<1x1x64x160xbf16> to vector<64x160xbf16>
    %c0_23 = arith.constant 0 : index
    %c0_24 = arith.constant 0 : index
    %32 = vector.load %arg14[%c0_23, %c0_24] : memref<160x128xbf16, #tpu.memory_space<vmem>>, vector<160x128xbf16>
    %cst_25 = arith.constant dense<0.000000e+00> : vector<64x128xf32>
    %33 = tpu.matmul %31, %32, %cst_25 {dimension_numbers = #tpu.dot_dimension_numbers<[1], [0], [0], [1], [0, 0, 1, 1], [], []>} : vector<64x160xbf16>, vector<160x128xbf16>, vector<64x128xf32> -> vector<64x128xf32>
    %c0_26 = arith.constant 0 : index
    %c0_27 = arith.constant 0 : index
    %c0_28 = arith.constant 0 : index
    %c0_29 = arith.constant 0 : index
    %34 = vector.load %arg6[%c0_26, %c0_27, %c0_28, %c0_29] : memref<4x4x64x1xf32, #tpu.memory_space<vmem>>, vector<1x1x64x1xf32>
    %35 = vector.shape_cast %34 : vector<1x1x64x1xf32> to vector<64x1xf32>
    %36 = vector.broadcast %35 : vector<64x1xf32> to vector<64x128xf32>
    %37 = arith.addf %33, %36 : vector<64x128xf32>
    %38 = vector.extract_strided_slice %37 {offsets = [0, 0], sizes = [32, 128], strides = [1, 1]} : vector<64x128xf32> to vector<32x128xf32>
    %39 = math.tanh %38 : vector<32x128xf32>
    %40 = vector.extract_strided_slice %37 {offsets = [32, 0], sizes = [32, 128], strides = [1, 1]} : vector<64x128xf32> to vector<32x128xf32>
    %41 = arith.negf %40 : vector<32x128xf32>
    %42 = math.exp %41 : vector<32x128xf32>
    %cst_30 = arith.constant 1.000000e+00 : f32
    %43 = vector.broadcast %cst_30 : f32 to vector<32x128xf32>
    %44 = arith.addf %43, %42 : vector<32x128xf32>
    %45 = arith.divf %43, %44 : vector<32x128xf32>
    %46 = arith.mulf %39, %45 : vector<32x128xf32>
    %c0_31 = arith.constant 0 : index
    %c0_32 = arith.constant 0 : index
    %c0_33 = arith.constant 0 : index
    %c0_34 = arith.constant 0 : index
    %47 = vector.load %arg7[%c0_31, %c0_32, %c0_33, %c0_34] : memref<4x3x64x32xbf16, #tpu.memory_space<vmem>>, vector<1x1x64x32xbf16>
    %48 = vector.shape_cast %47 : vector<1x1x64x32xbf16> to vector<64x32xbf16>
    %49 = arith.truncf %46 : vector<32x128xf32> to vector<32x128xbf16>
    %cst_35 = arith.constant dense<0.000000e+00> : vector<64x128xf32>
    %50 = tpu.matmul %48, %49, %cst_35 {dimension_numbers = #tpu.dot_dimension_numbers<[1], [0], [0], [1], [0, 0, 1, 1], [], []>} : vector<64x32xbf16>, vector<32x128xbf16>, vector<64x128xf32> -> vector<64x128xf32>
    %c0_36 = arith.constant 0 : index
    %c0_37 = arith.constant 0 : index
    %c0_38 = arith.constant 0 : index
    %c0_39 = arith.constant 0 : index
    %51 = vector.load %arg8[%c0_36, %c0_37, %c0_38, %c0_39] : memref<4x3x64x1xf32, #tpu.memory_space<vmem>>, vector<1x1x64x1xf32>
    %52 = vector.shape_cast %51 : vector<1x1x64x1xf32> to vector<64x1xf32>
    %53 = vector.broadcast %52 : vector<64x1xf32> to vector<64x128xf32>
    %54 = arith.addf %50, %53 : vector<64x128xf32>
    %55 = vector.extract_strided_slice %54 {offsets = [0, 0], sizes = [32, 128], strides = [1, 1]} : vector<64x128xf32> to vector<32x128xf32>
    %56 = arith.addf %15, %55 : vector<32x128xf32>
    %57 = vector.broadcast %1 : vector<1x128xf32> to vector<32x128xf32>
    %58 = arith.mulf %56, %57 : vector<32x128xf32>
    %59 = vector.extract_strided_slice %54 {offsets = [32, 0], sizes = [32, 128], strides = [1, 1]} : vector<64x128xf32> to vector<32x128xf32>
    %c2_i32_40 = arith.constant 2 : i32
    %60 = tpu.dynamic_rotate %58 by %c2_i32_40 dim 1 : vector<32x128xf32>, i32 -> vector<32x128xf32>
    %61 = arith.truncf %60 : vector<32x128xf32> to vector<32x128xbf16>
    %c0_41 = arith.constant 0 : index
    %c0_42 = arith.constant 0 : index
    %62 = vector.load %arg14[%c0_41, %c0_42] : memref<160x128xbf16, #tpu.memory_space<vmem>>, vector<32x128xbf16>
    tpu.vector_store %arg14[%c0_41, %c0_42], %61 {strides = array<i32>} : memref<160x128xbf16, #tpu.memory_space<vmem>>, vector<32x128xbf16>,
    %c1_i32_43 = arith.constant 1 : i32
    %63 = tpu.dynamic_rotate %58 by %c1_i32_43 dim 1 : vector<32x128xf32>, i32 -> vector<32x128xf32>
    %64 = arith.truncf %63 : vector<32x128xf32> to vector<32x128xbf16>
    %c32_44 = arith.constant 32 : index
    %c0_45 = arith.constant 0 : index
    %65 = vector.load %arg14[%c32_44, %c0_45] : memref<160x128xbf16, #tpu.memory_space<vmem>>, vector<32x128xbf16>
    tpu.vector_store %arg14[%c32_44, %c0_45], %64 {strides = array<i32>} : memref<160x128xbf16, #tpu.memory_space<vmem>>, vector<32x128xbf16>,
    %66 = arith.truncf %58 : vector<32x128xf32> to vector<32x128xbf16>
    %c64_46 = arith.constant 64 : index
    %c0_47 = arith.constant 0 : index
    %67 = vector.load %arg14[%c64_46, %c0_47] : memref<160x128xbf16, #tpu.memory_space<vmem>>, vector<32x128xbf16>
    tpu.vector_store %arg14[%c64_46, %c0_47], %66 {strides = array<i32>} : memref<160x128xbf16, #tpu.memory_space<vmem>>, vector<32x128xbf16>,
    %c127_i32_48 = arith.constant 127 : i32
    %68 = tpu.dynamic_rotate %58 by %c127_i32_48 dim 1 : vector<32x128xf32>, i32 -> vector<32x128xf32>
    %69 = arith.truncf %68 : vector<32x128xf32> to vector<32x128xbf16>
    %c96_49 = arith.constant 96 : index
    %c0_50 = arith.constant 0 : index
    %70 = vector.load %arg14[%c96_49, %c0_50] : memref<160x128xbf16, #tpu.memory_space<vmem>>, vector<32x128xbf16>
    tpu.vector_store %arg14[%c96_49, %c0_50], %69 {strides = array<i32>} : memref<160x128xbf16, #tpu.memory_space<vmem>>, vector<32x128xbf16>,
    %c126_i32_51 = arith.constant 126 : i32
    %71 = tpu.dynamic_rotate %58 by %c126_i32_51 dim 1 : vector<32x128xf32>, i32 -> vector<32x128xf32>
    %72 = arith.truncf %71 : vector<32x128xf32> to vector<32x128xbf16>
    %c128_52 = arith.constant 128 : index
    %c0_53 = arith.constant 0 : index
    %73 = vector.load %arg14[%c128_52, %c0_53] : memref<160x128xbf16, #tpu.memory_space<vmem>>, vector<32x128xbf16>
    tpu.vector_store %arg14[%c128_52, %c0_53], %72 {strides = array<i32>} : memref<160x128xbf16, #tpu.memory_space<vmem>>, vector<32x128xbf16>,
    %c0_54 = arith.constant 0 : index
    %c1 = arith.constant 1 : index
    %c0_55 = arith.constant 0 : index
    %c0_56 = arith.constant 0 : index
    %74 = vector.load %arg5[%c0_54, %c1, %c0_55, %c0_56] : memref<4x4x64x160xbf16, #tpu.memory_space<vmem>>, vector<1x1x64x160xbf16>
    %75 = vector.shape_cast %74 : vector<1x1x64x160xbf16> to vector<64x160xbf16>
    %c0_57 = arith.constant 0 : index
    %c0_58 = arith.constant 0 : index
    %76 = vector.load %arg14[%c0_57, %c0_58] : memref<160x128xbf16, #tpu.memory_space<vmem>>, vector<160x128xbf16>
    %cst_59 = arith.constant dense<0.000000e+00> : vector<64x128xf32>
    %77 = tpu.matmul %75, %76, %cst_59 {dimension_numbers = #tpu.dot_dimension_numbers<[1], [0], [0], [1], [0, 0, 1, 1], [], []>} : vector<64x160xbf16>, vector<160x128xbf16>, vector<64x128xf32> -> vector<64x128xf32>
    %c0_60 = arith.constant 0 : index
    %c1_61 = arith.constant 1 : index
    %c0_62 = arith.constant 0 : index
    %c0_63 = arith.constant 0 : index
    %78 = vector.load %arg6[%c0_60, %c1_61, %c0_62, %c0_63] : memref<4x4x64x1xf32, #tpu.memory_space<vmem>>, vector<1x1x64x1xf32>
    %79 = vector.shape_cast %78 : vector<1x1x64x1xf32> to vector<64x1xf32>
    %80 = vector.broadcast %79 : vector<64x1xf32> to vector<64x128xf32>
    %81 = arith.addf %77, %80 : vector<64x128xf32>
    %82 = vector.extract_strided_slice %81 {offsets = [0, 0], sizes = [32, 128], strides = [1, 1]} : vector<64x128xf32> to vector<32x128xf32>
    %83 = math.tanh %82 : vector<32x128xf32>
    %84 = vector.extract_strided_slice %81 {offsets = [32, 0], sizes = [32, 128], strides = [1, 1]} : vector<64x128xf32> to vector<32x128xf32>
    %85 = arith.negf %84 : vector<32x128xf32>
    %86 = math.exp %85 : vector<32x128xf32>
    %cst_64 = arith.constant 1.000000e+00 : f32
    %87 = vector.broadcast %cst_64 : f32 to vector<32x128xf32>
    %88 = arith.addf %87, %86 : vector<32x128xf32>
    %89 = arith.divf %87, %88 : vector<32x128xf32>
    %90 = arith.mulf %83, %89 : vector<32x128xf32>
    %c0_65 = arith.constant 0 : index
    %c1_66 = arith.constant 1 : index
    %c0_67 = arith.constant 0 : index
    %c0_68 = arith.constant 0 : index
    %91 = vector.load %arg7[%c0_65, %c1_66, %c0_67, %c0_68] : memref<4x3x64x32xbf16, #tpu.memory_space<vmem>>, vector<1x1x64x32xbf16>
    %92 = vector.shape_cast %91 : vector<1x1x64x32xbf16> to vector<64x32xbf16>
    %93 = arith.truncf %90 : vector<32x128xf32> to vector<32x128xbf16>
    %cst_69 = arith.constant dense<0.000000e+00> : vector<64x128xf32>
    %94 = tpu.matmul %92, %93, %cst_69 {dimension_numbers = #tpu.dot_dimension_numbers<[1], [0], [0], [1], [0, 0, 1, 1], [], []>} : vector<64x32xbf16>, vector<32x128xbf16>, vector<64x128xf32> -> vector<64x128xf32>
    %c0_70 = arith.constant 0 : index
    %c1_71 = arith.constant 1 : index
    %c0_72 = arith.constant 0 : index
    %c0_73 = arith.constant 0 : index
    %95 = vector.load %arg8[%c0_70, %c1_71, %c0_72, %c0_73] : memref<4x3x64x1xf32, #tpu.memory_space<vmem>>, vector<1x1x64x1xf32>
    %96 = vector.shape_cast %95 : vector<1x1x64x1xf32> to vector<64x1xf32>
    %97 = vector.broadcast %96 : vector<64x1xf32> to vector<64x128xf32>
    %98 = arith.addf %94, %97 : vector<64x128xf32>
    %99 = vector.extract_strided_slice %98 {offsets = [0, 0], sizes = [32, 128], strides = [1, 1]} : vector<64x128xf32> to vector<32x128xf32>
    %100 = arith.addf %58, %99 : vector<32x128xf32>
    %101 = vector.broadcast %1 : vector<1x128xf32> to vector<32x128xf32>
    %102 = arith.mulf %100, %101 : vector<32x128xf32>
    %103 = vector.extract_strided_slice %98 {offsets = [32, 0], sizes = [32, 128], strides = [1, 1]} : vector<64x128xf32> to vector<32x128xf32>
    %104 = arith.addf %59, %103 : vector<32x128xf32>
    %c2_i32_74 = arith.constant 2 : i32
    %105 = tpu.dynamic_rotate %102 by %c2_i32_74 dim 1 : vector<32x128xf32>, i32 -> vector<32x128xf32>
    %106 = arith.truncf %105 : vector<32x128xf32> to vector<32x128xbf16>
    %c0_75 = arith.constant 0 : index
    %c0_76 = arith.constant 0 : index
    %107 = vector.load %arg14[%c0_75, %c0_76] : memref<160x128xbf16, #tpu.memory_space<vmem>>, vector<32x128xbf16>
    tpu.vector_store %arg14[%c0_75, %c0_76], %106 {strides = array<i32>} : memref<160x128xbf16, #tpu.memory_space<vmem>>, vector<32x128xbf16>,
    %c1_i32_77 = arith.constant 1 : i32
    %108 = tpu.dynamic_rotate %102 by %c1_i32_77 dim 1 : vector<32x128xf32>, i32 -> vector<32x128xf32>
    %109 = arith.truncf %108 : vector<32x128xf32> to vector<32x128xbf16>
    %c32_78 = arith.constant 32 : index
    %c0_79 = arith.constant 0 : index
    %110 = vector.load %arg14[%c32_78, %c0_79] : memref<160x128xbf16, #tpu.memory_space<vmem>>, vector<32x128xbf16>
    tpu.vector_store %arg14[%c32_78, %c0_79], %109 {strides = array<i32>} : memref<160x128xbf16, #tpu.memory_space<vmem>>, vector<32x128xbf16>,
    %111 = arith.truncf %102 : vector<32x128xf32> to vector<32x128xbf16>
    %c64_80 = arith.constant 64 : index
    %c0_81 = arith.constant 0 : index
    %112 = vector.load %arg14[%c64_80, %c0_81] : memref<160x128xbf16, #tpu.memory_space<vmem>>, vector<32x128xbf16>
    tpu.vector_store %arg14[%c64_80, %c0_81], %111 {strides = array<i32>} : memref<160x128xbf16, #tpu.memory_space<vmem>>, vector<32x128xbf16>,
    %c127_i32_82 = arith.constant 127 : i32
    %113 = tpu.dynamic_rotate %102 by %c127_i32_82 dim 1 : vector<32x128xf32>, i32 -> vector<32x128xf32>
    %114 = arith.truncf %113 : vector<32x128xf32> to vector<32x128xbf16>
    %c96_83 = arith.constant 96 : index
    %c0_84 = arith.constant 0 : index
    %115 = vector.load %arg14[%c96_83, %c0_84] : memref<160x128xbf16, #tpu.memory_space<vmem>>, vector<32x128xbf16>
    tpu.vector_store %arg14[%c96_83, %c0_84], %114 {strides = array<i32>} : memref<160x128xbf16, #tpu.memory_space<vmem>>, vector<32x128xbf16>,
    %c126_i32_85 = arith.constant 126 : i32
    %116 = tpu.dynamic_rotate %102 by %c126_i32_85 dim 1 : vector<32x128xf32>, i32 -> vector<32x128xf32>
    %117 = arith.truncf %116 : vector<32x128xf32> to vector<32x128xbf16>
    %c128_86 = arith.constant 128 : index
    %c0_87 = arith.constant 0 : index
    %118 = vector.load %arg14[%c128_86, %c0_87] : memref<160x128xbf16, #tpu.memory_space<vmem>>, vector<32x128xbf16>
    tpu.vector_store %arg14[%c128_86, %c0_87], %117 {strides = array<i32>} : memref<160x128xbf16, #tpu.memory_space<vmem>>, vector<32x128xbf16>,
    %c0_88 = arith.constant 0 : index
    %c2_89 = arith.constant 2 : index
    %c0_90 = arith.constant 0 : index
    %c0_91 = arith.constant 0 : index
    %119 = vector.load %arg5[%c0_88, %c2_89, %c0_90, %c0_91] : memref<4x4x64x160xbf16, #tpu.memory_space<vmem>>, vector<1x1x64x160xbf16>
    %120 = vector.shape_cast %119 : vector<1x1x64x160xbf16> to vector<64x160xbf16>
    %c0_92 = arith.constant 0 : index
    %c0_93 = arith.constant 0 : index
    %121 = vector.load %arg14[%c0_92, %c0_93] : memref<160x128xbf16, #tpu.memory_space<vmem>>, vector<160x128xbf16>
    %cst_94 = arith.constant dense<0.000000e+00> : vector<64x128xf32>
    %122 = tpu.matmul %120, %121, %cst_94 {dimension_numbers = #tpu.dot_dimension_numbers<[1], [0], [0], [1], [0, 0, 1, 1], [], []>} : vector<64x160xbf16>, vector<160x128xbf16>, vector<64x128xf32> -> vector<64x128xf32>
    %c0_95 = arith.constant 0 : index
    %c2_96 = arith.constant 2 : index
    %c0_97 = arith.constant 0 : index
    %c0_98 = arith.constant 0 : index
    %123 = vector.load %arg6[%c0_95, %c2_96, %c0_97, %c0_98] : memref<4x4x64x1xf32, #tpu.memory_space<vmem>>, vector<1x1x64x1xf32>
    %124 = vector.shape_cast %123 : vector<1x1x64x1xf32> to vector<64x1xf32>
    %125 = vector.broadcast %124 : vector<64x1xf32> to vector<64x128xf32>
    %126 = arith.addf %122, %125 : vector<64x128xf32>
    %127 = vector.extract_strided_slice %126 {offsets = [0, 0], sizes = [32, 128], strides = [1, 1]} : vector<64x128xf32> to vector<32x128xf32>
    %128 = math.tanh %127 : vector<32x128xf32>
    %129 = vector.extract_strided_slice %126 {offsets = [32, 0], sizes = [32, 128], strides = [1, 1]} : vector<64x128xf32> to vector<32x128xf32>
    %130 = arith.negf %129 : vector<32x128xf32>
    %131 = math.exp %130 : vector<32x128xf32>
    %cst_99 = arith.constant 1.000000e+00 : f32
    %132 = vector.broadcast %cst_99 : f32 to vector<32x128xf32>
    %133 = arith.addf %132, %131 : vector<32x128xf32>
    %134 = arith.divf %132, %133 : vector<32x128xf32>
    %135 = arith.mulf %128, %134 : vector<32x128xf32>
    %c0_100 = arith.constant 0 : index
    %c2_101 = arith.constant 2 : index
    %c0_102 = arith.constant 0 : index
    %c0_103 = arith.constant 0 : index
    %136 = vector.load %arg7[%c0_100, %c2_101, %c0_102, %c0_103] : memref<4x3x64x32xbf16, #tpu.memory_space<vmem>>, vector<1x1x64x32xbf16>
    %137 = vector.shape_cast %136 : vector<1x1x64x32xbf16> to vector<64x32xbf16>
    %138 = arith.truncf %135 : vector<32x128xf32> to vector<32x128xbf16>
    %cst_104 = arith.constant dense<0.000000e+00> : vector<64x128xf32>
    %139 = tpu.matmul %137, %138, %cst_104 {dimension_numbers = #tpu.dot_dimension_numbers<[1], [0], [0], [1], [0, 0, 1, 1], [], []>} : vector<64x32xbf16>, vector<32x128xbf16>, vector<64x128xf32> -> vector<64x128xf32>
    %c0_105 = arith.constant 0 : index
    %c2_106 = arith.constant 2 : index
    %c0_107 = arith.constant 0 : index
    %c0_108 = arith.constant 0 : index
    %140 = vector.load %arg8[%c0_105, %c2_106, %c0_107, %c0_108] : memref<4x3x64x1xf32, #tpu.memory_space<vmem>>, vector<1x1x64x1xf32>
    %141 = vector.shape_cast %140 : vector<1x1x64x1xf32> to vector<64x1xf32>
    %142 = vector.broadcast %141 : vector<64x1xf32> to vector<64x128xf32>
    %143 = arith.addf %139, %142 : vector<64x128xf32>
    %144 = vector.extract_strided_slice %143 {offsets = [0, 0], sizes = [32, 128], strides = [1, 1]} : vector<64x128xf32> to vector<32x128xf32>
    %145 = arith.addf %102, %144 : vector<32x128xf32>
    %146 = vector.broadcast %1 : vector<1x128xf32> to vector<32x128xf32>
    %147 = arith.mulf %145, %146 : vector<32x128xf32>
    %148 = vector.extract_strided_slice %143 {offsets = [32, 0], sizes = [32, 128], strides = [1, 1]} : vector<64x128xf32> to vector<32x128xf32>
    %149 = arith.addf %104, %148 : vector<32x128xf32>
    %c2_i32_109 = arith.constant 2 : i32
    %150 = tpu.dynamic_rotate %147 by %c2_i32_109 dim 1 : vector<32x128xf32>, i32 -> vector<32x128xf32>
    %151 = arith.truncf %150 : vector<32x128xf32> to vector<32x128xbf16>
    %c0_110 = arith.constant 0 : index
    %c0_111 = arith.constant 0 : index
    %152 = vector.load %arg14[%c0_110, %c0_111] : memref<160x128xbf16, #tpu.memory_space<vmem>>, vector<32x128xbf16>
    tpu.vector_store %arg14[%c0_110, %c0_111], %151 {strides = array<i32>} : memref<160x128xbf16, #tpu.memory_space<vmem>>, vector<32x128xbf16>,
    %c1_i32_112 = arith.constant 1 : i32
    %153 = tpu.dynamic_rotate %147 by %c1_i32_112 dim 1 : vector<32x128xf32>, i32 -> vector<32x128xf32>
    %154 = arith.truncf %153 : vector<32x128xf32> to vector<32x128xbf16>
    %c32_113 = arith.constant 32 : index
    %c0_114 = arith.constant 0 : index
    %155 = vector.load %arg14[%c32_113, %c0_114] : memref<160x128xbf16, #tpu.memory_space<vmem>>, vector<32x128xbf16>
    tpu.vector_store %arg14[%c32_113, %c0_114], %154 {strides = array<i32>} : memref<160x128xbf16, #tpu.memory_space<vmem>>, vector<32x128xbf16>,
    %156 = arith.truncf %147 : vector<32x128xf32> to vector<32x128xbf16>
    %c64_115 = arith.constant 64 : index
    %c0_116 = arith.constant 0 : index
    %157 = vector.load %arg14[%c64_115, %c0_116] : memref<160x128xbf16, #tpu.memory_space<vmem>>, vector<32x128xbf16>
    tpu.vector_store %arg14[%c64_115, %c0_116], %156 {strides = array<i32>} : memref<160x128xbf16, #tpu.memory_space<vmem>>, vector<32x128xbf16>,
    %c127_i32_117 = arith.constant 127 : i32
    %158 = tpu.dynamic_rotate %147 by %c127_i32_117 dim 1 : vector<32x128xf32>, i32 -> vector<32x128xf32>
    %159 = arith.truncf %158 : vector<32x128xf32> to vector<32x128xbf16>
    %c96_118 = arith.constant 96 : index
    %c0_119 = arith.constant 0 : index
    %160 = vector.load %arg14[%c96_118, %c0_119] : memref<160x128xbf16, #tpu.memory_space<vmem>>, vector<32x128xbf16>
    tpu.vector_store %arg14[%c96_118, %c0_119], %159 {strides = array<i32>} : memref<160x128xbf16, #tpu.memory_space<vmem>>, vector<32x128xbf16>,
    %c126_i32_120 = arith.constant 126 : i32
    %161 = tpu.dynamic_rotate %147 by %c126_i32_120 dim 1 : vector<32x128xf32>, i32 -> vector<32x128xf32>
    %162 = arith.truncf %161 : vector<32x128xf32> to vector<32x128xbf16>
    %c128_121 = arith.constant 128 : index
    %c0_122 = arith.constant 0 : index
    %163 = vector.load %arg14[%c128_121, %c0_122] : memref<160x128xbf16, #tpu.memory_space<vmem>>, vector<32x128xbf16>
    tpu.vector_store %arg14[%c128_121, %c0_122], %162 {strides = array<i32>} : memref<160x128xbf16, #tpu.memory_space<vmem>>, vector<32x128xbf16>,
    %c0_123 = arith.constant 0 : index
    %c3 = arith.constant 3 : index
    %c0_124 = arith.constant 0 : index
    %c0_125 = arith.constant 0 : index
    %164 = vector.load %arg5[%c0_123, %c3, %c0_124, %c0_125] : memref<4x4x64x160xbf16, #tpu.memory_space<vmem>>, vector<1x1x64x160xbf16>
    %165 = vector.shape_cast %164 : vector<1x1x64x160xbf16> to vector<64x160xbf16>
    %c0_126 = arith.constant 0 : index
    %c0_127 = arith.constant 0 : index
    %166 = vector.load %arg14[%c0_126, %c0_127] : memref<160x128xbf16, #tpu.memory_space<vmem>>, vector<160x128xbf16>
    %cst_128 = arith.constant dense<0.000000e+00> : vector<64x128xf32>
    %167 = tpu.matmul %165, %166, %cst_128 {dimension_numbers = #tpu.dot_dimension_numbers<[1], [0], [0], [1], [0, 0, 1, 1], [], []>} : vector<64x160xbf16>, vector<160x128xbf16>, vector<64x128xf32> -> vector<64x128xf32>
    %c0_129 = arith.constant 0 : index
    %c3_130 = arith.constant 3 : index
    %c0_131 = arith.constant 0 : index
    %c0_132 = arith.constant 0 : index
    %168 = vector.load %arg6[%c0_129, %c3_130, %c0_131, %c0_132] : memref<4x4x64x1xf32, #tpu.memory_space<vmem>>, vector<1x1x64x1xf32>
    %169 = vector.shape_cast %168 : vector<1x1x64x1xf32> to vector<64x1xf32>
    %170 = vector.broadcast %169 : vector<64x1xf32> to vector<64x128xf32>
    %171 = arith.addf %167, %170 : vector<64x128xf32>
    %172 = vector.extract_strided_slice %171 {offsets = [0, 0], sizes = [32, 128], strides = [1, 1]} : vector<64x128xf32> to vector<32x128xf32>
    %173 = math.tanh %172 : vector<32x128xf32>
    %174 = vector.extract_strided_slice %171 {offsets = [32, 0], sizes = [32, 128], strides = [1, 1]} : vector<64x128xf32> to vector<32x128xf32>
    %175 = arith.negf %174 : vector<32x128xf32>
    %176 = math.exp %175 : vector<32x128xf32>
    %cst_133 = arith.constant 1.000000e+00 : f32
    %177 = vector.broadcast %cst_133 : f32 to vector<32x128xf32>
    %178 = arith.addf %177, %176 : vector<32x128xf32>
    %179 = arith.divf %177, %178 : vector<32x128xf32>
    %180 = arith.mulf %173, %179 : vector<32x128xf32>
    %c0_134 = arith.constant 0 : index
    %c0_135 = arith.constant 0 : index
    %c0_136 = arith.constant 0 : index
    %181 = vector.load %arg9[%c0_134, %c0_135, %c0_136] : memref<4x32x32xbf16, #tpu.memory_space<vmem>>, vector<1x32x32xbf16>
    %182 = vector.shape_cast %181 : vector<1x32x32xbf16> to vector<32x32xbf16>
    %183 = arith.truncf %180 : vector<32x128xf32> to vector<32x128xbf16>
    %cst_137 = arith.constant dense<0.000000e+00> : vector<32x128xf32>
    %184 = tpu.matmul %182, %183, %cst_137 {dimension_numbers = #tpu.dot_dimension_numbers<[1], [0], [0], [1], [0, 0, 1, 1], [], []>} : vector<32x32xbf16>, vector<32x128xbf16>, vector<32x128xf32> -> vector<32x128xf32>
    %c0_138 = arith.constant 0 : index
    %c0_139 = arith.constant 0 : index
    %c0_140 = arith.constant 0 : index
    %185 = vector.load %arg10[%c0_138, %c0_139, %c0_140] : memref<4x32x1xf32, #tpu.memory_space<vmem>>, vector<1x32x1xf32>
    %186 = vector.shape_cast %185 : vector<1x32x1xf32> to vector<32x1xf32>
    %187 = vector.broadcast %186 : vector<32x1xf32> to vector<32x128xf32>
    %188 = arith.addf %184, %187 : vector<32x128xf32>
    %189 = arith.addf %149, %188 : vector<32x128xf32>
    %c0_141 = arith.constant 0 : index
    %c0_142 = arith.constant 0 : index
    %c0_143 = arith.constant 0 : index
    %190 = vector.load %arg11[%c0_141, %c0_142, %c0_143] : memref<4x2x32xbf16, #tpu.memory_space<vmem>>, vector<1x2x32xbf16>
    %191 = vector.shape_cast %190 : vector<1x2x32xbf16> to vector<2x32xbf16>
    %192 = vector.broadcast %1 : vector<1x128xf32> to vector<32x128xf32>
    %193 = arith.mulf %189, %192 : vector<32x128xf32>
    %194 = arith.truncf %193 : vector<32x128xf32> to vector<32x128xbf16>
    %cst_144 = arith.constant dense<0.000000e+00> : vector<2x128xf32>
    %195 = tpu.matmul %191, %194, %cst_144 {dimension_numbers = #tpu.dot_dimension_numbers<[1], [0], [0], [1], [0, 0, 1, 1], [], []>} : vector<2x32xbf16>, vector<32x128xbf16>, vector<2x128xf32> -> vector<2x128xf32>
    %c0_145 = arith.constant 0 : index
    %c0_146 = arith.constant 0 : index
    %c0_147 = arith.constant 0 : index
    %196 = vector.load %arg12[%c0_145, %c0_146, %c0_147] : memref<4x2x1xf32, #tpu.memory_space<vmem>>, vector<1x2x1xf32>
    %197 = vector.shape_cast %196 : vector<1x2x1xf32> to vector<2x1xf32>
    %198 = vector.broadcast %197 : vector<2x1xf32> to vector<2x128xf32>
    %199 = arith.addf %195, %198 : vector<2x128xf32>
    %200 = vector.broadcast %1 : vector<1x128xf32> to vector<2x128xf32>
    %201 = arith.mulf %199, %200 : vector<2x128xf32>
    %202 = vector.broadcast %1 : vector<1x128xf32> to vector<2x128xf32>
    %203 = arith.mulf %5, %202 : vector<2x128xf32>
    %204 = arith.addf %201, %203 : vector<2x128xf32>
    %c1_148 = arith.constant 1 : index
    %c0_149 = arith.constant 0 : index
    %c0_150 = arith.constant 0 : index
    %205 = vector.load %arg3[%c1_148, %c0_149, %c0_150] : memref<4x32x2xbf16, #tpu.memory_space<vmem>>, vector<1x32x2xbf16>
    %206 = vector.shape_cast %205 : vector<1x32x2xbf16> to vector<32x2xbf16>
    %207 = arith.truncf %204 : vector<2x128xf32> to vector<2x128xbf16>
    %cst_151 = arith.constant dense<0.000000e+00> : vector<32x128xf32>
    %208 = tpu.matmul %206, %207, %cst_151 {dimension_numbers = #tpu.dot_dimension_numbers<[1], [0], [0], [1], [0, 0, 1, 1], [], []>} : vector<32x2xbf16>, vector<2x128xbf16>, vector<32x128xf32> -> vector<32x128xf32>
    %c1_152 = arith.constant 1 : index
    %c0_153 = arith.constant 0 : index
    %c0_154 = arith.constant 0 : index
    %209 = vector.load %arg4[%c1_152, %c0_153, %c0_154] : memref<4x32x1xf32, #tpu.memory_space<vmem>>, vector<1x32x1xf32>
    %210 = vector.shape_cast %209 : vector<1x32x1xf32> to vector<32x1xf32>
    %211 = vector.broadcast %210 : vector<32x1xf32> to vector<32x128xf32>
    %212 = arith.addf %208, %211 : vector<32x128xf32>
    %213 = vector.broadcast %1 : vector<1x128xf32> to vector<32x128xf32>
    %214 = arith.mulf %212, %213 : vector<32x128xf32>
    %c2_i32_155 = arith.constant 2 : i32
    %215 = tpu.dynamic_rotate %214 by %c2_i32_155 dim 1 : vector<32x128xf32>, i32 -> vector<32x128xf32>
    %216 = arith.truncf %215 : vector<32x128xf32> to vector<32x128xbf16>
    %c0_156 = arith.constant 0 : index
    %c0_157 = arith.constant 0 : index
    %217 = vector.load %arg14[%c0_156, %c0_157] : memref<160x128xbf16, #tpu.memory_space<vmem>>, vector<32x128xbf16>
    tpu.vector_store %arg14[%c0_156, %c0_157], %216 {strides = array<i32>} : memref<160x128xbf16, #tpu.memory_space<vmem>>, vector<32x128xbf16>,
    %c1_i32_158 = arith.constant 1 : i32
    %218 = tpu.dynamic_rotate %214 by %c1_i32_158 dim 1 : vector<32x128xf32>, i32 -> vector<32x128xf32>
    %219 = arith.truncf %218 : vector<32x128xf32> to vector<32x128xbf16>
    %c32_159 = arith.constant 32 : index
    %c0_160 = arith.constant 0 : index
    %220 = vector.load %arg14[%c32_159, %c0_160] : memref<160x128xbf16, #tpu.memory_space<vmem>>, vector<32x128xbf16>
    tpu.vector_store %arg14[%c32_159, %c0_160], %219 {strides = array<i32>} : memref<160x128xbf16, #tpu.memory_space<vmem>>, vector<32x128xbf16>,
    %221 = arith.truncf %214 : vector<32x128xf32> to vector<32x128xbf16>
    %c64_161 = arith.constant 64 : index
    %c0_162 = arith.constant 0 : index
    %222 = vector.load %arg14[%c64_161, %c0_162] : memref<160x128xbf16, #tpu.memory_space<vmem>>, vector<32x128xbf16>
    tpu.vector_store %arg14[%c64_161, %c0_162], %221 {strides = array<i32>} : memref<160x128xbf16, #tpu.memory_space<vmem>>, vector<32x128xbf16>,
    %c127_i32_163 = arith.constant 127 : i32
    %223 = tpu.dynamic_rotate %214 by %c127_i32_163 dim 1 : vector<32x128xf32>, i32 -> vector<32x128xf32>
    %224 = arith.truncf %223 : vector<32x128xf32> to vector<32x128xbf16>
    %c96_164 = arith.constant 96 : index
    %c0_165 = arith.constant 0 : index
    %225 = vector.load %arg14[%c96_164, %c0_165] : memref<160x128xbf16, #tpu.memory_space<vmem>>, vector<32x128xbf16>
    tpu.vector_store %arg14[%c96_164, %c0_165], %224 {strides = array<i32>} : memref<160x128xbf16, #tpu.memory_space<vmem>>, vector<32x128xbf16>,
    %c126_i32_166 = arith.constant 126 : i32
    %226 = tpu.dynamic_rotate %214 by %c126_i32_166 dim 1 : vector<32x128xf32>, i32 -> vector<32x128xf32>
    %227 = arith.truncf %226 : vector<32x128xf32> to vector<32x128xbf16>
    %c128_167 = arith.constant 128 : index
    %c0_168 = arith.constant 0 : index
    %228 = vector.load %arg14[%c128_167, %c0_168] : memref<160x128xbf16, #tpu.memory_space<vmem>>, vector<32x128xbf16>
    tpu.vector_store %arg14[%c128_167, %c0_168], %227 {strides = array<i32>} : memref<160x128xbf16, #tpu.memory_space<vmem>>, vector<32x128xbf16>,
    %c1_169 = arith.constant 1 : index
    %c0_170 = arith.constant 0 : index
    %c0_171 = arith.constant 0 : index
    %c0_172 = arith.constant 0 : index
    %229 = vector.load %arg5[%c1_169, %c0_170, %c0_171, %c0_172] : memref<4x4x64x160xbf16, #tpu.memory_space<vmem>>, vector<1x1x64x160xbf16>
    %230 = vector.shape_cast %229 : vector<1x1x64x160xbf16> to vector<64x160xbf16>
    %c0_173 = arith.constant 0 : index
    %c0_174 = arith.constant 0 : index
    %231 = vector.load %arg14[%c0_173, %c0_174] : memref<160x128xbf16, #tpu.memory_space<vmem>>, vector<160x128xbf16>
    %cst_175 = arith.constant dense<0.000000e+00> : vector<64x128xf32>
    %232 = tpu.matmul %230, %231, %cst_175 {dimension_numbers = #tpu.dot_dimension_numbers<[1], [0], [0], [1], [0, 0, 1, 1], [], []>} : vector<64x160xbf16>, vector<160x128xbf16>, vector<64x128xf32> -> vector<64x128xf32>
    %c1_176 = arith.constant 1 : index
    %c0_177 = arith.constant 0 : index
    %c0_178 = arith.constant 0 : index
    %c0_179 = arith.constant 0 : index
    %233 = vector.load %arg6[%c1_176, %c0_177, %c0_178, %c0_179] : memref<4x4x64x1xf32, #tpu.memory_space<vmem>>, vector<1x1x64x1xf32>
    %234 = vector.shape_cast %233 : vector<1x1x64x1xf32> to vector<64x1xf32>
    %235 = vector.broadcast %234 : vector<64x1xf32> to vector<64x128xf32>
    %236 = arith.addf %232, %235 : vector<64x128xf32>
    %237 = vector.extract_strided_slice %236 {offsets = [0, 0], sizes = [32, 128], strides = [1, 1]} : vector<64x128xf32> to vector<32x128xf32>
    %238 = math.tanh %237 : vector<32x128xf32>
    %239 = vector.extract_strided_slice %236 {offsets = [32, 0], sizes = [32, 128], strides = [1, 1]} : vector<64x128xf32> to vector<32x128xf32>
    %240 = arith.negf %239 : vector<32x128xf32>
    %241 = math.exp %240 : vector<32x128xf32>
    %cst_180 = arith.constant 1.000000e+00 : f32
    %242 = vector.broadcast %cst_180 : f32 to vector<32x128xf32>
    %243 = arith.addf %242, %241 : vector<32x128xf32>
    %244 = arith.divf %242, %243 : vector<32x128xf32>
    %245 = arith.mulf %238, %244 : vector<32x128xf32>
    %c1_181 = arith.constant 1 : index
    %c0_182 = arith.constant 0 : index
    %c0_183 = arith.constant 0 : index
    %c0_184 = arith.constant 0 : index
    %246 = vector.load %arg7[%c1_181, %c0_182, %c0_183, %c0_184] : memref<4x3x64x32xbf16, #tpu.memory_space<vmem>>, vector<1x1x64x32xbf16>
    %247 = vector.shape_cast %246 : vector<1x1x64x32xbf16> to vector<64x32xbf16>
    %248 = arith.truncf %245 : vector<32x128xf32> to vector<32x128xbf16>
    %cst_185 = arith.constant dense<0.000000e+00> : vector<64x128xf32>
    %249 = tpu.matmul %247, %248, %cst_185 {dimension_numbers = #tpu.dot_dimension_numbers<[1], [0], [0], [1], [0, 0, 1, 1], [], []>} : vector<64x32xbf16>, vector<32x128xbf16>, vector<64x128xf32> -> vector<64x128xf32>
    %c1_186 = arith.constant 1 : index
    %c0_187 = arith.constant 0 : index
    %c0_188 = arith.constant 0 : index
    %c0_189 = arith.constant 0 : index
    %250 = vector.load %arg8[%c1_186, %c0_187, %c0_188, %c0_189] : memref<4x3x64x1xf32, #tpu.memory_space<vmem>>, vector<1x1x64x1xf32>
    %251 = vector.shape_cast %250 : vector<1x1x64x1xf32> to vector<64x1xf32>
    %252 = vector.broadcast %251 : vector<64x1xf32> to vector<64x128xf32>
    %253 = arith.addf %249, %252 : vector<64x128xf32>
    %254 = vector.extract_strided_slice %253 {offsets = [0, 0], sizes = [32, 128], strides = [1, 1]} : vector<64x128xf32> to vector<32x128xf32>
    %255 = arith.addf %214, %254 : vector<32x128xf32>
    %256 = vector.broadcast %1 : vector<1x128xf32> to vector<32x128xf32>
    %257 = arith.mulf %255, %256 : vector<32x128xf32>
    %258 = vector.extract_strided_slice %253 {offsets = [32, 0], sizes = [32, 128], strides = [1, 1]} : vector<64x128xf32> to vector<32x128xf32>
    %c2_i32_190 = arith.constant 2 : i32
    %259 = tpu.dynamic_rotate %257 by %c2_i32_190 dim 1 : vector<32x128xf32>, i32 -> vector<32x128xf32>
    %260 = arith.truncf %259 : vector<32x128xf32> to vector<32x128xbf16>
    %c0_191 = arith.constant 0 : index
    %c0_192 = arith.constant 0 : index
    %261 = vector.load %arg14[%c0_191, %c0_192] : memref<160x128xbf16, #tpu.memory_space<vmem>>, vector<32x128xbf16>
    tpu.vector_store %arg14[%c0_191, %c0_192], %260 {strides = array<i32>} : memref<160x128xbf16, #tpu.memory_space<vmem>>, vector<32x128xbf16>,
    %c1_i32_193 = arith.constant 1 : i32
    %262 = tpu.dynamic_rotate %257 by %c1_i32_193 dim 1 : vector<32x128xf32>, i32 -> vector<32x128xf32>
    %263 = arith.truncf %262 : vector<32x128xf32> to vector<32x128xbf16>
    %c32_194 = arith.constant 32 : index
    %c0_195 = arith.constant 0 : index
    %264 = vector.load %arg14[%c32_194, %c0_195] : memref<160x128xbf16, #tpu.memory_space<vmem>>, vector<32x128xbf16>
    tpu.vector_store %arg14[%c32_194, %c0_195], %263 {strides = array<i32>} : memref<160x128xbf16, #tpu.memory_space<vmem>>, vector<32x128xbf16>,
    %265 = arith.truncf %257 : vector<32x128xf32> to vector<32x128xbf16>
    %c64_196 = arith.constant 64 : index
    %c0_197 = arith.constant 0 : index
    %266 = vector.load %arg14[%c64_196, %c0_197] : memref<160x128xbf16, #tpu.memory_space<vmem>>, vector<32x128xbf16>
    tpu.vector_store %arg14[%c64_196, %c0_197], %265 {strides = array<i32>} : memref<160x128xbf16, #tpu.memory_space<vmem>>, vector<32x128xbf16>,
    %c127_i32_198 = arith.constant 127 : i32
    %267 = tpu.dynamic_rotate %257 by %c127_i32_198 dim 1 : vector<32x128xf32>, i32 -> vector<32x128xf32>
    %268 = arith.truncf %267 : vector<32x128xf32> to vector<32x128xbf16>
    %c96_199 = arith.constant 96 : index
    %c0_200 = arith.constant 0 : index
    %269 = vector.load %arg14[%c96_199, %c0_200] : memref<160x128xbf16, #tpu.memory_space<vmem>>, vector<32x128xbf16>
    tpu.vector_store %arg14[%c96_199, %c0_200], %268 {strides = array<i32>} : memref<160x128xbf16, #tpu.memory_space<vmem>>, vector<32x128xbf16>,
    %c126_i32_201 = arith.constant 126 : i32
    %270 = tpu.dynamic_rotate %257 by %c126_i32_201 dim 1 : vector<32x128xf32>, i32 -> vector<32x128xf32>
    %271 = arith.truncf %270 : vector<32x128xf32> to vector<32x128xbf16>
    %c128_202 = arith.constant 128 : index
    %c0_203 = arith.constant 0 : index
    %272 = vector.load %arg14[%c128_202, %c0_203] : memref<160x128xbf16, #tpu.memory_space<vmem>>, vector<32x128xbf16>
    tpu.vector_store %arg14[%c128_202, %c0_203], %271 {strides = array<i32>} : memref<160x128xbf16, #tpu.memory_space<vmem>>, vector<32x128xbf16>,
    %c1_204 = arith.constant 1 : index
    %c1_205 = arith.constant 1 : index
    %c0_206 = arith.constant 0 : index
    %c0_207 = arith.constant 0 : index
    %273 = vector.load %arg5[%c1_204, %c1_205, %c0_206, %c0_207] : memref<4x4x64x160xbf16, #tpu.memory_space<vmem>>, vector<1x1x64x160xbf16>
    %274 = vector.shape_cast %273 : vector<1x1x64x160xbf16> to vector<64x160xbf16>
    %c0_208 = arith.constant 0 : index
    %c0_209 = arith.constant 0 : index
    %275 = vector.load %arg14[%c0_208, %c0_209] : memref<160x128xbf16, #tpu.memory_space<vmem>>, vector<160x128xbf16>
    %cst_210 = arith.constant dense<0.000000e+00> : vector<64x128xf32>
    %276 = tpu.matmul %274, %275, %cst_210 {dimension_numbers = #tpu.dot_dimension_numbers<[1], [0], [0], [1], [0, 0, 1, 1], [], []>} : vector<64x160xbf16>, vector<160x128xbf16>, vector<64x128xf32> -> vector<64x128xf32>
    %c1_211 = arith.constant 1 : index
    %c1_212 = arith.constant 1 : index
    %c0_213 = arith.constant 0 : index
    %c0_214 = arith.constant 0 : index
    %277 = vector.load %arg6[%c1_211, %c1_212, %c0_213, %c0_214] : memref<4x4x64x1xf32, #tpu.memory_space<vmem>>, vector<1x1x64x1xf32>
    %278 = vector.shape_cast %277 : vector<1x1x64x1xf32> to vector<64x1xf32>
    %279 = vector.broadcast %278 : vector<64x1xf32> to vector<64x128xf32>
    %280 = arith.addf %276, %279 : vector<64x128xf32>
    %281 = vector.extract_strided_slice %280 {offsets = [0, 0], sizes = [32, 128], strides = [1, 1]} : vector<64x128xf32> to vector<32x128xf32>
    %282 = math.tanh %281 : vector<32x128xf32>
    %283 = vector.extract_strided_slice %280 {offsets = [32, 0], sizes = [32, 128], strides = [1, 1]} : vector<64x128xf32> to vector<32x128xf32>
    %284 = arith.negf %283 : vector<32x128xf32>
    %285 = math.exp %284 : vector<32x128xf32>
    %cst_215 = arith.constant 1.000000e+00 : f32
    %286 = vector.broadcast %cst_215 : f32 to vector<32x128xf32>
    %287 = arith.addf %286, %285 : vector<32x128xf32>
    %288 = arith.divf %286, %287 : vector<32x128xf32>
    %289 = arith.mulf %282, %288 : vector<32x128xf32>
    %c1_216 = arith.constant 1 : index
    %c1_217 = arith.constant 1 : index
    %c0_218 = arith.constant 0 : index
    %c0_219 = arith.constant 0 : index
    %290 = vector.load %arg7[%c1_216, %c1_217, %c0_218, %c0_219] : memref<4x3x64x32xbf16, #tpu.memory_space<vmem>>, vector<1x1x64x32xbf16>
    %291 = vector.shape_cast %290 : vector<1x1x64x32xbf16> to vector<64x32xbf16>
    %292 = arith.truncf %289 : vector<32x128xf32> to vector<32x128xbf16>
    %cst_220 = arith.constant dense<0.000000e+00> : vector<64x128xf32>
    %293 = tpu.matmul %291, %292, %cst_220 {dimension_numbers = #tpu.dot_dimension_numbers<[1], [0], [0], [1], [0, 0, 1, 1], [], []>} : vector<64x32xbf16>, vector<32x128xbf16>, vector<64x128xf32> -> vector<64x128xf32>
    %c1_221 = arith.constant 1 : index
    %c1_222 = arith.constant 1 : index
    %c0_223 = arith.constant 0 : index
    %c0_224 = arith.constant 0 : index
    %294 = vector.load %arg8[%c1_221, %c1_222, %c0_223, %c0_224] : memref<4x3x64x1xf32, #tpu.memory_space<vmem>>, vector<1x1x64x1xf32>
    %295 = vector.shape_cast %294 : vector<1x1x64x1xf32> to vector<64x1xf32>
    %296 = vector.broadcast %295 : vector<64x1xf32> to vector<64x128xf32>
    %297 = arith.addf %293, %296 : vector<64x128xf32>
    %298 = vector.extract_strided_slice %297 {offsets = [0, 0], sizes = [32, 128], strides = [1, 1]} : vector<64x128xf32> to vector<32x128xf32>
    %299 = arith.addf %257, %298 : vector<32x128xf32>
    %300 = vector.broadcast %1 : vector<1x128xf32> to vector<32x128xf32>
    %301 = arith.mulf %299, %300 : vector<32x128xf32>
    %302 = vector.extract_strided_slice %297 {offsets = [32, 0], sizes = [32, 128], strides = [1, 1]} : vector<64x128xf32> to vector<32x128xf32>
    %303 = arith.addf %258, %302 : vector<32x128xf32>
    %c2_i32_225 = arith.constant 2 : i32
    %304 = tpu.dynamic_rotate %301 by %c2_i32_225 dim 1 : vector<32x128xf32>, i32 -> vector<32x128xf32>
    %305 = arith.truncf %304 : vector<32x128xf32> to vector<32x128xbf16>
    %c0_226 = arith.constant 0 : index
    %c0_227 = arith.constant 0 : index
    %306 = vector.load %arg14[%c0_226, %c0_227] : memref<160x128xbf16, #tpu.memory_space<vmem>>, vector<32x128xbf16>
    tpu.vector_store %arg14[%c0_226, %c0_227], %305 {strides = array<i32>} : memref<160x128xbf16, #tpu.memory_space<vmem>>, vector<32x128xbf16>,
    %c1_i32_228 = arith.constant 1 : i32
    %307 = tpu.dynamic_rotate %301 by %c1_i32_228 dim 1 : vector<32x128xf32>, i32 -> vector<32x128xf32>
    %308 = arith.truncf %307 : vector<32x128xf32> to vector<32x128xbf16>
    %c32_229 = arith.constant 32 : index
    %c0_230 = arith.constant 0 : index
    %309 = vector.load %arg14[%c32_229, %c0_230] : memref<160x128xbf16, #tpu.memory_space<vmem>>, vector<32x128xbf16>
    tpu.vector_store %arg14[%c32_229, %c0_230], %308 {strides = array<i32>} : memref<160x128xbf16, #tpu.memory_space<vmem>>, vector<32x128xbf16>,
    %310 = arith.truncf %301 : vector<32x128xf32> to vector<32x128xbf16>
    %c64_231 = arith.constant 64 : index
    %c0_232 = arith.constant 0 : index
    %311 = vector.load %arg14[%c64_231, %c0_232] : memref<160x128xbf16, #tpu.memory_space<vmem>>, vector<32x128xbf16>
    tpu.vector_store %arg14[%c64_231, %c0_232], %310 {strides = array<i32>} : memref<160x128xbf16, #tpu.memory_space<vmem>>, vector<32x128xbf16>,
    %c127_i32_233 = arith.constant 127 : i32
    %312 = tpu.dynamic_rotate %301 by %c127_i32_233 dim 1 : vector<32x128xf32>, i32 -> vector<32x128xf32>
    %313 = arith.truncf %312 : vector<32x128xf32> to vector<32x128xbf16>
    %c96_234 = arith.constant 96 : index
    %c0_235 = arith.constant 0 : index
    %314 = vector.load %arg14[%c96_234, %c0_235] : memref<160x128xbf16, #tpu.memory_space<vmem>>, vector<32x128xbf16>
    tpu.vector_store %arg14[%c96_234, %c0_235], %313 {strides = array<i32>} : memref<160x128xbf16, #tpu.memory_space<vmem>>, vector<32x128xbf16>,
    %c126_i32_236 = arith.constant 126 : i32
    %315 = tpu.dynamic_rotate %301 by %c126_i32_236 dim 1 : vector<32x128xf32>, i32 -> vector<32x128xf32>
    %316 = arith.truncf %315 : vector<32x128xf32> to vector<32x128xbf16>
    %c128_237 = arith.constant 128 : index
    %c0_238 = arith.constant 0 : index
    %317 = vector.load %arg14[%c128_237, %c0_238] : memref<160x128xbf16, #tpu.memory_space<vmem>>, vector<32x128xbf16>
    tpu.vector_store %arg14[%c128_237, %c0_238], %316 {strides = array<i32>} : memref<160x128xbf16, #tpu.memory_space<vmem>>, vector<32x128xbf16>,
    %c1_239 = arith.constant 1 : index
    %c2_240 = arith.constant 2 : index
    %c0_241 = arith.constant 0 : index
    %c0_242 = arith.constant 0 : index
    %318 = vector.load %arg5[%c1_239, %c2_240, %c0_241, %c0_242] : memref<4x4x64x160xbf16, #tpu.memory_space<vmem>>, vector<1x1x64x160xbf16>
    %319 = vector.shape_cast %318 : vector<1x1x64x160xbf16> to vector<64x160xbf16>
    %c0_243 = arith.constant 0 : index
    %c0_244 = arith.constant 0 : index
    %320 = vector.load %arg14[%c0_243, %c0_244] : memref<160x128xbf16, #tpu.memory_space<vmem>>, vector<160x128xbf16>
    %cst_245 = arith.constant dense<0.000000e+00> : vector<64x128xf32>
    %321 = tpu.matmul %319, %320, %cst_245 {dimension_numbers = #tpu.dot_dimension_numbers<[1], [0], [0], [1], [0, 0, 1, 1], [], []>} : vector<64x160xbf16>, vector<160x128xbf16>, vector<64x128xf32> -> vector<64x128xf32>
    %c1_246 = arith.constant 1 : index
    %c2_247 = arith.constant 2 : index
    %c0_248 = arith.constant 0 : index
    %c0_249 = arith.constant 0 : index
    %322 = vector.load %arg6[%c1_246, %c2_247, %c0_248, %c0_249] : memref<4x4x64x1xf32, #tpu.memory_space<vmem>>, vector<1x1x64x1xf32>
    %323 = vector.shape_cast %322 : vector<1x1x64x1xf32> to vector<64x1xf32>
    %324 = vector.broadcast %323 : vector<64x1xf32> to vector<64x128xf32>
    %325 = arith.addf %321, %324 : vector<64x128xf32>
    %326 = vector.extract_strided_slice %325 {offsets = [0, 0], sizes = [32, 128], strides = [1, 1]} : vector<64x128xf32> to vector<32x128xf32>
    %327 = math.tanh %326 : vector<32x128xf32>
    %328 = vector.extract_strided_slice %325 {offsets = [32, 0], sizes = [32, 128], strides = [1, 1]} : vector<64x128xf32> to vector<32x128xf32>
    %329 = arith.negf %328 : vector<32x128xf32>
    %330 = math.exp %329 : vector<32x128xf32>
    %cst_250 = arith.constant 1.000000e+00 : f32
    %331 = vector.broadcast %cst_250 : f32 to vector<32x128xf32>
    %332 = arith.addf %331, %330 : vector<32x128xf32>
    %333 = arith.divf %331, %332 : vector<32x128xf32>
    %334 = arith.mulf %327, %333 : vector<32x128xf32>
    %c1_251 = arith.constant 1 : index
    %c2_252 = arith.constant 2 : index
    %c0_253 = arith.constant 0 : index
    %c0_254 = arith.constant 0 : index
    %335 = vector.load %arg7[%c1_251, %c2_252, %c0_253, %c0_254] : memref<4x3x64x32xbf16, #tpu.memory_space<vmem>>, vector<1x1x64x32xbf16>
    %336 = vector.shape_cast %335 : vector<1x1x64x32xbf16> to vector<64x32xbf16>
    %337 = arith.truncf %334 : vector<32x128xf32> to vector<32x128xbf16>
    %cst_255 = arith.constant dense<0.000000e+00> : vector<64x128xf32>
    %338 = tpu.matmul %336, %337, %cst_255 {dimension_numbers = #tpu.dot_dimension_numbers<[1], [0], [0], [1], [0, 0, 1, 1], [], []>} : vector<64x32xbf16>, vector<32x128xbf16>, vector<64x128xf32> -> vector<64x128xf32>
    %c1_256 = arith.constant 1 : index
    %c2_257 = arith.constant 2 : index
    %c0_258 = arith.constant 0 : index
    %c0_259 = arith.constant 0 : index
    %339 = vector.load %arg8[%c1_256, %c2_257, %c0_258, %c0_259] : memref<4x3x64x1xf32, #tpu.memory_space<vmem>>, vector<1x1x64x1xf32>
    %340 = vector.shape_cast %339 : vector<1x1x64x1xf32> to vector<64x1xf32>
    %341 = vector.broadcast %340 : vector<64x1xf32> to vector<64x128xf32>
    %342 = arith.addf %338, %341 : vector<64x128xf32>
    %343 = vector.extract_strided_slice %342 {offsets = [0, 0], sizes = [32, 128], strides = [1, 1]} : vector<64x128xf32> to vector<32x128xf32>
    %344 = arith.addf %301, %343 : vector<32x128xf32>
    %345 = vector.broadcast %1 : vector<1x128xf32> to vector<32x128xf32>
    %346 = arith.mulf %344, %345 : vector<32x128xf32>
    %347 = vector.extract_strided_slice %342 {offsets = [32, 0], sizes = [32, 128], strides = [1, 1]} : vector<64x128xf32> to vector<32x128xf32>
    %348 = arith.addf %303, %347 : vector<32x128xf32>
    %c2_i32_260 = arith.constant 2 : i32
    %349 = tpu.dynamic_rotate %346 by %c2_i32_260 dim 1 : vector<32x128xf32>, i32 -> vector<32x128xf32>
    %350 = arith.truncf %349 : vector<32x128xf32> to vector<32x128xbf16>
    %c0_261 = arith.constant 0 : index
    %c0_262 = arith.constant 0 : index
    %351 = vector.load %arg14[%c0_261, %c0_262] : memref<160x128xbf16, #tpu.memory_space<vmem>>, vector<32x128xbf16>
    tpu.vector_store %arg14[%c0_261, %c0_262], %350 {strides = array<i32>} : memref<160x128xbf16, #tpu.memory_space<vmem>>, vector<32x128xbf16>,
    %c1_i32_263 = arith.constant 1 : i32
    %352 = tpu.dynamic_rotate %346 by %c1_i32_263 dim 1 : vector<32x128xf32>, i32 -> vector<32x128xf32>
    %353 = arith.truncf %352 : vector<32x128xf32> to vector<32x128xbf16>
    %c32_264 = arith.constant 32 : index
    %c0_265 = arith.constant 0 : index
    %354 = vector.load %arg14[%c32_264, %c0_265] : memref<160x128xbf16, #tpu.memory_space<vmem>>, vector<32x128xbf16>
    tpu.vector_store %arg14[%c32_264, %c0_265], %353 {strides = array<i32>} : memref<160x128xbf16, #tpu.memory_space<vmem>>, vector<32x128xbf16>,
    %355 = arith.truncf %346 : vector<32x128xf32> to vector<32x128xbf16>
    %c64_266 = arith.constant 64 : index
    %c0_267 = arith.constant 0 : index
    %356 = vector.load %arg14[%c64_266, %c0_267] : memref<160x128xbf16, #tpu.memory_space<vmem>>, vector<32x128xbf16>
    tpu.vector_store %arg14[%c64_266, %c0_267], %355 {strides = array<i32>} : memref<160x128xbf16, #tpu.memory_space<vmem>>, vector<32x128xbf16>,
    %c127_i32_268 = arith.constant 127 : i32
    %357 = tpu.dynamic_rotate %346 by %c127_i32_268 dim 1 : vector<32x128xf32>, i32 -> vector<32x128xf32>
    %358 = arith.truncf %357 : vector<32x128xf32> to vector<32x128xbf16>
    %c96_269 = arith.constant 96 : index
    %c0_270 = arith.constant 0 : index
    %359 = vector.load %arg14[%c96_269, %c0_270] : memref<160x128xbf16, #tpu.memory_space<vmem>>, vector<32x128xbf16>
    tpu.vector_store %arg14[%c96_269, %c0_270], %358 {strides = array<i32>} : memref<160x128xbf16, #tpu.memory_space<vmem>>, vector<32x128xbf16>,
    %c126_i32_271 = arith.constant 126 : i32
    %360 = tpu.dynamic_rotate %346 by %c126_i32_271 dim 1 : vector<32x128xf32>, i32 -> vector<32x128xf32>
    %361 = arith.truncf %360 : vector<32x128xf32> to vector<32x128xbf16>
    %c128_272 = arith.constant 128 : index
    %c0_273 = arith.constant 0 : index
    %362 = vector.load %arg14[%c128_272, %c0_273] : memref<160x128xbf16, #tpu.memory_space<vmem>>, vector<32x128xbf16>
    tpu.vector_store %arg14[%c128_272, %c0_273], %361 {strides = array<i32>} : memref<160x128xbf16, #tpu.memory_space<vmem>>, vector<32x128xbf16>,
    %c1_274 = arith.constant 1 : index
    %c3_275 = arith.constant 3 : index
    %c0_276 = arith.constant 0 : index
    %c0_277 = arith.constant 0 : index
    %363 = vector.load %arg5[%c1_274, %c3_275, %c0_276, %c0_277] : memref<4x4x64x160xbf16, #tpu.memory_space<vmem>>, vector<1x1x64x160xbf16>
    %364 = vector.shape_cast %363 : vector<1x1x64x160xbf16> to vector<64x160xbf16>
    %c0_278 = arith.constant 0 : index
    %c0_279 = arith.constant 0 : index
    %365 = vector.load %arg14[%c0_278, %c0_279] : memref<160x128xbf16, #tpu.memory_space<vmem>>, vector<160x128xbf16>
    %cst_280 = arith.constant dense<0.000000e+00> : vector<64x128xf32>
    %366 = tpu.matmul %364, %365, %cst_280 {dimension_numbers = #tpu.dot_dimension_numbers<[1], [0], [0], [1], [0, 0, 1, 1], [], []>} : vector<64x160xbf16>, vector<160x128xbf16>, vector<64x128xf32> -> vector<64x128xf32>
    %c1_281 = arith.constant 1 : index
    %c3_282 = arith.constant 3 : index
    %c0_283 = arith.constant 0 : index
    %c0_284 = arith.constant 0 : index
    %367 = vector.load %arg6[%c1_281, %c3_282, %c0_283, %c0_284] : memref<4x4x64x1xf32, #tpu.memory_space<vmem>>, vector<1x1x64x1xf32>
    %368 = vector.shape_cast %367 : vector<1x1x64x1xf32> to vector<64x1xf32>
    %369 = vector.broadcast %368 : vector<64x1xf32> to vector<64x128xf32>
    %370 = arith.addf %366, %369 : vector<64x128xf32>
    %371 = vector.extract_strided_slice %370 {offsets = [0, 0], sizes = [32, 128], strides = [1, 1]} : vector<64x128xf32> to vector<32x128xf32>
    %372 = math.tanh %371 : vector<32x128xf32>
    %373 = vector.extract_strided_slice %370 {offsets = [32, 0], sizes = [32, 128], strides = [1, 1]} : vector<64x128xf32> to vector<32x128xf32>
    %374 = arith.negf %373 : vector<32x128xf32>
    %375 = math.exp %374 : vector<32x128xf32>
    %cst_285 = arith.constant 1.000000e+00 : f32
    %376 = vector.broadcast %cst_285 : f32 to vector<32x128xf32>
    %377 = arith.addf %376, %375 : vector<32x128xf32>
    %378 = arith.divf %376, %377 : vector<32x128xf32>
    %379 = arith.mulf %372, %378 : vector<32x128xf32>
    %c1_286 = arith.constant 1 : index
    %c0_287 = arith.constant 0 : index
    %c0_288 = arith.constant 0 : index
    %380 = vector.load %arg9[%c1_286, %c0_287, %c0_288] : memref<4x32x32xbf16, #tpu.memory_space<vmem>>, vector<1x32x32xbf16>
    %381 = vector.shape_cast %380 : vector<1x32x32xbf16> to vector<32x32xbf16>
    %382 = arith.truncf %379 : vector<32x128xf32> to vector<32x128xbf16>
    %cst_289 = arith.constant dense<0.000000e+00> : vector<32x128xf32>
    %383 = tpu.matmul %381, %382, %cst_289 {dimension_numbers = #tpu.dot_dimension_numbers<[1], [0], [0], [1], [0, 0, 1, 1], [], []>} : vector<32x32xbf16>, vector<32x128xbf16>, vector<32x128xf32> -> vector<32x128xf32>
    %c1_290 = arith.constant 1 : index
    %c0_291 = arith.constant 0 : index
    %c0_292 = arith.constant 0 : index
    %384 = vector.load %arg10[%c1_290, %c0_291, %c0_292] : memref<4x32x1xf32, #tpu.memory_space<vmem>>, vector<1x32x1xf32>
    %385 = vector.shape_cast %384 : vector<1x32x1xf32> to vector<32x1xf32>
    %386 = vector.broadcast %385 : vector<32x1xf32> to vector<32x128xf32>
    %387 = arith.addf %383, %386 : vector<32x128xf32>
    %388 = arith.addf %348, %387 : vector<32x128xf32>
    %c1_293 = arith.constant 1 : index
    %c0_294 = arith.constant 0 : index
    %c0_295 = arith.constant 0 : index
    %389 = vector.load %arg11[%c1_293, %c0_294, %c0_295] : memref<4x2x32xbf16, #tpu.memory_space<vmem>>, vector<1x2x32xbf16>
    %390 = vector.shape_cast %389 : vector<1x2x32xbf16> to vector<2x32xbf16>
    %391 = vector.broadcast %1 : vector<1x128xf32> to vector<32x128xf32>
    %392 = arith.mulf %388, %391 : vector<32x128xf32>
    %393 = arith.truncf %392 : vector<32x128xf32> to vector<32x128xbf16>
    %cst_296 = arith.constant dense<0.000000e+00> : vector<2x128xf32>
    %394 = tpu.matmul %390, %393, %cst_296 {dimension_numbers = #tpu.dot_dimension_numbers<[1], [0], [0], [1], [0, 0, 1, 1], [], []>} : vector<2x32xbf16>, vector<32x128xbf16>, vector<2x128xf32> -> vector<2x128xf32>
    %c1_297 = arith.constant 1 : index
    %c0_298 = arith.constant 0 : index
    %c0_299 = arith.constant 0 : index
    %395 = vector.load %arg12[%c1_297, %c0_298, %c0_299] : memref<4x2x1xf32, #tpu.memory_space<vmem>>, vector<1x2x1xf32>
    %396 = vector.shape_cast %395 : vector<1x2x1xf32> to vector<2x1xf32>
    %397 = vector.broadcast %396 : vector<2x1xf32> to vector<2x128xf32>
    %398 = arith.addf %394, %397 : vector<2x128xf32>
    %399 = vector.broadcast %1 : vector<1x128xf32> to vector<2x128xf32>
    %400 = arith.mulf %398, %399 : vector<2x128xf32>
    %401 = vector.broadcast %1 : vector<1x128xf32> to vector<2x128xf32>
    %402 = arith.mulf %3, %401 : vector<2x128xf32>
    %403 = arith.addf %400, %402 : vector<2x128xf32>
    %c2_300 = arith.constant 2 : index
    %c0_301 = arith.constant 0 : index
    %c0_302 = arith.constant 0 : index
    %404 = vector.load %arg3[%c2_300, %c0_301, %c0_302] : memref<4x32x2xbf16, #tpu.memory_space<vmem>>, vector<1x32x2xbf16>
    %405 = vector.shape_cast %404 : vector<1x32x2xbf16> to vector<32x2xbf16>
    %406 = arith.truncf %403 : vector<2x128xf32> to vector<2x128xbf16>
    %cst_303 = arith.constant dense<0.000000e+00> : vector<32x128xf32>
    %407 = tpu.matmul %405, %406, %cst_303 {dimension_numbers = #tpu.dot_dimension_numbers<[1], [0], [0], [1], [0, 0, 1, 1], [], []>} : vector<32x2xbf16>, vector<2x128xbf16>, vector<32x128xf32> -> vector<32x128xf32>
    %c2_304 = arith.constant 2 : index
    %c0_305 = arith.constant 0 : index
    %c0_306 = arith.constant 0 : index
    %408 = vector.load %arg4[%c2_304, %c0_305, %c0_306] : memref<4x32x1xf32, #tpu.memory_space<vmem>>, vector<1x32x1xf32>
    %409 = vector.shape_cast %408 : vector<1x32x1xf32> to vector<32x1xf32>
    %410 = vector.broadcast %409 : vector<32x1xf32> to vector<32x128xf32>
    %411 = arith.addf %407, %410 : vector<32x128xf32>
    %412 = vector.broadcast %1 : vector<1x128xf32> to vector<32x128xf32>
    %413 = arith.mulf %411, %412 : vector<32x128xf32>
    %c2_i32_307 = arith.constant 2 : i32
    %414 = tpu.dynamic_rotate %413 by %c2_i32_307 dim 1 : vector<32x128xf32>, i32 -> vector<32x128xf32>
    %415 = arith.truncf %414 : vector<32x128xf32> to vector<32x128xbf16>
    %c0_308 = arith.constant 0 : index
    %c0_309 = arith.constant 0 : index
    %416 = vector.load %arg14[%c0_308, %c0_309] : memref<160x128xbf16, #tpu.memory_space<vmem>>, vector<32x128xbf16>
    tpu.vector_store %arg14[%c0_308, %c0_309], %415 {strides = array<i32>} : memref<160x128xbf16, #tpu.memory_space<vmem>>, vector<32x128xbf16>,
    %c1_i32_310 = arith.constant 1 : i32
    %417 = tpu.dynamic_rotate %413 by %c1_i32_310 dim 1 : vector<32x128xf32>, i32 -> vector<32x128xf32>
    %418 = arith.truncf %417 : vector<32x128xf32> to vector<32x128xbf16>
    %c32_311 = arith.constant 32 : index
    %c0_312 = arith.constant 0 : index
    %419 = vector.load %arg14[%c32_311, %c0_312] : memref<160x128xbf16, #tpu.memory_space<vmem>>, vector<32x128xbf16>
    tpu.vector_store %arg14[%c32_311, %c0_312], %418 {strides = array<i32>} : memref<160x128xbf16, #tpu.memory_space<vmem>>, vector<32x128xbf16>,
    %420 = arith.truncf %413 : vector<32x128xf32> to vector<32x128xbf16>
    %c64_313 = arith.constant 64 : index
    %c0_314 = arith.constant 0 : index
    %421 = vector.load %arg14[%c64_313, %c0_314] : memref<160x128xbf16, #tpu.memory_space<vmem>>, vector<32x128xbf16>
    tpu.vector_store %arg14[%c64_313, %c0_314], %420 {strides = array<i32>} : memref<160x128xbf16, #tpu.memory_space<vmem>>, vector<32x128xbf16>,
    %c127_i32_315 = arith.constant 127 : i32
    %422 = tpu.dynamic_rotate %413 by %c127_i32_315 dim 1 : vector<32x128xf32>, i32 -> vector<32x128xf32>
    %423 = arith.truncf %422 : vector<32x128xf32> to vector<32x128xbf16>
    %c96_316 = arith.constant 96 : index
    %c0_317 = arith.constant 0 : index
    %424 = vector.load %arg14[%c96_316, %c0_317] : memref<160x128xbf16, #tpu.memory_space<vmem>>, vector<32x128xbf16>
    tpu.vector_store %arg14[%c96_316, %c0_317], %423 {strides = array<i32>} : memref<160x128xbf16, #tpu.memory_space<vmem>>, vector<32x128xbf16>,
    %c126_i32_318 = arith.constant 126 : i32
    %425 = tpu.dynamic_rotate %413 by %c126_i32_318 dim 1 : vector<32x128xf32>, i32 -> vector<32x128xf32>
    %426 = arith.truncf %425 : vector<32x128xf32> to vector<32x128xbf16>
    %c128_319 = arith.constant 128 : index
    %c0_320 = arith.constant 0 : index
    %427 = vector.load %arg14[%c128_319, %c0_320] : memref<160x128xbf16, #tpu.memory_space<vmem>>, vector<32x128xbf16>
    tpu.vector_store %arg14[%c128_319, %c0_320], %426 {strides = array<i32>} : memref<160x128xbf16, #tpu.memory_space<vmem>>, vector<32x128xbf16>,
    %c2_321 = arith.constant 2 : index
    %c0_322 = arith.constant 0 : index
    %c0_323 = arith.constant 0 : index
    %c0_324 = arith.constant 0 : index
    %428 = vector.load %arg5[%c2_321, %c0_322, %c0_323, %c0_324] : memref<4x4x64x160xbf16, #tpu.memory_space<vmem>>, vector<1x1x64x160xbf16>
    %429 = vector.shape_cast %428 : vector<1x1x64x160xbf16> to vector<64x160xbf16>
    %c0_325 = arith.constant 0 : index
    %c0_326 = arith.constant 0 : index
    %430 = vector.load %arg14[%c0_325, %c0_326] : memref<160x128xbf16, #tpu.memory_space<vmem>>, vector<160x128xbf16>
    %cst_327 = arith.constant dense<0.000000e+00> : vector<64x128xf32>
    %431 = tpu.matmul %429, %430, %cst_327 {dimension_numbers = #tpu.dot_dimension_numbers<[1], [0], [0], [1], [0, 0, 1, 1], [], []>} : vector<64x160xbf16>, vector<160x128xbf16>, vector<64x128xf32> -> vector<64x128xf32>
    %c2_328 = arith.constant 2 : index
    %c0_329 = arith.constant 0 : index
    %c0_330 = arith.constant 0 : index
    %c0_331 = arith.constant 0 : index
    %432 = vector.load %arg6[%c2_328, %c0_329, %c0_330, %c0_331] : memref<4x4x64x1xf32, #tpu.memory_space<vmem>>, vector<1x1x64x1xf32>
    %433 = vector.shape_cast %432 : vector<1x1x64x1xf32> to vector<64x1xf32>
    %434 = vector.broadcast %433 : vector<64x1xf32> to vector<64x128xf32>
    %435 = arith.addf %431, %434 : vector<64x128xf32>
    %436 = vector.extract_strided_slice %435 {offsets = [0, 0], sizes = [32, 128], strides = [1, 1]} : vector<64x128xf32> to vector<32x128xf32>
    %437 = math.tanh %436 : vector<32x128xf32>
    %438 = vector.extract_strided_slice %435 {offsets = [32, 0], sizes = [32, 128], strides = [1, 1]} : vector<64x128xf32> to vector<32x128xf32>
    %439 = arith.negf %438 : vector<32x128xf32>
    %440 = math.exp %439 : vector<32x128xf32>
    %cst_332 = arith.constant 1.000000e+00 : f32
    %441 = vector.broadcast %cst_332 : f32 to vector<32x128xf32>
    %442 = arith.addf %441, %440 : vector<32x128xf32>
    %443 = arith.divf %441, %442 : vector<32x128xf32>
    %444 = arith.mulf %437, %443 : vector<32x128xf32>
    %c2_333 = arith.constant 2 : index
    %c0_334 = arith.constant 0 : index
    %c0_335 = arith.constant 0 : index
    %c0_336 = arith.constant 0 : index
    %445 = vector.load %arg7[%c2_333, %c0_334, %c0_335, %c0_336] : memref<4x3x64x32xbf16, #tpu.memory_space<vmem>>, vector<1x1x64x32xbf16>
    %446 = vector.shape_cast %445 : vector<1x1x64x32xbf16> to vector<64x32xbf16>
    %447 = arith.truncf %444 : vector<32x128xf32> to vector<32x128xbf16>
    %cst_337 = arith.constant dense<0.000000e+00> : vector<64x128xf32>
    %448 = tpu.matmul %446, %447, %cst_337 {dimension_numbers = #tpu.dot_dimension_numbers<[1], [0], [0], [1], [0, 0, 1, 1], [], []>} : vector<64x32xbf16>, vector<32x128xbf16>, vector<64x128xf32> -> vector<64x128xf32>
    %c2_338 = arith.constant 2 : index
    %c0_339 = arith.constant 0 : index
    %c0_340 = arith.constant 0 : index
    %c0_341 = arith.constant 0 : index
    %449 = vector.load %arg8[%c2_338, %c0_339, %c0_340, %c0_341] : memref<4x3x64x1xf32, #tpu.memory_space<vmem>>, vector<1x1x64x1xf32>
    %450 = vector.shape_cast %449 : vector<1x1x64x1xf32> to vector<64x1xf32>
    %451 = vector.broadcast %450 : vector<64x1xf32> to vector<64x128xf32>
    %452 = arith.addf %448, %451 : vector<64x128xf32>
    %453 = vector.extract_strided_slice %452 {offsets = [0, 0], sizes = [32, 128], strides = [1, 1]} : vector<64x128xf32> to vector<32x128xf32>
    %454 = arith.addf %413, %453 : vector<32x128xf32>
    %455 = vector.broadcast %1 : vector<1x128xf32> to vector<32x128xf32>
    %456 = arith.mulf %454, %455 : vector<32x128xf32>
    %457 = vector.extract_strided_slice %452 {offsets = [32, 0], sizes = [32, 128], strides = [1, 1]} : vector<64x128xf32> to vector<32x128xf32>
    %c2_i32_342 = arith.constant 2 : i32
    %458 = tpu.dynamic_rotate %456 by %c2_i32_342 dim 1 : vector<32x128xf32>, i32 -> vector<32x128xf32>
    %459 = arith.truncf %458 : vector<32x128xf32> to vector<32x128xbf16>
    %c0_343 = arith.constant 0 : index
    %c0_344 = arith.constant 0 : index
    %460 = vector.load %arg14[%c0_343, %c0_344] : memref<160x128xbf16, #tpu.memory_space<vmem>>, vector<32x128xbf16>
    tpu.vector_store %arg14[%c0_343, %c0_344], %459 {strides = array<i32>} : memref<160x128xbf16, #tpu.memory_space<vmem>>, vector<32x128xbf16>,
    %c1_i32_345 = arith.constant 1 : i32
    %461 = tpu.dynamic_rotate %456 by %c1_i32_345 dim 1 : vector<32x128xf32>, i32 -> vector<32x128xf32>
    %462 = arith.truncf %461 : vector<32x128xf32> to vector<32x128xbf16>
    %c32_346 = arith.constant 32 : index
    %c0_347 = arith.constant 0 : index
    %463 = vector.load %arg14[%c32_346, %c0_347] : memref<160x128xbf16, #tpu.memory_space<vmem>>, vector<32x128xbf16>
    tpu.vector_store %arg14[%c32_346, %c0_347], %462 {strides = array<i32>} : memref<160x128xbf16, #tpu.memory_space<vmem>>, vector<32x128xbf16>,
    %464 = arith.truncf %456 : vector<32x128xf32> to vector<32x128xbf16>
    %c64_348 = arith.constant 64 : index
    %c0_349 = arith.constant 0 : index
    %465 = vector.load %arg14[%c64_348, %c0_349] : memref<160x128xbf16, #tpu.memory_space<vmem>>, vector<32x128xbf16>
    tpu.vector_store %arg14[%c64_348, %c0_349], %464 {strides = array<i32>} : memref<160x128xbf16, #tpu.memory_space<vmem>>, vector<32x128xbf16>,
    %c127_i32_350 = arith.constant 127 : i32
    %466 = tpu.dynamic_rotate %456 by %c127_i32_350 dim 1 : vector<32x128xf32>, i32 -> vector<32x128xf32>
    %467 = arith.truncf %466 : vector<32x128xf32> to vector<32x128xbf16>
    %c96_351 = arith.constant 96 : index
    %c0_352 = arith.constant 0 : index
    %468 = vector.load %arg14[%c96_351, %c0_352] : memref<160x128xbf16, #tpu.memory_space<vmem>>, vector<32x128xbf16>
    tpu.vector_store %arg14[%c96_351, %c0_352], %467 {strides = array<i32>} : memref<160x128xbf16, #tpu.memory_space<vmem>>, vector<32x128xbf16>,
    %c126_i32_353 = arith.constant 126 : i32
    %469 = tpu.dynamic_rotate %456 by %c126_i32_353 dim 1 : vector<32x128xf32>, i32 -> vector<32x128xf32>
    %470 = arith.truncf %469 : vector<32x128xf32> to vector<32x128xbf16>
    %c128_354 = arith.constant 128 : index
    %c0_355 = arith.constant 0 : index
    %471 = vector.load %arg14[%c128_354, %c0_355] : memref<160x128xbf16, #tpu.memory_space<vmem>>, vector<32x128xbf16>
    tpu.vector_store %arg14[%c128_354, %c0_355], %470 {strides = array<i32>} : memref<160x128xbf16, #tpu.memory_space<vmem>>, vector<32x128xbf16>,
    %c2_356 = arith.constant 2 : index
    %c1_357 = arith.constant 1 : index
    %c0_358 = arith.constant 0 : index
    %c0_359 = arith.constant 0 : index
    %472 = vector.load %arg5[%c2_356, %c1_357, %c0_358, %c0_359] : memref<4x4x64x160xbf16, #tpu.memory_space<vmem>>, vector<1x1x64x160xbf16>
    %473 = vector.shape_cast %472 : vector<1x1x64x160xbf16> to vector<64x160xbf16>
    %c0_360 = arith.constant 0 : index
    %c0_361 = arith.constant 0 : index
    %474 = vector.load %arg14[%c0_360, %c0_361] : memref<160x128xbf16, #tpu.memory_space<vmem>>, vector<160x128xbf16>
    %cst_362 = arith.constant dense<0.000000e+00> : vector<64x128xf32>
    %475 = tpu.matmul %473, %474, %cst_362 {dimension_numbers = #tpu.dot_dimension_numbers<[1], [0], [0], [1], [0, 0, 1, 1], [], []>} : vector<64x160xbf16>, vector<160x128xbf16>, vector<64x128xf32> -> vector<64x128xf32>
    %c2_363 = arith.constant 2 : index
    %c1_364 = arith.constant 1 : index
    %c0_365 = arith.constant 0 : index
    %c0_366 = arith.constant 0 : index
    %476 = vector.load %arg6[%c2_363, %c1_364, %c0_365, %c0_366] : memref<4x4x64x1xf32, #tpu.memory_space<vmem>>, vector<1x1x64x1xf32>
    %477 = vector.shape_cast %476 : vector<1x1x64x1xf32> to vector<64x1xf32>
    %478 = vector.broadcast %477 : vector<64x1xf32> to vector<64x128xf32>
    %479 = arith.addf %475, %478 : vector<64x128xf32>
    %480 = vector.extract_strided_slice %479 {offsets = [0, 0], sizes = [32, 128], strides = [1, 1]} : vector<64x128xf32> to vector<32x128xf32>
    %481 = math.tanh %480 : vector<32x128xf32>
    %482 = vector.extract_strided_slice %479 {offsets = [32, 0], sizes = [32, 128], strides = [1, 1]} : vector<64x128xf32> to vector<32x128xf32>
    %483 = arith.negf %482 : vector<32x128xf32>
    %484 = math.exp %483 : vector<32x128xf32>
    %cst_367 = arith.constant 1.000000e+00 : f32
    %485 = vector.broadcast %cst_367 : f32 to vector<32x128xf32>
    %486 = arith.addf %485, %484 : vector<32x128xf32>
    %487 = arith.divf %485, %486 : vector<32x128xf32>
    %488 = arith.mulf %481, %487 : vector<32x128xf32>
    %c2_368 = arith.constant 2 : index
    %c1_369 = arith.constant 1 : index
    %c0_370 = arith.constant 0 : index
    %c0_371 = arith.constant 0 : index
    %489 = vector.load %arg7[%c2_368, %c1_369, %c0_370, %c0_371] : memref<4x3x64x32xbf16, #tpu.memory_space<vmem>>, vector<1x1x64x32xbf16>
    %490 = vector.shape_cast %489 : vector<1x1x64x32xbf16> to vector<64x32xbf16>
    %491 = arith.truncf %488 : vector<32x128xf32> to vector<32x128xbf16>
    %cst_372 = arith.constant dense<0.000000e+00> : vector<64x128xf32>
    %492 = tpu.matmul %490, %491, %cst_372 {dimension_numbers = #tpu.dot_dimension_numbers<[1], [0], [0], [1], [0, 0, 1, 1], [], []>} : vector<64x32xbf16>, vector<32x128xbf16>, vector<64x128xf32> -> vector<64x128xf32>
    %c2_373 = arith.constant 2 : index
    %c1_374 = arith.constant 1 : index
    %c0_375 = arith.constant 0 : index
    %c0_376 = arith.constant 0 : index
    %493 = vector.load %arg8[%c2_373, %c1_374, %c0_375, %c0_376] : memref<4x3x64x1xf32, #tpu.memory_space<vmem>>, vector<1x1x64x1xf32>
    %494 = vector.shape_cast %493 : vector<1x1x64x1xf32> to vector<64x1xf32>
    %495 = vector.broadcast %494 : vector<64x1xf32> to vector<64x128xf32>
    %496 = arith.addf %492, %495 : vector<64x128xf32>
    %497 = vector.extract_strided_slice %496 {offsets = [0, 0], sizes = [32, 128], strides = [1, 1]} : vector<64x128xf32> to vector<32x128xf32>
    %498 = arith.addf %456, %497 : vector<32x128xf32>
    %499 = vector.broadcast %1 : vector<1x128xf32> to vector<32x128xf32>
    %500 = arith.mulf %498, %499 : vector<32x128xf32>
    %501 = vector.extract_strided_slice %496 {offsets = [32, 0], sizes = [32, 128], strides = [1, 1]} : vector<64x128xf32> to vector<32x128xf32>
    %502 = arith.addf %457, %501 : vector<32x128xf32>
    %c2_i32_377 = arith.constant 2 : i32
    %503 = tpu.dynamic_rotate %500 by %c2_i32_377 dim 1 : vector<32x128xf32>, i32 -> vector<32x128xf32>
    %504 = arith.truncf %503 : vector<32x128xf32> to vector<32x128xbf16>
    %c0_378 = arith.constant 0 : index
    %c0_379 = arith.constant 0 : index
    %505 = vector.load %arg14[%c0_378, %c0_379] : memref<160x128xbf16, #tpu.memory_space<vmem>>, vector<32x128xbf16>
    tpu.vector_store %arg14[%c0_378, %c0_379], %504 {strides = array<i32>} : memref<160x128xbf16, #tpu.memory_space<vmem>>, vector<32x128xbf16>,
    %c1_i32_380 = arith.constant 1 : i32
    %506 = tpu.dynamic_rotate %500 by %c1_i32_380 dim 1 : vector<32x128xf32>, i32 -> vector<32x128xf32>
    %507 = arith.truncf %506 : vector<32x128xf32> to vector<32x128xbf16>
    %c32_381 = arith.constant 32 : index
    %c0_382 = arith.constant 0 : index
    %508 = vector.load %arg14[%c32_381, %c0_382] : memref<160x128xbf16, #tpu.memory_space<vmem>>, vector<32x128xbf16>
    tpu.vector_store %arg14[%c32_381, %c0_382], %507 {strides = array<i32>} : memref<160x128xbf16, #tpu.memory_space<vmem>>, vector<32x128xbf16>,
    %509 = arith.truncf %500 : vector<32x128xf32> to vector<32x128xbf16>
    %c64_383 = arith.constant 64 : index
    %c0_384 = arith.constant 0 : index
    %510 = vector.load %arg14[%c64_383, %c0_384] : memref<160x128xbf16, #tpu.memory_space<vmem>>, vector<32x128xbf16>
    tpu.vector_store %arg14[%c64_383, %c0_384], %509 {strides = array<i32>} : memref<160x128xbf16, #tpu.memory_space<vmem>>, vector<32x128xbf16>,
    %c127_i32_385 = arith.constant 127 : i32
    %511 = tpu.dynamic_rotate %500 by %c127_i32_385 dim 1 : vector<32x128xf32>, i32 -> vector<32x128xf32>
    %512 = arith.truncf %511 : vector<32x128xf32> to vector<32x128xbf16>
    %c96_386 = arith.constant 96 : index
    %c0_387 = arith.constant 0 : index
    %513 = vector.load %arg14[%c96_386, %c0_387] : memref<160x128xbf16, #tpu.memory_space<vmem>>, vector<32x128xbf16>
    tpu.vector_store %arg14[%c96_386, %c0_387], %512 {strides = array<i32>} : memref<160x128xbf16, #tpu.memory_space<vmem>>, vector<32x128xbf16>,
    %c126_i32_388 = arith.constant 126 : i32
    %514 = tpu.dynamic_rotate %500 by %c126_i32_388 dim 1 : vector<32x128xf32>, i32 -> vector<32x128xf32>
    %515 = arith.truncf %514 : vector<32x128xf32> to vector<32x128xbf16>
    %c128_389 = arith.constant 128 : index
    %c0_390 = arith.constant 0 : index
    %516 = vector.load %arg14[%c128_389, %c0_390] : memref<160x128xbf16, #tpu.memory_space<vmem>>, vector<32x128xbf16>
    tpu.vector_store %arg14[%c128_389, %c0_390], %515 {strides = array<i32>} : memref<160x128xbf16, #tpu.memory_space<vmem>>, vector<32x128xbf16>,
    %c2_391 = arith.constant 2 : index
    %c2_392 = arith.constant 2 : index
    %c0_393 = arith.constant 0 : index
    %c0_394 = arith.constant 0 : index
    %517 = vector.load %arg5[%c2_391, %c2_392, %c0_393, %c0_394] : memref<4x4x64x160xbf16, #tpu.memory_space<vmem>>, vector<1x1x64x160xbf16>
    %518 = vector.shape_cast %517 : vector<1x1x64x160xbf16> to vector<64x160xbf16>
    %c0_395 = arith.constant 0 : index
    %c0_396 = arith.constant 0 : index
    %519 = vector.load %arg14[%c0_395, %c0_396] : memref<160x128xbf16, #tpu.memory_space<vmem>>, vector<160x128xbf16>
    %cst_397 = arith.constant dense<0.000000e+00> : vector<64x128xf32>
    %520 = tpu.matmul %518, %519, %cst_397 {dimension_numbers = #tpu.dot_dimension_numbers<[1], [0], [0], [1], [0, 0, 1, 1], [], []>} : vector<64x160xbf16>, vector<160x128xbf16>, vector<64x128xf32> -> vector<64x128xf32>
    %c2_398 = arith.constant 2 : index
    %c2_399 = arith.constant 2 : index
    %c0_400 = arith.constant 0 : index
    %c0_401 = arith.constant 0 : index
    %521 = vector.load %arg6[%c2_398, %c2_399, %c0_400, %c0_401] : memref<4x4x64x1xf32, #tpu.memory_space<vmem>>, vector<1x1x64x1xf32>
    %522 = vector.shape_cast %521 : vector<1x1x64x1xf32> to vector<64x1xf32>
    %523 = vector.broadcast %522 : vector<64x1xf32> to vector<64x128xf32>
    %524 = arith.addf %520, %523 : vector<64x128xf32>
    %525 = vector.extract_strided_slice %524 {offsets = [0, 0], sizes = [32, 128], strides = [1, 1]} : vector<64x128xf32> to vector<32x128xf32>
    %526 = math.tanh %525 : vector<32x128xf32>
    %527 = vector.extract_strided_slice %524 {offsets = [32, 0], sizes = [32, 128], strides = [1, 1]} : vector<64x128xf32> to vector<32x128xf32>
    %528 = arith.negf %527 : vector<32x128xf32>
    %529 = math.exp %528 : vector<32x128xf32>
    %cst_402 = arith.constant 1.000000e+00 : f32
    %530 = vector.broadcast %cst_402 : f32 to vector<32x128xf32>
    %531 = arith.addf %530, %529 : vector<32x128xf32>
    %532 = arith.divf %530, %531 : vector<32x128xf32>
    %533 = arith.mulf %526, %532 : vector<32x128xf32>
    %c2_403 = arith.constant 2 : index
    %c2_404 = arith.constant 2 : index
    %c0_405 = arith.constant 0 : index
    %c0_406 = arith.constant 0 : index
    %534 = vector.load %arg7[%c2_403, %c2_404, %c0_405, %c0_406] : memref<4x3x64x32xbf16, #tpu.memory_space<vmem>>, vector<1x1x64x32xbf16>
    %535 = vector.shape_cast %534 : vector<1x1x64x32xbf16> to vector<64x32xbf16>
    %536 = arith.truncf %533 : vector<32x128xf32> to vector<32x128xbf16>
    %cst_407 = arith.constant dense<0.000000e+00> : vector<64x128xf32>
    %537 = tpu.matmul %535, %536, %cst_407 {dimension_numbers = #tpu.dot_dimension_numbers<[1], [0], [0], [1], [0, 0, 1, 1], [], []>} : vector<64x32xbf16>, vector<32x128xbf16>, vector<64x128xf32> -> vector<64x128xf32>
    %c2_408 = arith.constant 2 : index
    %c2_409 = arith.constant 2 : index
    %c0_410 = arith.constant 0 : index
    %c0_411 = arith.constant 0 : index
    %538 = vector.load %arg8[%c2_408, %c2_409, %c0_410, %c0_411] : memref<4x3x64x1xf32, #tpu.memory_space<vmem>>, vector<1x1x64x1xf32>
    %539 = vector.shape_cast %538 : vector<1x1x64x1xf32> to vector<64x1xf32>
    %540 = vector.broadcast %539 : vector<64x1xf32> to vector<64x128xf32>
    %541 = arith.addf %537, %540 : vector<64x128xf32>
    %542 = vector.extract_strided_slice %541 {offsets = [0, 0], sizes = [32, 128], strides = [1, 1]} : vector<64x128xf32> to vector<32x128xf32>
    %543 = arith.addf %500, %542 : vector<32x128xf32>
    %544 = vector.broadcast %1 : vector<1x128xf32> to vector<32x128xf32>
    %545 = arith.mulf %543, %544 : vector<32x128xf32>
    %546 = vector.extract_strided_slice %541 {offsets = [32, 0], sizes = [32, 128], strides = [1, 1]} : vector<64x128xf32> to vector<32x128xf32>
    %547 = arith.addf %502, %546 : vector<32x128xf32>
    %c2_i32_412 = arith.constant 2 : i32
    %548 = tpu.dynamic_rotate %545 by %c2_i32_412 dim 1 : vector<32x128xf32>, i32 -> vector<32x128xf32>
    %549 = arith.truncf %548 : vector<32x128xf32> to vector<32x128xbf16>
    %c0_413 = arith.constant 0 : index
    %c0_414 = arith.constant 0 : index
    %550 = vector.load %arg14[%c0_413, %c0_414] : memref<160x128xbf16, #tpu.memory_space<vmem>>, vector<32x128xbf16>
    tpu.vector_store %arg14[%c0_413, %c0_414], %549 {strides = array<i32>} : memref<160x128xbf16, #tpu.memory_space<vmem>>, vector<32x128xbf16>,
    %c1_i32_415 = arith.constant 1 : i32
    %551 = tpu.dynamic_rotate %545 by %c1_i32_415 dim 1 : vector<32x128xf32>, i32 -> vector<32x128xf32>
    %552 = arith.truncf %551 : vector<32x128xf32> to vector<32x128xbf16>
    %c32_416 = arith.constant 32 : index
    %c0_417 = arith.constant 0 : index
    %553 = vector.load %arg14[%c32_416, %c0_417] : memref<160x128xbf16, #tpu.memory_space<vmem>>, vector<32x128xbf16>
    tpu.vector_store %arg14[%c32_416, %c0_417], %552 {strides = array<i32>} : memref<160x128xbf16, #tpu.memory_space<vmem>>, vector<32x128xbf16>,
    %554 = arith.truncf %545 : vector<32x128xf32> to vector<32x128xbf16>
    %c64_418 = arith.constant 64 : index
    %c0_419 = arith.constant 0 : index
    %555 = vector.load %arg14[%c64_418, %c0_419] : memref<160x128xbf16, #tpu.memory_space<vmem>>, vector<32x128xbf16>
    tpu.vector_store %arg14[%c64_418, %c0_419], %554 {strides = array<i32>} : memref<160x128xbf16, #tpu.memory_space<vmem>>, vector<32x128xbf16>,
    %c127_i32_420 = arith.constant 127 : i32
    %556 = tpu.dynamic_rotate %545 by %c127_i32_420 dim 1 : vector<32x128xf32>, i32 -> vector<32x128xf32>
    %557 = arith.truncf %556 : vector<32x128xf32> to vector<32x128xbf16>
    %c96_421 = arith.constant 96 : index
    %c0_422 = arith.constant 0 : index
    %558 = vector.load %arg14[%c96_421, %c0_422] : memref<160x128xbf16, #tpu.memory_space<vmem>>, vector<32x128xbf16>
    tpu.vector_store %arg14[%c96_421, %c0_422], %557 {strides = array<i32>} : memref<160x128xbf16, #tpu.memory_space<vmem>>, vector<32x128xbf16>,
    %c126_i32_423 = arith.constant 126 : i32
    %559 = tpu.dynamic_rotate %545 by %c126_i32_423 dim 1 : vector<32x128xf32>, i32 -> vector<32x128xf32>
    %560 = arith.truncf %559 : vector<32x128xf32> to vector<32x128xbf16>
    %c128_424 = arith.constant 128 : index
    %c0_425 = arith.constant 0 : index
    %561 = vector.load %arg14[%c128_424, %c0_425] : memref<160x128xbf16, #tpu.memory_space<vmem>>, vector<32x128xbf16>
    tpu.vector_store %arg14[%c128_424, %c0_425], %560 {strides = array<i32>} : memref<160x128xbf16, #tpu.memory_space<vmem>>, vector<32x128xbf16>,
    %c2_426 = arith.constant 2 : index
    %c3_427 = arith.constant 3 : index
    %c0_428 = arith.constant 0 : index
    %c0_429 = arith.constant 0 : index
    %562 = vector.load %arg5[%c2_426, %c3_427, %c0_428, %c0_429] : memref<4x4x64x160xbf16, #tpu.memory_space<vmem>>, vector<1x1x64x160xbf16>
    %563 = vector.shape_cast %562 : vector<1x1x64x160xbf16> to vector<64x160xbf16>
    %c0_430 = arith.constant 0 : index
    %c0_431 = arith.constant 0 : index
    %564 = vector.load %arg14[%c0_430, %c0_431] : memref<160x128xbf16, #tpu.memory_space<vmem>>, vector<160x128xbf16>
    %cst_432 = arith.constant dense<0.000000e+00> : vector<64x128xf32>
    %565 = tpu.matmul %563, %564, %cst_432 {dimension_numbers = #tpu.dot_dimension_numbers<[1], [0], [0], [1], [0, 0, 1, 1], [], []>} : vector<64x160xbf16>, vector<160x128xbf16>, vector<64x128xf32> -> vector<64x128xf32>
    %c2_433 = arith.constant 2 : index
    %c3_434 = arith.constant 3 : index
    %c0_435 = arith.constant 0 : index
    %c0_436 = arith.constant 0 : index
    %566 = vector.load %arg6[%c2_433, %c3_434, %c0_435, %c0_436] : memref<4x4x64x1xf32, #tpu.memory_space<vmem>>, vector<1x1x64x1xf32>
    %567 = vector.shape_cast %566 : vector<1x1x64x1xf32> to vector<64x1xf32>
    %568 = vector.broadcast %567 : vector<64x1xf32> to vector<64x128xf32>
    %569 = arith.addf %565, %568 : vector<64x128xf32>
    %570 = vector.extract_strided_slice %569 {offsets = [0, 0], sizes = [32, 128], strides = [1, 1]} : vector<64x128xf32> to vector<32x128xf32>
    %571 = math.tanh %570 : vector<32x128xf32>
    %572 = vector.extract_strided_slice %569 {offsets = [32, 0], sizes = [32, 128], strides = [1, 1]} : vector<64x128xf32> to vector<32x128xf32>
    %573 = arith.negf %572 : vector<32x128xf32>
    %574 = math.exp %573 : vector<32x128xf32>
    %cst_437 = arith.constant 1.000000e+00 : f32
    %575 = vector.broadcast %cst_437 : f32 to vector<32x128xf32>
    %576 = arith.addf %575, %574 : vector<32x128xf32>
    %577 = arith.divf %575, %576 : vector<32x128xf32>
    %578 = arith.mulf %571, %577 : vector<32x128xf32>
    %c2_438 = arith.constant 2 : index
    %c0_439 = arith.constant 0 : index
    %c0_440 = arith.constant 0 : index
    %579 = vector.load %arg9[%c2_438, %c0_439, %c0_440] : memref<4x32x32xbf16, #tpu.memory_space<vmem>>, vector<1x32x32xbf16>
    %580 = vector.shape_cast %579 : vector<1x32x32xbf16> to vector<32x32xbf16>
    %581 = arith.truncf %578 : vector<32x128xf32> to vector<32x128xbf16>
    %cst_441 = arith.constant dense<0.000000e+00> : vector<32x128xf32>
    %582 = tpu.matmul %580, %581, %cst_441 {dimension_numbers = #tpu.dot_dimension_numbers<[1], [0], [0], [1], [0, 0, 1, 1], [], []>} : vector<32x32xbf16>, vector<32x128xbf16>, vector<32x128xf32> -> vector<32x128xf32>
    %c2_442 = arith.constant 2 : index
    %c0_443 = arith.constant 0 : index
    %c0_444 = arith.constant 0 : index
    %583 = vector.load %arg10[%c2_442, %c0_443, %c0_444] : memref<4x32x1xf32, #tpu.memory_space<vmem>>, vector<1x32x1xf32>
    %584 = vector.shape_cast %583 : vector<1x32x1xf32> to vector<32x1xf32>
    %585 = vector.broadcast %584 : vector<32x1xf32> to vector<32x128xf32>
    %586 = arith.addf %582, %585 : vector<32x128xf32>
    %587 = arith.addf %547, %586 : vector<32x128xf32>
    %c2_445 = arith.constant 2 : index
    %c0_446 = arith.constant 0 : index
    %c0_447 = arith.constant 0 : index
    %588 = vector.load %arg11[%c2_445, %c0_446, %c0_447] : memref<4x2x32xbf16, #tpu.memory_space<vmem>>, vector<1x2x32xbf16>
    %589 = vector.shape_cast %588 : vector<1x2x32xbf16> to vector<2x32xbf16>
    %590 = vector.broadcast %1 : vector<1x128xf32> to vector<32x128xf32>
    %591 = arith.mulf %587, %590 : vector<32x128xf32>
    %592 = arith.truncf %591 : vector<32x128xf32> to vector<32x128xbf16>
    %cst_448 = arith.constant dense<0.000000e+00> : vector<2x128xf32>
    %593 = tpu.matmul %589, %592, %cst_448 {dimension_numbers = #tpu.dot_dimension_numbers<[1], [0], [0], [1], [0, 0, 1, 1], [], []>} : vector<2x32xbf16>, vector<32x128xbf16>, vector<2x128xf32> -> vector<2x128xf32>
    %c2_449 = arith.constant 2 : index
    %c0_450 = arith.constant 0 : index
    %c0_451 = arith.constant 0 : index
    %594 = vector.load %arg12[%c2_449, %c0_450, %c0_451] : memref<4x2x1xf32, #tpu.memory_space<vmem>>, vector<1x2x1xf32>
    %595 = vector.shape_cast %594 : vector<1x2x1xf32> to vector<2x1xf32>
    %596 = vector.broadcast %595 : vector<2x1xf32> to vector<2x128xf32>
    %597 = arith.addf %593, %596 : vector<2x128xf32>
    %598 = vector.broadcast %1 : vector<1x128xf32> to vector<2x128xf32>
    %599 = arith.mulf %597, %598 : vector<2x128xf32>
    %600 = vector.broadcast %1 : vector<1x128xf32> to vector<2x128xf32>
    %601 = arith.mulf %204, %600 : vector<2x128xf32>
    %602 = arith.addf %599, %601 : vector<2x128xf32>
    %c3_452 = arith.constant 3 : index
    %c0_453 = arith.constant 0 : index
    %c0_454 = arith.constant 0 : index
    %603 = vector.load %arg3[%c3_452, %c0_453, %c0_454] : memref<4x32x2xbf16, #tpu.memory_space<vmem>>, vector<1x32x2xbf16>
    %604 = vector.shape_cast %603 : vector<1x32x2xbf16> to vector<32x2xbf16>
    %605 = arith.truncf %602 : vector<2x128xf32> to vector<2x128xbf16>
    %cst_455 = arith.constant dense<0.000000e+00> : vector<32x128xf32>
    %606 = tpu.matmul %604, %605, %cst_455 {dimension_numbers = #tpu.dot_dimension_numbers<[1], [0], [0], [1], [0, 0, 1, 1], [], []>} : vector<32x2xbf16>, vector<2x128xbf16>, vector<32x128xf32> -> vector<32x128xf32>
    %c3_456 = arith.constant 3 : index
    %c0_457 = arith.constant 0 : index
    %c0_458 = arith.constant 0 : index
    %607 = vector.load %arg4[%c3_456, %c0_457, %c0_458] : memref<4x32x1xf32, #tpu.memory_space<vmem>>, vector<1x32x1xf32>
    %608 = vector.shape_cast %607 : vector<1x32x1xf32> to vector<32x1xf32>
    %609 = vector.broadcast %608 : vector<32x1xf32> to vector<32x128xf32>
    %610 = arith.addf %606, %609 : vector<32x128xf32>
    %611 = vector.broadcast %1 : vector<1x128xf32> to vector<32x128xf32>
    %612 = arith.mulf %610, %611 : vector<32x128xf32>
    %c2_i32_459 = arith.constant 2 : i32
    %613 = tpu.dynamic_rotate %612 by %c2_i32_459 dim 1 : vector<32x128xf32>, i32 -> vector<32x128xf32>
    %614 = arith.truncf %613 : vector<32x128xf32> to vector<32x128xbf16>
    %c0_460 = arith.constant 0 : index
    %c0_461 = arith.constant 0 : index
    %615 = vector.load %arg14[%c0_460, %c0_461] : memref<160x128xbf16, #tpu.memory_space<vmem>>, vector<32x128xbf16>
    tpu.vector_store %arg14[%c0_460, %c0_461], %614 {strides = array<i32>} : memref<160x128xbf16, #tpu.memory_space<vmem>>, vector<32x128xbf16>,
    %c1_i32_462 = arith.constant 1 : i32
    %616 = tpu.dynamic_rotate %612 by %c1_i32_462 dim 1 : vector<32x128xf32>, i32 -> vector<32x128xf32>
    %617 = arith.truncf %616 : vector<32x128xf32> to vector<32x128xbf16>
    %c32_463 = arith.constant 32 : index
    %c0_464 = arith.constant 0 : index
    %618 = vector.load %arg14[%c32_463, %c0_464] : memref<160x128xbf16, #tpu.memory_space<vmem>>, vector<32x128xbf16>
    tpu.vector_store %arg14[%c32_463, %c0_464], %617 {strides = array<i32>} : memref<160x128xbf16, #tpu.memory_space<vmem>>, vector<32x128xbf16>,
    %619 = arith.truncf %612 : vector<32x128xf32> to vector<32x128xbf16>
    %c64_465 = arith.constant 64 : index
    %c0_466 = arith.constant 0 : index
    %620 = vector.load %arg14[%c64_465, %c0_466] : memref<160x128xbf16, #tpu.memory_space<vmem>>, vector<32x128xbf16>
    tpu.vector_store %arg14[%c64_465, %c0_466], %619 {strides = array<i32>} : memref<160x128xbf16, #tpu.memory_space<vmem>>, vector<32x128xbf16>,
    %c127_i32_467 = arith.constant 127 : i32
    %621 = tpu.dynamic_rotate %612 by %c127_i32_467 dim 1 : vector<32x128xf32>, i32 -> vector<32x128xf32>
    %622 = arith.truncf %621 : vector<32x128xf32> to vector<32x128xbf16>
    %c96_468 = arith.constant 96 : index
    %c0_469 = arith.constant 0 : index
    %623 = vector.load %arg14[%c96_468, %c0_469] : memref<160x128xbf16, #tpu.memory_space<vmem>>, vector<32x128xbf16>
    tpu.vector_store %arg14[%c96_468, %c0_469], %622 {strides = array<i32>} : memref<160x128xbf16, #tpu.memory_space<vmem>>, vector<32x128xbf16>,
    %c126_i32_470 = arith.constant 126 : i32
    %624 = tpu.dynamic_rotate %612 by %c126_i32_470 dim 1 : vector<32x128xf32>, i32 -> vector<32x128xf32>
    %625 = arith.truncf %624 : vector<32x128xf32> to vector<32x128xbf16>
    %c128_471 = arith.constant 128 : index
    %c0_472 = arith.constant 0 : index
    %626 = vector.load %arg14[%c128_471, %c0_472] : memref<160x128xbf16, #tpu.memory_space<vmem>>, vector<32x128xbf16>
    tpu.vector_store %arg14[%c128_471, %c0_472], %625 {strides = array<i32>} : memref<160x128xbf16, #tpu.memory_space<vmem>>, vector<32x128xbf16>,
    %c3_473 = arith.constant 3 : index
    %c0_474 = arith.constant 0 : index
    %c0_475 = arith.constant 0 : index
    %c0_476 = arith.constant 0 : index
    %627 = vector.load %arg5[%c3_473, %c0_474, %c0_475, %c0_476] : memref<4x4x64x160xbf16, #tpu.memory_space<vmem>>, vector<1x1x64x160xbf16>
    %628 = vector.shape_cast %627 : vector<1x1x64x160xbf16> to vector<64x160xbf16>
    %c0_477 = arith.constant 0 : index
    %c0_478 = arith.constant 0 : index
    %629 = vector.load %arg14[%c0_477, %c0_478] : memref<160x128xbf16, #tpu.memory_space<vmem>>, vector<160x128xbf16>
    %cst_479 = arith.constant dense<0.000000e+00> : vector<64x128xf32>
    %630 = tpu.matmul %628, %629, %cst_479 {dimension_numbers = #tpu.dot_dimension_numbers<[1], [0], [0], [1], [0, 0, 1, 1], [], []>} : vector<64x160xbf16>, vector<160x128xbf16>, vector<64x128xf32> -> vector<64x128xf32>
    %c3_480 = arith.constant 3 : index
    %c0_481 = arith.constant 0 : index
    %c0_482 = arith.constant 0 : index
    %c0_483 = arith.constant 0 : index
    %631 = vector.load %arg6[%c3_480, %c0_481, %c0_482, %c0_483] : memref<4x4x64x1xf32, #tpu.memory_space<vmem>>, vector<1x1x64x1xf32>
    %632 = vector.shape_cast %631 : vector<1x1x64x1xf32> to vector<64x1xf32>
    %633 = vector.broadcast %632 : vector<64x1xf32> to vector<64x128xf32>
    %634 = arith.addf %630, %633 : vector<64x128xf32>
    %635 = vector.extract_strided_slice %634 {offsets = [0, 0], sizes = [32, 128], strides = [1, 1]} : vector<64x128xf32> to vector<32x128xf32>
    %636 = math.tanh %635 : vector<32x128xf32>
    %637 = vector.extract_strided_slice %634 {offsets = [32, 0], sizes = [32, 128], strides = [1, 1]} : vector<64x128xf32> to vector<32x128xf32>
    %638 = arith.negf %637 : vector<32x128xf32>
    %639 = math.exp %638 : vector<32x128xf32>
    %cst_484 = arith.constant 1.000000e+00 : f32
    %640 = vector.broadcast %cst_484 : f32 to vector<32x128xf32>
    %641 = arith.addf %640, %639 : vector<32x128xf32>
    %642 = arith.divf %640, %641 : vector<32x128xf32>
    %643 = arith.mulf %636, %642 : vector<32x128xf32>
    %c3_485 = arith.constant 3 : index
    %c0_486 = arith.constant 0 : index
    %c0_487 = arith.constant 0 : index
    %c0_488 = arith.constant 0 : index
    %644 = vector.load %arg7[%c3_485, %c0_486, %c0_487, %c0_488] : memref<4x3x64x32xbf16, #tpu.memory_space<vmem>>, vector<1x1x64x32xbf16>
    %645 = vector.shape_cast %644 : vector<1x1x64x32xbf16> to vector<64x32xbf16>
    %646 = arith.truncf %643 : vector<32x128xf32> to vector<32x128xbf16>
    %cst_489 = arith.constant dense<0.000000e+00> : vector<64x128xf32>
    %647 = tpu.matmul %645, %646, %cst_489 {dimension_numbers = #tpu.dot_dimension_numbers<[1], [0], [0], [1], [0, 0, 1, 1], [], []>} : vector<64x32xbf16>, vector<32x128xbf16>, vector<64x128xf32> -> vector<64x128xf32>
    %c3_490 = arith.constant 3 : index
    %c0_491 = arith.constant 0 : index
    %c0_492 = arith.constant 0 : index
    %c0_493 = arith.constant 0 : index
    %648 = vector.load %arg8[%c3_490, %c0_491, %c0_492, %c0_493] : memref<4x3x64x1xf32, #tpu.memory_space<vmem>>, vector<1x1x64x1xf32>
    %649 = vector.shape_cast %648 : vector<1x1x64x1xf32> to vector<64x1xf32>
    %650 = vector.broadcast %649 : vector<64x1xf32> to vector<64x128xf32>
    %651 = arith.addf %647, %650 : vector<64x128xf32>
    %652 = vector.extract_strided_slice %651 {offsets = [0, 0], sizes = [32, 128], strides = [1, 1]} : vector<64x128xf32> to vector<32x128xf32>
    %653 = arith.addf %612, %652 : vector<32x128xf32>
    %654 = vector.broadcast %1 : vector<1x128xf32> to vector<32x128xf32>
    %655 = arith.mulf %653, %654 : vector<32x128xf32>
    %656 = vector.extract_strided_slice %651 {offsets = [32, 0], sizes = [32, 128], strides = [1, 1]} : vector<64x128xf32> to vector<32x128xf32>
    %c2_i32_494 = arith.constant 2 : i32
    %657 = tpu.dynamic_rotate %655 by %c2_i32_494 dim 1 : vector<32x128xf32>, i32 -> vector<32x128xf32>
    %658 = arith.truncf %657 : vector<32x128xf32> to vector<32x128xbf16>
    %c0_495 = arith.constant 0 : index
    %c0_496 = arith.constant 0 : index
    %659 = vector.load %arg14[%c0_495, %c0_496] : memref<160x128xbf16, #tpu.memory_space<vmem>>, vector<32x128xbf16>
    tpu.vector_store %arg14[%c0_495, %c0_496], %658 {strides = array<i32>} : memref<160x128xbf16, #tpu.memory_space<vmem>>, vector<32x128xbf16>,
    %c1_i32_497 = arith.constant 1 : i32
    %660 = tpu.dynamic_rotate %655 by %c1_i32_497 dim 1 : vector<32x128xf32>, i32 -> vector<32x128xf32>
    %661 = arith.truncf %660 : vector<32x128xf32> to vector<32x128xbf16>
    %c32_498 = arith.constant 32 : index
    %c0_499 = arith.constant 0 : index
    %662 = vector.load %arg14[%c32_498, %c0_499] : memref<160x128xbf16, #tpu.memory_space<vmem>>, vector<32x128xbf16>
    tpu.vector_store %arg14[%c32_498, %c0_499], %661 {strides = array<i32>} : memref<160x128xbf16, #tpu.memory_space<vmem>>, vector<32x128xbf16>,
    %663 = arith.truncf %655 : vector<32x128xf32> to vector<32x128xbf16>
    %c64_500 = arith.constant 64 : index
    %c0_501 = arith.constant 0 : index
    %664 = vector.load %arg14[%c64_500, %c0_501] : memref<160x128xbf16, #tpu.memory_space<vmem>>, vector<32x128xbf16>
    tpu.vector_store %arg14[%c64_500, %c0_501], %663 {strides = array<i32>} : memref<160x128xbf16, #tpu.memory_space<vmem>>, vector<32x128xbf16>,
    %c127_i32_502 = arith.constant 127 : i32
    %665 = tpu.dynamic_rotate %655 by %c127_i32_502 dim 1 : vector<32x128xf32>, i32 -> vector<32x128xf32>
    %666 = arith.truncf %665 : vector<32x128xf32> to vector<32x128xbf16>
    %c96_503 = arith.constant 96 : index
    %c0_504 = arith.constant 0 : index
    %667 = vector.load %arg14[%c96_503, %c0_504] : memref<160x128xbf16, #tpu.memory_space<vmem>>, vector<32x128xbf16>
    tpu.vector_store %arg14[%c96_503, %c0_504], %666 {strides = array<i32>} : memref<160x128xbf16, #tpu.memory_space<vmem>>, vector<32x128xbf16>,
    %c126_i32_505 = arith.constant 126 : i32
    %668 = tpu.dynamic_rotate %655 by %c126_i32_505 dim 1 : vector<32x128xf32>, i32 -> vector<32x128xf32>
    %669 = arith.truncf %668 : vector<32x128xf32> to vector<32x128xbf16>
    %c128_506 = arith.constant 128 : index
    %c0_507 = arith.constant 0 : index
    %670 = vector.load %arg14[%c128_506, %c0_507] : memref<160x128xbf16, #tpu.memory_space<vmem>>, vector<32x128xbf16>
    tpu.vector_store %arg14[%c128_506, %c0_507], %669 {strides = array<i32>} : memref<160x128xbf16, #tpu.memory_space<vmem>>, vector<32x128xbf16>,
    %c3_508 = arith.constant 3 : index
    %c1_509 = arith.constant 1 : index
    %c0_510 = arith.constant 0 : index
    %c0_511 = arith.constant 0 : index
    %671 = vector.load %arg5[%c3_508, %c1_509, %c0_510, %c0_511] : memref<4x4x64x160xbf16, #tpu.memory_space<vmem>>, vector<1x1x64x160xbf16>
    %672 = vector.shape_cast %671 : vector<1x1x64x160xbf16> to vector<64x160xbf16>
    %c0_512 = arith.constant 0 : index
    %c0_513 = arith.constant 0 : index
    %673 = vector.load %arg14[%c0_512, %c0_513] : memref<160x128xbf16, #tpu.memory_space<vmem>>, vector<160x128xbf16>
    %cst_514 = arith.constant dense<0.000000e+00> : vector<64x128xf32>
    %674 = tpu.matmul %672, %673, %cst_514 {dimension_numbers = #tpu.dot_dimension_numbers<[1], [0], [0], [1], [0, 0, 1, 1], [], []>} : vector<64x160xbf16>, vector<160x128xbf16>, vector<64x128xf32> -> vector<64x128xf32>
    %c3_515 = arith.constant 3 : index
    %c1_516 = arith.constant 1 : index
    %c0_517 = arith.constant 0 : index
    %c0_518 = arith.constant 0 : index
    %675 = vector.load %arg6[%c3_515, %c1_516, %c0_517, %c0_518] : memref<4x4x64x1xf32, #tpu.memory_space<vmem>>, vector<1x1x64x1xf32>
    %676 = vector.shape_cast %675 : vector<1x1x64x1xf32> to vector<64x1xf32>
    %677 = vector.broadcast %676 : vector<64x1xf32> to vector<64x128xf32>
    %678 = arith.addf %674, %677 : vector<64x128xf32>
    %679 = vector.extract_strided_slice %678 {offsets = [0, 0], sizes = [32, 128], strides = [1, 1]} : vector<64x128xf32> to vector<32x128xf32>
    %680 = math.tanh %679 : vector<32x128xf32>
    %681 = vector.extract_strided_slice %678 {offsets = [32, 0], sizes = [32, 128], strides = [1, 1]} : vector<64x128xf32> to vector<32x128xf32>
    %682 = arith.negf %681 : vector<32x128xf32>
    %683 = math.exp %682 : vector<32x128xf32>
    %cst_519 = arith.constant 1.000000e+00 : f32
    %684 = vector.broadcast %cst_519 : f32 to vector<32x128xf32>
    %685 = arith.addf %684, %683 : vector<32x128xf32>
    %686 = arith.divf %684, %685 : vector<32x128xf32>
    %687 = arith.mulf %680, %686 : vector<32x128xf32>
    %c3_520 = arith.constant 3 : index
    %c1_521 = arith.constant 1 : index
    %c0_522 = arith.constant 0 : index
    %c0_523 = arith.constant 0 : index
    %688 = vector.load %arg7[%c3_520, %c1_521, %c0_522, %c0_523] : memref<4x3x64x32xbf16, #tpu.memory_space<vmem>>, vector<1x1x64x32xbf16>
    %689 = vector.shape_cast %688 : vector<1x1x64x32xbf16> to vector<64x32xbf16>
    %690 = arith.truncf %687 : vector<32x128xf32> to vector<32x128xbf16>
    %cst_524 = arith.constant dense<0.000000e+00> : vector<64x128xf32>
    %691 = tpu.matmul %689, %690, %cst_524 {dimension_numbers = #tpu.dot_dimension_numbers<[1], [0], [0], [1], [0, 0, 1, 1], [], []>} : vector<64x32xbf16>, vector<32x128xbf16>, vector<64x128xf32> -> vector<64x128xf32>
    %c3_525 = arith.constant 3 : index
    %c1_526 = arith.constant 1 : index
    %c0_527 = arith.constant 0 : index
    %c0_528 = arith.constant 0 : index
    %692 = vector.load %arg8[%c3_525, %c1_526, %c0_527, %c0_528] : memref<4x3x64x1xf32, #tpu.memory_space<vmem>>, vector<1x1x64x1xf32>
    %693 = vector.shape_cast %692 : vector<1x1x64x1xf32> to vector<64x1xf32>
    %694 = vector.broadcast %693 : vector<64x1xf32> to vector<64x128xf32>
    %695 = arith.addf %691, %694 : vector<64x128xf32>
    %696 = vector.extract_strided_slice %695 {offsets = [0, 0], sizes = [32, 128], strides = [1, 1]} : vector<64x128xf32> to vector<32x128xf32>
    %697 = arith.addf %655, %696 : vector<32x128xf32>
    %698 = vector.broadcast %1 : vector<1x128xf32> to vector<32x128xf32>
    %699 = arith.mulf %697, %698 : vector<32x128xf32>
    %700 = vector.extract_strided_slice %695 {offsets = [32, 0], sizes = [32, 128], strides = [1, 1]} : vector<64x128xf32> to vector<32x128xf32>
    %701 = arith.addf %656, %700 : vector<32x128xf32>
    %c2_i32_529 = arith.constant 2 : i32
    %702 = tpu.dynamic_rotate %699 by %c2_i32_529 dim 1 : vector<32x128xf32>, i32 -> vector<32x128xf32>
    %703 = arith.truncf %702 : vector<32x128xf32> to vector<32x128xbf16>
    %c0_530 = arith.constant 0 : index
    %c0_531 = arith.constant 0 : index
    %704 = vector.load %arg14[%c0_530, %c0_531] : memref<160x128xbf16, #tpu.memory_space<vmem>>, vector<32x128xbf16>
    tpu.vector_store %arg14[%c0_530, %c0_531], %703 {strides = array<i32>} : memref<160x128xbf16, #tpu.memory_space<vmem>>, vector<32x128xbf16>,
    %c1_i32_532 = arith.constant 1 : i32
    %705 = tpu.dynamic_rotate %699 by %c1_i32_532 dim 1 : vector<32x128xf32>, i32 -> vector<32x128xf32>
    %706 = arith.truncf %705 : vector<32x128xf32> to vector<32x128xbf16>
    %c32_533 = arith.constant 32 : index
    %c0_534 = arith.constant 0 : index
    %707 = vector.load %arg14[%c32_533, %c0_534] : memref<160x128xbf16, #tpu.memory_space<vmem>>, vector<32x128xbf16>
    tpu.vector_store %arg14[%c32_533, %c0_534], %706 {strides = array<i32>} : memref<160x128xbf16, #tpu.memory_space<vmem>>, vector<32x128xbf16>,
    %708 = arith.truncf %699 : vector<32x128xf32> to vector<32x128xbf16>
    %c64_535 = arith.constant 64 : index
    %c0_536 = arith.constant 0 : index
    %709 = vector.load %arg14[%c64_535, %c0_536] : memref<160x128xbf16, #tpu.memory_space<vmem>>, vector<32x128xbf16>
    tpu.vector_store %arg14[%c64_535, %c0_536], %708 {strides = array<i32>} : memref<160x128xbf16, #tpu.memory_space<vmem>>, vector<32x128xbf16>,
    %c127_i32_537 = arith.constant 127 : i32
    %710 = tpu.dynamic_rotate %699 by %c127_i32_537 dim 1 : vector<32x128xf32>, i32 -> vector<32x128xf32>
    %711 = arith.truncf %710 : vector<32x128xf32> to vector<32x128xbf16>
    %c96_538 = arith.constant 96 : index
    %c0_539 = arith.constant 0 : index
    %712 = vector.load %arg14[%c96_538, %c0_539] : memref<160x128xbf16, #tpu.memory_space<vmem>>, vector<32x128xbf16>
    tpu.vector_store %arg14[%c96_538, %c0_539], %711 {strides = array<i32>} : memref<160x128xbf16, #tpu.memory_space<vmem>>, vector<32x128xbf16>,
    %c126_i32_540 = arith.constant 126 : i32
    %713 = tpu.dynamic_rotate %699 by %c126_i32_540 dim 1 : vector<32x128xf32>, i32 -> vector<32x128xf32>
    %714 = arith.truncf %713 : vector<32x128xf32> to vector<32x128xbf16>
    %c128_541 = arith.constant 128 : index
    %c0_542 = arith.constant 0 : index
    %715 = vector.load %arg14[%c128_541, %c0_542] : memref<160x128xbf16, #tpu.memory_space<vmem>>, vector<32x128xbf16>
    tpu.vector_store %arg14[%c128_541, %c0_542], %714 {strides = array<i32>} : memref<160x128xbf16, #tpu.memory_space<vmem>>, vector<32x128xbf16>,
    %c3_543 = arith.constant 3 : index
    %c2_544 = arith.constant 2 : index
    %c0_545 = arith.constant 0 : index
    %c0_546 = arith.constant 0 : index
    %716 = vector.load %arg5[%c3_543, %c2_544, %c0_545, %c0_546] : memref<4x4x64x160xbf16, #tpu.memory_space<vmem>>, vector<1x1x64x160xbf16>
    %717 = vector.shape_cast %716 : vector<1x1x64x160xbf16> to vector<64x160xbf16>
    %c0_547 = arith.constant 0 : index
    %c0_548 = arith.constant 0 : index
    %718 = vector.load %arg14[%c0_547, %c0_548] : memref<160x128xbf16, #tpu.memory_space<vmem>>, vector<160x128xbf16>
    %cst_549 = arith.constant dense<0.000000e+00> : vector<64x128xf32>
    %719 = tpu.matmul %717, %718, %cst_549 {dimension_numbers = #tpu.dot_dimension_numbers<[1], [0], [0], [1], [0, 0, 1, 1], [], []>} : vector<64x160xbf16>, vector<160x128xbf16>, vector<64x128xf32> -> vector<64x128xf32>
    %c3_550 = arith.constant 3 : index
    %c2_551 = arith.constant 2 : index
    %c0_552 = arith.constant 0 : index
    %c0_553 = arith.constant 0 : index
    %720 = vector.load %arg6[%c3_550, %c2_551, %c0_552, %c0_553] : memref<4x4x64x1xf32, #tpu.memory_space<vmem>>, vector<1x1x64x1xf32>
    %721 = vector.shape_cast %720 : vector<1x1x64x1xf32> to vector<64x1xf32>
    %722 = vector.broadcast %721 : vector<64x1xf32> to vector<64x128xf32>
    %723 = arith.addf %719, %722 : vector<64x128xf32>
    %724 = vector.extract_strided_slice %723 {offsets = [0, 0], sizes = [32, 128], strides = [1, 1]} : vector<64x128xf32> to vector<32x128xf32>
    %725 = math.tanh %724 : vector<32x128xf32>
    %726 = vector.extract_strided_slice %723 {offsets = [32, 0], sizes = [32, 128], strides = [1, 1]} : vector<64x128xf32> to vector<32x128xf32>
    %727 = arith.negf %726 : vector<32x128xf32>
    %728 = math.exp %727 : vector<32x128xf32>
    %cst_554 = arith.constant 1.000000e+00 : f32
    %729 = vector.broadcast %cst_554 : f32 to vector<32x128xf32>
    %730 = arith.addf %729, %728 : vector<32x128xf32>
    %731 = arith.divf %729, %730 : vector<32x128xf32>
    %732 = arith.mulf %725, %731 : vector<32x128xf32>
    %c3_555 = arith.constant 3 : index
    %c2_556 = arith.constant 2 : index
    %c0_557 = arith.constant 0 : index
    %c0_558 = arith.constant 0 : index
    %733 = vector.load %arg7[%c3_555, %c2_556, %c0_557, %c0_558] : memref<4x3x64x32xbf16, #tpu.memory_space<vmem>>, vector<1x1x64x32xbf16>
    %734 = vector.shape_cast %733 : vector<1x1x64x32xbf16> to vector<64x32xbf16>
    %735 = arith.truncf %732 : vector<32x128xf32> to vector<32x128xbf16>
    %cst_559 = arith.constant dense<0.000000e+00> : vector<64x128xf32>
    %736 = tpu.matmul %734, %735, %cst_559 {dimension_numbers = #tpu.dot_dimension_numbers<[1], [0], [0], [1], [0, 0, 1, 1], [], []>} : vector<64x32xbf16>, vector<32x128xbf16>, vector<64x128xf32> -> vector<64x128xf32>
    %c3_560 = arith.constant 3 : index
    %c2_561 = arith.constant 2 : index
    %c0_562 = arith.constant 0 : index
    %c0_563 = arith.constant 0 : index
    %737 = vector.load %arg8[%c3_560, %c2_561, %c0_562, %c0_563] : memref<4x3x64x1xf32, #tpu.memory_space<vmem>>, vector<1x1x64x1xf32>
    %738 = vector.shape_cast %737 : vector<1x1x64x1xf32> to vector<64x1xf32>
    %739 = vector.broadcast %738 : vector<64x1xf32> to vector<64x128xf32>
    %740 = arith.addf %736, %739 : vector<64x128xf32>
    %741 = vector.extract_strided_slice %740 {offsets = [0, 0], sizes = [32, 128], strides = [1, 1]} : vector<64x128xf32> to vector<32x128xf32>
    %742 = arith.addf %699, %741 : vector<32x128xf32>
    %743 = vector.broadcast %1 : vector<1x128xf32> to vector<32x128xf32>
    %744 = arith.mulf %742, %743 : vector<32x128xf32>
    %745 = vector.extract_strided_slice %740 {offsets = [32, 0], sizes = [32, 128], strides = [1, 1]} : vector<64x128xf32> to vector<32x128xf32>
    %746 = arith.addf %701, %745 : vector<32x128xf32>
    %c2_i32_564 = arith.constant 2 : i32
    %747 = tpu.dynamic_rotate %744 by %c2_i32_564 dim 1 : vector<32x128xf32>, i32 -> vector<32x128xf32>
    %748 = arith.truncf %747 : vector<32x128xf32> to vector<32x128xbf16>
    %c0_565 = arith.constant 0 : index
    %c0_566 = arith.constant 0 : index
    %749 = vector.load %arg14[%c0_565, %c0_566] : memref<160x128xbf16, #tpu.memory_space<vmem>>, vector<32x128xbf16>
    tpu.vector_store %arg14[%c0_565, %c0_566], %748 {strides = array<i32>} : memref<160x128xbf16, #tpu.memory_space<vmem>>, vector<32x128xbf16>,
    %c1_i32_567 = arith.constant 1 : i32
    %750 = tpu.dynamic_rotate %744 by %c1_i32_567 dim 1 : vector<32x128xf32>, i32 -> vector<32x128xf32>
    %751 = arith.truncf %750 : vector<32x128xf32> to vector<32x128xbf16>
    %c32_568 = arith.constant 32 : index
    %c0_569 = arith.constant 0 : index
    %752 = vector.load %arg14[%c32_568, %c0_569] : memref<160x128xbf16, #tpu.memory_space<vmem>>, vector<32x128xbf16>
    tpu.vector_store %arg14[%c32_568, %c0_569], %751 {strides = array<i32>} : memref<160x128xbf16, #tpu.memory_space<vmem>>, vector<32x128xbf16>,
    %753 = arith.truncf %744 : vector<32x128xf32> to vector<32x128xbf16>
    %c64_570 = arith.constant 64 : index
    %c0_571 = arith.constant 0 : index
    %754 = vector.load %arg14[%c64_570, %c0_571] : memref<160x128xbf16, #tpu.memory_space<vmem>>, vector<32x128xbf16>
    tpu.vector_store %arg14[%c64_570, %c0_571], %753 {strides = array<i32>} : memref<160x128xbf16, #tpu.memory_space<vmem>>, vector<32x128xbf16>,
    %c127_i32_572 = arith.constant 127 : i32
    %755 = tpu.dynamic_rotate %744 by %c127_i32_572 dim 1 : vector<32x128xf32>, i32 -> vector<32x128xf32>
    %756 = arith.truncf %755 : vector<32x128xf32> to vector<32x128xbf16>
    %c96_573 = arith.constant 96 : index
    %c0_574 = arith.constant 0 : index
    %757 = vector.load %arg14[%c96_573, %c0_574] : memref<160x128xbf16, #tpu.memory_space<vmem>>, vector<32x128xbf16>
    tpu.vector_store %arg14[%c96_573, %c0_574], %756 {strides = array<i32>} : memref<160x128xbf16, #tpu.memory_space<vmem>>, vector<32x128xbf16>,
    %c126_i32_575 = arith.constant 126 : i32
    %758 = tpu.dynamic_rotate %744 by %c126_i32_575 dim 1 : vector<32x128xf32>, i32 -> vector<32x128xf32>
    %759 = arith.truncf %758 : vector<32x128xf32> to vector<32x128xbf16>
    %c128_576 = arith.constant 128 : index
    %c0_577 = arith.constant 0 : index
    %760 = vector.load %arg14[%c128_576, %c0_577] : memref<160x128xbf16, #tpu.memory_space<vmem>>, vector<32x128xbf16>
    tpu.vector_store %arg14[%c128_576, %c0_577], %759 {strides = array<i32>} : memref<160x128xbf16, #tpu.memory_space<vmem>>, vector<32x128xbf16>,
    %c3_578 = arith.constant 3 : index
    %c3_579 = arith.constant 3 : index
    %c0_580 = arith.constant 0 : index
    %c0_581 = arith.constant 0 : index
    %761 = vector.load %arg5[%c3_578, %c3_579, %c0_580, %c0_581] : memref<4x4x64x160xbf16, #tpu.memory_space<vmem>>, vector<1x1x64x160xbf16>
    %762 = vector.shape_cast %761 : vector<1x1x64x160xbf16> to vector<64x160xbf16>
    %c0_582 = arith.constant 0 : index
    %c0_583 = arith.constant 0 : index
    %763 = vector.load %arg14[%c0_582, %c0_583] : memref<160x128xbf16, #tpu.memory_space<vmem>>, vector<160x128xbf16>
    %cst_584 = arith.constant dense<0.000000e+00> : vector<64x128xf32>
    %764 = tpu.matmul %762, %763, %cst_584 {dimension_numbers = #tpu.dot_dimension_numbers<[1], [0], [0], [1], [0, 0, 1, 1], [], []>} : vector<64x160xbf16>, vector<160x128xbf16>, vector<64x128xf32> -> vector<64x128xf32>
    %c3_585 = arith.constant 3 : index
    %c3_586 = arith.constant 3 : index
    %c0_587 = arith.constant 0 : index
    %c0_588 = arith.constant 0 : index
    %765 = vector.load %arg6[%c3_585, %c3_586, %c0_587, %c0_588] : memref<4x4x64x1xf32, #tpu.memory_space<vmem>>, vector<1x1x64x1xf32>
    %766 = vector.shape_cast %765 : vector<1x1x64x1xf32> to vector<64x1xf32>
    %767 = vector.broadcast %766 : vector<64x1xf32> to vector<64x128xf32>
    %768 = arith.addf %764, %767 : vector<64x128xf32>
    %769 = vector.extract_strided_slice %768 {offsets = [0, 0], sizes = [32, 128], strides = [1, 1]} : vector<64x128xf32> to vector<32x128xf32>
    %770 = math.tanh %769 : vector<32x128xf32>
    %771 = vector.extract_strided_slice %768 {offsets = [32, 0], sizes = [32, 128], strides = [1, 1]} : vector<64x128xf32> to vector<32x128xf32>
    %772 = arith.negf %771 : vector<32x128xf32>
    %773 = math.exp %772 : vector<32x128xf32>
    %cst_589 = arith.constant 1.000000e+00 : f32
    %774 = vector.broadcast %cst_589 : f32 to vector<32x128xf32>
    %775 = arith.addf %774, %773 : vector<32x128xf32>
    %776 = arith.divf %774, %775 : vector<32x128xf32>
    %777 = arith.mulf %770, %776 : vector<32x128xf32>
    %c3_590 = arith.constant 3 : index
    %c0_591 = arith.constant 0 : index
    %c0_592 = arith.constant 0 : index
    %778 = vector.load %arg9[%c3_590, %c0_591, %c0_592] : memref<4x32x32xbf16, #tpu.memory_space<vmem>>, vector<1x32x32xbf16>
    %779 = vector.shape_cast %778 : vector<1x32x32xbf16> to vector<32x32xbf16>
    %780 = arith.truncf %777 : vector<32x128xf32> to vector<32x128xbf16>
    %cst_593 = arith.constant dense<0.000000e+00> : vector<32x128xf32>
    %781 = tpu.matmul %779, %780, %cst_593 {dimension_numbers = #tpu.dot_dimension_numbers<[1], [0], [0], [1], [0, 0, 1, 1], [], []>} : vector<32x32xbf16>, vector<32x128xbf16>, vector<32x128xf32> -> vector<32x128xf32>
    %c3_594 = arith.constant 3 : index
    %c0_595 = arith.constant 0 : index
    %c0_596 = arith.constant 0 : index
    %782 = vector.load %arg10[%c3_594, %c0_595, %c0_596] : memref<4x32x1xf32, #tpu.memory_space<vmem>>, vector<1x32x1xf32>
    %783 = vector.shape_cast %782 : vector<1x32x1xf32> to vector<32x1xf32>
    %784 = vector.broadcast %783 : vector<32x1xf32> to vector<32x128xf32>
    %785 = arith.addf %781, %784 : vector<32x128xf32>
    %786 = arith.addf %746, %785 : vector<32x128xf32>
    %c3_597 = arith.constant 3 : index
    %c0_598 = arith.constant 0 : index
    %c0_599 = arith.constant 0 : index
    %787 = vector.load %arg11[%c3_597, %c0_598, %c0_599] : memref<4x2x32xbf16, #tpu.memory_space<vmem>>, vector<1x2x32xbf16>
    %788 = vector.shape_cast %787 : vector<1x2x32xbf16> to vector<2x32xbf16>
    %789 = vector.broadcast %1 : vector<1x128xf32> to vector<32x128xf32>
    %790 = arith.mulf %786, %789 : vector<32x128xf32>
    %791 = arith.truncf %790 : vector<32x128xf32> to vector<32x128xbf16>
    %cst_600 = arith.constant dense<0.000000e+00> : vector<2x128xf32>
    %792 = tpu.matmul %788, %791, %cst_600 {dimension_numbers = #tpu.dot_dimension_numbers<[1], [0], [0], [1], [0, 0, 1, 1], [], []>} : vector<2x32xbf16>, vector<32x128xbf16>, vector<2x128xf32> -> vector<2x128xf32>
    %c3_601 = arith.constant 3 : index
    %c0_602 = arith.constant 0 : index
    %c0_603 = arith.constant 0 : index
    %793 = vector.load %arg12[%c3_601, %c0_602, %c0_603] : memref<4x2x1xf32, #tpu.memory_space<vmem>>, vector<1x2x1xf32>
    %794 = vector.shape_cast %793 : vector<1x2x1xf32> to vector<2x1xf32>
    %795 = vector.broadcast %794 : vector<2x1xf32> to vector<2x128xf32>
    %796 = arith.addf %792, %795 : vector<2x128xf32>
    %797 = vector.broadcast %1 : vector<1x128xf32> to vector<2x128xf32>
    %798 = arith.mulf %796, %797 : vector<2x128xf32>
    %799 = vector.broadcast %1 : vector<1x128xf32> to vector<2x128xf32>
    %800 = arith.mulf %403, %799 : vector<2x128xf32>
    %801 = arith.addf %798, %800 : vector<2x128xf32>
    %c0_604 = arith.constant 0 : index
    %c0_605 = arith.constant 0 : index
    %c0_606 = arith.constant 0 : index
    %802 = vector.load %arg13[%c0_604, %c0_605, %c0_606] : memref<1x4x128xf32, #tpu.memory_space<vmem>>, vector<1x2x128xf32>
    %803 = vector.shape_cast %802 : vector<1x2x128xf32> to vector<2x128xf32>
    %804 = vector.shape_cast %801 : vector<2x128xf32> to vector<1x2x128xf32>
    tpu.vector_store %arg13[%c0_604, %c0_605, %c0_606], %804 {strides = array<i32>} : memref<1x4x128xf32, #tpu.memory_space<vmem>>, vector<1x2x128xf32>,
    %c0_607 = arith.constant 0 : index
    %c2_608 = arith.constant 2 : index
    %c0_609 = arith.constant 0 : index
    %805 = vector.load %arg13[%c0_607, %c2_608, %c0_609] : memref<1x4x128xf32, #tpu.memory_space<vmem>>, vector<1x2x128xf32>
    %806 = vector.shape_cast %805 : vector<1x2x128xf32> to vector<2x128xf32>
    %807 = vector.shape_cast %602 : vector<2x128xf32> to vector<1x2x128xf32>
    tpu.vector_store %arg13[%c0_607, %c2_608, %c0_609], %807 {strides = array<i32>} : memref<1x4x128xf32, #tpu.memory_space<vmem>>, vector<1x2x128xf32>,
    return
  }
  func.func @transform_0(%arg0: i32) -> (i32, i32, i32) {
    %c0_i32 = arith.constant 0 : i32
    %c0_i32_0 = arith.constant 0 : i32
    %c0_i32_1 = arith.constant 0 : i32
    return %arg0, %c0_i32, %c0_i32_0 : i32, i32, i32
  }
  func.func @transform_1(%arg0: i32) -> (i32, i32, i32) {
    %c0_i32 = arith.constant 0 : i32
    %c0_i32_0 = arith.constant 0 : i32
    %c0_i32_1 = arith.constant 0 : i32
    return %arg0, %c0_i32, %c0_i32_0 : i32, i32, i32
  }
  func.func @transform_2(%arg0: i32) -> (i32, i32, i32) {
    %c0_i32 = arith.constant 0 : i32
    %c0_i32_0 = arith.constant 0 : i32
    %c0_i32_1 = arith.constant 0 : i32
    %c0_i32_2 = arith.constant 0 : i32
    return %c0_i32, %c0_i32_0, %c0_i32_1 : i32, i32, i32
  }
  func.func @transform_3(%arg0: i32) -> (i32, i32, i32) {
    %c0_i32 = arith.constant 0 : i32
    %c0_i32_0 = arith.constant 0 : i32
    %c0_i32_1 = arith.constant 0 : i32
    %c0_i32_2 = arith.constant 0 : i32
    return %c0_i32, %c0_i32_0, %c0_i32_1 : i32, i32, i32
  }
  func.func @transform_4(%arg0: i32) -> (i32, i32, i32, i32) {
    %c0_i32 = arith.constant 0 : i32
    %c0_i32_0 = arith.constant 0 : i32
    %c0_i32_1 = arith.constant 0 : i32
    %c0_i32_2 = arith.constant 0 : i32
    %c0_i32_3 = arith.constant 0 : i32
    return %c0_i32, %c0_i32_0, %c0_i32_1, %c0_i32_2 : i32, i32, i32, i32
  }
  func.func @transform_5(%arg0: i32) -> (i32, i32, i32, i32) {
    %c0_i32 = arith.constant 0 : i32
    %c0_i32_0 = arith.constant 0 : i32
    %c0_i32_1 = arith.constant 0 : i32
    %c0_i32_2 = arith.constant 0 : i32
    %c0_i32_3 = arith.constant 0 : i32
    return %c0_i32, %c0_i32_0, %c0_i32_1, %c0_i32_2 : i32, i32, i32, i32
  }
  func.func @transform_6(%arg0: i32) -> (i32, i32, i32, i32) {
    %c0_i32 = arith.constant 0 : i32
    %c0_i32_0 = arith.constant 0 : i32
    %c0_i32_1 = arith.constant 0 : i32
    %c0_i32_2 = arith.constant 0 : i32
    %c0_i32_3 = arith.constant 0 : i32
    return %c0_i32, %c0_i32_0, %c0_i32_1, %c0_i32_2 : i32, i32, i32, i32
  }
  func.func @transform_7(%arg0: i32) -> (i32, i32, i32, i32) {
    %c0_i32 = arith.constant 0 : i32
    %c0_i32_0 = arith.constant 0 : i32
    %c0_i32_1 = arith.constant 0 : i32
    %c0_i32_2 = arith.constant 0 : i32
    %c0_i32_3 = arith.constant 0 : i32
    return %c0_i32, %c0_i32_0, %c0_i32_1, %c0_i32_2 : i32, i32, i32, i32
  }
  func.func @transform_8(%arg0: i32) -> (i32, i32, i32) {
    %c0_i32 = arith.constant 0 : i32
    %c0_i32_0 = arith.constant 0 : i32
    %c0_i32_1 = arith.constant 0 : i32
    %c0_i32_2 = arith.constant 0 : i32
    return %c0_i32, %c0_i32_0, %c0_i32_1 : i32, i32, i32
  }
  func.func @transform_9(%arg0: i32) -> (i32, i32, i32) {
    %c0_i32 = arith.constant 0 : i32
    %c0_i32_0 = arith.constant 0 : i32
    %c0_i32_1 = arith.constant 0 : i32
    %c0_i32_2 = arith.constant 0 : i32
    return %c0_i32, %c0_i32_0, %c0_i32_1 : i32, i32, i32
  }
  func.func @transform_10(%arg0: i32) -> (i32, i32, i32) {
    %c0_i32 = arith.constant 0 : i32
    %c0_i32_0 = arith.constant 0 : i32
    %c0_i32_1 = arith.constant 0 : i32
    %c0_i32_2 = arith.constant 0 : i32
    return %c0_i32, %c0_i32_0, %c0_i32_1 : i32, i32, i32
  }
  func.func @transform_11(%arg0: i32) -> (i32, i32, i32) {
    %c0_i32 = arith.constant 0 : i32
    %c0_i32_0 = arith.constant 0 : i32
    %c0_i32_1 = arith.constant 0 : i32
    %c0_i32_2 = arith.constant 0 : i32
    return %c0_i32, %c0_i32_0, %c0_i32_1 : i32, i32, i32
  }
  func.func @transform_12(%arg0: i32) -> (i32, i32, i32) {
    %c0_i32 = arith.constant 0 : i32
    %c0_i32_0 = arith.constant 0 : i32
    %c0_i32_1 = arith.constant 0 : i32
    return %arg0, %c0_i32, %c0_i32_0 : i32, i32, i32
  }
}

</mosaic_0001>

<llo_original>
// kernel: residual_coupling_block.1
$region0: #{residual_coupling_block.1}
  #allocation0 [shape = 'u32[]', space=smem, size = 0x4, offset = 0x4, fixed_abs, tag = 'smem constant byte address 0x4 - core index']
  #allocation1 [shape = 'u32[144,128]{1,0:T(1,128)}', space=vmem, size = 0x12000, scoped, tag = 'internal scratch']
  #allocation2 [shape = 'bf16[160,128]{1,0:T(16,128)(2,1)}', space=vmem, size = 0xa000, scoped, tag = 'scratch operand']
  %s0 = inlined_call_operand.vmem [shape: f32[2,4,128], index: 0, kind: input, shape index: {}]
  %s1 = inlined_call_operand.vmem [shape: f32[2,1,128], index: 1, kind: input, shape index: {}]
  %s2 = inlined_call_operand.vmem [shape: bf16[4,32,2], index: 2, kind: input, shape index: {}]
  %s3 = inlined_call_operand.vmem [shape: f32[4,32,1], index: 3, kind: input, shape index: {}]
  %s4 = inlined_call_operand.vmem [shape: bf16[4,4,64,160], index: 4, kind: input, shape index: {}]
  %s5 = inlined_call_operand.vmem [shape: f32[4,4,64,1], index: 5, kind: input, shape index: {}]
  %s6 = inlined_call_operand.vmem [shape: bf16[4,3,64,32], index: 6, kind: input, shape index: {}]
  %s7 = inlined_call_operand.vmem [shape: f32[4,3,64,1], index: 7, kind: input, shape index: {}]
  %s8 = inlined_call_operand.vmem [shape: bf16[4,32,32], index: 8, kind: input, shape index: {}]
  %s9 = inlined_call_operand.vmem [shape: f32[4,32,1], index: 9, kind: input, shape index: {}]
  %s10 = inlined_call_operand.vmem [shape: bf16[4,2,32], index: 10, kind: input, shape index: {}]
  %s11 = inlined_call_operand.vmem [shape: f32[4,2,1], index: 11, kind: input, shape index: {}]
  %s12 = inlined_call_operand.hbm [shape: f32[2,4,128], index: 12, kind: output, shape index: {}]
  %s13 = sld [smem:[#allocation0]]
  $region81: #{residual_coupling_block.1} parent=0
    _
  %s15 = ssub.s32 1, %s13
  %s16 = scalar_select 0, %s15, %s13
  $region1: #{residual_coupling_block.1} parent=0
    #allocation3 [shape = 'u8[4096]{0}', space=vmem, size = 0x1000, scoped, tag = 'output window, operand 0']
    #allocation4 [shape = 's32[2]{0}', space=sflag, size = 0x8, scoped, tag = 'scoped memory for residual_coupling_block.1']
    %17 = vsyncpa [#allocation4], 0
    %s18 = scalar_lea.sflag [#allocation4], 1
    %19 = vsyncpa %s18, 0
    loop: start=0, step=1, limit=4
    $region2: #{residual_coupling_block.1} parent=1 // loop_pre_header
      _
    $region3: #{residual_coupling_block.1} parent=1 // loop_header
      %s21 = sphi 0, %s25
      %p22 = scmp.ge.s32.totalorder %s21, 4
      %s31 = sphi 0, %s33
      %s34 = sphi 0, %s31
      %s35 = sphi 0, %s34
      %s51 = sphi 0, %s35
      %s57 = sphi 0, %s59
      %s60 = sphi 0, %s57
      %s61 = sphi 0, %s60
      %s77 = sphi 0, %s61
      %s81 = sphi 0, %s81
      %s83 = sphi 0, %s81
      %s84 = sphi 0, %s83
      %s98 = sphi 0, %s84
      %s102 = sphi 0, %s102
      %s104 = sphi 0, %s102
      %s105 = sphi 0, %s104
      %s119 = sphi 0, %s105
      %s123 = sphi 0, %s123
      %s125 = sphi 0, %s123
      %s126 = sphi 0, %s125
      %s140 = sphi 0, %s126
      %s144 = sphi 0, %s144
      %s146 = sphi 0, %s144
      %s147 = sphi 0, %s146
      %s161 = sphi 0, %s147
      %s165 = sphi 0, %s165
      %s167 = sphi 0, %s165
      %s168 = sphi 0, %s167
      %s182 = sphi 0, %s168
      %s186 = sphi 0, %s186
      %s188 = sphi 0, %s186
      %s189 = sphi 0, %s188
      %s203 = sphi 0, %s189
      %s207 = sphi 0, %s207
      %s209 = sphi 0, %s207
      %s210 = sphi 0, %s209
      %s224 = sphi 0, %s210
      %s228 = sphi 0, %s228
      %s230 = sphi 0, %s228
      %s231 = sphi 0, %s230
      %s245 = sphi 0, %s231
      %s249 = sphi 0, %s249
      %s251 = sphi 0, %s249
      %s252 = sphi 0, %s251
      %s266 = sphi 0, %s252
      %s270 = sphi 0, %s270
      %s272 = sphi 0, %s270
      %s273 = sphi 0, %s272
      %s287 = sphi 0, %s273
      %s293 = sphi 0, %s295
      %s296 = sphi 0, %s293
      %s297 = sphi 0, %s296
      %s313 = sphi 0, %s297
    $region4: #{residual_coupling_block.1} parent=1 // loop_header_branch
      %24 = sbr.rel (%p22) target = $region8
    $region5: #{residual_coupling_block.1} parent=1 // loop_body
      %s26 = ssub.s32 %s21, 1
      %s27 = ssub.s32 %s21, 2
      %s28 = sadd.s32 %s21, 1
      %s29 = ssub.s32 %s21, %s28
      %p30 = scmp.eq.s32.totalorder %s29, 0
      %s32 = sadd.s32 %s31, 1
      %s33 = scalar_select %p30, %s31, %s32
      %p36 = pneg %p30
      %p37 = scmp.eq.s32.totalorder %s21, 1
      %p38 = por %p36, %p37
      %p39 = scmp.ne.s32.totalorder %s31, %s34
      %p40 = scmp.eq.s32.totalorder %s21, 0
      %p41 = por %p39, %p40
      %p42 = scmp.ne.s32.totalorder %s31, %s34
      %p43 = scmp.eq.s32.totalorder %s26, 1
      %p44 = por %p42, %p43
      %p45 = scmp.ne.s32.totalorder %s34, %s35
      %p46 = scmp.eq.s32.totalorder %s26, 0
      %p47 = por %p45, %p46
      %p48 = scmp.ne.s32.totalorder %s34, %s35
      %p49 = scmp.eq.s32.totalorder %s27, 1
      %p50 = por %p48, %p49
      %p52 = scmp.ne.s32.totalorder %s35, %s51
      %p53 = scmp.eq.s32.totalorder %s27, 0
      %p54 = por %p52, %p53
      %s55 = ssub.s32 %s21, %s28
      %p56 = scmp.eq.s32.totalorder %s55, 0
      %s58 = sadd.s32 %s57, 1
      %s59 = scalar_select %p56, %s57, %s58
      %p62 = pneg %p56
      %p63 = scmp.eq.s32.totalorder %s21, 1
      %p64 = por %p62, %p63
      %p65 = scmp.ne.s32.totalorder %s57, %s60
      %p66 = scmp.eq.s32.totalorder %s21, 0
      %p67 = por %p65, %p66
      %p68 = scmp.ne.s32.totalorder %s57, %s60
      %p69 = scmp.eq.s32.totalorder %s26, 1
      %p70 = por %p68, %p69
      %p71 = scmp.ne.s32.totalorder %s60, %s61
      %p72 = scmp.eq.s32.totalorder %s26, 0
      %p73 = por %p71, %p72
      %p74 = scmp.ne.s32.totalorder %s60, %s61
      %p75 = scmp.eq.s32.totalorder %s27, 1
      %p76 = por %p74, %p75
      %p78 = scmp.ne.s32.totalorder %s61, %s77
      %p79 = scmp.eq.s32.totalorder %s27, 0
      %p80 = por %p78, %p79
      %s82 = sadd.s32 %s81, 1
      %p85 = scmp.eq.s32.totalorder %s21, 1
      %p86 = scmp.ne.s32.totalorder %s81, %s83
      %p87 = scmp.eq.s32.totalorder %s21, 0
      %p88 = por %p86, %p87
      %p89 = scmp.ne.s32.totalorder %s81, %s83
      %p90 = scmp.eq.s32.totalorder %s26, 1
      %p91 = por %p89, %p90
      %p92 = scmp.ne.s32.totalorder %s83, %s84
      %p93 = scmp.eq.s32.totalorder %s26, 0
      %p94 = por %p92, %p93
      %p95 = scmp.ne.s32.totalorder %s83, %s84
      %p96 = scmp.eq.s32.totalorder %s27, 1
      %p97 = por %p95, %p96
      %p99 = scmp.ne.s32.totalorder %s84, %s98
      %p100 = scmp.eq.s32.totalorder %s27, 0
      %p101 = por %p99, %p100
      %s103 = sadd.s32 %s102, 1
      %p106 = scmp.eq.s32.totalorder %s21, 1
      %p107 = scmp.ne.s32.totalorder %s102, %s104
      %p108 = scmp.eq.s32.totalorder %s21, 0
      %p109 = por %p107, %p108
      %p110 = scmp.ne.s32.totalorder %s102, %s104
      %p111 = scmp.eq.s32.totalorder %s26, 1
      %p112 = por %p110, %p111
      %p113 = scmp.ne.s32.totalorder %s104, %s105
      %p114 = scmp.eq.s32.totalorder %s26, 0
      %p115 = por %p113, %p114
      %p116 = scmp.ne.s32.totalorder %s104, %s105
      %p117 = scmp.eq.s32.totalorder %s27, 1
      %p118 = por %p116, %p117
      %p120 = scmp.ne.s32.totalorder %s105, %s119
      %p121 = scmp.eq.s32.totalorder %s27, 0
      %p122 = por %p120, %p121
      %s124 = sadd.s32 %s123, 1
      %p127 = scmp.eq.s32.totalorder %s21, 1
      %p128 = scmp.ne.s32.totalorder %s123, %s125
      %p129 = scmp.eq.s32.totalorder %s21, 0
      %p130 = por %p128, %p129
      %p131 = scmp.ne.s32.totalorder %s123, %s125
      %p132 = scmp.eq.s32.totalorder %s26, 1
      %p133 = por %p131, %p132
      %p134 = scmp.ne.s32.totalorder %s125, %s126
      %p135 = scmp.eq.s32.totalorder %s26, 0
      %p136 = por %p134, %p135
      %p137 = scmp.ne.s32.totalorder %s125, %s126
      %p138 = scmp.eq.s32.totalorder %s27, 1
      %p139 = por %p137, %p138
      %p141 = scmp.ne.s32.totalorder %s126, %s140
      %p142 = scmp.eq.s32.totalorder %s27, 0
      %p143 = por %p141, %p142
      %s145 = sadd.s32 %s144, 1
      %p148 = scmp.eq.s32.totalorder %s21, 1
      %p149 = scmp.ne.s32.totalorder %s144, %s146
      %p150 = scmp.eq.s32.totalorder %s21, 0
      %p151 = por %p149, %p150
      %p152 = scmp.ne.s32.totalorder %s144, %s146
      %p153 = scmp.eq.s32.totalorder %s26, 1
      %p154 = por %p152, %p153
      %p155 = scmp.ne.s32.totalorder %s146, %s147
      %p156 = scmp.eq.s32.totalorder %s26, 0
      %p157 = por %p155, %p156
      %p158 = scmp.ne.s32.totalorder %s146, %s147
      %p159 = scmp.eq.s32.totalorder %s27, 1
      %p160 = por %p158, %p159
      %p162 = scmp.ne.s32.totalorder %s147, %s161
      %p163 = scmp.eq.s32.totalorder %s27, 0
      %p164 = por %p162, %p163
      %s166 = sadd.s32 %s165, 1
      %p169 = scmp.eq.s32.totalorder %s21, 1
      %p170 = scmp.ne.s32.totalorder %s165, %s167
      %p171 = scmp.eq.s32.totalorder %s21, 0
      %p172 = por %p170, %p171
      %p173 = scmp.ne.s32.totalorder %s165, %s167
      %p174 = scmp.eq.s32.totalorder %s26, 1
      %p175 = por %p173, %p174
      %p176 = scmp.ne.s32.totalorder %s167, %s168
      %p177 = scmp.eq.s32.totalorder %s26, 0
      %p178 = por %p176, %p177
      %p179 = scmp.ne.s32.totalorder %s167, %s168
      %p180 = scmp.eq.s32.totalorder %s27, 1
      %p181 = por %p179, %p180
      %p183 = scmp.ne.s32.totalorder %s168, %s182
      %p184 = scmp.eq.s32.totalorder %s27, 0
      %p185 = por %p183, %p184
      %s187 = sadd.s32 %s186, 1
      %p190 = scmp.eq.s32.totalorder %s21, 1
      %p191 = scmp.ne.s32.totalorder %s186, %s188
      %p192 = scmp.eq.s32.totalorder %s21, 0
      %p193 = por %p191, %p192
      %p194 = scmp.ne.s32.totalorder %s186, %s188
      %p195 = scmp.eq.s32.totalorder %s26, 1
      %p196 = por %p194, %p195
      %p197 = scmp.ne.s32.totalorder %s188, %s189
      %p198 = scmp.eq.s32.totalorder %s26, 0
      %p199 = por %p197, %p198
      %p200 = scmp.ne.s32.totalorder %s188, %s189
      %p201 = scmp.eq.s32.totalorder %s27, 1
      %p202 = por %p200, %p201
      %p204 = scmp.ne.s32.totalorder %s189, %s203
      %p205 = scmp.eq.s32.totalorder %s27, 0
      %p206 = por %p204, %p205
      %s208 = sadd.s32 %s207, 1
      %p211 = scmp.eq.s32.totalorder %s21, 1
      %p212 = scmp.ne.s32.totalorder %s207, %s209
      %p213 = scmp.eq.s32.totalorder %s21, 0
      %p214 = por %p212, %p213
      %p215 = scmp.ne.s32.totalorder %s207, %s209
      %p216 = scmp.eq.s32.totalorder %s26, 1
      %p217 = por %p215, %p216
      %p218 = scmp.ne.s32.totalorder %s209, %s210
      %p219 = scmp.eq.s32.totalorder %s26, 0
      %p220 = por %p218, %p219
      %p221 = scmp.ne.s32.totalorder %s209, %s210
      %p222 = scmp.eq.s32.totalorder %s27, 1
      %p223 = por %p221, %p222
      %p225 = scmp.ne.s32.totalorder %s210, %s224
      %p226 = scmp.eq.s32.totalorder %s27, 0
      %p227 = por %p225, %p226
      %s229 = sadd.s32 %s228, 1
      %p232 = scmp.eq.s32.totalorder %s21, 1
      %p233 = scmp.ne.s32.totalorder %s228, %s230
      %p234 = scmp.eq.s32.totalorder %s21, 0
      %p235 = por %p233, %p234
      %p236 = scmp.ne.s32.totalorder %s228, %s230
      %p237 = scmp.eq.s32.totalorder %s26, 1
      %p238 = por %p236, %p237
      %p239 = scmp.ne.s32.totalorder %s230, %s231
      %p240 = scmp.eq.s32.totalorder %s26, 0
      %p241 = por %p239, %p240
      %p242 = scmp.ne.s32.totalorder %s230, %s231
      %p243 = scmp.eq.s32.totalorder %s27, 1
      %p244 = por %p242, %p243
      %p246 = scmp.ne.s32.totalorder %s231, %s245
      %p247 = scmp.eq.s32.totalorder %s27, 0
      %p248 = por %p246, %p247
      %s250 = sadd.s32 %s249, 1
      %p253 = scmp.eq.s32.totalorder %s21, 1
      %p254 = scmp.ne.s32.totalorder %s249, %s251
      %p255 = scmp.eq.s32.totalorder %s21, 0
      %p256 = por %p254, %p255
      %p257 = scmp.ne.s32.totalorder %s249, %s251
      %p258 = scmp.eq.s32.totalorder %s26, 1
      %p259 = por %p257, %p258
      %p260 = scmp.ne.s32.totalorder %s251, %s252
      %p261 = scmp.eq.s32.totalorder %s26, 0
      %p262 = por %p260, %p261
      %p263 = scmp.ne.s32.totalorder %s251, %s252
      %p264 = scmp.eq.s32.totalorder %s27, 1
      %p265 = por %p263, %p264
      %p267 = scmp.ne.s32.totalorder %s252, %s266
      %p268 = scmp.eq.s32.totalorder %s27, 0
      %p269 = por %p267, %p268
      %s271 = sadd.s32 %s270, 1
      %p274 = scmp.eq.s32.totalorder %s21, 1
      %p275 = scmp.ne.s32.totalorder %s270, %s272
      %p276 = scmp.eq.s32.totalorder %s21, 0
      %p277 = por %p275, %p276
      %p278 = scmp.ne.s32.totalorder %s270, %s272
      %p279 = scmp.eq.s32.totalorder %s26, 1
      %p280 = por %p278, %p279
      %p281 = scmp.ne.s32.totalorder %s272, %s273
      %p282 = scmp.eq.s32.totalorder %s26, 0
      %p283 = por %p281, %p282
      %p284 = scmp.ne.s32.totalorder %s272, %s273
      %p285 = scmp.eq.s32.totalorder %s27, 1
      %p286 = por %p284, %p285
      %p288 = scmp.ne.s32.totalorder %s273, %s287
      %p289 = scmp.eq.s32.totalorder %s27, 0
      %p290 = por %p288, %p289
      %s291 = ssub.s32 %s21, %s28
      %p292 = scmp.eq.s32.totalorder %s291, 0
      %s294 = sadd.s32 %s293, 1
      %s295 = scalar_select %p292, %s293, %s294
      %p298 = pneg %p292
      %p299 = scmp.eq.s32.totalorder %s21, 1
      %p300 = por %p298, %p299
      %p301 = scmp.ne.s32.totalorder %s293, %s296
      %p302 = scmp.eq.s32.totalorder %s21, 0
      %p303 = por %p301, %p302
      %p304 = scmp.ne.s32.totalorder %s293, %s296
      %p305 = scmp.eq.s32.totalorder %s26, 1
      %p306 = por %p304, %p305
      %p307 = scmp.ne.s32.totalorder %s296, %s297
      %p308 = scmp.eq.s32.totalorder %s26, 0
      %p309 = por %p307, %p308
      %p310 = scmp.ne.s32.totalorder %s296, %s297
      %p311 = scmp.eq.s32.totalorder %s27, 1
      %p312 = por %p310, %p311
      %p314 = scmp.ne.s32.totalorder %s297, %s313
      %p315 = scmp.eq.s32.totalorder %s27, 0
      %p316 = por %p314, %p315
      %p317 = scmp.le.s32.totalorder 1, %s21
      %p318 = scmp.lt.s32.totalorder %s21, 3
      %p319 = pnand %p317, %p318
      %p320 = pneg %p319
      // Predicated region
      $region9: #{residual_coupling_block.1} parent=5 // pred_check
        _
      $region10: #{residual_coupling_block.1} parent=5 // pred_check_branch
        %322 = sbr.rel (%p319) target = $region12
      $region11: #{residual_coupling_block.1} parent=5 // pred_region
        %s323 = ssub.s32 %s21, 1
        // Predicated region
        $region13: #{residual_coupling_block.1} parent=11 // pred_check
          %p324 = pneg %p94
        $region14: #{residual_coupling_block.1} parent=11 // pred_check_branch
          %326 = sbr.rel (%p324) target = $region16
        $region15: #{residual_coupling_block.1} parent=11 // pred_region
          _
        $region16: #{residual_coupling_block.1} parent=11 // pred_fallthru
          _
        // Predicated region
        $region17: #{residual_coupling_block.1} parent=11 // pred_check
          %p327 = pneg %p115
        $region18: #{residual_coupling_block.1} parent=11 // pred_check_branch
          %329 = sbr.rel (%p327) target = $region20
        $region19: #{residual_coupling_block.1} parent=11 // pred_region
          _
        $region20: #{residual_coupling_block.1} parent=11 // pred_fallthru
          _
        // Predicated region
        $region21: #{residual_coupling_block.1} parent=11 // pred_check
          %p330 = pneg %p136
        $region22: #{residual_coupling_block.1} parent=11 // pred_check_branch
          %332 = sbr.rel (%p330) target = $region24
        $region23: #{residual_coupling_block.1} parent=11 // pred_region
          _
        $region24: #{residual_coupling_block.1} parent=11 // pred_fallthru
          _
        // Predicated region
        $region25: #{residual_coupling_block.1} parent=11 // pred_check
          %p333 = pneg %p157
        $region26: #{residual_coupling_block.1} parent=11 // pred_check_branch
          %335 = sbr.rel (%p333) target = $region28
        $region27: #{residual_coupling_block.1} parent=11 // pred_region
          _
        $region28: #{residual_coupling_block.1} parent=11 // pred_fallthru
          _
        // Predicated region
        $region29: #{residual_coupling_block.1} parent=11 // pred_check
          %p336 = pneg %p178
        $region30: #{residual_coupling_block.1} parent=11 // pred_check_branch
          %338 = sbr.rel (%p336) target = $region32
        $region31: #{residual_coupling_block.1} parent=11 // pred_region
          _
        $region32: #{residual_coupling_block.1} parent=11 // pred_fallthru
          _
        // Predicated region
        $region33: #{residual_coupling_block.1} parent=11 // pred_check
          %p339 = pneg %p199
        $region34: #{residual_coupling_block.1} parent=11 // pred_check_branch
          %341 = sbr.rel (%p339) target = $region36
        $region35: #{residual_coupling_block.1} parent=11 // pred_region
          _
        $region36: #{residual_coupling_block.1} parent=11 // pred_fallthru
          _
        // Predicated region
        $region37: #{residual_coupling_block.1} parent=11 // pred_check
          %p342 = pneg %p220
        $region38: #{residual_coupling_block.1} parent=11 // pred_check_branch
          %344 = sbr.rel (%p342) target = $region40
        $region39: #{residual_coupling_block.1} parent=11 // pred_region
          _
        $region40: #{residual_coupling_block.1} parent=11 // pred_fallthru
          _
        // Predicated region
        $region41: #{residual_coupling_block.1} parent=11 // pred_check
          %p345 = pneg %p241
        $region42: #{residual_coupling_block.1} parent=11 // pred_check_branch
          %347 = sbr.rel (%p345) target = $region44
        $region43: #{residual_coupling_block.1} parent=11 // pred_region
          _
        $region44: #{residual_coupling_block.1} parent=11 // pred_fallthru
          _
        // Predicated region
        $region45: #{residual_coupling_block.1} parent=11 // pred_check
          %p348 = pneg %p262
        $region46: #{residual_coupling_block.1} parent=11 // pred_check_branch
          %350 = sbr.rel (%p348) target = $region48
        $region47: #{residual_coupling_block.1} parent=11 // pred_region
          _
        $region48: #{residual_coupling_block.1} parent=11 // pred_fallthru
          _
        // Predicated region
        $region49: #{residual_coupling_block.1} parent=11 // pred_check
          %p351 = pneg %p283
        $region50: #{residual_coupling_block.1} parent=11 // pred_check_branch
          %353 = sbr.rel (%p351) target = $region52
        $region51: #{residual_coupling_block.1} parent=11 // pred_region
          _
        $region52: #{residual_coupling_block.1} parent=11 // pred_fallthru
          _
      $region12: #{residual_coupling_block.1} parent=5 // pred_fallthru
        _
      %p354 = scmp.lt.s32.totalorder %s21, 2
      // Predicated region
      $region53: #{residual_coupling_block.1} parent=5 // pred_check
        %p355 = pneg %p354
      $region54: #{residual_coupling_block.1} parent=5 // pred_check_branch
        %357 = sbr.rel (%p355) target = $region56
      $region55: #{residual_coupling_block.1} parent=5 // pred_region
        // Predicated region
        $region57: #{residual_coupling_block.1} parent=55 // pred_check
          %p358 = pneg %p41
        $region58: #{residual_coupling_block.1} parent=55 // pred_check_branch
          %360 = sbr.rel (%p358) target = $region60
        $region59: #{residual_coupling_block.1} parent=55 // pred_region
          %p361 = scmp.lt.s32.totalorder %s21, 1
          %s362 = scalar_select %p361, %s21, 1
          %s363 = smul.addr %s362, 4
          %s364 = scalar_lea.vmem %s0, %s363
        $region60: #{residual_coupling_block.1} parent=55 // pred_fallthru
          _
        // Predicated region
        $region61: #{residual_coupling_block.1} parent=55 // pred_check
          %p365 = pneg %p67
        $region62: #{residual_coupling_block.1} parent=55 // pred_check_branch
          %367 = sbr.rel (%p365) target = $region64
        $region63: #{residual_coupling_block.1} parent=55 // pred_region
          %p368 = scmp.lt.s32.totalorder %s21, 1
          %s369 = scalar_select %p368, %s21, 1
          %s370 = scalar_lea.vmem %s1, %s369
        $region64: #{residual_coupling_block.1} parent=55 // pred_fallthru
          _
      $region56: #{residual_coupling_block.1} parent=5 // pred_fallthru
        _
      %p371 = scmp.le.s32.totalorder 1, %s21
      %p372 = scmp.lt.s32.totalorder %s21, 3
      %p373 = pnand %p371, %p372
      %p374 = pneg %p373
      // Predicated region
      $region65: #{residual_coupling_block.1} parent=5 // pred_check
        _
      $region66: #{residual_coupling_block.1} parent=5 // pred_check_branch
        %376 = sbr.rel (%p373) target = $region68
      $region67: #{residual_coupling_block.1} parent=5 // pred_region
        %s377 = ssub.s32 %s21, 1
        %p378 = scmp.lt.s32.totalorder %s26, 1
        %s379 = scalar_select %p378, %s26, 1
        %s380 = smul.addr %s379, 4
        %s381 = scalar_lea.vmem %s0, %s380
        %p382 = pneg %p47
        %p383 = pneg %p44
        %p384 = scmp.lt.s32.totalorder %s26, 1
        %s385 = scalar_select %p384, %s26, 1
        %s386 = scalar_lea.vmem %s1, %s385
        %p387 = pneg %p73
        %p388 = pneg %p70
        %p389 = pneg %p94
        %p390 = pneg %p91
        %p391 = pneg %p115
        %p392 = pneg %p112
        %p393 = pneg %p136
        %p394 = pneg %p133
        %p395 = pneg %p157
        %p396 = pneg %p154
        %p397 = pneg %p178
        %p398 = pneg %p175
        %p399 = pneg %p199
        %p400 = pneg %p196
        %p401 = pneg %p220
        %p402 = pneg %p217
        %p403 = pneg %p241
        %p404 = pneg %p238
        %p405 = pneg %p262
        %p406 = pneg %p259
        %p407 = pneg %p283
        %p408 = pneg %p280
        %p409 = pneg %p309
        %p410 = pneg %p306
        %s411 = sand.u32 %s296, 1
        %s412 = scalar_lea.sflag [#allocation4], %s411
        %s413 = sand.u32 %s296, 1
        %s414 = smul.addr %s413, 4
        %s415 = scalar_lea.vmem [#allocation3], %s414
        %p416 = scmp.lt.s32.totalorder %s26, 1
        %s417 = scalar_select %p416, %s26, 1
        %s418 = smul.addr %s417, 4
        %s419 = scalar_lea.vmem %s0, %s418
        %p420 = scmp.lt.s32.totalorder %s26, 1
        %s421 = scalar_select %p420, %s26, 1
        %s422 = scalar_lea.vmem %s1, %s421
        %v424 = vld [vmem:[%s422] sm:$0x1]
        %v425 = vld [vmem:[%s419] sm:$0x3]
        %v426 = vld [vmem:[%s419 + $0x2] sm:$0x3]
        %v427 = vld [vmem:[%s2] sm:$0xf]
        %v428 = vld [vmem:[%s2 + $0x4] sm:$0xf]
        %v429 = vld [vmem:[%s2 + $0x8] sm:$0xf]
        %v430 = vld [vmem:[%s2 + $0xc] sm:$0xf]
        %v431 = vpack.c.bf16 %v425, %v425
        %v432 = vld [vmem:[%s3] sm:$0xff]
        %v433 = vld [vmem:[%s3 + $0x8] sm:$0xff]
        %v434 = vld [vmem:[%s3 + $0x10] sm:$0xff]
        %v435 = vld [vmem:[%s3 + $0x18] sm:$0xff]
        %437 = vset.pattern.permute.xlu0 0
        %438 = vperm.xlu0 %437, %v432
        %v439 = vpop.permute.xlu0 %438
        %442 = vset.pattern.permute.xlu0 0
        %443 = vperm.xlu0 %442, %v433
        %v444 = vpop.permute.xlu0 %443
        %447 = vset.pattern.permute.xlu0 0
        %448 = vperm.xlu0 %447, %v434
        %v449 = vpop.permute.xlu0 %448
        %452 = vset.pattern.permute.xlu0 0
        %453 = vperm.xlu0 %452, %v435
        %v454 = vpop.permute.xlu0 %453
        %v460 = vunpack.c.l.b16 %v427
        %v461 = vunpack.c.l.b16 %v428
        %v462 = vunpack.c.l.b16 %v429
        %v463 = vunpack.c.l.b16 %v430
        %v464 = vpack.c.b16 %v461, %v460
        %v465 = vpack.c.b16 %v463, %v462
        %vm466 = vcmask 15360
        %v468 = vsel %vm466, %v464, 0
        %v471 = vsel %vm466, %v465, 0
        %vm473 = vcmask 1040384
        %v475 = vsel %vm473, %v431, 0
        %477 = vmatprep.subr.bf16.mxu0 0
        %478 = vmatpush1.bf16.msra.mxu0 %v475
        %479 = vmatprep.subr.bf16.mxu0 0
        %480 = vmatpush1.bf16.msra.mxu0 0
        %481 = vmatprep.subr.bf16.mxu0 0
        %482 = vmatpush1.bf16.msra.mxu0 0
        %483 = vmatprep.subr.bf16.mxu0 0
        %484 = vmatpush1.bf16.msra.mxu0 0
        %485 = vmatprep.subr.bf16.mxu0 0
        %486 = vmatpush1.bf16.msra.mxu0 0
        %487 = vmatprep.subr.bf16.mxu0 0
        %488 = vmatpush1.bf16.msra.mxu0 0
        %489 = vmatprep.subr.bf16.mxu0 0
        %490 = vmatpush1.bf16.msra.mxu0 0
        %491 = vmatprep.subr.bf16.mxu0 0
        %492 = vmatpush1.bf16.msra.mxu0 0
        %493 = vmatprep.subr.bf16.mxu0 0
        %494 = vmatpush1.bf16.msra.mxu0 0
        %495 = vmatprep.subr.bf16.mxu0 0
        %496 = vmatpush1.bf16.msra.mxu0 0
        %497 = vmatprep.subr.bf16.mxu0 0
        %498 = vmatpush1.bf16.msra.mxu0 0
        %499 = vmatprep.subr.bf16.mxu0 0
        %500 = vmatpush1.bf16.msra.mxu0 0
        %501 = vmatprep.subr.bf16.mxu0 0
        %502 = vmatpush1.bf16.msra.mxu0 0
        %503 = vmatprep.subr.bf16.mxu0 0
        %504 = vmatpush1.bf16.msra.mxu0 0
        %505 = vmatprep.subr.bf16.mxu0 0
        %506 = vmatpush1.bf16.msra.mxu0 0
        %507 = vmatprep.subr.bf16.mxu0 0
        %508 = vmatpush1.bf16.msra.mxu0 0
        %509 = vmatprep.mubr.bf16.mxu0 0
        %510 = vmatmul.mubr.bf16.gmra.mrb[0].mxu0 %v468
        %v511 = vpop.f32.mrb[0].mxu0
        %v512 = vadd.f32 %v439, %v511
        %v513 = vpop.f32.mrb[0].mxu0
        %v514 = vpop.f32.mrb[0].mxu0
        %v515 = vadd.f32 %v444, %v514
        %v516 = vpop.f32.mrb[0].mxu0
        %517 = vmatprep.mubr.bf16.mxu0 0
        %518 = vmatmul.mubr.bf16.gmra.mrb[0].mxu0 %v471
        %v519 = vpop.f32.mrb[0].mxu0
        %v520 = vadd.f32 %v449, %v519
        %v521 = vpop.f32.mrb[0].mxu0
        %v522 = vpop.f32.mrb[0].mxu0
        %v523 = vadd.f32 %v454, %v522
        %v524 = vpop.f32.mrb[0].mxu0
        %525 = vdwg.mxu0
        %v527 = vlaneseq
        %v528 = vshrl.u32 %v527, 7
        %v529 = vsub.s32 0, %v528
        %v530 = vrot.slane %v424, %v529
        %v532 = vmul.f32 %v512, %v530
        %v533 = vmul.f32 %v515, %v530
        %v534 = vmul.f32 %v520, %v530
        %v535 = vmul.f32 %v523, %v530
        %536 = vrot.lane.b32.xlu0 %v532, 2
        %v537 = vpop.permute.xlu0 %536
        %538 = vrot.lane.b32.xlu0 %v533, 2
        %v539 = vpop.permute.xlu0 %538
        %540 = vrot.lane.b32.xlu0 %v534, 2
        %v541 = vpop.permute.xlu0 %540
        %542 = vrot.lane.b32.xlu0 %v535, 2
        %v543 = vpop.permute.xlu0 %542
        %v544 = vpack.c.bf16 %v539, %v537
        %v545 = vpack.c.bf16 %v543, %v541
        %546 = vst [vmem:[#allocation2] sm:$0xff] %v544
        %547 = vst [vmem:[#allocation2 + $0x8] sm:$0xff] %v545
        %548 = vrot.lane.b32.xlu0 %v532, 1
        %v549 = vpop.permute.xlu0 %548
        %550 = vrot.lane.b32.xlu0 %v533, 1
        %v551 = vpop.permute.xlu0 %550
        %552 = vrot.lane.b32.xlu0 %v534, 1
        %v553 = vpop.permute.xlu0 %552
        %554 = vrot.lane.b32.xlu0 %v535, 1
        %v555 = vpop.permute.xlu0 %554
        %v556 = vpack.c.bf16 %v551, %v549
        %v557 = vpack.c.bf16 %v555, %v553
        %558 = vst [vmem:[#allocation2 + $0x10] sm:$0xff] %v556
        %559 = vst [vmem:[#allocation2 + $0x18] sm:$0xff] %v557
        %v560 = vpack.c.bf16 %v533, %v532
        %v561 = vpack.c.bf16 %v535, %v534
        %562 = vst [vmem:[#allocation2 + $0x20] sm:$0xff] %v560
        %563 = vst [vmem:[#allocation2 + $0x28] sm:$0xff] %v561
        %564 = vrot.lane.b32.xlu0 %v532, 127
        %v565 = vpop.permute.xlu0 %564
        %566 = vrot.lane.b32.xlu0 %v533, 127
        %v567 = vpop.permute.xlu0 %566
        %568 = vrot.lane.b32.xlu0 %v534, 127
        %v569 = vpop.permute.xlu0 %568
        %570 = vrot.lane.b32.xlu0 %v535, 127
        %v571 = vpop.permute.xlu0 %570
        %v572 = vpack.c.bf16 %v567, %v565
        %v573 = vpack.c.bf16 %v571, %v569
        %574 = vst [vmem:[#allocation2 + $0x30] sm:$0xff] %v572
        %575 = vst [vmem:[#allocation2 + $0x38] sm:$0xff] %v573
        %576 = vrot.lane.b32.xlu0 %v532, 126
        %v577 = vpop.permute.xlu0 %576
        %578 = vrot.lane.b32.xlu0 %v533, 126
        %v579 = vpop.permute.xlu0 %578
        %580 = vrot.lane.b32.xlu0 %v534, 126
        %v581 = vpop.permute.xlu0 %580
        %582 = vrot.lane.b32.xlu0 %v535, 126
        %v583 = vpop.permute.xlu0 %582
        %v584 = vpack.c.bf16 %v579, %v577
        %v585 = vpack.c.bf16 %v583, %v581
        %586 = vst [vmem:[#allocation2 + $0x40] sm:$0xff] %v584
        %587 = vst [vmem:[#allocation2 + $0x48] sm:$0xff] %v585
        %v588 = vld [vmem:[%s4] sm:$0xff]
        %v589 = vld [vmem:[%s4 + $0x8] sm:$0xff]
        %v590 = vld [vmem:[%s4 + $0x10] sm:$0xff]
        %v591 = vld [vmem:[%s4 + $0x18] sm:$0xff]
        %v592 = vld [vmem:[%s4 + $0x20] sm:$0xff]
        %v593 = vld [vmem:[%s4 + $0x28] sm:$0xff]
        %v594 = vld [vmem:[%s4 + $0x30] sm:$0xff]
        %v595 = vld [vmem:[%s4 + $0x38] sm:$0xff]
        %v596 = vld [vmem:[#allocation2] sm:$0xff]
        %v597 = vld [vmem:[#allocation2 + $0x8] sm:$0xff]
        %v598 = vld [vmem:[#allocation2 + $0x10] sm:$0xff]
        %v599 = vld [vmem:[#allocation2 + $0x18] sm:$0xff]
        %v600 = vld [vmem:[#allocation2 + $0x20] sm:$0xff]
        %v601 = vld [vmem:[#allocation2 + $0x28] sm:$0xff]
        %v602 = vld [vmem:[#allocation2 + $0x30] sm:$0xff]
        %v603 = vld [vmem:[#allocation2 + $0x38] sm:$0xff]
        %v604 = vld [vmem:[#allocation2 + $0x40] sm:$0xff]
        %v605 = vld [vmem:[#allocation2 + $0x48] sm:$0xff]
        %v606 = vld [vmem:[%s5] sm:$0xff]
        %v607 = vld [vmem:[%s5 + $0x8] sm:$0xff]
        %v608 = vld [vmem:[%s5 + $0x10] sm:$0xff]
        %v609 = vld [vmem:[%s5 + $0x18] sm:$0xff]
        %v610 = vld [vmem:[%s5 + $0x20] sm:$0xff]
        %v611 = vld [vmem:[%s5 + $0x28] sm:$0xff]
        %v612 = vld [vmem:[%s5 + $0x30] sm:$0xff]
        %v613 = vld [vmem:[%s5 + $0x38] sm:$0xff]
        %615 = vset.pattern.permute.xlu0 0
        %616 = vperm.xlu0 %615, %v606
        %v617 = vpop.permute.xlu0 %616
        %620 = vset.pattern.permute.xlu0 0
        %621 = vperm.xlu0 %620, %v607
        %v622 = vpop.permute.xlu0 %621
        %625 = vset.pattern.permute.xlu0 0
        %626 = vperm.xlu0 %625, %v608
        %v627 = vpop.permute.xlu0 %626
        %630 = vset.pattern.permute.xlu0 0
        %631 = vperm.xlu0 %630, %v609
        %v632 = vpop.permute.xlu0 %631
        %635 = vset.pattern.permute.xlu0 0
        %636 = vperm.xlu0 %635, %v610
        %v637 = vpop.permute.xlu0 %636
        %640 = vset.pattern.permute.xlu0 0
        %641 = vperm.xlu0 %640, %v611
        %v642 = vpop.permute.xlu0 %641
        %645 = vset.pattern.permute.xlu0 0
        %646 = vperm.xlu0 %645, %v612
        %v647 = vpop.permute.xlu0 %646
        %650 = vset.pattern.permute.xlu0 0
        %651 = vperm.xlu0 %650, %v613
        %v652 = vpop.permute.xlu0 %651
        %v662 = vunpack.c.l.b16 %v588
        %v663 = vunpack.c.h.b16 %v588
        %v664 = vunpack.c.l.b16 %v589
        %v665 = vunpack.c.h.b16 %v589
        %v666 = vunpack.c.l.b16 %v590
        %v667 = vunpack.c.h.b16 %v590
        %v668 = vunpack.c.l.b16 %v591
        %v669 = vunpack.c.h.b16 %v591
        %v670 = vunpack.c.l.b16 %v592
        %v671 = vunpack.c.h.b16 %v592
        %v672 = vunpack.c.l.b16 %v593
        %v673 = vunpack.c.h.b16 %v593
        %v674 = vunpack.c.l.b16 %v594
        %v675 = vunpack.c.h.b16 %v594
        %v676 = vunpack.c.l.b16 %v595
        %v677 = vunpack.c.h.b16 %v595
        %v678 = vpack.c.b16 %v664, %v662
        %v679 = vpack.c.b16 %v665, %v663
        %v680 = vpack.c.b16 %v668, %v666
        %v681 = vpack.c.b16 %v669, %v667
        %v682 = vpack.c.b16 %v672, %v670
        %v683 = vpack.c.b16 %v673, %v671
        %v684 = vpack.c.b16 %v676, %v674
        %v685 = vpack.c.b16 %v677, %v675
        %vm690 = vcmask 261120
        %v692 = vsel %vm690, %v679, 0
        %v695 = vsel %vm690, %v681, 0
        %v698 = vsel %vm690, %v683, 0
        %v701 = vsel %vm690, %v685, 0
        %703 = vmatprep.subr.bf16.mxu0 0
        %704 = vmatpush1.bf16.msra.mxu0 %v596
        %705 = vmatprep.subr.bf16.mxu0 0
        %706 = vmatpush1.bf16.msra.mxu0 %v597
        %707 = vmatprep.subr.bf16.mxu0 0
        %708 = vmatpush1.bf16.msra.mxu0 %v598
        %709 = vmatprep.subr.bf16.mxu0 0
        %710 = vmatpush1.bf16.msra.mxu0 %v599
        %711 = vmatprep.subr.bf16.mxu0 0
        %712 = vmatpush1.bf16.msra.mxu0 %v600
        %713 = vmatprep.subr.bf16.mxu0 0
        %714 = vmatpush1.bf16.msra.mxu0 %v601
        %715 = vmatprep.subr.bf16.mxu0 0
        %716 = vmatpush1.bf16.msra.mxu0 %v602
        %717 = vmatprep.subr.bf16.mxu0 0
        %718 = vmatpush1.bf16.msra.mxu0 %v603
        %719 = vmatprep.subr.bf16.mxu0 0
        %720 = vmatpush1.bf16.msra.mxu0 %v604
        %721 = vmatprep.subr.bf16.mxu0 0
        %722 = vmatpush1.bf16.msra.mxu0 %v605
        %723 = vmatprep.subr.bf16.mxu0 0
        %724 = vmatpush1.bf16.msra.mxu0 0
        %725 = vmatprep.subr.bf16.mxu0 0
        %726 = vmatpush1.bf16.msra.mxu0 0
        %727 = vmatprep.subr.bf16.mxu0 0
        %728 = vmatpush1.bf16.msra.mxu0 0
        %729 = vmatprep.subr.bf16.mxu0 0
        %730 = vmatpush1.bf16.msra.mxu0 0
        %731 = vmatprep.subr.bf16.mxu0 0
        %732 = vmatpush1.bf16.msra.mxu0 0
        %733 = vmatprep.subr.bf16.mxu0 0
        %734 = vmatpush1.bf16.msra.mxu0 0
        %735 = vmatprep.mubr.bf16.mxu0 %v692
        %736 = vmatmul.mubr.bf16.gmra.mrb[0].mxu0 %v678
        %v737 = vpop.f32.mrb[0].mxu0
        %v738 = vadd.f32 %v617, %v737
        %v739 = vpop.f32.mrb[0].mxu0
        %v740 = vpop.f32.mrb[0].mxu0
        %v741 = vadd.f32 %v622, %v740
        %v742 = vpop.f32.mrb[0].mxu0
        %743 = vmatprep.mubr.bf16.mxu0 %v695
        %744 = vmatmul.mubr.bf16.gmra.mrb[0].mxu0 %v680
        %v745 = vpop.f32.mrb[0].mxu0
        %v746 = vadd.f32 %v627, %v745
        %v747 = vpop.f32.mrb[0].mxu0
        %v748 = vpop.f32.mrb[0].mxu0
        %v749 = vadd.f32 %v632, %v748
        %v750 = vpop.f32.mrb[0].mxu0
        %751 = vmatprep.mubr.bf16.mxu0 %v698
        %752 = vmatmul.mubr.bf16.gmra.mrb[0].mxu0 %v682
        %v753 = vpop.f32.mrb[0].mxu0
        %v754 = vadd.f32 %v637, %v753
        %v755 = vpop.f32.mrb[0].mxu0
        %v756 = vpop.f32.mrb[0].mxu0
        %v757 = vadd.f32 %v642, %v756
        %v758 = vpop.f32.mrb[0].mxu0
        %759 = vmatprep.mubr.bf16.mxu0 %v701
        %760 = vmatmul.mubr.bf16.gmra.mrb[0].mxu0 %v684
        %v761 = vpop.f32.mrb[0].mxu0
        %v762 = vadd.f32 %v647, %v761
        %v763 = vpop.f32.mrb[0].mxu0
        %v764 = vpop.f32.mrb[0].mxu0
        %v765 = vadd.f32 %v652, %v764
        %v766 = vpop.f32.mrb[0].mxu0
        %767 = vdwg.mxu0
        %v768 = vtanh.pop %v738
        %v769 = vtanh.pop %v741
        %v770 = vtanh.pop %v746
        %v771 = vtanh.pop %v749
        %v772 = vxor.u32 %v754, 2147483648
        %v773 = vxor.u32 %v757, 2147483648
        %v774 = vxor.u32 %v762, 2147483648
        %v775 = vxor.u32 %v765, 2147483648
        %v776 = vmul.f32 %v772, 1.442695
        %v777 = vpow.pop %v776
        %v778 = vmul.f32 %v773, 1.442695
        %v779 = vpow.pop %v778
        %v780 = vmul.f32 %v774, 1.442695
        %v781 = vpow.pop %v780
        %v782 = vmul.f32 %v775, 1.442695
        %v783 = vpow.pop %v782
        %v784 = vadd.f32 %v777, 1.0
        %v785 = vadd.f32 %v779, 1.0
        %v786 = vadd.f32 %v781, 1.0
        %v787 = vadd.f32 %v783, 1.0
        %v788 = vrcp.pop %v784
        %v789 = vmul.f32 1.0, %v788
        %v790 = vrcp.pop %v785
        %v791 = vmul.f32 1.0, %v790
        %v792 = vrcp.pop %v786
        %v793 = vmul.f32 1.0, %v792
        %v794 = vrcp.pop %v787
        %v795 = vmul.f32 1.0, %v794
        %v796 = vmul.f32 %v768, %v789
        %v797 = vmul.f32 %v769, %v791
        %v798 = vmul.f32 %v770, %v793
        %v799 = vmul.f32 %v771, %v795
        %v800 = vld [vmem:[%s6] sm:$0xf]
        %v801 = vld [vmem:[%s6 + $0x4] sm:$0xf]
        %v802 = vld [vmem:[%s6 + $0x8] sm:$0xf]
        %v803 = vld [vmem:[%s6 + $0xc] sm:$0xf]
        %v804 = vld [vmem:[%s6 + $0x10] sm:$0xf]
        %v805 = vld [vmem:[%s6 + $0x14] sm:$0xf]
        %v806 = vld [vmem:[%s6 + $0x18] sm:$0xf]
        %v807 = vld [vmem:[%s6 + $0x1c] sm:$0xf]
        %v808 = vpack.c.bf16 %v797, %v796
        %v809 = vpack.c.bf16 %v799, %v798
        %v810 = vld [vmem:[%s7] sm:$0xff]
        %v811 = vld [vmem:[%s7 + $0x8] sm:$0xff]
        %v812 = vld [vmem:[%s7 + $0x10] sm:$0xff]
        %v813 = vld [vmem:[%s7 + $0x18] sm:$0xff]
        %v814 = vld [vmem:[%s7 + $0x20] sm:$0xff]
        %v815 = vld [vmem:[%s7 + $0x28] sm:$0xff]
        %v816 = vld [vmem:[%s7 + $0x30] sm:$0xff]
        %v817 = vld [vmem:[%s7 + $0x38] sm:$0xff]
        %819 = vset.pattern.permute.xlu0 0
        %820 = vperm.xlu0 %819, %v810
        %v821 = vpop.permute.xlu0 %820
        %824 = vset.pattern.permute.xlu0 0
        %825 = vperm.xlu0 %824, %v811
        %v826 = vpop.permute.xlu0 %825
        %829 = vset.pattern.permute.xlu0 0
        %830 = vperm.xlu0 %829, %v812
        %v831 = vpop.permute.xlu0 %830
        %834 = vset.pattern.permute.xlu0 0
        %835 = vperm.xlu0 %834, %v813
        %v836 = vpop.permute.xlu0 %835
        %839 = vset.pattern.permute.xlu0 0
        %840 = vperm.xlu0 %839, %v814
        %v841 = vpop.permute.xlu0 %840
        %844 = vset.pattern.permute.xlu0 0
        %845 = vperm.xlu0 %844, %v815
        %v846 = vpop.permute.xlu0 %845
        %849 = vset.pattern.permute.xlu0 0
        %850 = vperm.xlu0 %849, %v816
        %v851 = vpop.permute.xlu0 %850
        %854 = vset.pattern.permute.xlu0 0
        %855 = vperm.xlu0 %854, %v817
        %v856 = vpop.permute.xlu0 %855
        %v866 = vunpack.c.l.b16 %v800
        %v867 = vunpack.c.l.b16 %v801
        %v868 = vunpack.c.l.b16 %v802
        %v869 = vunpack.c.l.b16 %v803
        %v870 = vunpack.c.l.b16 %v804
        %v871 = vunpack.c.l.b16 %v805
        %v872 = vunpack.c.l.b16 %v806
        %v873 = vunpack.c.l.b16 %v807
        %v874 = vpack.c.b16 %v867, %v866
        %v875 = vpack.c.b16 %v869, %v868
        %v876 = vpack.c.b16 %v871, %v870
        %v877 = vpack.c.b16 %v873, %v872
        %v879 = vsel %vm690, %v874, 0
        %v882 = vsel %vm690, %v875, 0
        %v885 = vsel %vm690, %v876, 0
        %v888 = vsel %vm690, %v877, 0
        %890 = vmatprep.subr.bf16.mxu0 0
        %891 = vmatpush1.bf16.msra.mxu0 %v808
        %892 = vmatprep.subr.bf16.mxu0 0
        %893 = vmatpush1.bf16.msra.mxu0 %v809
        %894 = vmatprep.subr.bf16.mxu0 0
        %895 = vmatpush1.bf16.msra.mxu0 0
        %896 = vmatprep.subr.bf16.mxu0 0
        %897 = vmatpush1.bf16.msra.mxu0 0
        %898 = vmatprep.subr.bf16.mxu0 0
        %899 = vmatpush1.bf16.msra.mxu0 0
        %900 = vmatprep.subr.bf16.mxu0 0
        %901 = vmatpush1.bf16.msra.mxu0 0
        %902 = vmatprep.subr.bf16.mxu0 0
        %903 = vmatpush1.bf16.msra.mxu0 0
        %904 = vmatprep.subr.bf16.mxu0 0
        %905 = vmatpush1.bf16.msra.mxu0 0
        %906 = vmatprep.subr.bf16.mxu0 0
        %907 = vmatpush1.bf16.msra.mxu0 0
        %908 = vmatprep.subr.bf16.mxu0 0
        %909 = vmatpush1.bf16.msra.mxu0 0
        %910 = vmatprep.subr.bf16.mxu0 0
        %911 = vmatpush1.bf16.msra.mxu0 0
        %912 = vmatprep.subr.bf16.mxu0 0
        %913 = vmatpush1.bf16.msra.mxu0 0
        %914 = vmatprep.subr.bf16.mxu0 0
        %915 = vmatpush1.bf16.msra.mxu0 0
        %916 = vmatprep.subr.bf16.mxu0 0
        %917 = vmatpush1.bf16.msra.mxu0 0
        %918 = vmatprep.subr.bf16.mxu0 0
        %919 = vmatpush1.bf16.msra.mxu0 0
        %920 = vmatprep.subr.bf16.mxu0 0
        %921 = vmatpush1.bf16.msra.mxu0 0
        %922 = vmatprep.mubr.bf16.mxu0 0
        %923 = vmatmul.mubr.bf16.gmra.mrb[0].mxu0 %v879
        %v924 = vpop.f32.mrb[0].mxu0
        %v925 = vadd.f32 %v821, %v924
        %v926 = vpop.f32.mrb[0].mxu0
        %v927 = vpop.f32.mrb[0].mxu0
        %v928 = vadd.f32 %v826, %v927
        %v929 = vpop.f32.mrb[0].mxu0
        %930 = vmatprep.mubr.bf16.mxu0 0
        %931 = vmatmul.mubr.bf16.gmra.mrb[0].mxu0 %v882
        %v932 = vpop.f32.mrb[0].mxu0
        %v933 = vadd.f32 %v831, %v932
        %v934 = vpop.f32.mrb[0].mxu0
        %v935 = vpop.f32.mrb[0].mxu0
        %v936 = vadd.f32 %v836, %v935
        %v937 = vpop.f32.mrb[0].mxu0
        %938 = vmatprep.mubr.bf16.mxu0 0
        %939 = vmatmul.mubr.bf16.gmra.mrb[0].mxu0 %v885
        %v940 = vpop.f32.mrb[0].mxu0
        %v941 = vadd.f32 %v841, %v940
        %v942 = vpop.f32.mrb[0].mxu0
        %v943 = vpop.f32.mrb[0].mxu0
        %v944 = vadd.f32 %v846, %v943
        %v945 = vpop.f32.mrb[0].mxu0
        %946 = vmatprep.mubr.bf16.mxu0 0
        %947 = vmatmul.mubr.bf16.gmra.mrb[0].mxu0 %v888
        %v948 = vpop.f32.mrb[0].mxu0
        %v949 = vadd.f32 %v851, %v948
        %v950 = vpop.f32.mrb[0].mxu0
        %v951 = vpop.f32.mrb[0].mxu0
        %v952 = vadd.f32 %v856, %v951
        %v953 = vpop.f32.mrb[0].mxu0
        %954 = vdwg.mxu0
        %v955 = vadd.f32 %v532, %v925
        %v956 = vadd.f32 %v533, %v928
        %v957 = vadd.f32 %v534, %v933
        %v958 = vadd.f32 %v535, %v936
        %v959 = vmul.f32 %v955, %v530
        %v960 = vmul.f32 %v956, %v530
        %v961 = vmul.f32 %v957, %v530
        %v962 = vmul.f32 %v958, %v530
        %963 = vrot.lane.b32.xlu0 %v959, 2
        %v964 = vpop.permute.xlu0 %963
        %965 = vrot.lane.b32.xlu0 %v960, 2
        %v966 = vpop.permute.xlu0 %965
        %967 = vrot.lane.b32.xlu0 %v961, 2
        %v968 = vpop.permute.xlu0 %967
        %969 = vrot.lane.b32.xlu0 %v962, 2
        %v970 = vpop.permute.xlu0 %969
        %v971 = vpack.c.bf16 %v966, %v964
        %v972 = vpack.c.bf16 %v970, %v968
        %973 = vst [vmem:[#allocation2] sm:$0xff] %v971
        %974 = vst [vmem:[#allocation2 + $0x8] sm:$0xff] %v972
        %975 = vrot.lane.b32.xlu0 %v959, 1
        %v976 = vpop.permute.xlu0 %975
        %977 = vrot.lane.b32.xlu0 %v960, 1
        %v978 = vpop.permute.xlu0 %977
        %979 = vrot.lane.b32.xlu0 %v961, 1
        %v980 = vpop.permute.xlu0 %979
        %981 = vrot.lane.b32.xlu0 %v962, 1
        %v982 = vpop.permute.xlu0 %981
        %v983 = vpack.c.bf16 %v978, %v976
        %v984 = vpack.c.bf16 %v982, %v980
        %985 = vst [vmem:[#allocation2 + $0x10] sm:$0xff] %v983
        %986 = vst [vmem:[#allocation2 + $0x18] sm:$0xff] %v984
        %v987 = vpack.c.bf16 %v960, %v959
        %v988 = vpack.c.bf16 %v962, %v961
        %989 = vst [vmem:[#allocation2 + $0x20] sm:$0xff] %v987
        %990 = vst [vmem:[#allocation2 + $0x28] sm:$0xff] %v988
        %991 = vrot.lane.b32.xlu0 %v959, 127
        %v992 = vpop.permute.xlu0 %991
        %993 = vrot.lane.b32.xlu0 %v960, 127
        %v994 = vpop.permute.xlu0 %993
        %995 = vrot.lane.b32.xlu0 %v961, 127
        %v996 = vpop.permute.xlu0 %995
        %997 = vrot.lane.b32.xlu0 %v962, 127
        %v998 = vpop.permute.xlu0 %997
        %v999 = vpack.c.bf16 %v994, %v992
        %v1000 = vpack.c.bf16 %v998, %v996
        %1001 = vst [vmem:[#allocation2 + $0x30] sm:$0xff] %v999
        %1002 = vst [vmem:[#allocation2 + $0x38] sm:$0xff] %v1000
        %1003 = vrot.lane.b32.xlu0 %v959, 126
        %v1004 = vpop.permute.xlu0 %1003
        %1005 = vrot.lane.b32.xlu0 %v960, 126
        %v1006 = vpop.permute.xlu0 %1005
        %1007 = vrot.lane.b32.xlu0 %v961, 126
        %v1008 = vpop.permute.xlu0 %1007
        %1009 = vrot.lane.b32.xlu0 %v962, 126
        %v1010 = vpop.permute.xlu0 %1009
        %v1011 = vpack.c.bf16 %v1006, %v1004
        %v1012 = vpack.c.bf16 %v1010, %v1008
        %1013 = vst [vmem:[#allocation2 + $0x40] sm:$0xff] %v1011
        %1014 = vst [vmem:[#allocation2 + $0x48] sm:$0xff] %v1012
        %s1015 = scalar_lea.vmem %s4, 64
        %v1016 = vld [vmem:[%s1015] sm:$0xff]
        %v1017 = vld [vmem:[%s1015 + $0x8] sm:$0xff]
        %v1018 = vld [vmem:[%s1015 + $0x10] sm:$0xff]
        %v1019 = vld [vmem:[%s1015 + $0x18] sm:$0xff]
        %v1020 = vld [vmem:[%s1015 + $0x20] sm:$0xff]
        %v1021 = vld [vmem:[%s1015 + $0x28] sm:$0xff]
        %v1022 = vld [vmem:[%s1015 + $0x30] sm:$0xff]
        %v1023 = vld [vmem:[%s1015 + $0x38] sm:$0xff]
        %v1024 = vld [vmem:[#allocation2] sm:$0xff]
        %v1025 = vld [vmem:[#allocation2 + $0x8] sm:$0xff]
        %v1026 = vld [vmem:[#allocation2 + $0x10] sm:$0xff]
        %v1027 = vld [vmem:[#allocation2 + $0x18] sm:$0xff]
        %v1028 = vld [vmem:[#allocation2 + $0x20] sm:$0xff]
        %v1029 = vld [vmem:[#allocation2 + $0x28] sm:$0xff]
        %v1030 = vld [vmem:[#allocation2 + $0x30] sm:$0xff]
        %v1031 = vld [vmem:[#allocation2 + $0x38] sm:$0xff]
        %v1032 = vld [vmem:[#allocation2 + $0x40] sm:$0xff]
        %v1033 = vld [vmem:[#allocation2 + $0x48] sm:$0xff]
        %s1034 = scalar_lea.vmem %s5, 64
        %v1035 = vld [vmem:[%s1034] sm:$0xff]
        %v1036 = vld [vmem:[%s1034 + $0x8] sm:$0xff]
        %v1037 = vld [vmem:[%s1034 + $0x10] sm:$0xff]
        %v1038 = vld [vmem:[%s1034 + $0x18] sm:$0xff]
        %v1039 = vld [vmem:[%s1034 + $0x20] sm:$0xff]
        %v1040 = vld [vmem:[%s1034 + $0x28] sm:$0xff]
        %v1041 = vld [vmem:[%s1034 + $0x30] sm:$0xff]
        %v1042 = vld [vmem:[%s1034 + $0x38] sm:$0xff]
        %1044 = vset.pattern.permute.xlu0 0
        %1045 = vperm.xlu0 %1044, %v1035
        %v1046 = vpop.permute.xlu0 %1045
        %1049 = vset.pattern.permute.xlu0 0
        %1050 = vperm.xlu0 %1049, %v1036
        %v1051 = vpop.permute.xlu0 %1050
        %1054 = vset.pattern.permute.xlu0 0
        %1055 = vperm.xlu0 %1054, %v1037
        %v1056 = vpop.permute.xlu0 %1055
        %1059 = vset.pattern.permute.xlu0 0
        %1060 = vperm.xlu0 %1059, %v1038
        %v1061 = vpop.permute.xlu0 %1060
        %1064 = vset.pattern.permute.xlu0 0
        %1065 = vperm.xlu0 %1064, %v1039
        %v1066 = vpop.permute.xlu0 %1065
        %1069 = vset.pattern.permute.xlu0 0
        %1070 = vperm.xlu0 %1069, %v1040
        %v1071 = vpop.permute.xlu0 %1070
        %1074 = vset.pattern.permute.xlu0 0
        %1075 = vperm.xlu0 %1074, %v1041
        %v1076 = vpop.permute.xlu0 %1075
        %1079 = vset.pattern.permute.xlu0 0
        %1080 = vperm.xlu0 %1079, %v1042
        %v1081 = vpop.permute.xlu0 %1080
        %v1091 = vunpack.c.l.b16 %v1016
        %v1092 = vunpack.c.h.b16 %v1016
        %v1093 = vunpack.c.l.b16 %v1017
        %v1094 = vunpack.c.h.b16 %v1017
        %v1095 = vunpack.c.l.b16 %v1018
        %v1096 = vunpack.c.h.b16 %v1018
        %v1097 = vunpack.c.l.b16 %v1019
        %v1098 = vunpack.c.h.b16 %v1019
        %v1099 = vunpack.c.l.b16 %v1020
        %v1100 = vunpack.c.h.b16 %v1020
        %v1101 = vunpack.c.l.b16 %v1021
        %v1102 = vunpack.c.h.b16 %v1021
        %v1103 = vunpack.c.l.b16 %v1022
        %v1104 = vunpack.c.h.b16 %v1022
        %v1105 = vunpack.c.l.b16 %v1023
        %v1106 = vunpack.c.h.b16 %v1023
        %v1107 = vpack.c.b16 %v1093, %v1091
        %v1108 = vpack.c.b16 %v1094, %v1092
        %v1109 = vpack.c.b16 %v1097, %v1095
        %v1110 = vpack.c.b16 %v1098, %v1096
        %v1111 = vpack.c.b16 %v1101, %v1099
        %v1112 = vpack.c.b16 %v1102, %v1100
        %v1113 = vpack.c.b16 %v1105, %v1103
        %v1114 = vpack.c.b16 %v1106, %v1104
        %v1120 = vsel %vm690, %v1108, 0
        %v1123 = vsel %vm690, %v1110, 0
        %v1126 = vsel %vm690, %v1112, 0
        %v1129 = vsel %vm690, %v1114, 0
        %1131 = vmatprep.subr.bf16.mxu0 0
        %1132 = vmatpush1.bf16.msra.mxu0 %v1024
        %1133 = vmatprep.subr.bf16.mxu0 0
        %1134 = vmatpush1.bf16.msra.mxu0 %v1025
        %1135 = vmatprep.subr.bf16.mxu0 0
        %1136 = vmatpush1.bf16.msra.mxu0 %v1026
        %1137 = vmatprep.subr.bf16.mxu0 0
        %1138 = vmatpush1.bf16.msra.mxu0 %v1027
        %1139 = vmatprep.subr.bf16.mxu0 0
        %1140 = vmatpush1.bf16.msra.mxu0 %v1028
        %1141 = vmatprep.subr.bf16.mxu0 0
        %1142 = vmatpush1.bf16.msra.mxu0 %v1029
        %1143 = vmatprep.subr.bf16.mxu0 0
        %1144 = vmatpush1.bf16.msra.mxu0 %v1030
        %1145 = vmatprep.subr.bf16.mxu0 0
        %1146 = vmatpush1.bf16.msra.mxu0 %v1031
        %1147 = vmatprep.subr.bf16.mxu0 0
        %1148 = vmatpush1.bf16.msra.mxu0 %v1032
        %1149 = vmatprep.subr.bf16.mxu0 0
        %1150 = vmatpush1.bf16.msra.mxu0 %v1033
        %1151 = vmatprep.subr.bf16.mxu0 0
        %1152 = vmatpush1.bf16.msra.mxu0 0
        %1153 = vmatprep.subr.bf16.mxu0 0
        %1154 = vmatpush1.bf16.msra.mxu0 0
        %1155 = vmatprep.subr.bf16.mxu0 0
        %1156 = vmatpush1.bf16.msra.mxu0 0
        %1157 = vmatprep.subr.bf16.mxu0 0
        %1158 = vmatpush1.bf16.msra.mxu0 0
        %1159 = vmatprep.subr.bf16.mxu0 0
        %1160 = vmatpush1.bf16.msra.mxu0 0
        %1161 = vmatprep.subr.bf16.mxu0 0
        %1162 = vmatpush1.bf16.msra.mxu0 0
        %1163 = vmatprep.mubr.bf16.mxu0 %v1120
        %1164 = vmatmul.mubr.bf16.gmra.mrb[0].mxu0 %v1107
        %v1165 = vpop.f32.mrb[0].mxu0
        %v1166 = vadd.f32 %v1046, %v1165
        %v1167 = vpop.f32.mrb[0].mxu0
        %v1168 = vpop.f32.mrb[0].mxu0
        %v1169 = vadd.f32 %v1051, %v1168
        %v1170 = vpop.f32.mrb[0].mxu0
        %1171 = vmatprep.mubr.bf16.mxu0 %v1123
        %1172 = vmatmul.mubr.bf16.gmra.mrb[0].mxu0 %v1109
        %v1173 = vpop.f32.mrb[0].mxu0
        %v1174 = vadd.f32 %v1056, %v1173
        %v1175 = vpop.f32.mrb[0].mxu0
        %v1176 = vpop.f32.mrb[0].mxu0
        %v1177 = vadd.f32 %v1061, %v1176
        %v1178 = vpop.f32.mrb[0].mxu0
        %1179 = vmatprep.mubr.bf16.mxu0 %v1126
        %1180 = vmatmul.mubr.bf16.gmra.mrb[0].mxu0 %v1111
        %v1181 = vpop.f32.mrb[0].mxu0
        %v1182 = vadd.f32 %v1066, %v1181
        %v1183 = vpop.f32.mrb[0].mxu0
        %v1184 = vpop.f32.mrb[0].mxu0
        %v1185 = vadd.f32 %v1071, %v1184
        %v1186 = vpop.f32.mrb[0].mxu0
        %1187 = vmatprep.mubr.bf16.mxu0 %v1129
        %1188 = vmatmul.mubr.bf16.gmra.mrb[0].mxu0 %v1113
        %v1189 = vpop.f32.mrb[0].mxu0
        %v1190 = vadd.f32 %v1076, %v1189
        %v1191 = vpop.f32.mrb[0].mxu0
        %v1192 = vpop.f32.mrb[0].mxu0
        %v1193 = vadd.f32 %v1081, %v1192
        %v1194 = vpop.f32.mrb[0].mxu0
        %1195 = vdwg.mxu0
        %v1196 = vtanh.pop %v1166
        %v1197 = vtanh.pop %v1169
        %v1198 = vtanh.pop %v1174
        %v1199 = vtanh.pop %v1177
        %v1200 = vxor.u32 %v1182, 2147483648
        %v1201 = vxor.u32 %v1185, 2147483648
        %v1202 = vxor.u32 %v1190, 2147483648
        %v1203 = vxor.u32 %v1193, 2147483648
        %v1204 = vmul.f32 %v1200, 1.442695
        %v1205 = vpow.pop %v1204
        %v1206 = vmul.f32 %v1201, 1.442695
        %v1207 = vpow.pop %v1206
        %v1208 = vmul.f32 %v1202, 1.442695
        %v1209 = vpow.pop %v1208
        %v1210 = vmul.f32 %v1203, 1.442695
        %v1211 = vpow.pop %v1210
        %v1212 = vadd.f32 %v1205, 1.0
        %v1213 = vadd.f32 %v1207, 1.0
        %v1214 = vadd.f32 %v1209, 1.0
        %v1215 = vadd.f32 %v1211, 1.0
        %v1216 = vrcp.pop %v1212
        %v1217 = vmul.f32 1.0, %v1216
        %v1218 = vrcp.pop %v1213
        %v1219 = vmul.f32 1.0, %v1218
        %v1220 = vrcp.pop %v1214
        %v1221 = vmul.f32 1.0, %v1220
        %v1222 = vrcp.pop %v1215
        %v1223 = vmul.f32 1.0, %v1222
        %v1224 = vmul.f32 %v1196, %v1217
        %v1225 = vmul.f32 %v1197, %v1219
        %v1226 = vmul.f32 %v1198, %v1221
        %v1227 = vmul.f32 %v1199, %v1223
        %s1228 = scalar_lea.vmem %s6, 32
        %v1229 = vld [vmem:[%s1228] sm:$0xf]
        %v1230 = vld [vmem:[%s1228 + $0x4] sm:$0xf]
        %v1231 = vld [vmem:[%s1228 + $0x8] sm:$0xf]
        %v1232 = vld [vmem:[%s1228 + $0xc] sm:$0xf]
        %v1233 = vld [vmem:[%s1228 + $0x10] sm:$0xf]
        %v1234 = vld [vmem:[%s1228 + $0x14] sm:$0xf]
        %v1235 = vld [vmem:[%s1228 + $0x18] sm:$0xf]
        %v1236 = vld [vmem:[%s1228 + $0x1c] sm:$0xf]
        %v1237 = vpack.c.bf16 %v1225, %v1224
        %v1238 = vpack.c.bf16 %v1227, %v1226
        %s1239 = scalar_lea.vmem %s7, 64
        %v1240 = vld [vmem:[%s1239] sm:$0xff]
        %v1241 = vld [vmem:[%s1239 + $0x8] sm:$0xff]
        %v1242 = vld [vmem:[%s1239 + $0x10] sm:$0xff]
        %v1243 = vld [vmem:[%s1239 + $0x18] sm:$0xff]
        %v1244 = vld [vmem:[%s1239 + $0x20] sm:$0xff]
        %v1245 = vld [vmem:[%s1239 + $0x28] sm:$0xff]
        %v1246 = vld [vmem:[%s1239 + $0x30] sm:$0xff]
        %v1247 = vld [vmem:[%s1239 + $0x38] sm:$0xff]
        %1249 = vset.pattern.permute.xlu0 0
        %1250 = vperm.xlu0 %1249, %v1240
        %v1251 = vpop.permute.xlu0 %1250
        %1254 = vset.pattern.permute.xlu0 0
        %1255 = vperm.xlu0 %1254, %v1241
        %v1256 = vpop.permute.xlu0 %1255
        %1259 = vset.pattern.permute.xlu0 0
        %1260 = vperm.xlu0 %1259, %v1242
        %v1261 = vpop.permute.xlu0 %1260
        %1264 = vset.pattern.permute.xlu0 0
        %1265 = vperm.xlu0 %1264, %v1243
        %v1266 = vpop.permute.xlu0 %1265
        %1269 = vset.pattern.permute.xlu0 0
        %1270 = vperm.xlu0 %1269, %v1244
        %v1271 = vpop.permute.xlu0 %1270
        %1274 = vset.pattern.permute.xlu0 0
        %1275 = vperm.xlu0 %1274, %v1245
        %v1276 = vpop.permute.xlu0 %1275
        %1279 = vset.pattern.permute.xlu0 0
        %1280 = vperm.xlu0 %1279, %v1246
        %v1281 = vpop.permute.xlu0 %1280
        %1284 = vset.pattern.permute.xlu0 0
        %1285 = vperm.xlu0 %1284, %v1247
        %v1286 = vpop.permute.xlu0 %1285
        %v1296 = vunpack.c.l.b16 %v1229
        %v1297 = vunpack.c.l.b16 %v1230
        %v1298 = vunpack.c.l.b16 %v1231
        %v1299 = vunpack.c.l.b16 %v1232
        %v1300 = vunpack.c.l.b16 %v1233
        %v1301 = vunpack.c.l.b16 %v1234
        %v1302 = vunpack.c.l.b16 %v1235
        %v1303 = vunpack.c.l.b16 %v1236
        %v1304 = vpack.c.b16 %v1297, %v1296
        %v1305 = vpack.c.b16 %v1299, %v1298
        %v1306 = vpack.c.b16 %v1301, %v1300
        %v1307 = vpack.c.b16 %v1303, %v1302
        %v1309 = vsel %vm690, %v1304, 0
        %v1312 = vsel %vm690, %v1305, 0
        %v1315 = vsel %vm690, %v1306, 0
        %v1318 = vsel %vm690, %v1307, 0
        %1320 = vmatprep.subr.bf16.mxu0 0
        %1321 = vmatpush1.bf16.msra.mxu0 %v1237
        %1322 = vmatprep.subr.bf16.mxu0 0
        %1323 = vmatpush1.bf16.msra.mxu0 %v1238
        %1324 = vmatprep.subr.bf16.mxu0 0
        %1325 = vmatpush1.bf16.msra.mxu0 0
        %1326 = vmatprep.subr.bf16.mxu0 0
        %1327 = vmatpush1.bf16.msra.mxu0 0
        %1328 = vmatprep.subr.bf16.mxu0 0
        %1329 = vmatpush1.bf16.msra.mxu0 0
        %1330 = vmatprep.subr.bf16.mxu0 0
        %1331 = vmatpush1.bf16.msra.mxu0 0
        %1332 = vmatprep.subr.bf16.mxu0 0
        %1333 = vmatpush1.bf16.msra.mxu0 0
        %1334 = vmatprep.subr.bf16.mxu0 0
        %1335 = vmatpush1.bf16.msra.mxu0 0
        %1336 = vmatprep.subr.bf16.mxu0 0
        %1337 = vmatpush1.bf16.msra.mxu0 0
        %1338 = vmatprep.subr.bf16.mxu0 0
        %1339 = vmatpush1.bf16.msra.mxu0 0
        %1340 = vmatprep.subr.bf16.mxu0 0
        %1341 = vmatpush1.bf16.msra.mxu0 0
        %1342 = vmatprep.subr.bf16.mxu0 0
        %1343 = vmatpush1.bf16.msra.mxu0 0
        %1344 = vmatprep.subr.bf16.mxu0 0
        %1345 = vmatpush1.bf16.msra.mxu0 0
        %1346 = vmatprep.subr.bf16.mxu0 0
        %1347 = vmatpush1.bf16.msra.mxu0 0
        %1348 = vmatprep.subr.bf16.mxu0 0
        %1349 = vmatpush1.bf16.msra.mxu0 0
        %1350 = vmatprep.subr.bf16.mxu0 0
        %1351 = vmatpush1.bf16.msra.mxu0 0
        %1352 = vmatprep.mubr.bf16.mxu0 0
        %1353 = vmatmul.mubr.bf16.gmra.mrb[0].mxu0 %v1309
        %v1354 = vpop.f32.mrb[0].mxu0
        %v1355 = vadd.f32 %v1251, %v1354
        %v1356 = vpop.f32.mrb[0].mxu0
        %v1357 = vpop.f32.mrb[0].mxu0
        %v1358 = vadd.f32 %v1256, %v1357
        %v1359 = vpop.f32.mrb[0].mxu0
        %1360 = vmatprep.mubr.bf16.mxu0 0
        %1361 = vmatmul.mubr.bf16.gmra.mrb[0].mxu0 %v1312
        %v1362 = vpop.f32.mrb[0].mxu0
        %v1363 = vadd.f32 %v1261, %v1362
        %v1364 = vpop.f32.mrb[0].mxu0
        %v1365 = vpop.f32.mrb[0].mxu0
        %v1366 = vadd.f32 %v1266, %v1365
        %v1367 = vpop.f32.mrb[0].mxu0
        %1368 = vmatprep.mubr.bf16.mxu0 0
        %1369 = vmatmul.mubr.bf16.gmra.mrb[0].mxu0 %v1315
        %v1370 = vpop.f32.mrb[0].mxu0
        %v1371 = vadd.f32 %v1271, %v1370
        %v1372 = vpop.f32.mrb[0].mxu0
        %v1373 = vpop.f32.mrb[0].mxu0
        %v1374 = vadd.f32 %v1276, %v1373
        %v1375 = vpop.f32.mrb[0].mxu0
        %1376 = vmatprep.mubr.bf16.mxu0 0
        %1377 = vmatmul.mubr.bf16.gmra.mrb[0].mxu0 %v1318
        %v1378 = vpop.f32.mrb[0].mxu0
        %v1379 = vadd.f32 %v1281, %v1378
        %v1380 = vpop.f32.mrb[0].mxu0
        %v1381 = vpop.f32.mrb[0].mxu0
        %v1382 = vadd.f32 %v1286, %v1381
        %v1383 = vpop.f32.mrb[0].mxu0
        %1384 = vdwg.mxu0
        %v1385 = vadd.f32 %v959, %v1355
        %v1386 = vadd.f32 %v960, %v1358
        %v1387 = vadd.f32 %v961, %v1363
        %v1388 = vadd.f32 %v962, %v1366
        %v1389 = vmul.f32 %v1385, %v530
        %v1390 = vmul.f32 %v1386, %v530
        %v1391 = vmul.f32 %v1387, %v530
        %v1392 = vmul.f32 %v1388, %v530
        %v1393 = vadd.f32 %v941, %v1371
        %v1394 = vadd.f32 %v944, %v1374
        %v1395 = vadd.f32 %v949, %v1379
        %v1396 = vadd.f32 %v952, %v1382
        %1397 = vrot.lane.b32.xlu0 %v1389, 2
        %v1398 = vpop.permute.xlu0 %1397
        %1399 = vrot.lane.b32.xlu0 %v1390, 2
        %v1400 = vpop.permute.xlu0 %1399
        %1401 = vrot.lane.b32.xlu0 %v1391, 2
        %v1402 = vpop.permute.xlu0 %1401
        %1403 = vrot.lane.b32.xlu0 %v1392, 2
        %v1404 = vpop.permute.xlu0 %1403
        %v1405 = vpack.c.bf16 %v1400, %v1398
        %v1406 = vpack.c.bf16 %v1404, %v1402
        %1407 = vst [vmem:[#allocation2] sm:$0xff] %v1405
        %1408 = vst [vmem:[#allocation2 + $0x8] sm:$0xff] %v1406
        %1409 = vrot.lane.b32.xlu0 %v1389, 1
        %v1410 = vpop.permute.xlu0 %1409
        %1411 = vrot.lane.b32.xlu0 %v1390, 1
        %v1412 = vpop.permute.xlu0 %1411
        %1413 = vrot.lane.b32.xlu0 %v1391, 1
        %v1414 = vpop.permute.xlu0 %1413
        %1415 = vrot.lane.b32.xlu0 %v1392, 1
        %v1416 = vpop.permute.xlu0 %1415
        %v1417 = vpack.c.bf16 %v1412, %v1410
        %v1418 = vpack.c.bf16 %v1416, %v1414
        %1419 = vst [vmem:[#allocation2 + $0x10] sm:$0xff] %v1417
        %1420 = vst [vmem:[#allocation2 + $0x18] sm:$0xff] %v1418
        %v1421 = vpack.c.bf16 %v1390, %v1389
        %v1422 = vpack.c.bf16 %v1392, %v1391
        %1423 = vst [vmem:[#allocation2 + $0x20] sm:$0xff] %v1421
        %1424 = vst [vmem:[#allocation2 + $0x28] sm:$0xff] %v1422
        %1425 = vrot.lane.b32.xlu0 %v1389, 127
        %v1426 = vpop.permute.xlu0 %1425
        %1427 = vrot.lane.b32.xlu0 %v1390, 127
        %v1428 = vpop.permute.xlu0 %1427
        %1429 = vrot.lane.b32.xlu0 %v1391, 127
        %v1430 = vpop.permute.xlu0 %1429
        %1431 = vrot.lane.b32.xlu0 %v1392, 127
        %v1432 = vpop.permute.xlu0 %1431
        %v1433 = vpack.c.bf16 %v1428, %v1426
        %v1434 = vpack.c.bf16 %v1432, %v1430
        %1435 = vst [vmem:[#allocation2 + $0x30] sm:$0xff] %v1433
        %1436 = vst [vmem:[#allocation2 + $0x38] sm:$0xff] %v1434
        %1437 = vrot.lane.b32.xlu0 %v1389, 126
        %v1438 = vpop.permute.xlu0 %1437
        %1439 = vrot.lane.b32.xlu0 %v1390, 126
        %v1440 = vpop.permute.xlu0 %1439
        %1441 = vrot.lane.b32.xlu0 %v1391, 126
        %v1442 = vpop.permute.xlu0 %1441
        %1443 = vrot.lane.b32.xlu0 %v1392, 126
        %v1444 = vpop.permute.xlu0 %1443
        %v1445 = vpack.c.bf16 %v1440, %v1438
        %v1446 = vpack.c.bf16 %v1444, %v1442
        %1447 = vst [vmem:[#allocation2 + $0x40] sm:$0xff] %v1445
        %1448 = vst [vmem:[#allocation2 + $0x48] sm:$0xff] %v1446
        %s1449 = scalar_lea.vmem %s4, 128
        %v1450 = vld [vmem:[%s1449] sm:$0xff]
        %v1451 = vld [vmem:[%s1449 + $0x8] sm:$0xff]
        %v1452 = vld [vmem:[%s1449 + $0x10] sm:$0xff]
        %v1453 = vld [vmem:[%s1449 + $0x18] sm:$0xff]
        %v1454 = vld [vmem:[%s1449 + $0x20] sm:$0xff]
        %v1455 = vld [vmem:[%s1449 + $0x28] sm:$0xff]
        %v1456 = vld [vmem:[%s1449 + $0x30] sm:$0xff]
        %v1457 = vld [vmem:[%s1449 + $0x38] sm:$0xff]
        %v1458 = vld [vmem:[#allocation2] sm:$0xff]
        %v1459 = vld [vmem:[#allocation2 + $0x8] sm:$0xff]
        %v1460 = vld [vmem:[#allocation2 + $0x10] sm:$0xff]
        %v1461 = vld [vmem:[#allocation2 + $0x18] sm:$0xff]
        %v1462 = vld [vmem:[#allocation2 + $0x20] sm:$0xff]
        %v1463 = vld [vmem:[#allocation2 + $0x28] sm:$0xff]
        %v1464 = vld [vmem:[#allocation2 + $0x30] sm:$0xff]
        %v1465 = vld [vmem:[#allocation2 + $0x38] sm:$0xff]
        %v1466 = vld [vmem:[#allocation2 + $0x40] sm:$0xff]
        %v1467 = vld [vmem:[#allocation2 + $0x48] sm:$0xff]
        %s1468 = scalar_lea.vmem %s5, 128
        %v1469 = vld [vmem:[%s1468] sm:$0xff]
        %v1470 = vld [vmem:[%s1468 + $0x8] sm:$0xff]
        %v1471 = vld [vmem:[%s1468 + $0x10] sm:$0xff]
        %v1472 = vld [vmem:[%s1468 + $0x18] sm:$0xff]
        %v1473 = vld [vmem:[%s1468 + $0x20] sm:$0xff]
        %v1474 = vld [vmem:[%s1468 + $0x28] sm:$0xff]
        %v1475 = vld [vmem:[%s1468 + $0x30] sm:$0xff]
        %v1476 = vld [vmem:[%s1468 + $0x38] sm:$0xff]
        %1478 = vset.pattern.permute.xlu0 0
        %1479 = vperm.xlu0 %1478, %v1469
        %v1480 = vpop.permute.xlu0 %1479
        %1483 = vset.pattern.permute.xlu0 0
        %1484 = vperm.xlu0 %1483, %v1470
        %v1485 = vpop.permute.xlu0 %1484
        %1488 = vset.pattern.permute.xlu0 0
        %1489 = vperm.xlu0 %1488, %v1471
        %v1490 = vpop.permute.xlu0 %1489
        %1493 = vset.pattern.permute.xlu0 0
        %1494 = vperm.xlu0 %1493, %v1472
        %v1495 = vpop.permute.xlu0 %1494
        %1498 = vset.pattern.permute.xlu0 0
        %1499 = vperm.xlu0 %1498, %v1473
        %v1500 = vpop.permute.xlu0 %1499
        %1503 = vset.pattern.permute.xlu0 0
        %1504 = vperm.xlu0 %1503, %v1474
        %v1505 = vpop.permute.xlu0 %1504
        %1508 = vset.pattern.permute.xlu0 0
        %1509 = vperm.xlu0 %1508, %v1475
        %v1510 = vpop.permute.xlu0 %1509
        %1513 = vset.pattern.permute.xlu0 0
        %1514 = vperm.xlu0 %1513, %v1476
        %v1515 = vpop.permute.xlu0 %1514
        %v1525 = vunpack.c.l.b16 %v1450
        %v1526 = vunpack.c.h.b16 %v1450
        %v1527 = vunpack.c.l.b16 %v1451
        %v1528 = vunpack.c.h.b16 %v1451
        %v1529 = vunpack.c.l.b16 %v1452
        %v1530 = vunpack.c.h.b16 %v1452
        %v1531 = vunpack.c.l.b16 %v1453
        %v1532 = vunpack.c.h.b16 %v1453
        %v1533 = vunpack.c.l.b16 %v1454
        %v1534 = vunpack.c.h.b16 %v1454
        %v1535 = vunpack.c.l.b16 %v1455
        %v1536 = vunpack.c.h.b16 %v1455
        %v1537 = vunpack.c.l.b16 %v1456
        %v1538 = vunpack.c.h.b16 %v1456
        %v1539 = vunpack.c.l.b16 %v1457
        %v1540 = vunpack.c.h.b16 %v1457
        %v1541 = vpack.c.b16 %v1527, %v1525
        %v1542 = vpack.c.b16 %v1528, %v1526
        %v1543 = vpack.c.b16 %v1531, %v1529
        %v1544 = vpack.c.b16 %v1532, %v1530
        %v1545 = vpack.c.b16 %v1535, %v1533
        %v1546 = vpack.c.b16 %v1536, %v1534
        %v1547 = vpack.c.b16 %v1539, %v1537
        %v1548 = vpack.c.b16 %v1540, %v1538
        %v1554 = vsel %vm690, %v1542, 0
        %v1557 = vsel %vm690, %v1544, 0
        %v1560 = vsel %vm690, %v1546, 0
        %v1563 = vsel %vm690, %v1548, 0
        %1565 = vmatprep.subr.bf16.mxu0 0
        %1566 = vmatpush1.bf16.msra.mxu0 %v1458
        %1567 = vmatprep.subr.bf16.mxu0 0
        %1568 = vmatpush1.bf16.msra.mxu0 %v1459
        %1569 = vmatprep.subr.bf16.mxu0 0
        %1570 = vmatpush1.bf16.msra.mxu0 %v1460
        %1571 = vmatprep.subr.bf16.mxu0 0
        %1572 = vmatpush1.bf16.msra.mxu0 %v1461
        %1573 = vmatprep.subr.bf16.mxu0 0
        %1574 = vmatpush1.bf16.msra.mxu0 %v1462
        %1575 = vmatprep.subr.bf16.mxu0 0
        %1576 = vmatpush1.bf16.msra.mxu0 %v1463
        %1577 = vmatprep.subr.bf16.mxu0 0
        %1578 = vmatpush1.bf16.msra.mxu0 %v1464
        %1579 = vmatprep.subr.bf16.mxu0 0
        %1580 = vmatpush1.bf16.msra.mxu0 %v1465
        %1581 = vmatprep.subr.bf16.mxu0 0
        %1582 = vmatpush1.bf16.msra.mxu0 %v1466
        %1583 = vmatprep.subr.bf16.mxu0 0
        %1584 = vmatpush1.bf16.msra.mxu0 %v1467
        %1585 = vmatprep.subr.bf16.mxu0 0
        %1586 = vmatpush1.bf16.msra.mxu0 0
        %1587 = vmatprep.subr.bf16.mxu0 0
        %1588 = vmatpush1.bf16.msra.mxu0 0
        %1589 = vmatprep.subr.bf16.mxu0 0
        %1590 = vmatpush1.bf16.msra.mxu0 0
        %1591 = vmatprep.subr.bf16.mxu0 0
        %1592 = vmatpush1.bf16.msra.mxu0 0
        %1593 = vmatprep.subr.bf16.mxu0 0
        %1594 = vmatpush1.bf16.msra.mxu0 0
        %1595 = vmatprep.subr.bf16.mxu0 0
        %1596 = vmatpush1.bf16.msra.mxu0 0
        %1597 = vmatprep.mubr.bf16.mxu0 %v1554
        %1598 = vmatmul.mubr.bf16.gmra.mrb[0].mxu0 %v1541
        %v1599 = vpop.f32.mrb[0].mxu0
        %v1600 = vadd.f32 %v1480, %v1599
        %v1601 = vpop.f32.mrb[0].mxu0
        %v1602 = vpop.f32.mrb[0].mxu0
        %v1603 = vadd.f32 %v1485, %v1602
        %v1604 = vpop.f32.mrb[0].mxu0
        %1605 = vmatprep.mubr.bf16.mxu0 %v1557
        %1606 = vmatmul.mubr.bf16.gmra.mrb[0].mxu0 %v1543
        %v1607 = vpop.f32.mrb[0].mxu0
        %v1608 = vadd.f32 %v1490, %v1607
        %v1609 = vpop.f32.mrb[0].mxu0
        %v1610 = vpop.f32.mrb[0].mxu0
        %v1611 = vadd.f32 %v1495, %v1610
        %v1612 = vpop.f32.mrb[0].mxu0
        %1613 = vmatprep.mubr.bf16.mxu0 %v1560
        %1614 = vmatmul.mubr.bf16.gmra.mrb[0].mxu0 %v1545
        %v1615 = vpop.f32.mrb[0].mxu0
        %v1616 = vadd.f32 %v1500, %v1615
        %v1617 = vpop.f32.mrb[0].mxu0
        %v1618 = vpop.f32.mrb[0].mxu0
        %v1619 = vadd.f32 %v1505, %v1618
        %v1620 = vpop.f32.mrb[0].mxu0
        %1621 = vmatprep.mubr.bf16.mxu0 %v1563
        %1622 = vmatmul.mubr.bf16.gmra.mrb[0].mxu0 %v1547
        %v1623 = vpop.f32.mrb[0].mxu0
        %v1624 = vadd.f32 %v1510, %v1623
        %v1625 = vpop.f32.mrb[0].mxu0
        %v1626 = vpop.f32.mrb[0].mxu0
        %v1627 = vadd.f32 %v1515, %v1626
        %v1628 = vpop.f32.mrb[0].mxu0
        %1629 = vdwg.mxu0
        %v1630 = vtanh.pop %v1600
        %v1631 = vtanh.pop %v1603
        %v1632 = vtanh.pop %v1608
        %v1633 = vtanh.pop %v1611
        %v1634 = vxor.u32 %v1616, 2147483648
        %v1635 = vxor.u32 %v1619, 2147483648
        %v1636 = vxor.u32 %v1624, 2147483648
        %v1637 = vxor.u32 %v1627, 2147483648
        %v1638 = vmul.f32 %v1634, 1.442695
        %v1639 = vpow.pop %v1638
        %v1640 = vmul.f32 %v1635, 1.442695
        %v1641 = vpow.pop %v1640
        %v1642 = vmul.f32 %v1636, 1.442695
        %v1643 = vpow.pop %v1642
        %v1644 = vmul.f32 %v1637, 1.442695
        %v1645 = vpow.pop %v1644
        %v1646 = vadd.f32 %v1639, 1.0
        %v1647 = vadd.f32 %v1641, 1.0
        %v1648 = vadd.f32 %v1643, 1.0
        %v1649 = vadd.f32 %v1645, 1.0
        %v1650 = vrcp.pop %v1646
        %v1651 = vmul.f32 1.0, %v1650
        %v1652 = vrcp.pop %v1647
        %v1653 = vmul.f32 1.0, %v1652
        %v1654 = vrcp.pop %v1648
        %v1655 = vmul.f32 1.0, %v1654
        %v1656 = vrcp.pop %v1649
        %v1657 = vmul.f32 1.0, %v1656
        %v1658 = vmul.f32 %v1630, %v1651
        %v1659 = vmul.f32 %v1631, %v1653
        %v1660 = vmul.f32 %v1632, %v1655
        %v1661 = vmul.f32 %v1633, %v1657
        %s1662 = scalar_lea.vmem %s6, 64
        %v1663 = vld [vmem:[%s1662] sm:$0xf]
        %v1664 = vld [vmem:[%s1662 + $0x4] sm:$0xf]
        %v1665 = vld [vmem:[%s1662 + $0x8] sm:$0xf]
        %v1666 = vld [vmem:[%s1662 + $0xc] sm:$0xf]
        %v1667 = vld [vmem:[%s1662 + $0x10] sm:$0xf]
        %v1668 = vld [vmem:[%s1662 + $0x14] sm:$0xf]
        %v1669 = vld [vmem:[%s1662 + $0x18] sm:$0xf]
        %v1670 = vld [vmem:[%s1662 + $0x1c] sm:$0xf]
        %v1671 = vpack.c.bf16 %v1659, %v1658
        %v1672 = vpack.c.bf16 %v1661, %v1660
        %s1673 = scalar_lea.vmem %s7, 128
        %v1674 = vld [vmem:[%s1673] sm:$0xff]
        %v1675 = vld [vmem:[%s1673 + $0x8] sm:$0xff]
        %v1676 = vld [vmem:[%s1673 + $0x10] sm:$0xff]
        %v1677 = vld [vmem:[%s1673 + $0x18] sm:$0xff]
        %v1678 = vld [vmem:[%s1673 + $0x20] sm:$0xff]
        %v1679 = vld [vmem:[%s1673 + $0x28] sm:$0xff]
        %v1680 = vld [vmem:[%s1673 + $0x30] sm:$0xff]
        %v1681 = vld [vmem:[%s1673 + $0x38] sm:$0xff]
        %1683 = vset.pattern.permute.xlu0 0
        %1684 = vperm.xlu0 %1683, %v1674
        %v1685 = vpop.permute.xlu0 %1684
        %1688 = vset.pattern.permute.xlu0 0
        %1689 = vperm.xlu0 %1688, %v1675
        %v1690 = vpop.permute.xlu0 %1689
        %1693 = vset.pattern.permute.xlu0 0
        %1694 = vperm.xlu0 %1693, %v1676
        %v1695 = vpop.permute.xlu0 %1694
        %1698 = vset.pattern.permute.xlu0 0
        %1699 = vperm.xlu0 %1698, %v1677
        %v1700 = vpop.permute.xlu0 %1699
        %1703 = vset.pattern.permute.xlu0 0
        %1704 = vperm.xlu0 %1703, %v1678
        %v1705 = vpop.permute.xlu0 %1704
        %1708 = vset.pattern.permute.xlu0 0
        %1709 = vperm.xlu0 %1708, %v1679
        %v1710 = vpop.permute.xlu0 %1709
        %1713 = vset.pattern.permute.xlu0 0
        %1714 = vperm.xlu0 %1713, %v1680
        %v1715 = vpop.permute.xlu0 %1714
        %1718 = vset.pattern.permute.xlu0 0
        %1719 = vperm.xlu0 %1718, %v1681
        %v1720 = vpop.permute.xlu0 %1719
        %v1730 = vunpack.c.l.b16 %v1663
        %v1731 = vunpack.c.l.b16 %v1664
        %v1732 = vunpack.c.l.b16 %v1665
        %v1733 = vunpack.c.l.b16 %v1666
        %v1734 = vunpack.c.l.b16 %v1667
        %v1735 = vunpack.c.l.b16 %v1668
        %v1736 = vunpack.c.l.b16 %v1669
        %v1737 = vunpack.c.l.b16 %v1670
        %v1738 = vpack.c.b16 %v1731, %v1730
        %v1739 = vpack.c.b16 %v1733, %v1732
        %v1740 = vpack.c.b16 %v1735, %v1734
        %v1741 = vpack.c.b16 %v1737, %v1736
        %v1743 = vsel %vm690, %v1738, 0
        %v1746 = vsel %vm690, %v1739, 0
        %v1749 = vsel %vm690, %v1740, 0
        %v1752 = vsel %vm690, %v1741, 0
        %1754 = vmatprep.subr.bf16.mxu0 0
        %1755 = vmatpush1.bf16.msra.mxu0 %v1671
        %1756 = vmatprep.subr.bf16.mxu0 0
        %1757 = vmatpush1.bf16.msra.mxu0 %v1672
        %1758 = vmatprep.subr.bf16.mxu0 0
        %1759 = vmatpush1.bf16.msra.mxu0 0
        %1760 = vmatprep.subr.bf16.mxu0 0
        %1761 = vmatpush1.bf16.msra.mxu0 0
        %1762 = vmatprep.subr.bf16.mxu0 0
        %1763 = vmatpush1.bf16.msra.mxu0 0
        %1764 = vmatprep.subr.bf16.mxu0 0
        %1765 = vmatpush1.bf16.msra.mxu0 0
        %1766 = vmatprep.subr.bf16.mxu0 0
        %1767 = vmatpush1.bf16.msra.mxu0 0
        %1768 = vmatprep.subr.bf16.mxu0 0
        %1769 = vmatpush1.bf16.msra.mxu0 0
        %1770 = vmatprep.subr.bf16.mxu0 0
        %1771 = vmatpush1.bf16.msra.mxu0 0
        %1772 = vmatprep.subr.bf16.mxu0 0
        %1773 = vmatpush1.bf16.msra.mxu0 0
        %1774 = vmatprep.subr.bf16.mxu0 0
        %1775 = vmatpush1.bf16.msra.mxu0 0
        %1776 = vmatprep.subr.bf16.mxu0 0
        %1777 = vmatpush1.bf16.msra.mxu0 0
        %1778 = vmatprep.subr.bf16.mxu0 0
        %1779 = vmatpush1.bf16.msra.mxu0 0
        %1780 = vmatprep.subr.bf16.mxu0 0
        %1781 = vmatpush1.bf16.msra.mxu0 0
        %1782 = vmatprep.subr.bf16.mxu0 0
        %1783 = vmatpush1.bf16.msra.mxu0 0
        %1784 = vmatprep.subr.bf16.mxu0 0
        %1785 = vmatpush1.bf16.msra.mxu0 0
        %1786 = vmatprep.mubr.bf16.mxu0 0
        %1787 = vmatmul.mubr.bf16.gmra.mrb[0].mxu0 %v1743
        %v1788 = vpop.f32.mrb[0].mxu0
        %v1789 = vadd.f32 %v1685, %v1788
        %v1790 = vpop.f32.mrb[0].mxu0
        %v1791 = vpop.f32.mrb[0].mxu0
        %v1792 = vadd.f32 %v1690, %v1791
        %v1793 = vpop.f32.mrb[0].mxu0
        %1794 = vmatprep.mubr.bf16.mxu0 0
        %1795 = vmatmul.mubr.bf16.gmra.mrb[0].mxu0 %v1746
        %v1796 = vpop.f32.mrb[0].mxu0
        %v1797 = vadd.f32 %v1695, %v1796
        %v1798 = vpop.f32.mrb[0].mxu0
        %v1799 = vpop.f32.mrb[0].mxu0
        %v1800 = vadd.f32 %v1700, %v1799
        %v1801 = vpop.f32.mrb[0].mxu0
        %1802 = vmatprep.mubr.bf16.mxu0 0
        %1803 = vmatmul.mubr.bf16.gmra.mrb[0].mxu0 %v1749
        %v1804 = vpop.f32.mrb[0].mxu0
        %v1805 = vadd.f32 %v1705, %v1804
        %v1806 = vpop.f32.mrb[0].mxu0
        %v1807 = vpop.f32.mrb[0].mxu0
        %v1808 = vadd.f32 %v1710, %v1807
        %v1809 = vpop.f32.mrb[0].mxu0
        %1810 = vmatprep.mubr.bf16.mxu0 0
        %1811 = vmatmul.mubr.bf16.gmra.mrb[0].mxu0 %v1752
        %v1812 = vpop.f32.mrb[0].mxu0
        %v1813 = vadd.f32 %v1715, %v1812
        %v1814 = vpop.f32.mrb[0].mxu0
        %v1815 = vpop.f32.mrb[0].mxu0
        %v1816 = vadd.f32 %v1720, %v1815
        %v1817 = vpop.f32.mrb[0].mxu0
        %1818 = vdwg.mxu0
        %v1819 = vadd.f32 %v1389, %v1789
        %v1820 = vadd.f32 %v1390, %v1792
        %v1821 = vadd.f32 %v1391, %v1797
        %v1822 = vadd.f32 %v1392, %v1800
        %v1823 = vmul.f32 %v1819, %v530
        %v1824 = vmul.f32 %v1820, %v530
        %v1825 = vmul.f32 %v1821, %v530
        %v1826 = vmul.f32 %v1822, %v530
        %v1827 = vadd.f32 %v1393, %v1805
        %v1828 = vadd.f32 %v1394, %v1808
        %v1829 = vadd.f32 %v1395, %v1813
        %v1830 = vadd.f32 %v1396, %v1816
        %1831 = vrot.lane.b32.xlu0 %v1823, 2
        %v1832 = vpop.permute.xlu0 %1831
        %1833 = vrot.lane.b32.xlu0 %v1824, 2
        %v1834 = vpop.permute.xlu0 %1833
        %1835 = vrot.lane.b32.xlu0 %v1825, 2
        %v1836 = vpop.permute.xlu0 %1835
        %1837 = vrot.lane.b32.xlu0 %v1826, 2
        %v1838 = vpop.permute.xlu0 %1837
        %v1839 = vpack.c.bf16 %v1834, %v1832
        %v1840 = vpack.c.bf16 %v1838, %v1836
        %1841 = vst [vmem:[#allocation2] sm:$0xff] %v1839
        %1842 = vst [vmem:[#allocation2 + $0x8] sm:$0xff] %v1840
        %1843 = vrot.lane.b32.xlu0 %v1823, 1
        %v1844 = vpop.permute.xlu0 %1843
        %1845 = vrot.lane.b32.xlu0 %v1824, 1
        %v1846 = vpop.permute.xlu0 %1845
        %1847 = vrot.lane.b32.xlu0 %v1825, 1
        %v1848 = vpop.permute.xlu0 %1847
        %1849 = vrot.lane.b32.xlu0 %v1826, 1
        %v1850 = vpop.permute.xlu0 %1849
        %v1851 = vpack.c.bf16 %v1846, %v1844
        %v1852 = vpack.c.bf16 %v1850, %v1848
        %1853 = vst [vmem:[#allocation2 + $0x10] sm:$0xff] %v1851
        %1854 = vst [vmem:[#allocation2 + $0x18] sm:$0xff] %v1852
        %v1855 = vpack.c.bf16 %v1824, %v1823
        %v1856 = vpack.c.bf16 %v1826, %v1825
        %1857 = vst [vmem:[#allocation2 + $0x20] sm:$0xff] %v1855
        %1858 = vst [vmem:[#allocation2 + $0x28] sm:$0xff] %v1856
        %1859 = vrot.lane.b32.xlu0 %v1823, 127
        %v1860 = vpop.permute.xlu0 %1859
        %1861 = vrot.lane.b32.xlu0 %v1824, 127
        %v1862 = vpop.permute.xlu0 %1861
        %1863 = vrot.lane.b32.xlu0 %v1825, 127
        %v1864 = vpop.permute.xlu0 %1863
        %1865 = vrot.lane.b32.xlu0 %v1826, 127
        %v1866 = vpop.permute.xlu0 %1865
        %v1867 = vpack.c.bf16 %v1862, %v1860
        %v1868 = vpack.c.bf16 %v1866, %v1864
        %1869 = vst [vmem:[#allocation2 + $0x30] sm:$0xff] %v1867
        %1870 = vst [vmem:[#allocation2 + $0x38] sm:$0xff] %v1868
        %1871 = vrot.lane.b32.xlu0 %v1823, 126
        %v1872 = vpop.permute.xlu0 %1871
        %1873 = vrot.lane.b32.xlu0 %v1824, 126
        %v1874 = vpop.permute.xlu0 %1873
        %1875 = vrot.lane.b32.xlu0 %v1825, 126
        %v1876 = vpop.permute.xlu0 %1875
        %1877 = vrot.lane.b32.xlu0 %v1826, 126
        %v1878 = vpop.permute.xlu0 %1877
        %v1879 = vpack.c.bf16 %v1874, %v1872
        %v1880 = vpack.c.bf16 %v1878, %v1876
        %1881 = vst [vmem:[#allocation2 + $0x40] sm:$0xff] %v1879
        %1882 = vst [vmem:[#allocation2 + $0x48] sm:$0xff] %v1880
        %s1883 = scalar_lea.vmem %s4, 192
        %v1884 = vld [vmem:[%s1883] sm:$0xff]
        %v1885 = vld [vmem:[%s1883 + $0x8] sm:$0xff]
        %v1886 = vld [vmem:[%s1883 + $0x10] sm:$0xff]
        %v1887 = vld [vmem:[%s1883 + $0x18] sm:$0xff]
        %v1888 = vld [vmem:[%s1883 + $0x20] sm:$0xff]
        %v1889 = vld [vmem:[%s1883 + $0x28] sm:$0xff]
        %v1890 = vld [vmem:[%s1883 + $0x30] sm:$0xff]
        %v1891 = vld [vmem:[%s1883 + $0x38] sm:$0xff]
        %v1892 = vld [vmem:[#allocation2] sm:$0xff]
        %v1893 = vld [vmem:[#allocation2 + $0x8] sm:$0xff]
        %v1894 = vld [vmem:[#allocation2 + $0x10] sm:$0xff]
        %v1895 = vld [vmem:[#allocation2 + $0x18] sm:$0xff]
        %v1896 = vld [vmem:[#allocation2 + $0x20] sm:$0xff]
        %v1897 = vld [vmem:[#allocation2 + $0x28] sm:$0xff]
        %v1898 = vld [vmem:[#allocation2 + $0x30] sm:$0xff]
        %v1899 = vld [vmem:[#allocation2 + $0x38] sm:$0xff]
        %v1900 = vld [vmem:[#allocation2 + $0x40] sm:$0xff]
        %v1901 = vld [vmem:[#allocation2 + $0x48] sm:$0xff]
        %s1902 = scalar_lea.vmem %s5, 192
        %v1903 = vld [vmem:[%s1902] sm:$0xff]
        %v1904 = vld [vmem:[%s1902 + $0x8] sm:$0xff]
        %v1905 = vld [vmem:[%s1902 + $0x10] sm:$0xff]
        %v1906 = vld [vmem:[%s1902 + $0x18] sm:$0xff]
        %v1907 = vld [vmem:[%s1902 + $0x20] sm:$0xff]
        %v1908 = vld [vmem:[%s1902 + $0x28] sm:$0xff]
        %v1909 = vld [vmem:[%s1902 + $0x30] sm:$0xff]
        %v1910 = vld [vmem:[%s1902 + $0x38] sm:$0xff]
        %1912 = vset.pattern.permute.xlu0 0
        %1913 = vperm.xlu0 %1912, %v1903
        %v1914 = vpop.permute.xlu0 %1913
        %1917 = vset.pattern.permute.xlu0 0
        %1918 = vperm.xlu0 %1917, %v1904
        %v1919 = vpop.permute.xlu0 %1918
        %1922 = vset.pattern.permute.xlu0 0
        %1923 = vperm.xlu0 %1922, %v1905
        %v1924 = vpop.permute.xlu0 %1923
        %1927 = vset.pattern.permute.xlu0 0
        %1928 = vperm.xlu0 %1927, %v1906
        %v1929 = vpop.permute.xlu0 %1928
        %1932 = vset.pattern.permute.xlu0 0
        %1933 = vperm.xlu0 %1932, %v1907
        %v1934 = vpop.permute.xlu0 %1933
        %1937 = vset.pattern.permute.xlu0 0
        %1938 = vperm.xlu0 %1937, %v1908
        %v1939 = vpop.permute.xlu0 %1938
        %1942 = vset.pattern.permute.xlu0 0
        %1943 = vperm.xlu0 %1942, %v1909
        %v1944 = vpop.permute.xlu0 %1943
        %1947 = vset.pattern.permute.xlu0 0
        %1948 = vperm.xlu0 %1947, %v1910
        %v1949 = vpop.permute.xlu0 %1948
        %v1959 = vunpack.c.l.b16 %v1884
        %v1960 = vunpack.c.h.b16 %v1884
        %v1961 = vunpack.c.l.b16 %v1885
        %v1962 = vunpack.c.h.b16 %v1885
        %v1963 = vunpack.c.l.b16 %v1886
        %v1964 = vunpack.c.h.b16 %v1886
        %v1965 = vunpack.c.l.b16 %v1887
        %v1966 = vunpack.c.h.b16 %v1887
        %v1967 = vunpack.c.l.b16 %v1888
        %v1968 = vunpack.c.h.b16 %v1888
        %v1969 = vunpack.c.l.b16 %v1889
        %v1970 = vunpack.c.h.b16 %v1889
        %v1971 = vunpack.c.l.b16 %v1890
        %v1972 = vunpack.c.h.b16 %v1890
        %v1973 = vunpack.c.l.b16 %v1891
        %v1974 = vunpack.c.h.b16 %v1891
        %v1975 = vpack.c.b16 %v1961, %v1959
        %v1976 = vpack.c.b16 %v1962, %v1960
        %v1977 = vpack.c.b16 %v1965, %v1963
        %v1978 = vpack.c.b16 %v1966, %v1964
        %v1979 = vpack.c.b16 %v1969, %v1967
        %v1980 = vpack.c.b16 %v1970, %v1968
        %v1981 = vpack.c.b16 %v1973, %v1971
        %v1982 = vpack.c.b16 %v1974, %v1972
        %v1988 = vsel %vm690, %v1976, 0
        %v1991 = vsel %vm690, %v1978, 0
        %v1994 = vsel %vm690, %v1980, 0
        %v1997 = vsel %vm690, %v1982, 0
        %1999 = vmatprep.subr.bf16.mxu0 0
        %2000 = vmatpush1.bf16.msra.mxu0 %v1892
        %2001 = vmatprep.subr.bf16.mxu0 0
        %2002 = vmatpush1.bf16.msra.mxu0 %v1893
        %2003 = vmatprep.subr.bf16.mxu0 0
        %2004 = vmatpush1.bf16.msra.mxu0 %v1894
        %2005 = vmatprep.subr.bf16.mxu0 0
        %2006 = vmatpush1.bf16.msra.mxu0 %v1895
        %2007 = vmatprep.subr.bf16.mxu0 0
        %2008 = vmatpush1.bf16.msra.mxu0 %v1896
        %2009 = vmatprep.subr.bf16.mxu0 0
        %2010 = vmatpush1.bf16.msra.mxu0 %v1897
        %2011 = vmatprep.subr.bf16.mxu0 0
        %2012 = vmatpush1.bf16.msra.mxu0 %v1898
        %2013 = vmatprep.subr.bf16.mxu0 0
        %2014 = vmatpush1.bf16.msra.mxu0 %v1899
        %2015 = vmatprep.subr.bf16.mxu0 0
        %2016 = vmatpush1.bf16.msra.mxu0 %v1900
        %2017 = vmatprep.subr.bf16.mxu0 0
        %2018 = vmatpush1.bf16.msra.mxu0 %v1901
        %2019 = vmatprep.subr.bf16.mxu0 0
        %2020 = vmatpush1.bf16.msra.mxu0 0
        %2021 = vmatprep.subr.bf16.mxu0 0
        %2022 = vmatpush1.bf16.msra.mxu0 0
        %2023 = vmatprep.subr.bf16.mxu0 0
        %2024 = vmatpush1.bf16.msra.mxu0 0
        %2025 = vmatprep.subr.bf16.mxu0 0
        %2026 = vmatpush1.bf16.msra.mxu0 0
        %2027 = vmatprep.subr.bf16.mxu0 0
        %2028 = vmatpush1.bf16.msra.mxu0 0
        %2029 = vmatprep.subr.bf16.mxu0 0
        %2030 = vmatpush1.bf16.msra.mxu0 0
        %2031 = vmatprep.mubr.bf16.mxu0 %v1988
        %2032 = vmatmul.mubr.bf16.gmra.mrb[0].mxu0 %v1975
        %v2033 = vpop.f32.mrb[0].mxu0
        %v2034 = vadd.f32 %v1914, %v2033
        %v2035 = vpop.f32.mrb[0].mxu0
        %v2036 = vpop.f32.mrb[0].mxu0
        %v2037 = vadd.f32 %v1919, %v2036
        %v2038 = vpop.f32.mrb[0].mxu0
        %2039 = vmatprep.mubr.bf16.mxu0 %v1991
        %2040 = vmatmul.mubr.bf16.gmra.mrb[0].mxu0 %v1977
        %v2041 = vpop.f32.mrb[0].mxu0
        %v2042 = vadd.f32 %v1924, %v2041
        %v2043 = vpop.f32.mrb[0].mxu0
        %v2044 = vpop.f32.mrb[0].mxu0
        %v2045 = vadd.f32 %v1929, %v2044
        %v2046 = vpop.f32.mrb[0].mxu0
        %2047 = vmatprep.mubr.bf16.mxu0 %v1994
        %2048 = vmatmul.mubr.bf16.gmra.mrb[0].mxu0 %v1979
        %v2049 = vpop.f32.mrb[0].mxu0
        %v2050 = vadd.f32 %v1934, %v2049
        %v2051 = vpop.f32.mrb[0].mxu0
        %v2052 = vpop.f32.mrb[0].mxu0
        %v2053 = vadd.f32 %v1939, %v2052
        %v2054 = vpop.f32.mrb[0].mxu0
        %2055 = vmatprep.mubr.bf16.mxu0 %v1997
        %2056 = vmatmul.mubr.bf16.gmra.mrb[0].mxu0 %v1981
        %v2057 = vpop.f32.mrb[0].mxu0
        %v2058 = vadd.f32 %v1944, %v2057
        %v2059 = vpop.f32.mrb[0].mxu0
        %v2060 = vpop.f32.mrb[0].mxu0
        %v2061 = vadd.f32 %v1949, %v2060
        %v2062 = vpop.f32.mrb[0].mxu0
        %2063 = vdwg.mxu0
        %v2064 = vtanh.pop %v2034
        %v2065 = vtanh.pop %v2037
        %v2066 = vtanh.pop %v2042
        %v2067 = vtanh.pop %v2045
        %v2068 = vxor.u32 %v2050, 2147483648
        %v2069 = vxor.u32 %v2053, 2147483648
        %v2070 = vxor.u32 %v2058, 2147483648
        %v2071 = vxor.u32 %v2061, 2147483648
        %v2072 = vmul.f32 %v2068, 1.442695
        %v2073 = vpow.pop %v2072
        %v2074 = vmul.f32 %v2069, 1.442695
        %v2075 = vpow.pop %v2074
        %v2076 = vmul.f32 %v2070, 1.442695
        %v2077 = vpow.pop %v2076
        %v2078 = vmul.f32 %v2071, 1.442695
        %v2079 = vpow.pop %v2078
        %v2080 = vadd.f32 %v2073, 1.0
        %v2081 = vadd.f32 %v2075, 1.0
        %v2082 = vadd.f32 %v2077, 1.0
        %v2083 = vadd.f32 %v2079, 1.0
        %v2084 = vrcp.pop %v2080
        %v2085 = vmul.f32 1.0, %v2084
        %v2086 = vrcp.pop %v2081
        %v2087 = vmul.f32 1.0, %v2086
        %v2088 = vrcp.pop %v2082
        %v2089 = vmul.f32 1.0, %v2088
        %v2090 = vrcp.pop %v2083
        %v2091 = vmul.f32 1.0, %v2090
        %v2092 = vmul.f32 %v2064, %v2085
        %v2093 = vmul.f32 %v2065, %v2087
        %v2094 = vmul.f32 %v2066, %v2089
        %v2095 = vmul.f32 %v2067, %v2091
        %v2096 = vld [vmem:[%s8] sm:$0xf]
        %v2097 = vld [vmem:[%s8 + $0x4] sm:$0xf]
        %v2098 = vld [vmem:[%s8 + $0x8] sm:$0xf]
        %v2099 = vld [vmem:[%s8 + $0xc] sm:$0xf]
        %v2100 = vpack.c.bf16 %v2093, %v2092
        %v2101 = vpack.c.bf16 %v2095, %v2094
        %v2102 = vld [vmem:[%s9] sm:$0xff]
        %v2103 = vld [vmem:[%s9 + $0x8] sm:$0xff]
        %v2104 = vld [vmem:[%s9 + $0x10] sm:$0xff]
        %v2105 = vld [vmem:[%s9 + $0x18] sm:$0xff]
        %2107 = vset.pattern.permute.xlu0 0
        %2108 = vperm.xlu0 %2107, %v2102
        %v2109 = vpop.permute.xlu0 %2108
        %2112 = vset.pattern.permute.xlu0 0
        %2113 = vperm.xlu0 %2112, %v2103
        %v2114 = vpop.permute.xlu0 %2113
        %2117 = vset.pattern.permute.xlu0 0
        %2118 = vperm.xlu0 %2117, %v2104
        %v2119 = vpop.permute.xlu0 %2118
        %2122 = vset.pattern.permute.xlu0 0
        %2123 = vperm.xlu0 %2122, %v2105
        %v2124 = vpop.permute.xlu0 %2123
        %v2130 = vunpack.c.l.b16 %v2096
        %v2131 = vunpack.c.l.b16 %v2097
        %v2132 = vunpack.c.l.b16 %v2098
        %v2133 = vunpack.c.l.b16 %v2099
        %v2134 = vpack.c.b16 %v2131, %v2130
        %v2135 = vpack.c.b16 %v2133, %v2132
        %v2137 = vsel %vm690, %v2134, 0
        %v2140 = vsel %vm690, %v2135, 0
        %2142 = vmatprep.subr.bf16.mxu0 0
        %2143 = vmatpush1.bf16.msra.mxu0 %v2100
        %2144 = vmatprep.subr.bf16.mxu0 0
        %2145 = vmatpush1.bf16.msra.mxu0 %v2101
        %2146 = vmatprep.subr.bf16.mxu0 0
        %2147 = vmatpush1.bf16.msra.mxu0 0
        %2148 = vmatprep.subr.bf16.mxu0 0
        %2149 = vmatpush1.bf16.msra.mxu0 0
        %2150 = vmatprep.subr.bf16.mxu0 0
        %2151 = vmatpush1.bf16.msra.mxu0 0
        %2152 = vmatprep.subr.bf16.mxu0 0
        %2153 = vmatpush1.bf16.msra.mxu0 0
        %2154 = vmatprep.subr.bf16.mxu0 0
        %2155 = vmatpush1.bf16.msra.mxu0 0
        %2156 = vmatprep.subr.bf16.mxu0 0
        %2157 = vmatpush1.bf16.msra.mxu0 0
        %2158 = vmatprep.subr.bf16.mxu0 0
        %2159 = vmatpush1.bf16.msra.mxu0 0
        %2160 = vmatprep.subr.bf16.mxu0 0
        %2161 = vmatpush1.bf16.msra.mxu0 0
        %2162 = vmatprep.subr.bf16.mxu0 0
        %2163 = vmatpush1.bf16.msra.mxu0 0
        %2164 = vmatprep.subr.bf16.mxu0 0
        %2165 = vmatpush1.bf16.msra.mxu0 0
        %2166 = vmatprep.subr.bf16.mxu0 0
        %2167 = vmatpush1.bf16.msra.mxu0 0
        %2168 = vmatprep.subr.bf16.mxu0 0
        %2169 = vmatpush1.bf16.msra.mxu0 0
        %2170 = vmatprep.subr.bf16.mxu0 0
        %2171 = vmatpush1.bf16.msra.mxu0 0
        %2172 = vmatprep.subr.bf16.mxu0 0
        %2173 = vmatpush1.bf16.msra.mxu0 0
        %2174 = vmatprep.mubr.bf16.mxu0 0
        %2175 = vmatmul.mubr.bf16.gmra.mrb[0].mxu0 %v2137
        %v2176 = vpop.f32.mrb[0].mxu0
        %v2177 = vadd.f32 %v2109, %v2176
        %v2178 = vpop.f32.mrb[0].mxu0
        %v2179 = vpop.f32.mrb[0].mxu0
        %v2180 = vadd.f32 %v2114, %v2179
        %v2181 = vpop.f32.mrb[0].mxu0
        %2182 = vmatprep.mubr.bf16.mxu0 0
        %2183 = vmatmul.mubr.bf16.gmra.mrb[0].mxu0 %v2140
        %v2184 = vpop.f32.mrb[0].mxu0
        %v2185 = vadd.f32 %v2119, %v2184
        %v2186 = vpop.f32.mrb[0].mxu0
        %v2187 = vpop.f32.mrb[0].mxu0
        %v2188 = vadd.f32 %v2124, %v2187
        %v2189 = vpop.f32.mrb[0].mxu0
        %2190 = vdwg.mxu0
        %v2191 = vadd.f32 %v1827, %v2177
        %v2192 = vadd.f32 %v1828, %v2180
        %v2193 = vadd.f32 %v1829, %v2185
        %v2194 = vadd.f32 %v1830, %v2188
        %v2195 = vld [vmem:[%s10] sm:$0x1]
        %v2196 = vmul.f32 %v2191, %v530
        %v2197 = vmul.f32 %v2192, %v530
        %v2198 = vmul.f32 %v2193, %v530
        %v2199 = vmul.f32 %v2194, %v530
        %v2200 = vpack.c.bf16 %v2197, %v2196
        %v2201 = vpack.c.bf16 %v2199, %v2198
        %v2202 = vld [vmem:[%s11] sm:$0x3]
        %2204 = vset.pattern.permute.xlu0 0
        %2205 = vperm.xlu0 %2204, %v2202
        %v2206 = vpop.permute.xlu0 %2205
        %v2209 = vsel %vm690, %v2195, 0
        %2211 = vmatprep.subr.bf16.mxu0 0
        %2212 = vmatpush1.bf16.msra.mxu0 %v2200
        %2213 = vmatprep.subr.bf16.mxu0 0
        %2214 = vmatpush1.bf16.msra.mxu0 %v2201
        %2215 = vmatprep.subr.bf16.mxu0 0
        %2216 = vmatpush1.bf16.msra.mxu0 0
        %2217 = vmatprep.subr.bf16.mxu0 0
        %2218 = vmatpush1.bf16.msra.mxu0 0
        %2219 = vmatprep.subr.bf16.mxu0 0
        %2220 = vmatpush1.bf16.msra.mxu0 0
        %2221 = vmatprep.subr.bf16.mxu0 0
        %2222 = vmatpush1.bf16.msra.mxu0 0
        %2223 = vmatprep.subr.bf16.mxu0 0
        %2224 = vmatpush1.bf16.msra.mxu0 0
        %2225 = vmatprep.subr.bf16.mxu0 0
        %2226 = vmatpush1.bf16.msra.mxu0 0
        %2227 = vmatprep.subr.bf16.mxu0 0
        %2228 = vmatpush1.bf16.msra.mxu0 0
        %2229 = vmatprep.subr.bf16.mxu0 0
        %2230 = vmatpush1.bf16.msra.mxu0 0
        %2231 = vmatprep.subr.bf16.mxu0 0
        %2232 = vmatpush1.bf16.msra.mxu0 0
        %2233 = vmatprep.subr.bf16.mxu0 0
        %2234 = vmatpush1.bf16.msra.mxu0 0
        %2235 = vmatprep.subr.bf16.mxu0 0
        %2236 = vmatpush1.bf16.msra.mxu0 0
        %2237 = vmatprep.subr.bf16.mxu0 0
        %2238 = vmatpush1.bf16.msra.mxu0 0
        %2239 = vmatprep.subr.bf16.mxu0 0
        %2240 = vmatpush1.bf16.msra.mxu0 0
        %2241 = vmatprep.subr.bf16.mxu0 0
        %2242 = vmatpush1.bf16.msra.mxu0 0
        %2243 = vmatprep.mubr.bf16.mxu0 0
        %2244 = vmatmul.mubr.bf16.gmra.mrb[0].mxu0 %v2209
        %v2245 = vpop.f32.mrb[0].mxu0
        %v2246 = vadd.f32 %v2206, %v2245
        %v2247 = vpop.f32.mrb[0].mxu0
        %v2248 = vpop.f32.mrb[0].mxu0
        %v2249 = vpop.f32.mrb[0].mxu0
        %2250 = vdwg.mxu0
        %v2251 = vmul.f32 %v2246, %v530
        %v2252 = vmul.f32 %v426, %v530
        %v2253 = vadd.f32 %v2251, %v2252
        %s2254 = scalar_lea.vmem %s2, 16
        %v2255 = vld [vmem:[%s2254] sm:$0xf]
        %v2256 = vld [vmem:[%s2254 + $0x4] sm:$0xf]
        %v2257 = vld [vmem:[%s2254 + $0x8] sm:$0xf]
        %v2258 = vld [vmem:[%s2254 + $0xc] sm:$0xf]
        %v2259 = vpack.c.bf16 %v2253, %v2253
        %s2260 = scalar_lea.vmem %s3, 32
        %v2261 = vld [vmem:[%s2260] sm:$0xff]
        %v2262 = vld [vmem:[%s2260 + $0x8] sm:$0xff]
        %v2263 = vld [vmem:[%s2260 + $0x10] sm:$0xff]
        %v2264 = vld [vmem:[%s2260 + $0x18] sm:$0xff]
        %2266 = vset.pattern.permute.xlu0 0
        %2267 = vperm.xlu0 %2266, %v2261
        %v2268 = vpop.permute.xlu0 %2267
        %2271 = vset.pattern.permute.xlu0 0
        %2272 = vperm.xlu0 %2271, %v2262
        %v2273 = vpop.permute.xlu0 %2272
        %2276 = vset.pattern.permute.xlu0 0
        %2277 = vperm.xlu0 %2276, %v2263
        %v2278 = vpop.permute.xlu0 %2277
        %2281 = vset.pattern.permute.xlu0 0
        %2282 = vperm.xlu0 %2281, %v2264
        %v2283 = vpop.permute.xlu0 %2282
        %v2289 = vunpack.c.l.b16 %v2255
        %v2290 = vunpack.c.l.b16 %v2256
        %v2291 = vunpack.c.l.b16 %v2257
        %v2292 = vunpack.c.l.b16 %v2258
        %v2293 = vpack.c.b16 %v2290, %v2289
        %v2294 = vpack.c.b16 %v2292, %v2291
        %v2296 = vsel %vm466, %v2293, 0
        %v2299 = vsel %vm466, %v2294, 0
        %v2302 = vsel %vm473, %v2259, 0
        %2304 = vmatprep.subr.bf16.mxu0 0
        %2305 = vmatpush1.bf16.msra.mxu0 %v2302
        %2306 = vmatprep.subr.bf16.mxu0 0
        %2307 = vmatpush1.bf16.msra.mxu0 0
        %2308 = vmatprep.subr.bf16.mxu0 0
        %2309 = vmatpush1.bf16.msra.mxu0 0
        %2310 = vmatprep.subr.bf16.mxu0 0
        %2311 = vmatpush1.bf16.msra.mxu0 0
        %2312 = vmatprep.subr.bf16.mxu0 0
        %2313 = vmatpush1.bf16.msra.mxu0 0
        %2314 = vmatprep.subr.bf16.mxu0 0
        %2315 = vmatpush1.bf16.msra.mxu0 0
        %2316 = vmatprep.subr.bf16.mxu0 0
        %2317 = vmatpush1.bf16.msra.mxu0 0
        %2318 = vmatprep.subr.bf16.mxu0 0
        %2319 = vmatpush1.bf16.msra.mxu0 0
        %2320 = vmatprep.subr.bf16.mxu0 0
        %2321 = vmatpush1.bf16.msra.mxu0 0
        %2322 = vmatprep.subr.bf16.mxu0 0
        %2323 = vmatpush1.bf16.msra.mxu0 0
        %2324 = vmatprep.subr.bf16.mxu0 0
        %2325 = vmatpush1.bf16.msra.mxu0 0
        %2326 = vmatprep.subr.bf16.mxu0 0
        %2327 = vmatpush1.bf16.msra.mxu0 0
        %2328 = vmatprep.subr.bf16.mxu0 0
        %2329 = vmatpush1.bf16.msra.mxu0 0
        %2330 = vmatprep.subr.bf16.mxu0 0
        %2331 = vmatpush1.bf16.msra.mxu0 0
        %2332 = vmatprep.subr.bf16.mxu0 0
        %2333 = vmatpush1.bf16.msra.mxu0 0
        %2334 = vmatprep.subr.bf16.mxu0 0
        %2335 = vmatpush1.bf16.msra.mxu0 0
        %2336 = vmatprep.mubr.bf16.mxu0 0
        %2337 = vmatmul.mubr.bf16.gmra.mrb[0].mxu0 %v2296
        %v2338 = vpop.f32.mrb[0].mxu0
        %v2339 = vadd.f32 %v2268, %v2338
        %v2340 = vpop.f32.mrb[0].mxu0
        %v2341 = vpop.f32.mrb[0].mxu0
        %v2342 = vadd.f32 %v2273, %v2341
        %v2343 = vpop.f32.mrb[0].mxu0
        %2344 = vmatprep.mubr.bf16.mxu0 0
        %2345 = vmatmul.mubr.bf16.gmra.mrb[0].mxu0 %v2299
        %v2346 = vpop.f32.mrb[0].mxu0
        %v2347 = vadd.f32 %v2278, %v2346
        %v2348 = vpop.f32.mrb[0].mxu0
        %v2349 = vpop.f32.mrb[0].mxu0
        %v2350 = vadd.f32 %v2283, %v2349
        %v2351 = vpop.f32.mrb[0].mxu0
        %2352 = vdwg.mxu0
        %v2353 = vmul.f32 %v2339, %v530
        %v2354 = vmul.f32 %v2342, %v530
        %v2355 = vmul.f32 %v2347, %v530
        %v2356 = vmul.f32 %v2350, %v530
        %2357 = vrot.lane.b32.xlu0 %v2353, 2
        %v2358 = vpop.permute.xlu0 %2357
        %2359 = vrot.lane.b32.xlu0 %v2354, 2
        %v2360 = vpop.permute.xlu0 %2359
        %2361 = vrot.lane.b32.xlu0 %v2355, 2
        %v2362 = vpop.permute.xlu0 %2361
        %2363 = vrot.lane.b32.xlu0 %v2356, 2
        %v2364 = vpop.permute.xlu0 %2363
        %v2365 = vpack.c.bf16 %v2360, %v2358
        %v2366 = vpack.c.bf16 %v2364, %v2362
        %2367 = vst [vmem:[#allocation2] sm:$0xff] %v2365
        %2368 = vst [vmem:[#allocation2 + $0x8] sm:$0xff] %v2366
        %2369 = vrot.lane.b32.xlu0 %v2353, 1
        %v2370 = vpop.permute.xlu0 %2369
        %2371 = vrot.lane.b32.xlu0 %v2354, 1
        %v2372 = vpop.permute.xlu0 %2371
        %2373 = vrot.lane.b32.xlu0 %v2355, 1
        %v2374 = vpop.permute.xlu0 %2373
        %2375 = vrot.lane.b32.xlu0 %v2356, 1
        %v2376 = vpop.permute.xlu0 %2375
        %v2377 = vpack.c.bf16 %v2372, %v2370
        %v2378 = vpack.c.bf16 %v2376, %v2374
        %2379 = vst [vmem:[#allocation2 + $0x10] sm:$0xff] %v2377
        %2380 = vst [vmem:[#allocation2 + $0x18] sm:$0xff] %v2378
        %v2381 = vpack.c.bf16 %v2354, %v2353
        %v2382 = vpack.c.bf16 %v2356, %v2355
        %2383 = vst [vmem:[#allocation2 + $0x20] sm:$0xff] %v2381
        %2384 = vst [vmem:[#allocation2 + $0x28] sm:$0xff] %v2382
        %2385 = vrot.lane.b32.xlu0 %v2353, 127
        %v2386 = vpop.permute.xlu0 %2385
        %2387 = vrot.lane.b32.xlu0 %v2354, 127
        %v2388 = vpop.permute.xlu0 %2387
        %2389 = vrot.lane.b32.xlu0 %v2355, 127
        %v2390 = vpop.permute.xlu0 %2389
        %2391 = vrot.lane.b32.xlu0 %v2356, 127
        %v2392 = vpop.permute.xlu0 %2391
        %v2393 = vpack.c.bf16 %v2388, %v2386
        %v2394 = vpack.c.bf16 %v2392, %v2390
        %2395 = vst [vmem:[#allocation2 + $0x30] sm:$0xff] %v2393
        %2396 = vst [vmem:[#allocation2 + $0x38] sm:$0xff] %v2394
        %2397 = vrot.lane.b32.xlu0 %v2353, 126
        %v2398 = vpop.permute.xlu0 %2397
        %2399 = vrot.lane.b32.xlu0 %v2354, 126
        %v2400 = vpop.permute.xlu0 %2399
        %2401 = vrot.lane.b32.xlu0 %v2355, 126
        %v2402 = vpop.permute.xlu0 %2401
        %2403 = vrot.lane.b32.xlu0 %v2356, 126
        %v2404 = vpop.permute.xlu0 %2403
        %v2405 = vpack.c.bf16 %v2400, %v2398
        %v2406 = vpack.c.bf16 %v2404, %v2402
        %2407 = vst [vmem:[#allocation2 + $0x40] sm:$0xff] %v2405
        %2408 = vst [vmem:[#allocation2 + $0x48] sm:$0xff] %v2406
        %s2409 = scalar_lea.vmem %s4, 256
        %v2410 = vld [vmem:[%s2409] sm:$0xff]
        %v2411 = vld [vmem:[%s2409 + $0x8] sm:$0xff]
        %v2412 = vld [vmem:[%s2409 + $0x10] sm:$0xff]
        %v2413 = vld [vmem:[%s2409 + $0x18] sm:$0xff]
        %v2414 = vld [vmem:[%s2409 + $0x20] sm:$0xff]
        %v2415 = vld [vmem:[%s2409 + $0x28] sm:$0xff]
        %v2416 = vld [vmem:[%s2409 + $0x30] sm:$0xff]
        %v2417 = vld [vmem:[%s2409 + $0x38] sm:$0xff]
        %v2418 = vld [vmem:[#allocation2] sm:$0xff]
        %v2419 = vld [vmem:[#allocation2 + $0x8] sm:$0xff]
        %v2420 = vld [vmem:[#allocation2 + $0x10] sm:$0xff]
        %v2421 = vld [vmem:[#allocation2 + $0x18] sm:$0xff]
        %v2422 = vld [vmem:[#allocation2 + $0x20] sm:$0xff]
        %v2423 = vld [vmem:[#allocation2 + $0x28] sm:$0xff]
        %v2424 = vld [vmem:[#allocation2 + $0x30] sm:$0xff]
        %v2425 = vld [vmem:[#allocation2 + $0x38] sm:$0xff]
        %v2426 = vld [vmem:[#allocation2 + $0x40] sm:$0xff]
        %v2427 = vld [vmem:[#allocation2 + $0x48] sm:$0xff]
        %s2428 = scalar_lea.vmem %s5, 256
        %v2429 = vld [vmem:[%s2428] sm:$0xff]
        %v2430 = vld [vmem:[%s2428 + $0x8] sm:$0xff]
        %v2431 = vld [vmem:[%s2428 + $0x10] sm:$0xff]
        %v2432 = vld [vmem:[%s2428 + $0x18] sm:$0xff]
        %v2433 = vld [vmem:[%s2428 + $0x20] sm:$0xff]
        %v2434 = vld [vmem:[%s2428 + $0x28] sm:$0xff]
        %v2435 = vld [vmem:[%s2428 + $0x30] sm:$0xff]
        %v2436 = vld [vmem:[%s2428 + $0x38] sm:$0xff]
        %2438 = vset.pattern.permute.xlu0 0
        %2439 = vperm.xlu0 %2438, %v2429
        %v2440 = vpop.permute.xlu0 %2439
        %2443 = vset.pattern.permute.xlu0 0
        %2444 = vperm.xlu0 %2443, %v2430
        %v2445 = vpop.permute.xlu0 %2444
        %2448 = vset.pattern.permute.xlu0 0
        %2449 = vperm.xlu0 %2448, %v2431
        %v2450 = vpop.permute.xlu0 %2449
        %2453 = vset.pattern.permute.xlu0 0
        %2454 = vperm.xlu0 %2453, %v2432
        %v2455 = vpop.permute.xlu0 %2454
        %2458 = vset.pattern.permute.xlu0 0
        %2459 = vperm.xlu0 %2458, %v2433
        %v2460 = vpop.permute.xlu0 %2459
        %2463 = vset.pattern.permute.xlu0 0
        %2464 = vperm.xlu0 %2463, %v2434
        %v2465 = vpop.permute.xlu0 %2464
        %2468 = vset.pattern.permute.xlu0 0
        %2469 = vperm.xlu0 %2468, %v2435
        %v2470 = vpop.permute.xlu0 %2469
        %2473 = vset.pattern.permute.xlu0 0
        %2474 = vperm.xlu0 %2473, %v2436
        %v2475 = vpop.permute.xlu0 %2474
        %v2485 = vunpack.c.l.b16 %v2410
        %v2486 = vunpack.c.h.b16 %v2410
        %v2487 = vunpack.c.l.b16 %v2411
        %v2488 = vunpack.c.h.b16 %v2411
        %v2489 = vunpack.c.l.b16 %v2412
        %v2490 = vunpack.c.h.b16 %v2412
        %v2491 = vunpack.c.l.b16 %v2413
        %v2492 = vunpack.c.h.b16 %v2413
        %v2493 = vunpack.c.l.b16 %v2414
        %v2494 = vunpack.c.h.b16 %v2414
        %v2495 = vunpack.c.l.b16 %v2415
        %v2496 = vunpack.c.h.b16 %v2415
        %v2497 = vunpack.c.l.b16 %v2416
        %v2498 = vunpack.c.h.b16 %v2416
        %v2499 = vunpack.c.l.b16 %v2417
        %v2500 = vunpack.c.h.b16 %v2417
        %v2501 = vpack.c.b16 %v2487, %v2485
        %v2502 = vpack.c.b16 %v2488, %v2486
        %v2503 = vpack.c.b16 %v2491, %v2489
        %v2504 = vpack.c.b16 %v2492, %v2490
        %v2505 = vpack.c.b16 %v2495, %v2493
        %v2506 = vpack.c.b16 %v2496, %v2494
        %v2507 = vpack.c.b16 %v2499, %v2497
        %v2508 = vpack.c.b16 %v2500, %v2498
        %v2514 = vsel %vm690, %v2502, 0
        %v2517 = vsel %vm690, %v2504, 0
        %v2520 = vsel %vm690, %v2506, 0
        %v2523 = vsel %vm690, %v2508, 0
        %2525 = vmatprep.subr.bf16.mxu0 0
        %2526 = vmatpush1.bf16.msra.mxu0 %v2418
        %2527 = vmatprep.subr.bf16.mxu0 0
        %2528 = vmatpush1.bf16.msra.mxu0 %v2419
        %2529 = vmatprep.subr.bf16.mxu0 0
        %2530 = vmatpush1.bf16.msra.mxu0 %v2420
        %2531 = vmatprep.subr.bf16.mxu0 0
        %2532 = vmatpush1.bf16.msra.mxu0 %v2421
        %2533 = vmatprep.subr.bf16.mxu0 0
        %2534 = vmatpush1.bf16.msra.mxu0 %v2422
        %2535 = vmatprep.subr.bf16.mxu0 0
        %2536 = vmatpush1.bf16.msra.mxu0 %v2423
        %2537 = vmatprep.subr.bf16.mxu0 0
        %2538 = vmatpush1.bf16.msra.mxu0 %v2424
        %2539 = vmatprep.subr.bf16.mxu0 0
        %2540 = vmatpush1.bf16.msra.mxu0 %v2425
        %2541 = vmatprep.subr.bf16.mxu0 0
        %2542 = vmatpush1.bf16.msra.mxu0 %v2426
        %2543 = vmatprep.subr.bf16.mxu0 0
        %2544 = vmatpush1.bf16.msra.mxu0 %v2427
        %2545 = vmatprep.subr.bf16.mxu0 0
        %2546 = vmatpush1.bf16.msra.mxu0 0
        %2547 = vmatprep.subr.bf16.mxu0 0
        %2548 = vmatpush1.bf16.msra.mxu0 0
        %2549 = vmatprep.subr.bf16.mxu0 0
        %2550 = vmatpush1.bf16.msra.mxu0 0
        %2551 = vmatprep.subr.bf16.mxu0 0
        %2552 = vmatpush1.bf16.msra.mxu0 0
        %2553 = vmatprep.subr.bf16.mxu0 0
        %2554 = vmatpush1.bf16.msra.mxu0 0
        %2555 = vmatprep.subr.bf16.mxu0 0
        %2556 = vmatpush1.bf16.msra.mxu0 0
        %2557 = vmatprep.mubr.bf16.mxu0 %v2514
        %2558 = vmatmul.mubr.bf16.gmra.mrb[0].mxu0 %v2501
        %v2559 = vpop.f32.mrb[0].mxu0
        %v2560 = vadd.f32 %v2440, %v2559
        %v2561 = vpop.f32.mrb[0].mxu0
        %v2562 = vpop.f32.mrb[0].mxu0
        %v2563 = vadd.f32 %v2445, %v2562
        %v2564 = vpop.f32.mrb[0].mxu0
        %2565 = vmatprep.mubr.bf16.mxu0 %v2517
        %2566 = vmatmul.mubr.bf16.gmra.mrb[0].mxu0 %v2503
        %v2567 = vpop.f32.mrb[0].mxu0
        %v2568 = vadd.f32 %v2450, %v2567
        %v2569 = vpop.f32.mrb[0].mxu0
        %v2570 = vpop.f32.mrb[0].mxu0
        %v2571 = vadd.f32 %v2455, %v2570
        %v2572 = vpop.f32.mrb[0].mxu0
        %2573 = vmatprep.mubr.bf16.mxu0 %v2520
        %2574 = vmatmul.mubr.bf16.gmra.mrb[0].mxu0 %v2505
        %v2575 = vpop.f32.mrb[0].mxu0
        %v2576 = vadd.f32 %v2460, %v2575
        %v2577 = vpop.f32.mrb[0].mxu0
        %v2578 = vpop.f32.mrb[0].mxu0
        %v2579 = vadd.f32 %v2465, %v2578
        %v2580 = vpop.f32.mrb[0].mxu0
        %2581 = vmatprep.mubr.bf16.mxu0 %v2523
        %2582 = vmatmul.mubr.bf16.gmra.mrb[0].mxu0 %v2507
        %v2583 = vpop.f32.mrb[0].mxu0
        %v2584 = vadd.f32 %v2470, %v2583
        %v2585 = vpop.f32.mrb[0].mxu0
        %v2586 = vpop.f32.mrb[0].mxu0
        %v2587 = vadd.f32 %v2475, %v2586
        %v2588 = vpop.f32.mrb[0].mxu0
        %2589 = vdwg.mxu0
        %v2590 = vtanh.pop %v2560
        %v2591 = vtanh.pop %v2563
        %v2592 = vtanh.pop %v2568
        %v2593 = vtanh.pop %v2571
        %v2594 = vxor.u32 %v2576, 2147483648
        %v2595 = vxor.u32 %v2579, 2147483648
        %v2596 = vxor.u32 %v2584, 2147483648
        %v2597 = vxor.u32 %v2587, 2147483648
        %v2598 = vmul.f32 %v2594, 1.442695
        %v2599 = vpow.pop %v2598
        %v2600 = vmul.f32 %v2595, 1.442695
        %v2601 = vpow.pop %v2600
        %v2602 = vmul.f32 %v2596, 1.442695
        %v2603 = vpow.pop %v2602
        %v2604 = vmul.f32 %v2597, 1.442695
        %v2605 = vpow.pop %v2604
        %v2606 = vadd.f32 %v2599, 1.0
        %v2607 = vadd.f32 %v2601, 1.0
        %v2608 = vadd.f32 %v2603, 1.0
        %v2609 = vadd.f32 %v2605, 1.0
        %v2610 = vrcp.pop %v2606
        %v2611 = vmul.f32 1.0, %v2610
        %v2612 = vrcp.pop %v2607
        %v2613 = vmul.f32 1.0, %v2612
        %v2614 = vrcp.pop %v2608
        %v2615 = vmul.f32 1.0, %v2614
        %v2616 = vrcp.pop %v2609
        %v2617 = vmul.f32 1.0, %v2616
        %v2618 = vmul.f32 %v2590, %v2611
        %v2619 = vmul.f32 %v2591, %v2613
        %v2620 = vmul.f32 %v2592, %v2615
        %v2621 = vmul.f32 %v2593, %v2617
        %s2622 = scalar_lea.vmem %s6, 96
        %v2623 = vld [vmem:[%s2622] sm:$0xf]
        %v2624 = vld [vmem:[%s2622 + $0x4] sm:$0xf]
        %v2625 = vld [vmem:[%s2622 + $0x8] sm:$0xf]
        %v2626 = vld [vmem:[%s2622 + $0xc] sm:$0xf]
        %v2627 = vld [vmem:[%s2622 + $0x10] sm:$0xf]
        %v2628 = vld [vmem:[%s2622 + $0x14] sm:$0xf]
        %v2629 = vld [vmem:[%s2622 + $0x18] sm:$0xf]
        %v2630 = vld [vmem:[%s2622 + $0x1c] sm:$0xf]
        %v2631 = vpack.c.bf16 %v2619, %v2618
        %v2632 = vpack.c.bf16 %v2621, %v2620
        %s2633 = scalar_lea.vmem %s7, 192
        %v2634 = vld [vmem:[%s2633] sm:$0xff]
        %v2635 = vld [vmem:[%s2633 + $0x8] sm:$0xff]
        %v2636 = vld [vmem:[%s2633 + $0x10] sm:$0xff]
        %v2637 = vld [vmem:[%s2633 + $0x18] sm:$0xff]
        %v2638 = vld [vmem:[%s2633 + $0x20] sm:$0xff]
        %v2639 = vld [vmem:[%s2633 + $0x28] sm:$0xff]
        %v2640 = vld [vmem:[%s2633 + $0x30] sm:$0xff]
        %v2641 = vld [vmem:[%s2633 + $0x38] sm:$0xff]
        %2643 = vset.pattern.permute.xlu0 0
        %2644 = vperm.xlu0 %2643, %v2634
        %v2645 = vpop.permute.xlu0 %2644
        %2648 = vset.pattern.permute.xlu0 0
        %2649 = vperm.xlu0 %2648, %v2635
        %v2650 = vpop.permute.xlu0 %2649
        %2653 = vset.pattern.permute.xlu0 0
        %2654 = vperm.xlu0 %2653, %v2636
        %v2655 = vpop.permute.xlu0 %2654
        %2658 = vset.pattern.permute.xlu0 0
        %2659 = vperm.xlu0 %2658, %v2637
        %v2660 = vpop.permute.xlu0 %2659
        %2663 = vset.pattern.permute.xlu0 0
        %2664 = vperm.xlu0 %2663, %v2638
        %v2665 = vpop.permute.xlu0 %2664
        %2668 = vset.pattern.permute.xlu0 0
        %2669 = vperm.xlu0 %2668, %v2639
        %v2670 = vpop.permute.xlu0 %2669
        %2673 = vset.pattern.permute.xlu0 0
        %2674 = vperm.xlu0 %2673, %v2640
        %v2675 = vpop.permute.xlu0 %2674
        %2678 = vset.pattern.permute.xlu0 0
        %2679 = vperm.xlu0 %2678, %v2641
        %v2680 = vpop.permute.xlu0 %2679
        %v2690 = vunpack.c.l.b16 %v2623
        %v2691 = vunpack.c.l.b16 %v2624
        %v2692 = vunpack.c.l.b16 %v2625
        %v2693 = vunpack.c.l.b16 %v2626
        %v2694 = vunpack.c.l.b16 %v2627
        %v2695 = vunpack.c.l.b16 %v2628
        %v2696 = vunpack.c.l.b16 %v2629
        %v2697 = vunpack.c.l.b16 %v2630
        %v2698 = vpack.c.b16 %v2691, %v2690
        %v2699 = vpack.c.b16 %v2693, %v2692
        %v2700 = vpack.c.b16 %v2695, %v2694
        %v2701 = vpack.c.b16 %v2697, %v2696
        %v2703 = vsel %vm690, %v2698, 0
        %v2706 = vsel %vm690, %v2699, 0
        %v2709 = vsel %vm690, %v2700, 0
        %v2712 = vsel %vm690, %v2701, 0
        %2714 = vmatprep.subr.bf16.mxu0 0
        %2715 = vmatpush1.bf16.msra.mxu0 %v2631
        %2716 = vmatprep.subr.bf16.mxu0 0
        %2717 = vmatpush1.bf16.msra.mxu0 %v2632
        %2718 = vmatprep.subr.bf16.mxu0 0
        %2719 = vmatpush1.bf16.msra.mxu0 0
        %2720 = vmatprep.subr.bf16.mxu0 0
        %2721 = vmatpush1.bf16.msra.mxu0 0
        %2722 = vmatprep.subr.bf16.mxu0 0
        %2723 = vmatpush1.bf16.msra.mxu0 0
        %2724 = vmatprep.subr.bf16.mxu0 0
        %2725 = vmatpush1.bf16.msra.mxu0 0
        %2726 = vmatprep.subr.bf16.mxu0 0
        %2727 = vmatpush1.bf16.msra.mxu0 0
        %2728 = vmatprep.subr.bf16.mxu0 0
        %2729 = vmatpush1.bf16.msra.mxu0 0
        %2730 = vmatprep.subr.bf16.mxu0 0
        %2731 = vmatpush1.bf16.msra.mxu0 0
        %2732 = vmatprep.subr.bf16.mxu0 0
        %2733 = vmatpush1.bf16.msra.mxu0 0
        %2734 = vmatprep.subr.bf16.mxu0 0
        %2735 = vmatpush1.bf16.msra.mxu0 0
        %2736 = vmatprep.subr.bf16.mxu0 0
        %2737 = vmatpush1.bf16.msra.mxu0 0
        %2738 = vmatprep.subr.bf16.mxu0 0
        %2739 = vmatpush1.bf16.msra.mxu0 0
        %2740 = vmatprep.subr.bf16.mxu0 0
        %2741 = vmatpush1.bf16.msra.mxu0 0
        %2742 = vmatprep.subr.bf16.mxu0 0
        %2743 = vmatpush1.bf16.msra.mxu0 0
        %2744 = vmatprep.subr.bf16.mxu0 0
        %2745 = vmatpush1.bf16.msra.mxu0 0
        %2746 = vmatprep.mubr.bf16.mxu0 0
        %2747 = vmatmul.mubr.bf16.gmra.mrb[0].mxu0 %v2703
        %v2748 = vpop.f32.mrb[0].mxu0
        %v2749 = vadd.f32 %v2645, %v2748
        %v2750 = vpop.f32.mrb[0].mxu0
        %v2751 = vpop.f32.mrb[0].mxu0
        %v2752 = vadd.f32 %v2650, %v2751
        %v2753 = vpop.f32.mrb[0].mxu0
        %2754 = vmatprep.mubr.bf16.mxu0 0
        %2755 = vmatmul.mubr.bf16.gmra.mrb[0].mxu0 %v2706
        %v2756 = vpop.f32.mrb[0].mxu0
        %v2757 = vadd.f32 %v2655, %v2756
        %v2758 = vpop.f32.mrb[0].mxu0
        %v2759 = vpop.f32.mrb[0].mxu0
        %v2760 = vadd.f32 %v2660, %v2759
        %v2761 = vpop.f32.mrb[0].mxu0
        %2762 = vmatprep.mubr.bf16.mxu0 0
        %2763 = vmatmul.mubr.bf16.gmra.mrb[0].mxu0 %v2709
        %v2764 = vpop.f32.mrb[0].mxu0
        %v2765 = vadd.f32 %v2665, %v2764
        %v2766 = vpop.f32.mrb[0].mxu0
        %v2767 = vpop.f32.mrb[0].mxu0
        %v2768 = vadd.f32 %v2670, %v2767
        %v2769 = vpop.f32.mrb[0].mxu0
        %2770 = vmatprep.mubr.bf16.mxu0 0
        %2771 = vmatmul.mubr.bf16.gmra.mrb[0].mxu0 %v2712
        %v2772 = vpop.f32.mrb[0].mxu0
        %v2773 = vadd.f32 %v2675, %v2772
        %v2774 = vpop.f32.mrb[0].mxu0
        %v2775 = vpop.f32.mrb[0].mxu0
        %v2776 = vadd.f32 %v2680, %v2775
        %v2777 = vpop.f32.mrb[0].mxu0
        %2778 = vdwg.mxu0
        %v2779 = vadd.f32 %v2353, %v2749
        %v2780 = vadd.f32 %v2354, %v2752
        %v2781 = vadd.f32 %v2355, %v2757
        %v2782 = vadd.f32 %v2356, %v2760
        %v2783 = vmul.f32 %v2779, %v530
        %v2784 = vmul.f32 %v2780, %v530
        %v2785 = vmul.f32 %v2781, %v530
        %v2786 = vmul.f32 %v2782, %v530
        %2787 = vrot.lane.b32.xlu0 %v2783, 2
        %v2788 = vpop.permute.xlu0 %2787
        %2789 = vrot.lane.b32.xlu0 %v2784, 2
        %v2790 = vpop.permute.xlu0 %2789
        %2791 = vrot.lane.b32.xlu0 %v2785, 2
        %v2792 = vpop.permute.xlu0 %2791
        %2793 = vrot.lane.b32.xlu0 %v2786, 2
        %v2794 = vpop.permute.xlu0 %2793
        %v2795 = vpack.c.bf16 %v2790, %v2788
        %v2796 = vpack.c.bf16 %v2794, %v2792
        %2797 = vst [vmem:[#allocation2] sm:$0xff] %v2795
        %2798 = vst [vmem:[#allocation2 + $0x8] sm:$0xff] %v2796
        %2799 = vrot.lane.b32.xlu0 %v2783, 1
        %v2800 = vpop.permute.xlu0 %2799
        %2801 = vrot.lane.b32.xlu0 %v2784, 1
        %v2802 = vpop.permute.xlu0 %2801
        %2803 = vrot.lane.b32.xlu0 %v2785, 1
        %v2804 = vpop.permute.xlu0 %2803
        %2805 = vrot.lane.b32.xlu0 %v2786, 1
        %v2806 = vpop.permute.xlu0 %2805
        %v2807 = vpack.c.bf16 %v2802, %v2800
        %v2808 = vpack.c.bf16 %v2806, %v2804
        %2809 = vst [vmem:[#allocation2 + $0x10] sm:$0xff] %v2807
        %2810 = vst [vmem:[#allocation2 + $0x18] sm:$0xff] %v2808
        %v2811 = vpack.c.bf16 %v2784, %v2783
        %v2812 = vpack.c.bf16 %v2786, %v2785
        %2813 = vst [vmem:[#allocation2 + $0x20] sm:$0xff] %v2811
        %2814 = vst [vmem:[#allocation2 + $0x28] sm:$0xff] %v2812
        %2815 = vrot.lane.b32.xlu0 %v2783, 127
        %v2816 = vpop.permute.xlu0 %2815
        %2817 = vrot.lane.b32.xlu0 %v2784, 127
        %v2818 = vpop.permute.xlu0 %2817
        %2819 = vrot.lane.b32.xlu0 %v2785, 127
        %v2820 = vpop.permute.xlu0 %2819
        %2821 = vrot.lane.b32.xlu0 %v2786, 127
        %v2822 = vpop.permute.xlu0 %2821
        %v2823 = vpack.c.bf16 %v2818, %v2816
        %v2824 = vpack.c.bf16 %v2822, %v2820
        %2825 = vst [vmem:[#allocation2 + $0x30] sm:$0xff] %v2823
        %2826 = vst [vmem:[#allocation2 + $0x38] sm:$0xff] %v2824
        %2827 = vrot.lane.b32.xlu0 %v2783, 126
        %v2828 = vpop.permute.xlu0 %2827
        %2829 = vrot.lane.b32.xlu0 %v2784, 126
        %v2830 = vpop.permute.xlu0 %2829
        %2831 = vrot.lane.b32.xlu0 %v2785, 126
        %v2832 = vpop.permute.xlu0 %2831
        %2833 = vrot.lane.b32.xlu0 %v2786, 126
        %v2834 = vpop.permute.xlu0 %2833
        %v2835 = vpack.c.bf16 %v2830, %v2828
        %v2836 = vpack.c.bf16 %v2834, %v2832
        %2837 = vst [vmem:[#allocation2 + $0x40] sm:$0xff] %v2835
        %2838 = vst [vmem:[#allocation2 + $0x48] sm:$0xff] %v2836
        %s2839 = scalar_lea.vmem %s4, 320
        %v2840 = vld [vmem:[%s2839] sm:$0xff]
        %v2841 = vld [vmem:[%s2839 + $0x8] sm:$0xff]
        %v2842 = vld [vmem:[%s2839 + $0x10] sm:$0xff]
        %v2843 = vld [vmem:[%s2839 + $0x18] sm:$0xff]
        %v2844 = vld [vmem:[%s2839 + $0x20] sm:$0xff]
        %v2845 = vld [vmem:[%s2839 + $0x28] sm:$0xff]
        %v2846 = vld [vmem:[%s2839 + $0x30] sm:$0xff]
        %v2847 = vld [vmem:[%s2839 + $0x38] sm:$0xff]
        %v2848 = vld [vmem:[#allocation2] sm:$0xff]
        %v2849 = vld [vmem:[#allocation2 + $0x8] sm:$0xff]
        %v2850 = vld [vmem:[#allocation2 + $0x10] sm:$0xff]
        %v2851 = vld [vmem:[#allocation2 + $0x18] sm:$0xff]
        %v2852 = vld [vmem:[#allocation2 + $0x20] sm:$0xff]
        %v2853 = vld [vmem:[#allocation2 + $0x28] sm:$0xff]
        %v2854 = vld [vmem:[#allocation2 + $0x30] sm:$0xff]
        %v2855 = vld [vmem:[#allocation2 + $0x38] sm:$0xff]
        %v2856 = vld [vmem:[#allocation2 + $0x40] sm:$0xff]
        %v2857 = vld [vmem:[#allocation2 + $0x48] sm:$0xff]
        %s2858 = scalar_lea.vmem %s5, 320
        %v2859 = vld [vmem:[%s2858] sm:$0xff]
        %v2860 = vld [vmem:[%s2858 + $0x8] sm:$0xff]
        %v2861 = vld [vmem:[%s2858 + $0x10] sm:$0xff]
        %v2862 = vld [vmem:[%s2858 + $0x18] sm:$0xff]
        %v2863 = vld [vmem:[%s2858 + $0x20] sm:$0xff]
        %v2864 = vld [vmem:[%s2858 + $0x28] sm:$0xff]
        %v2865 = vld [vmem:[%s2858 + $0x30] sm:$0xff]
        %v2866 = vld [vmem:[%s2858 + $0x38] sm:$0xff]
        %2868 = vset.pattern.permute.xlu0 0
        %2869 = vperm.xlu0 %2868, %v2859
        %v2870 = vpop.permute.xlu0 %2869
        %2873 = vset.pattern.permute.xlu0 0
        %2874 = vperm.xlu0 %2873, %v2860
        %v2875 = vpop.permute.xlu0 %2874
        %2878 = vset.pattern.permute.xlu0 0
        %2879 = vperm.xlu0 %2878, %v2861
        %v2880 = vpop.permute.xlu0 %2879
        %2883 = vset.pattern.permute.xlu0 0
        %2884 = vperm.xlu0 %2883, %v2862
        %v2885 = vpop.permute.xlu0 %2884
        %2888 = vset.pattern.permute.xlu0 0
        %2889 = vperm.xlu0 %2888, %v2863
        %v2890 = vpop.permute.xlu0 %2889
        %2893 = vset.pattern.permute.xlu0 0
        %2894 = vperm.xlu0 %2893, %v2864
        %v2895 = vpop.permute.xlu0 %2894
        %2898 = vset.pattern.permute.xlu0 0
        %2899 = vperm.xlu0 %2898, %v2865
        %v2900 = vpop.permute.xlu0 %2899
        %2903 = vset.pattern.permute.xlu0 0
        %2904 = vperm.xlu0 %2903, %v2866
        %v2905 = vpop.permute.xlu0 %2904
        %v2915 = vunpack.c.l.b16 %v2840
        %v2916 = vunpack.c.h.b16 %v2840
        %v2917 = vunpack.c.l.b16 %v2841
        %v2918 = vunpack.c.h.b16 %v2841
        %v2919 = vunpack.c.l.b16 %v2842
        %v2920 = vunpack.c.h.b16 %v2842
        %v2921 = vunpack.c.l.b16 %v2843
        %v2922 = vunpack.c.h.b16 %v2843
        %v2923 = vunpack.c.l.b16 %v2844
        %v2924 = vunpack.c.h.b16 %v2844
        %v2925 = vunpack.c.l.b16 %v2845
        %v2926 = vunpack.c.h.b16 %v2845
        %v2927 = vunpack.c.l.b16 %v2846
        %v2928 = vunpack.c.h.b16 %v2846
        %v2929 = vunpack.c.l.b16 %v2847
        %v2930 = vunpack.c.h.b16 %v2847
        %v2931 = vpack.c.b16 %v2917, %v2915
        %v2932 = vpack.c.b16 %v2918, %v2916
        %v2933 = vpack.c.b16 %v2921, %v2919
        %v2934 = vpack.c.b16 %v2922, %v2920
        %v2935 = vpack.c.b16 %v2925, %v2923
        %v2936 = vpack.c.b16 %v2926, %v2924
        %v2937 = vpack.c.b16 %v2929, %v2927
        %v2938 = vpack.c.b16 %v2930, %v2928
        %v2944 = vsel %vm690, %v2932, 0
        %v2947 = vsel %vm690, %v2934, 0
        %v2950 = vsel %vm690, %v2936, 0
        %v2953 = vsel %vm690, %v2938, 0
        %2955 = vmatprep.subr.bf16.mxu0 0
        %2956 = vmatpush1.bf16.msra.mxu0 %v2848
        %2957 = vmatprep.subr.bf16.mxu0 0
        %2958 = vmatpush1.bf16.msra.mxu0 %v2849
        %2959 = vmatprep.subr.bf16.mxu0 0
        %2960 = vmatpush1.bf16.msra.mxu0 %v2850
        %2961 = vmatprep.subr.bf16.mxu0 0
        %2962 = vmatpush1.bf16.msra.mxu0 %v2851
        %2963 = vmatprep.subr.bf16.mxu0 0
        %2964 = vmatpush1.bf16.msra.mxu0 %v2852
        %2965 = vmatprep.subr.bf16.mxu0 0
        %2966 = vmatpush1.bf16.msra.mxu0 %v2853
        %2967 = vmatprep.subr.bf16.mxu0 0
        %2968 = vmatpush1.bf16.msra.mxu0 %v2854
        %2969 = vmatprep.subr.bf16.mxu0 0
        %2970 = vmatpush1.bf16.msra.mxu0 %v2855
        %2971 = vmatprep.subr.bf16.mxu0 0
        %2972 = vmatpush1.bf16.msra.mxu0 %v2856
        %2973 = vmatprep.subr.bf16.mxu0 0
        %2974 = vmatpush1.bf16.msra.mxu0 %v2857
        %2975 = vmatprep.subr.bf16.mxu0 0
        %2976 = vmatpush1.bf16.msra.mxu0 0
        %2977 = vmatprep.subr.bf16.mxu0 0
        %2978 = vmatpush1.bf16.msra.mxu0 0
        %2979 = vmatprep.subr.bf16.mxu0 0
        %2980 = vmatpush1.bf16.msra.mxu0 0
        %2981 = vmatprep.subr.bf16.mxu0 0
        %2982 = vmatpush1.bf16.msra.mxu0 0
        %2983 = vmatprep.subr.bf16.mxu0 0
        %2984 = vmatpush1.bf16.msra.mxu0 0
        %2985 = vmatprep.subr.bf16.mxu0 0
        %2986 = vmatpush1.bf16.msra.mxu0 0
        %2987 = vmatprep.mubr.bf16.mxu0 %v2944
        %2988 = vmatmul.mubr.bf16.gmra.mrb[0].mxu0 %v2931
        %v2989 = vpop.f32.mrb[0].mxu0
        %v2990 = vadd.f32 %v2870, %v2989
        %v2991 = vpop.f32.mrb[0].mxu0
        %v2992 = vpop.f32.mrb[0].mxu0
        %v2993 = vadd.f32 %v2875, %v2992
        %v2994 = vpop.f32.mrb[0].mxu0
        %2995 = vmatprep.mubr.bf16.mxu0 %v2947
        %2996 = vmatmul.mubr.bf16.gmra.mrb[0].mxu0 %v2933
        %v2997 = vpop.f32.mrb[0].mxu0
        %v2998 = vadd.f32 %v2880, %v2997
        %v2999 = vpop.f32.mrb[0].mxu0
        %v3000 = vpop.f32.mrb[0].mxu0
        %v3001 = vadd.f32 %v2885, %v3000
        %v3002 = vpop.f32.mrb[0].mxu0
        %3003 = vmatprep.mubr.bf16.mxu0 %v2950
        %3004 = vmatmul.mubr.bf16.gmra.mrb[0].mxu0 %v2935
        %v3005 = vpop.f32.mrb[0].mxu0
        %v3006 = vadd.f32 %v2890, %v3005
        %v3007 = vpop.f32.mrb[0].mxu0
        %v3008 = vpop.f32.mrb[0].mxu0
        %v3009 = vadd.f32 %v2895, %v3008
        %v3010 = vpop.f32.mrb[0].mxu0
        %3011 = vmatprep.mubr.bf16.mxu0 %v2953
        %3012 = vmatmul.mubr.bf16.gmra.mrb[0].mxu0 %v2937
        %v3013 = vpop.f32.mrb[0].mxu0
        %v3014 = vadd.f32 %v2900, %v3013
        %v3015 = vpop.f32.mrb[0].mxu0
        %v3016 = vpop.f32.mrb[0].mxu0
        %v3017 = vadd.f32 %v2905, %v3016
        %v3018 = vpop.f32.mrb[0].mxu0
        %3019 = vdwg.mxu0
        %v3020 = vtanh.pop %v2990
        %v3021 = vtanh.pop %v2993
        %v3022 = vtanh.pop %v2998
        %v3023 = vtanh.pop %v3001
        %v3024 = vxor.u32 %v3006, 2147483648
        %v3025 = vxor.u32 %v3009, 2147483648
        %v3026 = vxor.u32 %v3014, 2147483648
        %v3027 = vxor.u32 %v3017, 2147483648
        %v3028 = vmul.f32 %v3024, 1.442695
        %v3029 = vpow.pop %v3028
        %v3030 = vmul.f32 %v3025, 1.442695
        %v3031 = vpow.pop %v3030
        %v3032 = vmul.f32 %v3026, 1.442695
        %v3033 = vpow.pop %v3032
        %v3034 = vmul.f32 %v3027, 1.442695
        %v3035 = vpow.pop %v3034
        %v3036 = vadd.f32 %v3029, 1.0
        %v3037 = vadd.f32 %v3031, 1.0
        %v3038 = vadd.f32 %v3033, 1.0
        %v3039 = vadd.f32 %v3035, 1.0
        %v3040 = vrcp.pop %v3036
        %v3041 = vmul.f32 1.0, %v3040
        %v3042 = vrcp.pop %v3037
        %v3043 = vmul.f32 1.0, %v3042
        %v3044 = vrcp.pop %v3038
        %v3045 = vmul.f32 1.0, %v3044
        %v3046 = vrcp.pop %v3039
        %v3047 = vmul.f32 1.0, %v3046
        %v3048 = vmul.f32 %v3020, %v3041
        %v3049 = vmul.f32 %v3021, %v3043
        %v3050 = vmul.f32 %v3022, %v3045
        %v3051 = vmul.f32 %v3023, %v3047
        %s3052 = scalar_lea.vmem %s6, 128
        %v3053 = vld [vmem:[%s3052] sm:$0xf]
        %v3054 = vld [vmem:[%s3052 + $0x4] sm:$0xf]
        %v3055 = vld [vmem:[%s3052 + $0x8] sm:$0xf]
        %v3056 = vld [vmem:[%s3052 + $0xc] sm:$0xf]
        %v3057 = vld [vmem:[%s3052 + $0x10] sm:$0xf]
        %v3058 = vld [vmem:[%s3052 + $0x14] sm:$0xf]
        %v3059 = vld [vmem:[%s3052 + $0x18] sm:$0xf]
        %v3060 = vld [vmem:[%s3052 + $0x1c] sm:$0xf]
        %v3061 = vpack.c.bf16 %v3049, %v3048
        %v3062 = vpack.c.bf16 %v3051, %v3050
        %s3063 = scalar_lea.vmem %s7, 256
        %v3064 = vld [vmem:[%s3063] sm:$0xff]
        %v3065 = vld [vmem:[%s3063 + $0x8] sm:$0xff]
        %v3066 = vld [vmem:[%s3063 + $0x10] sm:$0xff]
        %v3067 = vld [vmem:[%s3063 + $0x18] sm:$0xff]
        %v3068 = vld [vmem:[%s3063 + $0x20] sm:$0xff]
        %v3069 = vld [vmem:[%s3063 + $0x28] sm:$0xff]
        %v3070 = vld [vmem:[%s3063 + $0x30] sm:$0xff]
        %v3071 = vld [vmem:[%s3063 + $0x38] sm:$0xff]
        %3073 = vset.pattern.permute.xlu0 0
        %3074 = vperm.xlu0 %3073, %v3064
        %v3075 = vpop.permute.xlu0 %3074
        %3078 = vset.pattern.permute.xlu0 0
        %3079 = vperm.xlu0 %3078, %v3065
        %v3080 = vpop.permute.xlu0 %3079
        %3083 = vset.pattern.permute.xlu0 0
        %3084 = vperm.xlu0 %3083, %v3066
        %v3085 = vpop.permute.xlu0 %3084
        %3088 = vset.pattern.permute.xlu0 0
        %3089 = vperm.xlu0 %3088, %v3067
        %v3090 = vpop.permute.xlu0 %3089
        %3093 = vset.pattern.permute.xlu0 0
        %3094 = vperm.xlu0 %3093, %v3068
        %v3095 = vpop.permute.xlu0 %3094
        %3098 = vset.pattern.permute.xlu0 0
        %3099 = vperm.xlu0 %3098, %v3069
        %v3100 = vpop.permute.xlu0 %3099
        %3103 = vset.pattern.permute.xlu0 0
        %3104 = vperm.xlu0 %3103, %v3070
        %v3105 = vpop.permute.xlu0 %3104
        %3108 = vset.pattern.permute.xlu0 0
        %3109 = vperm.xlu0 %3108, %v3071
        %v3110 = vpop.permute.xlu0 %3109
        %v3120 = vunpack.c.l.b16 %v3053
        %v3121 = vunpack.c.l.b16 %v3054
        %v3122 = vunpack.c.l.b16 %v3055
        %v3123 = vunpack.c.l.b16 %v3056
        %v3124 = vunpack.c.l.b16 %v3057
        %v3125 = vunpack.c.l.b16 %v3058
        %v3126 = vunpack.c.l.b16 %v3059
        %v3127 = vunpack.c.l.b16 %v3060
        %v3128 = vpack.c.b16 %v3121, %v3120
        %v3129 = vpack.c.b16 %v3123, %v3122
        %v3130 = vpack.c.b16 %v3125, %v3124
        %v3131 = vpack.c.b16 %v3127, %v3126
        %v3133 = vsel %vm690, %v3128, 0
        %v3136 = vsel %vm690, %v3129, 0
        %v3139 = vsel %vm690, %v3130, 0
        %v3142 = vsel %vm690, %v3131, 0
        %3144 = vmatprep.subr.bf16.mxu0 0
        %3145 = vmatpush1.bf16.msra.mxu0 %v3061
        %3146 = vmatprep.subr.bf16.mxu0 0
        %3147 = vmatpush1.bf16.msra.mxu0 %v3062
        %3148 = vmatprep.subr.bf16.mxu0 0
        %3149 = vmatpush1.bf16.msra.mxu0 0
        %3150 = vmatprep.subr.bf16.mxu0 0
        %3151 = vmatpush1.bf16.msra.mxu0 0
        %3152 = vmatprep.subr.bf16.mxu0 0
        %3153 = vmatpush1.bf16.msra.mxu0 0
        %3154 = vmatprep.subr.bf16.mxu0 0
        %3155 = vmatpush1.bf16.msra.mxu0 0
        %3156 = vmatprep.subr.bf16.mxu0 0
        %3157 = vmatpush1.bf16.msra.mxu0 0
        %3158 = vmatprep.subr.bf16.mxu0 0
        %3159 = vmatpush1.bf16.msra.mxu0 0
        %3160 = vmatprep.subr.bf16.mxu0 0
        %3161 = vmatpush1.bf16.msra.mxu0 0
        %3162 = vmatprep.subr.bf16.mxu0 0
        %3163 = vmatpush1.bf16.msra.mxu0 0
        %3164 = vmatprep.subr.bf16.mxu0 0
        %3165 = vmatpush1.bf16.msra.mxu0 0
        %3166 = vmatprep.subr.bf16.mxu0 0
        %3167 = vmatpush1.bf16.msra.mxu0 0
        %3168 = vmatprep.subr.bf16.mxu0 0
        %3169 = vmatpush1.bf16.msra.mxu0 0
        %3170 = vmatprep.subr.bf16.mxu0 0
        %3171 = vmatpush1.bf16.msra.mxu0 0
        %3172 = vmatprep.subr.bf16.mxu0 0
        %3173 = vmatpush1.bf16.msra.mxu0 0
        %3174 = vmatprep.subr.bf16.mxu0 0
        %3175 = vmatpush1.bf16.msra.mxu0 0
        %3176 = vmatprep.mubr.bf16.mxu0 0
        %3177 = vmatmul.mubr.bf16.gmra.mrb[0].mxu0 %v3133
        %v3178 = vpop.f32.mrb[0].mxu0
        %v3179 = vadd.f32 %v3075, %v3178
        %v3180 = vpop.f32.mrb[0].mxu0
        %v3181 = vpop.f32.mrb[0].mxu0
        %v3182 = vadd.f32 %v3080, %v3181
        %v3183 = vpop.f32.mrb[0].mxu0
        %3184 = vmatprep.mubr.bf16.mxu0 0
        %3185 = vmatmul.mubr.bf16.gmra.mrb[0].mxu0 %v3136
        %v3186 = vpop.f32.mrb[0].mxu0
        %v3187 = vadd.f32 %v3085, %v3186
        %v3188 = vpop.f32.mrb[0].mxu0
        %v3189 = vpop.f32.mrb[0].mxu0
        %v3190 = vadd.f32 %v3090, %v3189
        %v3191 = vpop.f32.mrb[0].mxu0
        %3192 = vmatprep.mubr.bf16.mxu0 0
        %3193 = vmatmul.mubr.bf16.gmra.mrb[0].mxu0 %v3139
        %v3194 = vpop.f32.mrb[0].mxu0
        %v3195 = vadd.f32 %v3095, %v3194
        %v3196 = vpop.f32.mrb[0].mxu0
        %v3197 = vpop.f32.mrb[0].mxu0
        %v3198 = vadd.f32 %v3100, %v3197
        %v3199 = vpop.f32.mrb[0].mxu0
        %3200 = vmatprep.mubr.bf16.mxu0 0
        %3201 = vmatmul.mubr.bf16.gmra.mrb[0].mxu0 %v3142
        %v3202 = vpop.f32.mrb[0].mxu0
        %v3203 = vadd.f32 %v3105, %v3202
        %v3204 = vpop.f32.mrb[0].mxu0
        %v3205 = vpop.f32.mrb[0].mxu0
        %v3206 = vadd.f32 %v3110, %v3205
        %v3207 = vpop.f32.mrb[0].mxu0
        %3208 = vdwg.mxu0
        %v3209 = vadd.f32 %v2783, %v3179
        %v3210 = vadd.f32 %v2784, %v3182
        %v3211 = vadd.f32 %v2785, %v3187
        %v3212 = vadd.f32 %v2786, %v3190
        %v3213 = vmul.f32 %v3209, %v530
        %v3214 = vmul.f32 %v3210, %v530
        %v3215 = vmul.f32 %v3211, %v530
        %v3216 = vmul.f32 %v3212, %v530
        %v3217 = vadd.f32 %v2765, %v3195
        %v3218 = vadd.f32 %v2768, %v3198
        %v3219 = vadd.f32 %v2773, %v3203
        %v3220 = vadd.f32 %v2776, %v3206
        %3221 = vrot.lane.b32.xlu0 %v3213, 2
        %v3222 = vpop.permute.xlu0 %3221
        %3223 = vrot.lane.b32.xlu0 %v3214, 2
        %v3224 = vpop.permute.xlu0 %3223
        %3225 = vrot.lane.b32.xlu0 %v3215, 2
        %v3226 = vpop.permute.xlu0 %3225
        %3227 = vrot.lane.b32.xlu0 %v3216, 2
        %v3228 = vpop.permute.xlu0 %3227
        %v3229 = vpack.c.bf16 %v3224, %v3222
        %v3230 = vpack.c.bf16 %v3228, %v3226
        %3231 = vst [vmem:[#allocation2] sm:$0xff] %v3229
        %3232 = vst [vmem:[#allocation2 + $0x8] sm:$0xff] %v3230
        %3233 = vrot.lane.b32.xlu0 %v3213, 1
        %v3234 = vpop.permute.xlu0 %3233
        %3235 = vrot.lane.b32.xlu0 %v3214, 1
        %v3236 = vpop.permute.xlu0 %3235
        %3237 = vrot.lane.b32.xlu0 %v3215, 1
        %v3238 = vpop.permute.xlu0 %3237
        %3239 = vrot.lane.b32.xlu0 %v3216, 1
        %v3240 = vpop.permute.xlu0 %3239
        %v3241 = vpack.c.bf16 %v3236, %v3234
        %v3242 = vpack.c.bf16 %v3240, %v3238
        %3243 = vst [vmem:[#allocation2 + $0x10] sm:$0xff] %v3241
        %3244 = vst [vmem:[#allocation2 + $0x18] sm:$0xff] %v3242
        %v3245 = vpack.c.bf16 %v3214, %v3213
        %v3246 = vpack.c.bf16 %v3216, %v3215
        %3247 = vst [vmem:[#allocation2 + $0x20] sm:$0xff] %v3245
        %3248 = vst [vmem:[#allocation2 + $0x28] sm:$0xff] %v3246
        %3249 = vrot.lane.b32.xlu0 %v3213, 127
        %v3250 = vpop.permute.xlu0 %3249
        %3251 = vrot.lane.b32.xlu0 %v3214, 127
        %v3252 = vpop.permute.xlu0 %3251
        %3253 = vrot.lane.b32.xlu0 %v3215, 127
        %v3254 = vpop.permute.xlu0 %3253
        %3255 = vrot.lane.b32.xlu0 %v3216, 127
        %v3256 = vpop.permute.xlu0 %3255
        %v3257 = vpack.c.bf16 %v3252, %v3250
        %v3258 = vpack.c.bf16 %v3256, %v3254
        %3259 = vst [vmem:[#allocation2 + $0x30] sm:$0xff] %v3257
        %3260 = vst [vmem:[#allocation2 + $0x38] sm:$0xff] %v3258
        %3261 = vrot.lane.b32.xlu0 %v3213, 126
        %v3262 = vpop.permute.xlu0 %3261
        %3263 = vrot.lane.b32.xlu0 %v3214, 126
        %v3264 = vpop.permute.xlu0 %3263
        %3265 = vrot.lane.b32.xlu0 %v3215, 126
        %v3266 = vpop.permute.xlu0 %3265
        %3267 = vrot.lane.b32.xlu0 %v3216, 126
        %v3268 = vpop.permute.xlu0 %3267
        %v3269 = vpack.c.bf16 %v3264, %v3262
        %v3270 = vpack.c.bf16 %v3268, %v3266
        %3271 = vst [vmem:[#allocation2 + $0x40] sm:$0xff] %v3269
        %3272 = vst [vmem:[#allocation2 + $0x48] sm:$0xff] %v3270
        %s3273 = scalar_lea.vmem %s4, 384
        %v3274 = vld [vmem:[%s3273] sm:$0xff]
        %v3275 = vld [vmem:[%s3273 + $0x8] sm:$0xff]
        %v3276 = vld [vmem:[%s3273 + $0x10] sm:$0xff]
        %v3277 = vld [vmem:[%s3273 + $0x18] sm:$0xff]
        %v3278 = vld [vmem:[%s3273 + $0x20] sm:$0xff]
        %v3279 = vld [vmem:[%s3273 + $0x28] sm:$0xff]
        %v3280 = vld [vmem:[%s3273 + $0x30] sm:$0xff]
        %v3281 = vld [vmem:[%s3273 + $0x38] sm:$0xff]
        %v3282 = vld [vmem:[#allocation2] sm:$0xff]
        %v3283 = vld [vmem:[#allocation2 + $0x8] sm:$0xff]
        %v3284 = vld [vmem:[#allocation2 + $0x10] sm:$0xff]
        %v3285 = vld [vmem:[#allocation2 + $0x18] sm:$0xff]
        %v3286 = vld [vmem:[#allocation2 + $0x20] sm:$0xff]
        %v3287 = vld [vmem:[#allocation2 + $0x28] sm:$0xff]
        %v3288 = vld [vmem:[#allocation2 + $0x30] sm:$0xff]
        %v3289 = vld [vmem:[#allocation2 + $0x38] sm:$0xff]
        %v3290 = vld [vmem:[#allocation2 + $0x40] sm:$0xff]
        %v3291 = vld [vmem:[#allocation2 + $0x48] sm:$0xff]
        %s3292 = scalar_lea.vmem %s5, 384
        %v3293 = vld [vmem:[%s3292] sm:$0xff]
        %v3294 = vld [vmem:[%s3292 + $0x8] sm:$0xff]
        %v3295 = vld [vmem:[%s3292 + $0x10] sm:$0xff]
        %v3296 = vld [vmem:[%s3292 + $0x18] sm:$0xff]
        %v3297 = vld [vmem:[%s3292 + $0x20] sm:$0xff]
        %v3298 = vld [vmem:[%s3292 + $0x28] sm:$0xff]
        %v3299 = vld [vmem:[%s3292 + $0x30] sm:$0xff]
        %v3300 = vld [vmem:[%s3292 + $0x38] sm:$0xff]
        %3302 = vset.pattern.permute.xlu0 0
        %3303 = vperm.xlu0 %3302, %v3293
        %v3304 = vpop.permute.xlu0 %3303
        %3307 = vset.pattern.permute.xlu0 0
        %3308 = vperm.xlu0 %3307, %v3294
        %v3309 = vpop.permute.xlu0 %3308
        %3312 = vset.pattern.permute.xlu0 0
        %3313 = vperm.xlu0 %3312, %v3295
        %v3314 = vpop.permute.xlu0 %3313
        %3317 = vset.pattern.permute.xlu0 0
        %3318 = vperm.xlu0 %3317, %v3296
        %v3319 = vpop.permute.xlu0 %3318
        %3322 = vset.pattern.permute.xlu0 0
        %3323 = vperm.xlu0 %3322, %v3297
        %v3324 = vpop.permute.xlu0 %3323
        %3327 = vset.pattern.permute.xlu0 0
        %3328 = vperm.xlu0 %3327, %v3298
        %v3329 = vpop.permute.xlu0 %3328
        %3332 = vset.pattern.permute.xlu0 0
        %3333 = vperm.xlu0 %3332, %v3299
        %v3334 = vpop.permute.xlu0 %3333
        %3337 = vset.pattern.permute.xlu0 0
        %3338 = vperm.xlu0 %3337, %v3300
        %v3339 = vpop.permute.xlu0 %3338
        %v3349 = vunpack.c.l.b16 %v3274
        %v3350 = vunpack.c.h.b16 %v3274
        %v3351 = vunpack.c.l.b16 %v3275
        %v3352 = vunpack.c.h.b16 %v3275
        %v3353 = vunpack.c.l.b16 %v3276
        %v3354 = vunpack.c.h.b16 %v3276
        %v3355 = vunpack.c.l.b16 %v3277
        %v3356 = vunpack.c.h.b16 %v3277
        %v3357 = vunpack.c.l.b16 %v3278
        %v3358 = vunpack.c.h.b16 %v3278
        %v3359 = vunpack.c.l.b16 %v3279
        %v3360 = vunpack.c.h.b16 %v3279
        %v3361 = vunpack.c.l.b16 %v3280
        %v3362 = vunpack.c.h.b16 %v3280
        %v3363 = vunpack.c.l.b16 %v3281
        %v3364 = vunpack.c.h.b16 %v3281
        %v3365 = vpack.c.b16 %v3351, %v3349
        %v3366 = vpack.c.b16 %v3352, %v3350
        %v3367 = vpack.c.b16 %v3355, %v3353
        %v3368 = vpack.c.b16 %v3356, %v3354
        %v3369 = vpack.c.b16 %v3359, %v3357
        %v3370 = vpack.c.b16 %v3360, %v3358
        %v3371 = vpack.c.b16 %v3363, %v3361
        %v3372 = vpack.c.b16 %v3364, %v3362
        %v3378 = vsel %vm690, %v3366, 0
        %v3381 = vsel %vm690, %v3368, 0
        %v3384 = vsel %vm690, %v3370, 0
        %v3387 = vsel %vm690, %v3372, 0
        %3389 = vmatprep.subr.bf16.mxu0 0
        %3390 = vmatpush1.bf16.msra.mxu0 %v3282
        %3391 = vmatprep.subr.bf16.mxu0 0
        %3392 = vmatpush1.bf16.msra.mxu0 %v3283
        %3393 = vmatprep.subr.bf16.mxu0 0
        %3394 = vmatpush1.bf16.msra.mxu0 %v3284
        %3395 = vmatprep.subr.bf16.mxu0 0
        %3396 = vmatpush1.bf16.msra.mxu0 %v3285
        %3397 = vmatprep.subr.bf16.mxu0 0
        %3398 = vmatpush1.bf16.msra.mxu0 %v3286
        %3399 = vmatprep.subr.bf16.mxu0 0
        %3400 = vmatpush1.bf16.msra.mxu0 %v3287
        %3401 = vmatprep.subr.bf16.mxu0 0
        %3402 = vmatpush1.bf16.msra.mxu0 %v3288
        %3403 = vmatprep.subr.bf16.mxu0 0
        %3404 = vmatpush1.bf16.msra.mxu0 %v3289
        %3405 = vmatprep.subr.bf16.mxu0 0
        %3406 = vmatpush1.bf16.msra.mxu0 %v3290
        %3407 = vmatprep.subr.bf16.mxu0 0
        %3408 = vmatpush1.bf16.msra.mxu0 %v3291
        %3409 = vmatprep.subr.bf16.mxu0 0
        %3410 = vmatpush1.bf16.msra.mxu0 0
        %3411 = vmatprep.subr.bf16.mxu0 0
        %3412 = vmatpush1.bf16.msra.mxu0 0
        %3413 = vmatprep.subr.bf16.mxu0 0
        %3414 = vmatpush1.bf16.msra.mxu0 0
        %3415 = vmatprep.subr.bf16.mxu0 0
        %3416 = vmatpush1.bf16.msra.mxu0 0
        %3417 = vmatprep.subr.bf16.mxu0 0
        %3418 = vmatpush1.bf16.msra.mxu0 0
        %3419 = vmatprep.subr.bf16.mxu0 0
        %3420 = vmatpush1.bf16.msra.mxu0 0
        %3421 = vmatprep.mubr.bf16.mxu0 %v3378
        %3422 = vmatmul.mubr.bf16.gmra.mrb[0].mxu0 %v3365
        %v3423 = vpop.f32.mrb[0].mxu0
        %v3424 = vadd.f32 %v3304, %v3423
        %v3425 = vpop.f32.mrb[0].mxu0
        %v3426 = vpop.f32.mrb[0].mxu0
        %v3427 = vadd.f32 %v3309, %v3426
        %v3428 = vpop.f32.mrb[0].mxu0
        %3429 = vmatprep.mubr.bf16.mxu0 %v3381
        %3430 = vmatmul.mubr.bf16.gmra.mrb[0].mxu0 %v3367
        %v3431 = vpop.f32.mrb[0].mxu0
        %v3432 = vadd.f32 %v3314, %v3431
        %v3433 = vpop.f32.mrb[0].mxu0
        %v3434 = vpop.f32.mrb[0].mxu0
        %v3435 = vadd.f32 %v3319, %v3434
        %v3436 = vpop.f32.mrb[0].mxu0
        %3437 = vmatprep.mubr.bf16.mxu0 %v3384
        %3438 = vmatmul.mubr.bf16.gmra.mrb[0].mxu0 %v3369
        %v3439 = vpop.f32.mrb[0].mxu0
        %v3440 = vadd.f32 %v3324, %v3439
        %v3441 = vpop.f32.mrb[0].mxu0
        %v3442 = vpop.f32.mrb[0].mxu0
        %v3443 = vadd.f32 %v3329, %v3442
        %v3444 = vpop.f32.mrb[0].mxu0
        %3445 = vmatprep.mubr.bf16.mxu0 %v3387
        %3446 = vmatmul.mubr.bf16.gmra.mrb[0].mxu0 %v3371
        %v3447 = vpop.f32.mrb[0].mxu0
        %v3448 = vadd.f32 %v3334, %v3447
        %v3449 = vpop.f32.mrb[0].mxu0
        %v3450 = vpop.f32.mrb[0].mxu0
        %v3451 = vadd.f32 %v3339, %v3450
        %v3452 = vpop.f32.mrb[0].mxu0
        %3453 = vdwg.mxu0
        %v3454 = vtanh.pop %v3424
        %v3455 = vtanh.pop %v3427
        %v3456 = vtanh.pop %v3432
        %v3457 = vtanh.pop %v3435
        %v3458 = vxor.u32 %v3440, 2147483648
        %v3459 = vxor.u32 %v3443, 2147483648
        %v3460 = vxor.u32 %v3448, 2147483648
        %v3461 = vxor.u32 %v3451, 2147483648
        %v3462 = vmul.f32 %v3458, 1.442695
        %v3463 = vpow.pop %v3462
        %v3464 = vmul.f32 %v3459, 1.442695
        %v3465 = vpow.pop %v3464
        %v3466 = vmul.f32 %v3460, 1.442695
        %v3467 = vpow.pop %v3466
        %v3468 = vmul.f32 %v3461, 1.442695
        %v3469 = vpow.pop %v3468
        %v3470 = vadd.f32 %v3463, 1.0
        %v3471 = vadd.f32 %v3465, 1.0
        %v3472 = vadd.f32 %v3467, 1.0
        %v3473 = vadd.f32 %v3469, 1.0
        %v3474 = vrcp.pop %v3470
        %v3475 = vmul.f32 1.0, %v3474
        %v3476 = vrcp.pop %v3471
        %v3477 = vmul.f32 1.0, %v3476
        %v3478 = vrcp.pop %v3472
        %v3479 = vmul.f32 1.0, %v3478
        %v3480 = vrcp.pop %v3473
        %v3481 = vmul.f32 1.0, %v3480
        %v3482 = vmul.f32 %v3454, %v3475
        %v3483 = vmul.f32 %v3455, %v3477
        %v3484 = vmul.f32 %v3456, %v3479
        %v3485 = vmul.f32 %v3457, %v3481
        %s3486 = scalar_lea.vmem %s6, 160
        %v3487 = vld [vmem:[%s3486] sm:$0xf]
        %v3488 = vld [vmem:[%s3486 + $0x4] sm:$0xf]
        %v3489 = vld [vmem:[%s3486 + $0x8] sm:$0xf]
        %v3490 = vld [vmem:[%s3486 + $0xc] sm:$0xf]
        %v3491 = vld [vmem:[%s3486 + $0x10] sm:$0xf]
        %v3492 = vld [vmem:[%s3486 + $0x14] sm:$0xf]
        %v3493 = vld [vmem:[%s3486 + $0x18] sm:$0xf]
        %v3494 = vld [vmem:[%s3486 + $0x1c] sm:$0xf]
        %v3495 = vpack.c.bf16 %v3483, %v3482
        %v3496 = vpack.c.bf16 %v3485, %v3484
        %s3497 = scalar_lea.vmem %s7, 320
        %v3498 = vld [vmem:[%s3497] sm:$0xff]
        %v3499 = vld [vmem:[%s3497 + $0x8] sm:$0xff]
        %v3500 = vld [vmem:[%s3497 + $0x10] sm:$0xff]
        %v3501 = vld [vmem:[%s3497 + $0x18] sm:$0xff]
        %v3502 = vld [vmem:[%s3497 + $0x20] sm:$0xff]
        %v3503 = vld [vmem:[%s3497 + $0x28] sm:$0xff]
        %v3504 = vld [vmem:[%s3497 + $0x30] sm:$0xff]
        %v3505 = vld [vmem:[%s3497 + $0x38] sm:$0xff]
        %3507 = vset.pattern.permute.xlu0 0
        %3508 = vperm.xlu0 %3507, %v3498
        %v3509 = vpop.permute.xlu0 %3508
        %3512 = vset.pattern.permute.xlu0 0
        %3513 = vperm.xlu0 %3512, %v3499
        %v3514 = vpop.permute.xlu0 %3513
        %3517 = vset.pattern.permute.xlu0 0
        %3518 = vperm.xlu0 %3517, %v3500
        %v3519 = vpop.permute.xlu0 %3518
        %3522 = vset.pattern.permute.xlu0 0
        %3523 = vperm.xlu0 %3522, %v3501
        %v3524 = vpop.permute.xlu0 %3523
        %3527 = vset.pattern.permute.xlu0 0
        %3528 = vperm.xlu0 %3527, %v3502
        %v3529 = vpop.permute.xlu0 %3528
        %3532 = vset.pattern.permute.xlu0 0
        %3533 = vperm.xlu0 %3532, %v3503
        %v3534 = vpop.permute.xlu0 %3533
        %3537 = vset.pattern.permute.xlu0 0
        %3538 = vperm.xlu0 %3537, %v3504
        %v3539 = vpop.permute.xlu0 %3538
        %3542 = vset.pattern.permute.xlu0 0
        %3543 = vperm.xlu0 %3542, %v3505
        %v3544 = vpop.permute.xlu0 %3543
        %v3554 = vunpack.c.l.b16 %v3487
        %v3555 = vunpack.c.l.b16 %v3488
        %v3556 = vunpack.c.l.b16 %v3489
        %v3557 = vunpack.c.l.b16 %v3490
        %v3558 = vunpack.c.l.b16 %v3491
        %v3559 = vunpack.c.l.b16 %v3492
        %v3560 = vunpack.c.l.b16 %v3493
        %v3561 = vunpack.c.l.b16 %v3494
        %v3562 = vpack.c.b16 %v3555, %v3554
        %v3563 = vpack.c.b16 %v3557, %v3556
        %v3564 = vpack.c.b16 %v3559, %v3558
        %v3565 = vpack.c.b16 %v3561, %v3560
        %v3567 = vsel %vm690, %v3562, 0
        %v3570 = vsel %vm690, %v3563, 0
        %v3573 = vsel %vm690, %v3564, 0
        %v3576 = vsel %vm690, %v3565, 0
        %3578 = vmatprep.subr.bf16.mxu0 0
        %3579 = vmatpush1.bf16.msra.mxu0 %v3495
        %3580 = vmatprep.subr.bf16.mxu0 0
        %3581 = vmatpush1.bf16.msra.mxu0 %v3496
        %3582 = vmatprep.subr.bf16.mxu0 0
        %3583 = vmatpush1.bf16.msra.mxu0 0
        %3584 = vmatprep.subr.bf16.mxu0 0
        %3585 = vmatpush1.bf16.msra.mxu0 0
        %3586 = vmatprep.subr.bf16.mxu0 0
        %3587 = vmatpush1.bf16.msra.mxu0 0
        %3588 = vmatprep.subr.bf16.mxu0 0
        %3589 = vmatpush1.bf16.msra.mxu0 0
        %3590 = vmatprep.subr.bf16.mxu0 0
        %3591 = vmatpush1.bf16.msra.mxu0 0
        %3592 = vmatprep.subr.bf16.mxu0 0
        %3593 = vmatpush1.bf16.msra.mxu0 0
        %3594 = vmatprep.subr.bf16.mxu0 0
        %3595 = vmatpush1.bf16.msra.mxu0 0
        %3596 = vmatprep.subr.bf16.mxu0 0
        %3597 = vmatpush1.bf16.msra.mxu0 0
        %3598 = vmatprep.subr.bf16.mxu0 0
        %3599 = vmatpush1.bf16.msra.mxu0 0
        %3600 = vmatprep.subr.bf16.mxu0 0
        %3601 = vmatpush1.bf16.msra.mxu0 0
        %3602 = vmatprep.subr.bf16.mxu0 0
        %3603 = vmatpush1.bf16.msra.mxu0 0
        %3604 = vmatprep.subr.bf16.mxu0 0
        %3605 = vmatpush1.bf16.msra.mxu0 0
        %3606 = vmatprep.subr.bf16.mxu0 0
        %3607 = vmatpush1.bf16.msra.mxu0 0
        %3608 = vmatprep.subr.bf16.mxu0 0
        %3609 = vmatpush1.bf16.msra.mxu0 0
        %3610 = vmatprep.mubr.bf16.mxu0 0
        %3611 = vmatmul.mubr.bf16.gmra.mrb[0].mxu0 %v3567
        %v3612 = vpop.f32.mrb[0].mxu0
        %v3613 = vadd.f32 %v3509, %v3612
        %v3614 = vpop.f32.mrb[0].mxu0
        %v3615 = vpop.f32.mrb[0].mxu0
        %v3616 = vadd.f32 %v3514, %v3615
        %v3617 = vpop.f32.mrb[0].mxu0
        %3618 = vmatprep.mubr.bf16.mxu0 0
        %3619 = vmatmul.mubr.bf16.gmra.mrb[0].mxu0 %v3570
        %v3620 = vpop.f32.mrb[0].mxu0
        %v3621 = vadd.f32 %v3519, %v3620
        %v3622 = vpop.f32.mrb[0].mxu0
        %v3623 = vpop.f32.mrb[0].mxu0
        %v3624 = vadd.f32 %v3524, %v3623
        %v3625 = vpop.f32.mrb[0].mxu0
        %3626 = vmatprep.mubr.bf16.mxu0 0
        %3627 = vmatmul.mubr.bf16.gmra.mrb[0].mxu0 %v3573
        %v3628 = vpop.f32.mrb[0].mxu0
        %v3629 = vadd.f32 %v3529, %v3628
        %v3630 = vpop.f32.mrb[0].mxu0
        %v3631 = vpop.f32.mrb[0].mxu0
        %v3632 = vadd.f32 %v3534, %v3631
        %v3633 = vpop.f32.mrb[0].mxu0
        %3634 = vmatprep.mubr.bf16.mxu0 0
        %3635 = vmatmul.mubr.bf16.gmra.mrb[0].mxu0 %v3576
        %v3636 = vpop.f32.mrb[0].mxu0
        %v3637 = vadd.f32 %v3539, %v3636
        %v3638 = vpop.f32.mrb[0].mxu0
        %v3639 = vpop.f32.mrb[0].mxu0
        %v3640 = vadd.f32 %v3544, %v3639
        %v3641 = vpop.f32.mrb[0].mxu0
        %3642 = vdwg.mxu0
        %v3643 = vadd.f32 %v3213, %v3613
        %v3644 = vadd.f32 %v3214, %v3616
        %v3645 = vadd.f32 %v3215, %v3621
        %v3646 = vadd.f32 %v3216, %v3624
        %v3647 = vmul.f32 %v3643, %v530
        %v3648 = vmul.f32 %v3644, %v530
        %v3649 = vmul.f32 %v3645, %v530
        %v3650 = vmul.f32 %v3646, %v530
        %v3651 = vadd.f32 %v3217, %v3629
        %v3652 = vadd.f32 %v3218, %v3632
        %v3653 = vadd.f32 %v3219, %v3637
        %v3654 = vadd.f32 %v3220, %v3640
        %3655 = vrot.lane.b32.xlu0 %v3647, 2
        %v3656 = vpop.permute.xlu0 %3655
        %3657 = vrot.lane.b32.xlu0 %v3648, 2
        %v3658 = vpop.permute.xlu0 %3657
        %3659 = vrot.lane.b32.xlu0 %v3649, 2
        %v3660 = vpop.permute.xlu0 %3659
        %3661 = vrot.lane.b32.xlu0 %v3650, 2
        %v3662 = vpop.permute.xlu0 %3661
        %v3663 = vpack.c.bf16 %v3658, %v3656
        %v3664 = vpack.c.bf16 %v3662, %v3660
        %3665 = vst [vmem:[#allocation2] sm:$0xff] %v3663
        %3666 = vst [vmem:[#allocation2 + $0x8] sm:$0xff] %v3664
        %3667 = vrot.lane.b32.xlu0 %v3647, 1
        %v3668 = vpop.permute.xlu0 %3667
        %3669 = vrot.lane.b32.xlu0 %v3648, 1
        %v3670 = vpop.permute.xlu0 %3669
        %3671 = vrot.lane.b32.xlu0 %v3649, 1
        %v3672 = vpop.permute.xlu0 %3671
        %3673 = vrot.lane.b32.xlu0 %v3650, 1
        %v3674 = vpop.permute.xlu0 %3673
        %v3675 = vpack.c.bf16 %v3670, %v3668
        %v3676 = vpack.c.bf16 %v3674, %v3672
        %3677 = vst [vmem:[#allocation2 + $0x10] sm:$0xff] %v3675
        %3678 = vst [vmem:[#allocation2 + $0x18] sm:$0xff] %v3676
        %v3679 = vpack.c.bf16 %v3648, %v3647
        %v3680 = vpack.c.bf16 %v3650, %v3649
        %3681 = vst [vmem:[#allocation2 + $0x20] sm:$0xff] %v3679
        %3682 = vst [vmem:[#allocation2 + $0x28] sm:$0xff] %v3680
        %3683 = vrot.lane.b32.xlu0 %v3647, 127
        %v3684 = vpop.permute.xlu0 %3683
        %3685 = vrot.lane.b32.xlu0 %v3648, 127
        %v3686 = vpop.permute.xlu0 %3685
        %3687 = vrot.lane.b32.xlu0 %v3649, 127
        %v3688 = vpop.permute.xlu0 %3687
        %3689 = vrot.lane.b32.xlu0 %v3650, 127
        %v3690 = vpop.permute.xlu0 %3689
        %v3691 = vpack.c.bf16 %v3686, %v3684
        %v3692 = vpack.c.bf16 %v3690, %v3688
        %3693 = vst [vmem:[#allocation2 + $0x30] sm:$0xff] %v3691
        %3694 = vst [vmem:[#allocation2 + $0x38] sm:$0xff] %v3692
        %3695 = vrot.lane.b32.xlu0 %v3647, 126
        %v3696 = vpop.permute.xlu0 %3695
        %3697 = vrot.lane.b32.xlu0 %v3648, 126
        %v3698 = vpop.permute.xlu0 %3697
        %3699 = vrot.lane.b32.xlu0 %v3649, 126
        %v3700 = vpop.permute.xlu0 %3699
        %3701 = vrot.lane.b32.xlu0 %v3650, 126
        %v3702 = vpop.permute.xlu0 %3701
        %v3703 = vpack.c.bf16 %v3698, %v3696
        %v3704 = vpack.c.bf16 %v3702, %v3700
        %3705 = vst [vmem:[#allocation2 + $0x40] sm:$0xff] %v3703
        %3706 = vst [vmem:[#allocation2 + $0x48] sm:$0xff] %v3704
        %s3707 = scalar_lea.vmem %s4, 448
        %v3708 = vld [vmem:[%s3707] sm:$0xff]
        %v3709 = vld [vmem:[%s3707 + $0x8] sm:$0xff]
        %v3710 = vld [vmem:[%s3707 + $0x10] sm:$0xff]
        %v3711 = vld [vmem:[%s3707 + $0x18] sm:$0xff]
        %v3712 = vld [vmem:[%s3707 + $0x20] sm:$0xff]
        %v3713 = vld [vmem:[%s3707 + $0x28] sm:$0xff]
        %v3714 = vld [vmem:[%s3707 + $0x30] sm:$0xff]
        %v3715 = vld [vmem:[%s3707 + $0x38] sm:$0xff]
        %v3716 = vld [vmem:[#allocation2] sm:$0xff]
        %v3717 = vld [vmem:[#allocation2 + $0x8] sm:$0xff]
        %v3718 = vld [vmem:[#allocation2 + $0x10] sm:$0xff]
        %v3719 = vld [vmem:[#allocation2 + $0x18] sm:$0xff]
        %v3720 = vld [vmem:[#allocation2 + $0x20] sm:$0xff]
        %v3721 = vld [vmem:[#allocation2 + $0x28] sm:$0xff]
        %v3722 = vld [vmem:[#allocation2 + $0x30] sm:$0xff]
        %v3723 = vld [vmem:[#allocation2 + $0x38] sm:$0xff]
        %v3724 = vld [vmem:[#allocation2 + $0x40] sm:$0xff]
        %v3725 = vld [vmem:[#allocation2 + $0x48] sm:$0xff]
        %s3726 = scalar_lea.vmem %s5, 448
        %v3727 = vld [vmem:[%s3726] sm:$0xff]
        %v3728 = vld [vmem:[%s3726 + $0x8] sm:$0xff]
        %v3729 = vld [vmem:[%s3726 + $0x10] sm:$0xff]
        %v3730 = vld [vmem:[%s3726 + $0x18] sm:$0xff]
        %v3731 = vld [vmem:[%s3726 + $0x20] sm:$0xff]
        %v3732 = vld [vmem:[%s3726 + $0x28] sm:$0xff]
        %v3733 = vld [vmem:[%s3726 + $0x30] sm:$0xff]
        %v3734 = vld [vmem:[%s3726 + $0x38] sm:$0xff]
        %3736 = vset.pattern.permute.xlu0 0
        %3737 = vperm.xlu0 %3736, %v3727
        %v3738 = vpop.permute.xlu0 %3737
        %3741 = vset.pattern.permute.xlu0 0
        %3742 = vperm.xlu0 %3741, %v3728
        %v3743 = vpop.permute.xlu0 %3742
        %3746 = vset.pattern.permute.xlu0 0
        %3747 = vperm.xlu0 %3746, %v3729
        %v3748 = vpop.permute.xlu0 %3747
        %3751 = vset.pattern.permute.xlu0 0
        %3752 = vperm.xlu0 %3751, %v3730
        %v3753 = vpop.permute.xlu0 %3752
        %3756 = vset.pattern.permute.xlu0 0
        %3757 = vperm.xlu0 %3756, %v3731
        %v3758 = vpop.permute.xlu0 %3757
        %3761 = vset.pattern.permute.xlu0 0
        %3762 = vperm.xlu0 %3761, %v3732
        %v3763 = vpop.permute.xlu0 %3762
        %3766 = vset.pattern.permute.xlu0 0
        %3767 = vperm.xlu0 %3766, %v3733
        %v3768 = vpop.permute.xlu0 %3767
        %3771 = vset.pattern.permute.xlu0 0
        %3772 = vperm.xlu0 %3771, %v3734
        %v3773 = vpop.permute.xlu0 %3772
        %v3783 = vunpack.c.l.b16 %v3708
        %v3784 = vunpack.c.h.b16 %v3708
        %v3785 = vunpack.c.l.b16 %v3709
        %v3786 = vunpack.c.h.b16 %v3709
        %v3787 = vunpack.c.l.b16 %v3710
        %v3788 = vunpack.c.h.b16 %v3710
        %v3789 = vunpack.c.l.b16 %v3711
        %v3790 = vunpack.c.h.b16 %v3711
        %v3791 = vunpack.c.l.b16 %v3712
        %v3792 = vunpack.c.h.b16 %v3712
        %v3793 = vunpack.c.l.b16 %v3713
        %v3794 = vunpack.c.h.b16 %v3713
        %v3795 = vunpack.c.l.b16 %v3714
        %v3796 = vunpack.c.h.b16 %v3714
        %v3797 = vunpack.c.l.b16 %v3715
        %v3798 = vunpack.c.h.b16 %v3715
        %v3799 = vpack.c.b16 %v3785, %v3783
        %v3800 = vpack.c.b16 %v3786, %v3784
        %v3801 = vpack.c.b16 %v3789, %v3787
        %v3802 = vpack.c.b16 %v3790, %v3788
        %v3803 = vpack.c.b16 %v3793, %v3791
        %v3804 = vpack.c.b16 %v3794, %v3792
        %v3805 = vpack.c.b16 %v3797, %v3795
        %v3806 = vpack.c.b16 %v3798, %v3796
        %v3812 = vsel %vm690, %v3800, 0
        %v3815 = vsel %vm690, %v3802, 0
        %v3818 = vsel %vm690, %v3804, 0
        %v3821 = vsel %vm690, %v3806, 0
        %3823 = vmatprep.subr.bf16.mxu0 0
        %3824 = vmatpush1.bf16.msra.mxu0 %v3716
        %3825 = vmatprep.subr.bf16.mxu0 0
        %3826 = vmatpush1.bf16.msra.mxu0 %v3717
        %3827 = vmatprep.subr.bf16.mxu0 0
        %3828 = vmatpush1.bf16.msra.mxu0 %v3718
        %3829 = vmatprep.subr.bf16.mxu0 0
        %3830 = vmatpush1.bf16.msra.mxu0 %v3719
        %3831 = vmatprep.subr.bf16.mxu0 0
        %3832 = vmatpush1.bf16.msra.mxu0 %v3720
        %3833 = vmatprep.subr.bf16.mxu0 0
        %3834 = vmatpush1.bf16.msra.mxu0 %v3721
        %3835 = vmatprep.subr.bf16.mxu0 0
        %3836 = vmatpush1.bf16.msra.mxu0 %v3722
        %3837 = vmatprep.subr.bf16.mxu0 0
        %3838 = vmatpush1.bf16.msra.mxu0 %v3723
        %3839 = vmatprep.subr.bf16.mxu0 0
        %3840 = vmatpush1.bf16.msra.mxu0 %v3724
        %3841 = vmatprep.subr.bf16.mxu0 0
        %3842 = vmatpush1.bf16.msra.mxu0 %v3725
        %3843 = vmatprep.subr.bf16.mxu0 0
        %3844 = vmatpush1.bf16.msra.mxu0 0
        %3845 = vmatprep.subr.bf16.mxu0 0
        %3846 = vmatpush1.bf16.msra.mxu0 0
        %3847 = vmatprep.subr.bf16.mxu0 0
        %3848 = vmatpush1.bf16.msra.mxu0 0
        %3849 = vmatprep.subr.bf16.mxu0 0
        %3850 = vmatpush1.bf16.msra.mxu0 0
        %3851 = vmatprep.subr.bf16.mxu0 0
        %3852 = vmatpush1.bf16.msra.mxu0 0
        %3853 = vmatprep.subr.bf16.mxu0 0
        %3854 = vmatpush1.bf16.msra.mxu0 0
        %3855 = vmatprep.mubr.bf16.mxu0 %v3812
        %3856 = vmatmul.mubr.bf16.gmra.mrb[0].mxu0 %v3799
        %v3857 = vpop.f32.mrb[0].mxu0
        %v3858 = vadd.f32 %v3738, %v3857
        %v3859 = vpop.f32.mrb[0].mxu0
        %v3860 = vpop.f32.mrb[0].mxu0
        %v3861 = vadd.f32 %v3743, %v3860
        %v3862 = vpop.f32.mrb[0].mxu0
        %3863 = vmatprep.mubr.bf16.mxu0 %v3815
        %3864 = vmatmul.mubr.bf16.gmra.mrb[0].mxu0 %v3801
        %v3865 = vpop.f32.mrb[0].mxu0
        %v3866 = vadd.f32 %v3748, %v3865
        %v3867 = vpop.f32.mrb[0].mxu0
        %v3868 = vpop.f32.mrb[0].mxu0
        %v3869 = vadd.f32 %v3753, %v3868
        %v3870 = vpop.f32.mrb[0].mxu0
        %3871 = vmatprep.mubr.bf16.mxu0 %v3818
        %3872 = vmatmul.mubr.bf16.gmra.mrb[0].mxu0 %v3803
        %v3873 = vpop.f32.mrb[0].mxu0
        %v3874 = vadd.f32 %v3758, %v3873
        %v3875 = vpop.f32.mrb[0].mxu0
        %v3876 = vpop.f32.mrb[0].mxu0
        %v3877 = vadd.f32 %v3763, %v3876
        %v3878 = vpop.f32.mrb[0].mxu0
        %3879 = vmatprep.mubr.bf16.mxu0 %v3821
        %3880 = vmatmul.mubr.bf16.gmra.mrb[0].mxu0 %v3805
        %v3881 = vpop.f32.mrb[0].mxu0
        %v3882 = vadd.f32 %v3768, %v3881
        %v3883 = vpop.f32.mrb[0].mxu0
        %v3884 = vpop.f32.mrb[0].mxu0
        %v3885 = vadd.f32 %v3773, %v3884
        %v3886 = vpop.f32.mrb[0].mxu0
        %3887 = vdwg.mxu0
        %v3888 = vtanh.pop %v3858
        %v3889 = vtanh.pop %v3861
        %v3890 = vtanh.pop %v3866
        %v3891 = vtanh.pop %v3869
        %v3892 = vxor.u32 %v3874, 2147483648
        %v3893 = vxor.u32 %v3877, 2147483648
        %v3894 = vxor.u32 %v3882, 2147483648
        %v3895 = vxor.u32 %v3885, 2147483648
        %v3896 = vmul.f32 %v3892, 1.442695
        %v3897 = vpow.pop %v3896
        %v3898 = vmul.f32 %v3893, 1.442695
        %v3899 = vpow.pop %v3898
        %v3900 = vmul.f32 %v3894, 1.442695
        %v3901 = vpow.pop %v3900
        %v3902 = vmul.f32 %v3895, 1.442695
        %v3903 = vpow.pop %v3902
        %v3904 = vadd.f32 %v3897, 1.0
        %v3905 = vadd.f32 %v3899, 1.0
        %v3906 = vadd.f32 %v3901, 1.0
        %v3907 = vadd.f32 %v3903, 1.0
        %v3908 = vrcp.pop %v3904
        %v3909 = vmul.f32 1.0, %v3908
        %v3910 = vrcp.pop %v3905
        %v3911 = vmul.f32 1.0, %v3910
        %v3912 = vrcp.pop %v3906
        %v3913 = vmul.f32 1.0, %v3912
        %v3914 = vrcp.pop %v3907
        %v3915 = vmul.f32 1.0, %v3914
        %v3916 = vmul.f32 %v3888, %v3909
        %v3917 = vmul.f32 %v3889, %v3911
        %v3918 = vmul.f32 %v3890, %v3913
        %v3919 = vmul.f32 %v3891, %v3915
        %s3920 = scalar_lea.vmem %s8, 16
        %v3921 = vld [vmem:[%s3920] sm:$0xf]
        %v3922 = vld [vmem:[%s3920 + $0x4] sm:$0xf]
        %v3923 = vld [vmem:[%s3920 + $0x8] sm:$0xf]
        %v3924 = vld [vmem:[%s3920 + $0xc] sm:$0xf]
        %v3925 = vpack.c.bf16 %v3917, %v3916
        %v3926 = vpack.c.bf16 %v3919, %v3918
        %s3927 = scalar_lea.vmem %s9, 32
        %v3928 = vld [vmem:[%s3927] sm:$0xff]
        %v3929 = vld [vmem:[%s3927 + $0x8] sm:$0xff]
        %v3930 = vld [vmem:[%s3927 + $0x10] sm:$0xff]
        %v3931 = vld [vmem:[%s3927 + $0x18] sm:$0xff]
        %3933 = vset.pattern.permute.xlu0 0
        %3934 = vperm.xlu0 %3933, %v3928
        %v3935 = vpop.permute.xlu0 %3934
        %3938 = vset.pattern.permute.xlu0 0
        %3939 = vperm.xlu0 %3938, %v3929
        %v3940 = vpop.permute.xlu0 %3939
        %3943 = vset.pattern.permute.xlu0 0
        %3944 = vperm.xlu0 %3943, %v3930
        %v3945 = vpop.permute.xlu0 %3944
        %3948 = vset.pattern.permute.xlu0 0
        %3949 = vperm.xlu0 %3948, %v3931
        %v3950 = vpop.permute.xlu0 %3949
        %v3956 = vunpack.c.l.b16 %v3921
        %v3957 = vunpack.c.l.b16 %v3922
        %v3958 = vunpack.c.l.b16 %v3923
        %v3959 = vunpack.c.l.b16 %v3924
        %v3960 = vpack.c.b16 %v3957, %v3956
        %v3961 = vpack.c.b16 %v3959, %v3958
        %v3963 = vsel %vm690, %v3960, 0
        %v3966 = vsel %vm690, %v3961, 0
        %3968 = vmatprep.subr.bf16.mxu0 0
        %3969 = vmatpush1.bf16.msra.mxu0 %v3925
        %3970 = vmatprep.subr.bf16.mxu0 0
        %3971 = vmatpush1.bf16.msra.mxu0 %v3926
        %3972 = vmatprep.subr.bf16.mxu0 0
        %3973 = vmatpush1.bf16.msra.mxu0 0
        %3974 = vmatprep.subr.bf16.mxu0 0
        %3975 = vmatpush1.bf16.msra.mxu0 0
        %3976 = vmatprep.subr.bf16.mxu0 0
        %3977 = vmatpush1.bf16.msra.mxu0 0
        %3978 = vmatprep.subr.bf16.mxu0 0
        %3979 = vmatpush1.bf16.msra.mxu0 0
        %3980 = vmatprep.subr.bf16.mxu0 0
        %3981 = vmatpush1.bf16.msra.mxu0 0
        %3982 = vmatprep.subr.bf16.mxu0 0
        %3983 = vmatpush1.bf16.msra.mxu0 0
        %3984 = vmatprep.subr.bf16.mxu0 0
        %3985 = vmatpush1.bf16.msra.mxu0 0
        %3986 = vmatprep.subr.bf16.mxu0 0
        %3987 = vmatpush1.bf16.msra.mxu0 0
        %3988 = vmatprep.subr.bf16.mxu0 0
        %3989 = vmatpush1.bf16.msra.mxu0 0
        %3990 = vmatprep.subr.bf16.mxu0 0
        %3991 = vmatpush1.bf16.msra.mxu0 0
        %3992 = vmatprep.subr.bf16.mxu0 0
        %3993 = vmatpush1.bf16.msra.mxu0 0
        %3994 = vmatprep.subr.bf16.mxu0 0
        %3995 = vmatpush1.bf16.msra.mxu0 0
        %3996 = vmatprep.subr.bf16.mxu0 0
        %3997 = vmatpush1.bf16.msra.mxu0 0
        %3998 = vmatprep.subr.bf16.mxu0 0
        %3999 = vmatpush1.bf16.msra.mxu0 0
        %4000 = vmatprep.mubr.bf16.mxu0 0
        %4001 = vmatmul.mubr.bf16.gmra.mrb[0].mxu0 %v3963
        %v4002 = vpop.f32.mrb[0].mxu0
        %v4003 = vadd.f32 %v3935, %v4002
        %v4004 = vpop.f32.mrb[0].mxu0
        %v4005 = vpop.f32.mrb[0].mxu0
        %v4006 = vadd.f32 %v3940, %v4005
        %v4007 = vpop.f32.mrb[0].mxu0
        %4008 = vmatprep.mubr.bf16.mxu0 0
        %4009 = vmatmul.mubr.bf16.gmra.mrb[0].mxu0 %v3966
        %v4010 = vpop.f32.mrb[0].mxu0
        %v4011 = vadd.f32 %v3945, %v4010
        %v4012 = vpop.f32.mrb[0].mxu0
        %v4013 = vpop.f32.mrb[0].mxu0
        %v4014 = vadd.f32 %v3950, %v4013
        %v4015 = vpop.f32.mrb[0].mxu0
        %4016 = vdwg.mxu0
        %v4017 = vadd.f32 %v3651, %v4003
        %v4018 = vadd.f32 %v3652, %v4006
        %v4019 = vadd.f32 %v3653, %v4011
        %v4020 = vadd.f32 %v3654, %v4014
        %s4021 = scalar_lea.vmem %s10, 1
        %v4022 = vld [vmem:[%s4021] sm:$0x1]
        %v4023 = vmul.f32 %v4017, %v530
        %v4024 = vmul.f32 %v4018, %v530
        %v4025 = vmul.f32 %v4019, %v530
        %v4026 = vmul.f32 %v4020, %v530
        %v4027 = vpack.c.bf16 %v4024, %v4023
        %v4028 = vpack.c.bf16 %v4026, %v4025
        %s4029 = scalar_lea.vmem %s11, 2
        %v4030 = vld [vmem:[%s4029] sm:$0x3]
        %4032 = vset.pattern.permute.xlu0 0
        %4033 = vperm.xlu0 %4032, %v4030
        %v4034 = vpop.permute.xlu0 %4033
        %v4037 = vsel %vm690, %v4022, 0
        %4039 = vmatprep.subr.bf16.mxu0 0
        %4040 = vmatpush1.bf16.msra.mxu0 %v4027
        %4041 = vmatprep.subr.bf16.mxu0 0
        %4042 = vmatpush1.bf16.msra.mxu0 %v4028
        %4043 = vmatprep.subr.bf16.mxu0 0
        %4044 = vmatpush1.bf16.msra.mxu0 0
        %4045 = vmatprep.subr.bf16.mxu0 0
        %4046 = vmatpush1.bf16.msra.mxu0 0
        %4047 = vmatprep.subr.bf16.mxu0 0
        %4048 = vmatpush1.bf16.msra.mxu0 0
        %4049 = vmatprep.subr.bf16.mxu0 0
        %4050 = vmatpush1.bf16.msra.mxu0 0
        %4051 = vmatprep.subr.bf16.mxu0 0
        %4052 = vmatpush1.bf16.msra.mxu0 0
        %4053 = vmatprep.subr.bf16.mxu0 0
        %4054 = vmatpush1.bf16.msra.mxu0 0
        %4055 = vmatprep.subr.bf16.mxu0 0
        %4056 = vmatpush1.bf16.msra.mxu0 0
        %4057 = vmatprep.subr.bf16.mxu0 0
        %4058 = vmatpush1.bf16.msra.mxu0 0
        %4059 = vmatprep.subr.bf16.mxu0 0
        %4060 = vmatpush1.bf16.msra.mxu0 0
        %4061 = vmatprep.subr.bf16.mxu0 0
        %4062 = vmatpush1.bf16.msra.mxu0 0
        %4063 = vmatprep.subr.bf16.mxu0 0
        %4064 = vmatpush1.bf16.msra.mxu0 0
        %4065 = vmatprep.subr.bf16.mxu0 0
        %4066 = vmatpush1.bf16.msra.mxu0 0
        %4067 = vmatprep.subr.bf16.mxu0 0
        %4068 = vmatpush1.bf16.msra.mxu0 0
        %4069 = vmatprep.subr.bf16.mxu0 0
        %4070 = vmatpush1.bf16.msra.mxu0 0
        %4071 = vmatprep.mubr.bf16.mxu0 0
        %4072 = vmatmul.mubr.bf16.gmra.mrb[0].mxu0 %v4037
        %v4073 = vpop.f32.mrb[0].mxu0
        %v4074 = vadd.f32 %v4034, %v4073
        %v4075 = vpop.f32.mrb[0].mxu0
        %v4076 = vpop.f32.mrb[0].mxu0
        %v4077 = vpop.f32.mrb[0].mxu0
        %4078 = vdwg.mxu0
        %v4079 = vmul.f32 %v4074, %v530
        %v4080 = vmul.f32 %v425, %v530
        %v4081 = vadd.f32 %v4079, %v4080
        %s4082 = scalar_lea.vmem %s2, 32
        %v4083 = vld [vmem:[%s4082] sm:$0xf]
        %v4084 = vld [vmem:[%s4082 + $0x4] sm:$0xf]
        %v4085 = vld [vmem:[%s4082 + $0x8] sm:$0xf]
        %v4086 = vld [vmem:[%s4082 + $0xc] sm:$0xf]
        %v4087 = vpack.c.bf16 %v4081, %v4081
        %s4088 = scalar_lea.vmem %s3, 64
        %v4089 = vld [vmem:[%s4088] sm:$0xff]
        %v4090 = vld [vmem:[%s4088 + $0x8] sm:$0xff]
        %v4091 = vld [vmem:[%s4088 + $0x10] sm:$0xff]
        %v4092 = vld [vmem:[%s4088 + $0x18] sm:$0xff]
        %4094 = vset.pattern.permute.xlu0 0
        %4095 = vperm.xlu0 %4094, %v4089
        %v4096 = vpop.permute.xlu0 %4095
        %4099 = vset.pattern.permute.xlu0 0
        %4100 = vperm.xlu0 %4099, %v4090
        %v4101 = vpop.permute.xlu0 %4100
        %4104 = vset.pattern.permute.xlu0 0
        %4105 = vperm.xlu0 %4104, %v4091
        %v4106 = vpop.permute.xlu0 %4105
        %4109 = vset.pattern.permute.xlu0 0
        %4110 = vperm.xlu0 %4109, %v4092
        %v4111 = vpop.permute.xlu0 %4110
        %v4117 = vunpack.c.l.b16 %v4083
        %v4118 = vunpack.c.l.b16 %v4084
        %v4119 = vunpack.c.l.b16 %v4085
        %v4120 = vunpack.c.l.b16 %v4086
        %v4121 = vpack.c.b16 %v4118, %v4117
        %v4122 = vpack.c.b16 %v4120, %v4119
        %v4124 = vsel %vm466, %v4121, 0
        %v4127 = vsel %vm466, %v4122, 0
        %v4130 = vsel %vm473, %v4087, 0
        %4132 = vmatprep.subr.bf16.mxu0 0
        %4133 = vmatpush1.bf16.msra.mxu0 %v4130
        %4134 = vmatprep.subr.bf16.mxu0 0
        %4135 = vmatpush1.bf16.msra.mxu0 0
        %4136 = vmatprep.subr.bf16.mxu0 0
        %4137 = vmatpush1.bf16.msra.mxu0 0
        %4138 = vmatprep.subr.bf16.mxu0 0
        %4139 = vmatpush1.bf16.msra.mxu0 0
        %4140 = vmatprep.subr.bf16.mxu0 0
        %4141 = vmatpush1.bf16.msra.mxu0 0
        %4142 = vmatprep.subr.bf16.mxu0 0
        %4143 = vmatpush1.bf16.msra.mxu0 0
        %4144 = vmatprep.subr.bf16.mxu0 0
        %4145 = vmatpush1.bf16.msra.mxu0 0
        %4146 = vmatprep.subr.bf16.mxu0 0
        %4147 = vmatpush1.bf16.msra.mxu0 0
        %4148 = vmatprep.subr.bf16.mxu0 0
        %4149 = vmatpush1.bf16.msra.mxu0 0
        %4150 = vmatprep.subr.bf16.mxu0 0
        %4151 = vmatpush1.bf16.msra.mxu0 0
        %4152 = vmatprep.subr.bf16.mxu0 0
        %4153 = vmatpush1.bf16.msra.mxu0 0
        %4154 = vmatprep.subr.bf16.mxu0 0
        %4155 = vmatpush1.bf16.msra.mxu0 0
        %4156 = vmatprep.subr.bf16.mxu0 0
        %4157 = vmatpush1.bf16.msra.mxu0 0
        %4158 = vmatprep.subr.bf16.mxu0 0
        %4159 = vmatpush1.bf16.msra.mxu0 0
        %4160 = vmatprep.subr.bf16.mxu0 0
        %4161 = vmatpush1.bf16.msra.mxu0 0
        %4162 = vmatprep.subr.bf16.mxu0 0
        %4163 = vmatpush1.bf16.msra.mxu0 0
        %4164 = vmatprep.mubr.bf16.mxu0 0
        %4165 = vmatmul.mubr.bf16.gmra.mrb[0].mxu0 %v4124
        %v4166 = vpop.f32.mrb[0].mxu0
        %v4167 = vadd.f32 %v4096, %v4166
        %v4168 = vpop.f32.mrb[0].mxu0
        %v4169 = vpop.f32.mrb[0].mxu0
        %v4170 = vadd.f32 %v4101, %v4169
        %v4171 = vpop.f32.mrb[0].mxu0
        %4172 = vmatprep.mubr.bf16.mxu0 0
        %4173 = vmatmul.mubr.bf16.gmra.mrb[0].mxu0 %v4127
        %v4174 = vpop.f32.mrb[0].mxu0
        %v4175 = vadd.f32 %v4106, %v4174
        %v4176 = vpop.f32.mrb[0].mxu0
        %v4177 = vpop.f32.mrb[0].mxu0
        %v4178 = vadd.f32 %v4111, %v4177
        %v4179 = vpop.f32.mrb[0].mxu0
        %4180 = vdwg.mxu0
        %v4181 = vmul.f32 %v4167, %v530
        %v4182 = vmul.f32 %v4170, %v530
        %v4183 = vmul.f32 %v4175, %v530
        %v4184 = vmul.f32 %v4178, %v530
        %4185 = vrot.lane.b32.xlu0 %v4181, 2
        %v4186 = vpop.permute.xlu0 %4185
        %4187 = vrot.lane.b32.xlu0 %v4182, 2
        %v4188 = vpop.permute.xlu0 %4187
        %4189 = vrot.lane.b32.xlu0 %v4183, 2
        %v4190 = vpop.permute.xlu0 %4189
        %4191 = vrot.lane.b32.xlu0 %v4184, 2
        %v4192 = vpop.permute.xlu0 %4191
        %v4193 = vpack.c.bf16 %v4188, %v4186
        %v4194 = vpack.c.bf16 %v4192, %v4190
        %4195 = vst [vmem:[#allocation2] sm:$0xff] %v4193
        %4196 = vst [vmem:[#allocation2 + $0x8] sm:$0xff] %v4194
        %4197 = vrot.lane.b32.xlu0 %v4181, 1
        %v4198 = vpop.permute.xlu0 %4197
        %4199 = vrot.lane.b32.xlu0 %v4182, 1
        %v4200 = vpop.permute.xlu0 %4199
        %4201 = vrot.lane.b32.xlu0 %v4183, 1
        %v4202 = vpop.permute.xlu0 %4201
        %4203 = vrot.lane.b32.xlu0 %v4184, 1
        %v4204 = vpop.permute.xlu0 %4203
        %v4205 = vpack.c.bf16 %v4200, %v4198
        %v4206 = vpack.c.bf16 %v4204, %v4202
        %4207 = vst [vmem:[#allocation2 + $0x10] sm:$0xff] %v4205
        %4208 = vst [vmem:[#allocation2 + $0x18] sm:$0xff] %v4206
        %v4209 = vpack.c.bf16 %v4182, %v4181
        %v4210 = vpack.c.bf16 %v4184, %v4183
        %4211 = vst [vmem:[#allocation2 + $0x20] sm:$0xff] %v4209
        %4212 = vst [vmem:[#allocation2 + $0x28] sm:$0xff] %v4210
        %4213 = vrot.lane.b32.xlu0 %v4181, 127
        %v4214 = vpop.permute.xlu0 %4213
        %4215 = vrot.lane.b32.xlu0 %v4182, 127
        %v4216 = vpop.permute.xlu0 %4215
        %4217 = vrot.lane.b32.xlu0 %v4183, 127
        %v4218 = vpop.permute.xlu0 %4217
        %4219 = vrot.lane.b32.xlu0 %v4184, 127
        %v4220 = vpop.permute.xlu0 %4219
        %v4221 = vpack.c.bf16 %v4216, %v4214
        %v4222 = vpack.c.bf16 %v4220, %v4218
        %4223 = vst [vmem:[#allocation2 + $0x30] sm:$0xff] %v4221
        %4224 = vst [vmem:[#allocation2 + $0x38] sm:$0xff] %v4222
        %4225 = vrot.lane.b32.xlu0 %v4181, 126
        %v4226 = vpop.permute.xlu0 %4225
        %4227 = vrot.lane.b32.xlu0 %v4182, 126
        %v4228 = vpop.permute.xlu0 %4227
        %4229 = vrot.lane.b32.xlu0 %v4183, 126
        %v4230 = vpop.permute.xlu0 %4229
        %4231 = vrot.lane.b32.xlu0 %v4184, 126
        %v4232 = vpop.permute.xlu0 %4231
        %v4233 = vpack.c.bf16 %v4228, %v4226
        %v4234 = vpack.c.bf16 %v4232, %v4230
        %4235 = vst [vmem:[#allocation2 + $0x40] sm:$0xff] %v4233
        %4236 = vst [vmem:[#allocation2 + $0x48] sm:$0xff] %v4234
        %s4237 = scalar_lea.vmem %s4, 512
        %v4238 = vld [vmem:[%s4237] sm:$0xff]
        %v4239 = vld [vmem:[%s4237 + $0x8] sm:$0xff]
        %v4240 = vld [vmem:[%s4237 + $0x10] sm:$0xff]
        %v4241 = vld [vmem:[%s4237 + $0x18] sm:$0xff]
        %v4242 = vld [vmem:[%s4237 + $0x20] sm:$0xff]
        %v4243 = vld [vmem:[%s4237 + $0x28] sm:$0xff]
        %v4244 = vld [vmem:[%s4237 + $0x30] sm:$0xff]
        %v4245 = vld [vmem:[%s4237 + $0x38] sm:$0xff]
        %v4246 = vld [vmem:[#allocation2] sm:$0xff]
        %v4247 = vld [vmem:[#allocation2 + $0x8] sm:$0xff]
        %v4248 = vld [vmem:[#allocation2 + $0x10] sm:$0xff]
        %v4249 = vld [vmem:[#allocation2 + $0x18] sm:$0xff]
        %v4250 = vld [vmem:[#allocation2 + $0x20] sm:$0xff]
        %v4251 = vld [vmem:[#allocation2 + $0x28] sm:$0xff]
        %v4252 = vld [vmem:[#allocation2 + $0x30] sm:$0xff]
        %v4253 = vld [vmem:[#allocation2 + $0x38] sm:$0xff]
        %v4254 = vld [vmem:[#allocation2 + $0x40] sm:$0xff]
        %v4255 = vld [vmem:[#allocation2 + $0x48] sm:$0xff]
        %s4256 = scalar_lea.vmem %s5, 512
        %v4257 = vld [vmem:[%s4256] sm:$0xff]
        %v4258 = vld [vmem:[%s4256 + $0x8] sm:$0xff]
        %v4259 = vld [vmem:[%s4256 + $0x10] sm:$0xff]
        %v4260 = vld [vmem:[%s4256 + $0x18] sm:$0xff]
        %v4261 = vld [vmem:[%s4256 + $0x20] sm:$0xff]
        %v4262 = vld [vmem:[%s4256 + $0x28] sm:$0xff]
        %v4263 = vld [vmem:[%s4256 + $0x30] sm:$0xff]
        %v4264 = vld [vmem:[%s4256 + $0x38] sm:$0xff]
        %4266 = vset.pattern.permute.xlu0 0
        %4267 = vperm.xlu0 %4266, %v4257
        %v4268 = vpop.permute.xlu0 %4267
        %4271 = vset.pattern.permute.xlu0 0
        %4272 = vperm.xlu0 %4271, %v4258
        %v4273 = vpop.permute.xlu0 %4272
        %4276 = vset.pattern.permute.xlu0 0
        %4277 = vperm.xlu0 %4276, %v4259
        %v4278 = vpop.permute.xlu0 %4277
        %4281 = vset.pattern.permute.xlu0 0
        %4282 = vperm.xlu0 %4281, %v4260
        %v4283 = vpop.permute.xlu0 %4282
        %4286 = vset.pattern.permute.xlu0 0
        %4287 = vperm.xlu0 %4286, %v4261
        %v4288 = vpop.permute.xlu0 %4287
        %4291 = vset.pattern.permute.xlu0 0
        %4292 = vperm.xlu0 %4291, %v4262
        %v4293 = vpop.permute.xlu0 %4292
        %4296 = vset.pattern.permute.xlu0 0
        %4297 = vperm.xlu0 %4296, %v4263
        %v4298 = vpop.permute.xlu0 %4297
        %4301 = vset.pattern.permute.xlu0 0
        %4302 = vperm.xlu0 %4301, %v4264
        %v4303 = vpop.permute.xlu0 %4302
        %v4313 = vunpack.c.l.b16 %v4238
        %v4314 = vunpack.c.h.b16 %v4238
        %v4315 = vunpack.c.l.b16 %v4239
        %v4316 = vunpack.c.h.b16 %v4239
        %v4317 = vunpack.c.l.b16 %v4240
        %v4318 = vunpack.c.h.b16 %v4240
        %v4319 = vunpack.c.l.b16 %v4241
        %v4320 = vunpack.c.h.b16 %v4241
        %v4321 = vunpack.c.l.b16 %v4242
        %v4322 = vunpack.c.h.b16 %v4242
        %v4323 = vunpack.c.l.b16 %v4243
        %v4324 = vunpack.c.h.b16 %v4243
        %v4325 = vunpack.c.l.b16 %v4244
        %v4326 = vunpack.c.h.b16 %v4244
        %v4327 = vunpack.c.l.b16 %v4245
        %v4328 = vunpack.c.h.b16 %v4245
        %v4329 = vpack.c.b16 %v4315, %v4313
        %v4330 = vpack.c.b16 %v4316, %v4314
        %v4331 = vpack.c.b16 %v4319, %v4317
        %v4332 = vpack.c.b16 %v4320, %v4318
        %v4333 = vpack.c.b16 %v4323, %v4321
        %v4334 = vpack.c.b16 %v4324, %v4322
        %v4335 = vpack.c.b16 %v4327, %v4325
        %v4336 = vpack.c.b16 %v4328, %v4326
        %v4342 = vsel %vm690, %v4330, 0
        %v4345 = vsel %vm690, %v4332, 0
        %v4348 = vsel %vm690, %v4334, 0
        %v4351 = vsel %vm690, %v4336, 0
        %4353 = vmatprep.subr.bf16.mxu0 0
        %4354 = vmatpush1.bf16.msra.mxu0 %v4246
        %4355 = vmatprep.subr.bf16.mxu0 0
        %4356 = vmatpush1.bf16.msra.mxu0 %v4247
        %4357 = vmatprep.subr.bf16.mxu0 0
        %4358 = vmatpush1.bf16.msra.mxu0 %v4248
        %4359 = vmatprep.subr.bf16.mxu0 0
        %4360 = vmatpush1.bf16.msra.mxu0 %v4249
        %4361 = vmatprep.subr.bf16.mxu0 0
        %4362 = vmatpush1.bf16.msra.mxu0 %v4250
        %4363 = vmatprep.subr.bf16.mxu0 0
        %4364 = vmatpush1.bf16.msra.mxu0 %v4251
        %4365 = vmatprep.subr.bf16.mxu0 0
        %4366 = vmatpush1.bf16.msra.mxu0 %v4252
        %4367 = vmatprep.subr.bf16.mxu0 0
        %4368 = vmatpush1.bf16.msra.mxu0 %v4253
        %4369 = vmatprep.subr.bf16.mxu0 0
        %4370 = vmatpush1.bf16.msra.mxu0 %v4254
        %4371 = vmatprep.subr.bf16.mxu0 0
        %4372 = vmatpush1.bf16.msra.mxu0 %v4255
        %4373 = vmatprep.subr.bf16.mxu0 0
        %4374 = vmatpush1.bf16.msra.mxu0 0
        %4375 = vmatprep.subr.bf16.mxu0 0
        %4376 = vmatpush1.bf16.msra.mxu0 0
        %4377 = vmatprep.subr.bf16.mxu0 0
        %4378 = vmatpush1.bf16.msra.mxu0 0
        %4379 = vmatprep.subr.bf16.mxu0 0
        %4380 = vmatpush1.bf16.msra.mxu0 0
        %4381 = vmatprep.subr.bf16.mxu0 0
        %4382 = vmatpush1.bf16.msra.mxu0 0
        %4383 = vmatprep.subr.bf16.mxu0 0
        %4384 = vmatpush1.bf16.msra.mxu0 0
        %4385 = vmatprep.mubr.bf16.mxu0 %v4342
        %4386 = vmatmul.mubr.bf16.gmra.mrb[0].mxu0 %v4329
        %v4387 = vpop.f32.mrb[0].mxu0
        %v4388 = vadd.f32 %v4268, %v4387
        %v4389 = vpop.f32.mrb[0].mxu0
        %v4390 = vpop.f32.mrb[0].mxu0
        %v4391 = vadd.f32 %v4273, %v4390
        %v4392 = vpop.f32.mrb[0].mxu0
        %4393 = vmatprep.mubr.bf16.mxu0 %v4345
        %4394 = vmatmul.mubr.bf16.gmra.mrb[0].mxu0 %v4331
        %v4395 = vpop.f32.mrb[0].mxu0
        %v4396 = vadd.f32 %v4278, %v4395
        %v4397 = vpop.f32.mrb[0].mxu0
        %v4398 = vpop.f32.mrb[0].mxu0
        %v4399 = vadd.f32 %v4283, %v4398
        %v4400 = vpop.f32.mrb[0].mxu0
        %4401 = vmatprep.mubr.bf16.mxu0 %v4348
        %4402 = vmatmul.mubr.bf16.gmra.mrb[0].mxu0 %v4333
        %v4403 = vpop.f32.mrb[0].mxu0
        %v4404 = vadd.f32 %v4288, %v4403
        %v4405 = vpop.f32.mrb[0].mxu0
        %v4406 = vpop.f32.mrb[0].mxu0
        %v4407 = vadd.f32 %v4293, %v4406
        %v4408 = vpop.f32.mrb[0].mxu0
        %4409 = vmatprep.mubr.bf16.mxu0 %v4351
        %4410 = vmatmul.mubr.bf16.gmra.mrb[0].mxu0 %v4335
        %v4411 = vpop.f32.mrb[0].mxu0
        %v4412 = vadd.f32 %v4298, %v4411
        %v4413 = vpop.f32.mrb[0].mxu0
        %v4414 = vpop.f32.mrb[0].mxu0
        %v4415 = vadd.f32 %v4303, %v4414
        %v4416 = vpop.f32.mrb[0].mxu0
        %4417 = vdwg.mxu0
        %v4418 = vtanh.pop %v4388
        %v4419 = vtanh.pop %v4391
        %v4420 = vtanh.pop %v4396
        %v4421 = vtanh.pop %v4399
        %v4422 = vxor.u32 %v4404, 2147483648
        %v4423 = vxor.u32 %v4407, 2147483648
        %v4424 = vxor.u32 %v4412, 2147483648
        %v4425 = vxor.u32 %v4415, 2147483648
        %v4426 = vmul.f32 %v4422, 1.442695
        %v4427 = vpow.pop %v4426
        %v4428 = vmul.f32 %v4423, 1.442695
        %v4429 = vpow.pop %v4428
        %v4430 = vmul.f32 %v4424, 1.442695
        %v4431 = vpow.pop %v4430
        %v4432 = vmul.f32 %v4425, 1.442695
        %v4433 = vpow.pop %v4432
        %v4434 = vadd.f32 %v4427, 1.0
        %v4435 = vadd.f32 %v4429, 1.0
        %v4436 = vadd.f32 %v4431, 1.0
        %v4437 = vadd.f32 %v4433, 1.0
        %v4438 = vrcp.pop %v4434
        %v4439 = vmul.f32 1.0, %v4438
        %v4440 = vrcp.pop %v4435
        %v4441 = vmul.f32 1.0, %v4440
        %v4442 = vrcp.pop %v4436
        %v4443 = vmul.f32 1.0, %v4442
        %v4444 = vrcp.pop %v4437
        %v4445 = vmul.f32 1.0, %v4444
        %v4446 = vmul.f32 %v4418, %v4439
        %v4447 = vmul.f32 %v4419, %v4441
        %v4448 = vmul.f32 %v4420, %v4443
        %v4449 = vmul.f32 %v4421, %v4445
        %s4450 = scalar_lea.vmem %s6, 192
        %v4451 = vld [vmem:[%s4450] sm:$0xf]
        %v4452 = vld [vmem:[%s4450 + $0x4] sm:$0xf]
        %v4453 = vld [vmem:[%s4450 + $0x8] sm:$0xf]
        %v4454 = vld [vmem:[%s4450 + $0xc] sm:$0xf]
        %v4455 = vld [vmem:[%s4450 + $0x10] sm:$0xf]
        %v4456 = vld [vmem:[%s4450 + $0x14] sm:$0xf]
        %v4457 = vld [vmem:[%s4450 + $0x18] sm:$0xf]
        %v4458 = vld [vmem:[%s4450 + $0x1c] sm:$0xf]
        %v4459 = vpack.c.bf16 %v4447, %v4446
        %v4460 = vpack.c.bf16 %v4449, %v4448
        %s4461 = scalar_lea.vmem %s7, 384
        %v4462 = vld [vmem:[%s4461] sm:$0xff]
        %v4463 = vld [vmem:[%s4461 + $0x8] sm:$0xff]
        %v4464 = vld [vmem:[%s4461 + $0x10] sm:$0xff]
        %v4465 = vld [vmem:[%s4461 + $0x18] sm:$0xff]
        %v4466 = vld [vmem:[%s4461 + $0x20] sm:$0xff]
        %v4467 = vld [vmem:[%s4461 + $0x28] sm:$0xff]
        %v4468 = vld [vmem:[%s4461 + $0x30] sm:$0xff]
        %v4469 = vld [vmem:[%s4461 + $0x38] sm:$0xff]
        %4471 = vset.pattern.permute.xlu0 0
        %4472 = vperm.xlu0 %4471, %v4462
        %v4473 = vpop.permute.xlu0 %4472
        %4476 = vset.pattern.permute.xlu0 0
        %4477 = vperm.xlu0 %4476, %v4463
        %v4478 = vpop.permute.xlu0 %4477
        %4481 = vset.pattern.permute.xlu0 0
        %4482 = vperm.xlu0 %4481, %v4464
        %v4483 = vpop.permute.xlu0 %4482
        %4486 = vset.pattern.permute.xlu0 0
        %4487 = vperm.xlu0 %4486, %v4465
        %v4488 = vpop.permute.xlu0 %4487
        %4491 = vset.pattern.permute.xlu0 0
        %4492 = vperm.xlu0 %4491, %v4466
        %v4493 = vpop.permute.xlu0 %4492
        %4496 = vset.pattern.permute.xlu0 0
        %4497 = vperm.xlu0 %4496, %v4467
        %v4498 = vpop.permute.xlu0 %4497
        %4501 = vset.pattern.permute.xlu0 0
        %4502 = vperm.xlu0 %4501, %v4468
        %v4503 = vpop.permute.xlu0 %4502
        %4506 = vset.pattern.permute.xlu0 0
        %4507 = vperm.xlu0 %4506, %v4469
        %v4508 = vpop.permute.xlu0 %4507
        %v4518 = vunpack.c.l.b16 %v4451
        %v4519 = vunpack.c.l.b16 %v4452
        %v4520 = vunpack.c.l.b16 %v4453
        %v4521 = vunpack.c.l.b16 %v4454
        %v4522 = vunpack.c.l.b16 %v4455
        %v4523 = vunpack.c.l.b16 %v4456
        %v4524 = vunpack.c.l.b16 %v4457
        %v4525 = vunpack.c.l.b16 %v4458
        %v4526 = vpack.c.b16 %v4519, %v4518
        %v4527 = vpack.c.b16 %v4521, %v4520
        %v4528 = vpack.c.b16 %v4523, %v4522
        %v4529 = vpack.c.b16 %v4525, %v4524
        %v4531 = vsel %vm690, %v4526, 0
        %v4534 = vsel %vm690, %v4527, 0
        %v4537 = vsel %vm690, %v4528, 0
        %v4540 = vsel %vm690, %v4529, 0
        %4542 = vmatprep.subr.bf16.mxu0 0
        %4543 = vmatpush1.bf16.msra.mxu0 %v4459
        %4544 = vmatprep.subr.bf16.mxu0 0
        %4545 = vmatpush1.bf16.msra.mxu0 %v4460
        %4546 = vmatprep.subr.bf16.mxu0 0
        %4547 = vmatpush1.bf16.msra.mxu0 0
        %4548 = vmatprep.subr.bf16.mxu0 0
        %4549 = vmatpush1.bf16.msra.mxu0 0
        %4550 = vmatprep.subr.bf16.mxu0 0
        %4551 = vmatpush1.bf16.msra.mxu0 0
        %4552 = vmatprep.subr.bf16.mxu0 0
        %4553 = vmatpush1.bf16.msra.mxu0 0
        %4554 = vmatprep.subr.bf16.mxu0 0
        %4555 = vmatpush1.bf16.msra.mxu0 0
        %4556 = vmatprep.subr.bf16.mxu0 0
        %4557 = vmatpush1.bf16.msra.mxu0 0
        %4558 = vmatprep.subr.bf16.mxu0 0
        %4559 = vmatpush1.bf16.msra.mxu0 0
        %4560 = vmatprep.subr.bf16.mxu0 0
        %4561 = vmatpush1.bf16.msra.mxu0 0
        %4562 = vmatprep.subr.bf16.mxu0 0
        %4563 = vmatpush1.bf16.msra.mxu0 0
        %4564 = vmatprep.subr.bf16.mxu0 0
        %4565 = vmatpush1.bf16.msra.mxu0 0
        %4566 = vmatprep.subr.bf16.mxu0 0
        %4567 = vmatpush1.bf16.msra.mxu0 0
        %4568 = vmatprep.subr.bf16.mxu0 0
        %4569 = vmatpush1.bf16.msra.mxu0 0
        %4570 = vmatprep.subr.bf16.mxu0 0
        %4571 = vmatpush1.bf16.msra.mxu0 0
        %4572 = vmatprep.subr.bf16.mxu0 0
        %4573 = vmatpush1.bf16.msra.mxu0 0
        %4574 = vmatprep.mubr.bf16.mxu0 0
        %4575 = vmatmul.mubr.bf16.gmra.mrb[0].mxu0 %v4531
        %v4576 = vpop.f32.mrb[0].mxu0
        %v4577 = vadd.f32 %v4473, %v4576
        %v4578 = vpop.f32.mrb[0].mxu0
        %v4579 = vpop.f32.mrb[0].mxu0
        %v4580 = vadd.f32 %v4478, %v4579
        %v4581 = vpop.f32.mrb[0].mxu0
        %4582 = vmatprep.mubr.bf16.mxu0 0
        %4583 = vmatmul.mubr.bf16.gmra.mrb[0].mxu0 %v4534
        %v4584 = vpop.f32.mrb[0].mxu0
        %v4585 = vadd.f32 %v4483, %v4584
        %v4586 = vpop.f32.mrb[0].mxu0
        %v4587 = vpop.f32.mrb[0].mxu0
        %v4588 = vadd.f32 %v4488, %v4587
        %v4589 = vpop.f32.mrb[0].mxu0
        %4590 = vmatprep.mubr.bf16.mxu0 0
        %4591 = vmatmul.mubr.bf16.gmra.mrb[0].mxu0 %v4537
        %v4592 = vpop.f32.mrb[0].mxu0
        %v4593 = vadd.f32 %v4493, %v4592
        %v4594 = vpop.f32.mrb[0].mxu0
        %v4595 = vpop.f32.mrb[0].mxu0
        %v4596 = vadd.f32 %v4498, %v4595
        %v4597 = vpop.f32.mrb[0].mxu0
        %4598 = vmatprep.mubr.bf16.mxu0 0
        %4599 = vmatmul.mubr.bf16.gmra.mrb[0].mxu0 %v4540
        %v4600 = vpop.f32.mrb[0].mxu0
        %v4601 = vadd.f32 %v4503, %v4600
        %v4602 = vpop.f32.mrb[0].mxu0
        %v4603 = vpop.f32.mrb[0].mxu0
        %v4604 = vadd.f32 %v4508, %v4603
        %v4605 = vpop.f32.mrb[0].mxu0
        %4606 = vdwg.mxu0
        %v4607 = vadd.f32 %v4181, %v4577
        %v4608 = vadd.f32 %v4182, %v4580
        %v4609 = vadd.f32 %v4183, %v4585
        %v4610 = vadd.f32 %v4184, %v4588
        %v4611 = vmul.f32 %v4607, %v530
        %v4612 = vmul.f32 %v4608, %v530
        %v4613 = vmul.f32 %v4609, %v530
        %v4614 = vmul.f32 %v4610, %v530
        %4615 = vrot.lane.b32.xlu0 %v4611, 2
        %v4616 = vpop.permute.xlu0 %4615
        %4617 = vrot.lane.b32.xlu0 %v4612, 2
        %v4618 = vpop.permute.xlu0 %4617
        %4619 = vrot.lane.b32.xlu0 %v4613, 2
        %v4620 = vpop.permute.xlu0 %4619
        %4621 = vrot.lane.b32.xlu0 %v4614, 2
        %v4622 = vpop.permute.xlu0 %4621
        %v4623 = vpack.c.bf16 %v4618, %v4616
        %v4624 = vpack.c.bf16 %v4622, %v4620
        %4625 = vst [vmem:[#allocation2] sm:$0xff] %v4623
        %4626 = vst [vmem:[#allocation2 + $0x8] sm:$0xff] %v4624
        %4627 = vrot.lane.b32.xlu0 %v4611, 1
        %v4628 = vpop.permute.xlu0 %4627
        %4629 = vrot.lane.b32.xlu0 %v4612, 1
        %v4630 = vpop.permute.xlu0 %4629
        %4631 = vrot.lane.b32.xlu0 %v4613, 1
        %v4632 = vpop.permute.xlu0 %4631
        %4633 = vrot.lane.b32.xlu0 %v4614, 1
        %v4634 = vpop.permute.xlu0 %4633
        %v4635 = vpack.c.bf16 %v4630, %v4628
        %v4636 = vpack.c.bf16 %v4634, %v4632
        %4637 = vst [vmem:[#allocation2 + $0x10] sm:$0xff] %v4635
        %4638 = vst [vmem:[#allocation2 + $0x18] sm:$0xff] %v4636
        %v4639 = vpack.c.bf16 %v4612, %v4611
        %v4640 = vpack.c.bf16 %v4614, %v4613
        %4641 = vst [vmem:[#allocation2 + $0x20] sm:$0xff] %v4639
        %4642 = vst [vmem:[#allocation2 + $0x28] sm:$0xff] %v4640
        %4643 = vrot.lane.b32.xlu0 %v4611, 127
        %v4644 = vpop.permute.xlu0 %4643
        %4645 = vrot.lane.b32.xlu0 %v4612, 127
        %v4646 = vpop.permute.xlu0 %4645
        %4647 = vrot.lane.b32.xlu0 %v4613, 127
        %v4648 = vpop.permute.xlu0 %4647
        %4649 = vrot.lane.b32.xlu0 %v4614, 127
        %v4650 = vpop.permute.xlu0 %4649
        %v4651 = vpack.c.bf16 %v4646, %v4644
        %v4652 = vpack.c.bf16 %v4650, %v4648
        %4653 = vst [vmem:[#allocation2 + $0x30] sm:$0xff] %v4651
        %4654 = vst [vmem:[#allocation2 + $0x38] sm:$0xff] %v4652
        %4655 = vrot.lane.b32.xlu0 %v4611, 126
        %v4656 = vpop.permute.xlu0 %4655
        %4657 = vrot.lane.b32.xlu0 %v4612, 126
        %v4658 = vpop.permute.xlu0 %4657
        %4659 = vrot.lane.b32.xlu0 %v4613, 126
        %v4660 = vpop.permute.xlu0 %4659
        %4661 = vrot.lane.b32.xlu0 %v4614, 126
        %v4662 = vpop.permute.xlu0 %4661
        %v4663 = vpack.c.bf16 %v4658, %v4656
        %v4664 = vpack.c.bf16 %v4662, %v4660
        %4665 = vst [vmem:[#allocation2 + $0x40] sm:$0xff] %v4663
        %4666 = vst [vmem:[#allocation2 + $0x48] sm:$0xff] %v4664
        %s4667 = scalar_lea.vmem %s4, 576
        %v4668 = vld [vmem:[%s4667] sm:$0xff]
        %v4669 = vld [vmem:[%s4667 + $0x8] sm:$0xff]
        %v4670 = vld [vmem:[%s4667 + $0x10] sm:$0xff]
        %v4671 = vld [vmem:[%s4667 + $0x18] sm:$0xff]
        %v4672 = vld [vmem:[%s4667 + $0x20] sm:$0xff]
        %v4673 = vld [vmem:[%s4667 + $0x28] sm:$0xff]
        %v4674 = vld [vmem:[%s4667 + $0x30] sm:$0xff]
        %v4675 = vld [vmem:[%s4667 + $0x38] sm:$0xff]
        %v4676 = vld [vmem:[#allocation2] sm:$0xff]
        %v4677 = vld [vmem:[#allocation2 + $0x8] sm:$0xff]
        %v4678 = vld [vmem:[#allocation2 + $0x10] sm:$0xff]
        %v4679 = vld [vmem:[#allocation2 + $0x18] sm:$0xff]
        %v4680 = vld [vmem:[#allocation2 + $0x20] sm:$0xff]
        %v4681 = vld [vmem:[#allocation2 + $0x28] sm:$0xff]
        %v4682 = vld [vmem:[#allocation2 + $0x30] sm:$0xff]
        %v4683 = vld [vmem:[#allocation2 + $0x38] sm:$0xff]
        %v4684 = vld [vmem:[#allocation2 + $0x40] sm:$0xff]
        %v4685 = vld [vmem:[#allocation2 + $0x48] sm:$0xff]
        %s4686 = scalar_lea.vmem %s5, 576
        %v4687 = vld [vmem:[%s4686] sm:$0xff]
        %v4688 = vld [vmem:[%s4686 + $0x8] sm:$0xff]
        %v4689 = vld [vmem:[%s4686 + $0x10] sm:$0xff]
        %v4690 = vld [vmem:[%s4686 + $0x18] sm:$0xff]
        %v4691 = vld [vmem:[%s4686 + $0x20] sm:$0xff]
        %v4692 = vld [vmem:[%s4686 + $0x28] sm:$0xff]
        %v4693 = vld [vmem:[%s4686 + $0x30] sm:$0xff]
        %v4694 = vld [vmem:[%s4686 + $0x38] sm:$0xff]
        %4696 = vset.pattern.permute.xlu0 0
        %4697 = vperm.xlu0 %4696, %v4687
        %v4698 = vpop.permute.xlu0 %4697
        %4701 = vset.pattern.permute.xlu0 0
        %4702 = vperm.xlu0 %4701, %v4688
        %v4703 = vpop.permute.xlu0 %4702
        %4706 = vset.pattern.permute.xlu0 0
        %4707 = vperm.xlu0 %4706, %v4689
        %v4708 = vpop.permute.xlu0 %4707
        %4711 = vset.pattern.permute.xlu0 0
        %4712 = vperm.xlu0 %4711, %v4690
        %v4713 = vpop.permute.xlu0 %4712
        %4716 = vset.pattern.permute.xlu0 0
        %4717 = vperm.xlu0 %4716, %v4691
        %v4718 = vpop.permute.xlu0 %4717
        %4721 = vset.pattern.permute.xlu0 0
        %4722 = vperm.xlu0 %4721, %v4692
        %v4723 = vpop.permute.xlu0 %4722
        %4726 = vset.pattern.permute.xlu0 0
        %4727 = vperm.xlu0 %4726, %v4693
        %v4728 = vpop.permute.xlu0 %4727
        %4731 = vset.pattern.permute.xlu0 0
        %4732 = vperm.xlu0 %4731, %v4694
        %v4733 = vpop.permute.xlu0 %4732
        %v4743 = vunpack.c.l.b16 %v4668
        %v4744 = vunpack.c.h.b16 %v4668
        %v4745 = vunpack.c.l.b16 %v4669
        %v4746 = vunpack.c.h.b16 %v4669
        %v4747 = vunpack.c.l.b16 %v4670
        %v4748 = vunpack.c.h.b16 %v4670
        %v4749 = vunpack.c.l.b16 %v4671
        %v4750 = vunpack.c.h.b16 %v4671
        %v4751 = vunpack.c.l.b16 %v4672
        %v4752 = vunpack.c.h.b16 %v4672
        %v4753 = vunpack.c.l.b16 %v4673
        %v4754 = vunpack.c.h.b16 %v4673
        %v4755 = vunpack.c.l.b16 %v4674
        %v4756 = vunpack.c.h.b16 %v4674
        %v4757 = vunpack.c.l.b16 %v4675
        %v4758 = vunpack.c.h.b16 %v4675
        %v4759 = vpack.c.b16 %v4745, %v4743
        %v4760 = vpack.c.b16 %v4746, %v4744
        %v4761 = vpack.c.b16 %v4749, %v4747
        %v4762 = vpack.c.b16 %v4750, %v4748
        %v4763 = vpack.c.b16 %v4753, %v4751
        %v4764 = vpack.c.b16 %v4754, %v4752
        %v4765 = vpack.c.b16 %v4757, %v4755
        %v4766 = vpack.c.b16 %v4758, %v4756
        %v4772 = vsel %vm690, %v4760, 0
        %v4775 = vsel %vm690, %v4762, 0
        %v4778 = vsel %vm690, %v4764, 0
        %v4781 = vsel %vm690, %v4766, 0
        %4783 = vmatprep.subr.bf16.mxu0 0
        %4784 = vmatpush1.bf16.msra.mxu0 %v4676
        %4785 = vmatprep.subr.bf16.mxu0 0
        %4786 = vmatpush1.bf16.msra.mxu0 %v4677
        %4787 = vmatprep.subr.bf16.mxu0 0
        %4788 = vmatpush1.bf16.msra.mxu0 %v4678
        %4789 = vmatprep.subr.bf16.mxu0 0
        %4790 = vmatpush1.bf16.msra.mxu0 %v4679
        %4791 = vmatprep.subr.bf16.mxu0 0
        %4792 = vmatpush1.bf16.msra.mxu0 %v4680
        %4793 = vmatprep.subr.bf16.mxu0 0
        %4794 = vmatpush1.bf16.msra.mxu0 %v4681
        %4795 = vmatprep.subr.bf16.mxu0 0
        %4796 = vmatpush1.bf16.msra.mxu0 %v4682
        %4797 = vmatprep.subr.bf16.mxu0 0
        %4798 = vmatpush1.bf16.msra.mxu0 %v4683
        %4799 = vmatprep.subr.bf16.mxu0 0
        %4800 = vmatpush1.bf16.msra.mxu0 %v4684
        %4801 = vmatprep.subr.bf16.mxu0 0
        %4802 = vmatpush1.bf16.msra.mxu0 %v4685
        %4803 = vmatprep.subr.bf16.mxu0 0
        %4804 = vmatpush1.bf16.msra.mxu0 0
        %4805 = vmatprep.subr.bf16.mxu0 0
        %4806 = vmatpush1.bf16.msra.mxu0 0
        %4807 = vmatprep.subr.bf16.mxu0 0
        %4808 = vmatpush1.bf16.msra.mxu0 0
        %4809 = vmatprep.subr.bf16.mxu0 0
        %4810 = vmatpush1.bf16.msra.mxu0 0
        %4811 = vmatprep.subr.bf16.mxu0 0
        %4812 = vmatpush1.bf16.msra.mxu0 0
        %4813 = vmatprep.subr.bf16.mxu0 0
        %4814 = vmatpush1.bf16.msra.mxu0 0
        %4815 = vmatprep.mubr.bf16.mxu0 %v4772
        %4816 = vmatmul.mubr.bf16.gmra.mrb[0].mxu0 %v4759
        %v4817 = vpop.f32.mrb[0].mxu0
        %v4818 = vadd.f32 %v4698, %v4817
        %v4819 = vpop.f32.mrb[0].mxu0
        %v4820 = vpop.f32.mrb[0].mxu0
        %v4821 = vadd.f32 %v4703, %v4820
        %v4822 = vpop.f32.mrb[0].mxu0
        %4823 = vmatprep.mubr.bf16.mxu0 %v4775
        %4824 = vmatmul.mubr.bf16.gmra.mrb[0].mxu0 %v4761
        %v4825 = vpop.f32.mrb[0].mxu0
        %v4826 = vadd.f32 %v4708, %v4825
        %v4827 = vpop.f32.mrb[0].mxu0
        %v4828 = vpop.f32.mrb[0].mxu0
        %v4829 = vadd.f32 %v4713, %v4828
        %v4830 = vpop.f32.mrb[0].mxu0
        %4831 = vmatprep.mubr.bf16.mxu0 %v4778
        %4832 = vmatmul.mubr.bf16.gmra.mrb[0].mxu0 %v4763
        %v4833 = vpop.f32.mrb[0].mxu0
        %v4834 = vadd.f32 %v4718, %v4833
        %v4835 = vpop.f32.mrb[0].mxu0
        %v4836 = vpop.f32.mrb[0].mxu0
        %v4837 = vadd.f32 %v4723, %v4836
        %v4838 = vpop.f32.mrb[0].mxu0
        %4839 = vmatprep.mubr.bf16.mxu0 %v4781
        %4840 = vmatmul.mubr.bf16.gmra.mrb[0].mxu0 %v4765
        %v4841 = vpop.f32.mrb[0].mxu0
        %v4842 = vadd.f32 %v4728, %v4841
        %v4843 = vpop.f32.mrb[0].mxu0
        %v4844 = vpop.f32.mrb[0].mxu0
        %v4845 = vadd.f32 %v4733, %v4844
        %v4846 = vpop.f32.mrb[0].mxu0
        %4847 = vdwg.mxu0
        %v4848 = vtanh.pop %v4818
        %v4849 = vtanh.pop %v4821
        %v4850 = vtanh.pop %v4826
        %v4851 = vtanh.pop %v4829
        %v4852 = vxor.u32 %v4834, 2147483648
        %v4853 = vxor.u32 %v4837, 2147483648
        %v4854 = vxor.u32 %v4842, 2147483648
        %v4855 = vxor.u32 %v4845, 2147483648
        %v4856 = vmul.f32 %v4852, 1.442695
        %v4857 = vpow.pop %v4856
        %v4858 = vmul.f32 %v4853, 1.442695
        %v4859 = vpow.pop %v4858
        %v4860 = vmul.f32 %v4854, 1.442695
        %v4861 = vpow.pop %v4860
        %v4862 = vmul.f32 %v4855, 1.442695
        %v4863 = vpow.pop %v4862
        %v4864 = vadd.f32 %v4857, 1.0
        %v4865 = vadd.f32 %v4859, 1.0
        %v4866 = vadd.f32 %v4861, 1.0
        %v4867 = vadd.f32 %v4863, 1.0
        %v4868 = vrcp.pop %v4864
        %v4869 = vmul.f32 1.0, %v4868
        %v4870 = vrcp.pop %v4865
        %v4871 = vmul.f32 1.0, %v4870
        %v4872 = vrcp.pop %v4866
        %v4873 = vmul.f32 1.0, %v4872
        %v4874 = vrcp.pop %v4867
        %v4875 = vmul.f32 1.0, %v4874
        %v4876 = vmul.f32 %v4848, %v4869
        %v4877 = vmul.f32 %v4849, %v4871
        %v4878 = vmul.f32 %v4850, %v4873
        %v4879 = vmul.f32 %v4851, %v4875
        %s4880 = scalar_lea.vmem %s6, 224
        %v4881 = vld [vmem:[%s4880] sm:$0xf]
        %v4882 = vld [vmem:[%s4880 + $0x4] sm:$0xf]
        %v4883 = vld [vmem:[%s4880 + $0x8] sm:$0xf]
        %v4884 = vld [vmem:[%s4880 + $0xc] sm:$0xf]
        %v4885 = vld [vmem:[%s4880 + $0x10] sm:$0xf]
        %v4886 = vld [vmem:[%s4880 + $0x14] sm:$0xf]
        %v4887 = vld [vmem:[%s4880 + $0x18] sm:$0xf]
        %v4888 = vld [vmem:[%s4880 + $0x1c] sm:$0xf]
        %v4889 = vpack.c.bf16 %v4877, %v4876
        %v4890 = vpack.c.bf16 %v4879, %v4878
        %s4891 = scalar_lea.vmem %s7, 448
        %v4892 = vld [vmem:[%s4891] sm:$0xff]
        %v4893 = vld [vmem:[%s4891 + $0x8] sm:$0xff]
        %v4894 = vld [vmem:[%s4891 + $0x10] sm:$0xff]
        %v4895 = vld [vmem:[%s4891 + $0x18] sm:$0xff]
        %v4896 = vld [vmem:[%s4891 + $0x20] sm:$0xff]
        %v4897 = vld [vmem:[%s4891 + $0x28] sm:$0xff]
        %v4898 = vld [vmem:[%s4891 + $0x30] sm:$0xff]
        %v4899 = vld [vmem:[%s4891 + $0x38] sm:$0xff]
        %4901 = vset.pattern.permute.xlu0 0
        %4902 = vperm.xlu0 %4901, %v4892
        %v4903 = vpop.permute.xlu0 %4902
        %4906 = vset.pattern.permute.xlu0 0
        %4907 = vperm.xlu0 %4906, %v4893
        %v4908 = vpop.permute.xlu0 %4907
        %4911 = vset.pattern.permute.xlu0 0
        %4912 = vperm.xlu0 %4911, %v4894
        %v4913 = vpop.permute.xlu0 %4912
        %4916 = vset.pattern.permute.xlu0 0
        %4917 = vperm.xlu0 %4916, %v4895
        %v4918 = vpop.permute.xlu0 %4917
        %4921 = vset.pattern.permute.xlu0 0
        %4922 = vperm.xlu0 %4921, %v4896
        %v4923 = vpop.permute.xlu0 %4922
        %4926 = vset.pattern.permute.xlu0 0
        %4927 = vperm.xlu0 %4926, %v4897
        %v4928 = vpop.permute.xlu0 %4927
        %4931 = vset.pattern.permute.xlu0 0
        %4932 = vperm.xlu0 %4931, %v4898
        %v4933 = vpop.permute.xlu0 %4932
        %4936 = vset.pattern.permute.xlu0 0
        %4937 = vperm.xlu0 %4936, %v4899
        %v4938 = vpop.permute.xlu0 %4937
        %v4948 = vunpack.c.l.b16 %v4881
        %v4949 = vunpack.c.l.b16 %v4882
        %v4950 = vunpack.c.l.b16 %v4883
        %v4951 = vunpack.c.l.b16 %v4884
        %v4952 = vunpack.c.l.b16 %v4885
        %v4953 = vunpack.c.l.b16 %v4886
        %v4954 = vunpack.c.l.b16 %v4887
        %v4955 = vunpack.c.l.b16 %v4888
        %v4956 = vpack.c.b16 %v4949, %v4948
        %v4957 = vpack.c.b16 %v4951, %v4950
        %v4958 = vpack.c.b16 %v4953, %v4952
        %v4959 = vpack.c.b16 %v4955, %v4954
        %v4961 = vsel %vm690, %v4956, 0
        %v4964 = vsel %vm690, %v4957, 0
        %v4967 = vsel %vm690, %v4958, 0
        %v4970 = vsel %vm690, %v4959, 0
        %4972 = vmatprep.subr.bf16.mxu0 0
        %4973 = vmatpush1.bf16.msra.mxu0 %v4889
        %4974 = vmatprep.subr.bf16.mxu0 0
        %4975 = vmatpush1.bf16.msra.mxu0 %v4890
        %4976 = vmatprep.subr.bf16.mxu0 0
        %4977 = vmatpush1.bf16.msra.mxu0 0
        %4978 = vmatprep.subr.bf16.mxu0 0
        %4979 = vmatpush1.bf16.msra.mxu0 0
        %4980 = vmatprep.subr.bf16.mxu0 0
        %4981 = vmatpush1.bf16.msra.mxu0 0
        %4982 = vmatprep.subr.bf16.mxu0 0
        %4983 = vmatpush1.bf16.msra.mxu0 0
        %4984 = vmatprep.subr.bf16.mxu0 0
        %4985 = vmatpush1.bf16.msra.mxu0 0
        %4986 = vmatprep.subr.bf16.mxu0 0
        %4987 = vmatpush1.bf16.msra.mxu0 0
        %4988 = vmatprep.subr.bf16.mxu0 0
        %4989 = vmatpush1.bf16.msra.mxu0 0
        %4990 = vmatprep.subr.bf16.mxu0 0
        %4991 = vmatpush1.bf16.msra.mxu0 0
        %4992 = vmatprep.subr.bf16.mxu0 0
        %4993 = vmatpush1.bf16.msra.mxu0 0
        %4994 = vmatprep.subr.bf16.mxu0 0
        %4995 = vmatpush1.bf16.msra.mxu0 0
        %4996 = vmatprep.subr.bf16.mxu0 0
        %4997 = vmatpush1.bf16.msra.mxu0 0
        %4998 = vmatprep.subr.bf16.mxu0 0
        %4999 = vmatpush1.bf16.msra.mxu0 0
        %5000 = vmatprep.subr.bf16.mxu0 0
        %5001 = vmatpush1.bf16.msra.mxu0 0
        %5002 = vmatprep.subr.bf16.mxu0 0
        %5003 = vmatpush1.bf16.msra.mxu0 0
        %5004 = vmatprep.mubr.bf16.mxu0 0
        %5005 = vmatmul.mubr.bf16.gmra.mrb[0].mxu0 %v4961
        %v5006 = vpop.f32.mrb[0].mxu0
        %v5007 = vadd.f32 %v4903, %v5006
        %v5008 = vpop.f32.mrb[0].mxu0
        %v5009 = vpop.f32.mrb[0].mxu0
        %v5010 = vadd.f32 %v4908, %v5009
        %v5011 = vpop.f32.mrb[0].mxu0
        %5012 = vmatprep.mubr.bf16.mxu0 0
        %5013 = vmatmul.mubr.bf16.gmra.mrb[0].mxu0 %v4964
        %v5014 = vpop.f32.mrb[0].mxu0
        %v5015 = vadd.f32 %v4913, %v5014
        %v5016 = vpop.f32.mrb[0].mxu0
        %v5017 = vpop.f32.mrb[0].mxu0
        %v5018 = vadd.f32 %v4918, %v5017
        %v5019 = vpop.f32.mrb[0].mxu0
        %5020 = vmatprep.mubr.bf16.mxu0 0
        %5021 = vmatmul.mubr.bf16.gmra.mrb[0].mxu0 %v4967
        %v5022 = vpop.f32.mrb[0].mxu0
        %v5023 = vadd.f32 %v4923, %v5022
        %v5024 = vpop.f32.mrb[0].mxu0
        %v5025 = vpop.f32.mrb[0].mxu0
        %v5026 = vadd.f32 %v4928, %v5025
        %v5027 = vpop.f32.mrb[0].mxu0
        %5028 = vmatprep.mubr.bf16.mxu0 0
        %5029 = vmatmul.mubr.bf16.gmra.mrb[0].mxu0 %v4970
        %v5030 = vpop.f32.mrb[0].mxu0
        %v5031 = vadd.f32 %v4933, %v5030
        %v5032 = vpop.f32.mrb[0].mxu0
        %v5033 = vpop.f32.mrb[0].mxu0
        %v5034 = vadd.f32 %v4938, %v5033
        %v5035 = vpop.f32.mrb[0].mxu0
        %5036 = vdwg.mxu0
        %v5037 = vadd.f32 %v4611, %v5007
        %v5038 = vadd.f32 %v4612, %v5010
        %v5039 = vadd.f32 %v4613, %v5015
        %v5040 = vadd.f32 %v4614, %v5018
        %v5041 = vmul.f32 %v5037, %v530
        %v5042 = vmul.f32 %v5038, %v530
        %v5043 = vmul.f32 %v5039, %v530
        %v5044 = vmul.f32 %v5040, %v530
        %v5045 = vadd.f32 %v4593, %v5023
        %v5046 = vadd.f32 %v4596, %v5026
        %v5047 = vadd.f32 %v4601, %v5031
        %v5048 = vadd.f32 %v4604, %v5034
        %5049 = vrot.lane.b32.xlu0 %v5041, 2
        %v5050 = vpop.permute.xlu0 %5049
        %5051 = vrot.lane.b32.xlu0 %v5042, 2
        %v5052 = vpop.permute.xlu0 %5051
        %5053 = vrot.lane.b32.xlu0 %v5043, 2
        %v5054 = vpop.permute.xlu0 %5053
        %5055 = vrot.lane.b32.xlu0 %v5044, 2
        %v5056 = vpop.permute.xlu0 %5055
        %v5057 = vpack.c.bf16 %v5052, %v5050
        %v5058 = vpack.c.bf16 %v5056, %v5054
        %5059 = vst [vmem:[#allocation2] sm:$0xff] %v5057
        %5060 = vst [vmem:[#allocation2 + $0x8] sm:$0xff] %v5058
        %5061 = vrot.lane.b32.xlu0 %v5041, 1
        %v5062 = vpop.permute.xlu0 %5061
        %5063 = vrot.lane.b32.xlu0 %v5042, 1
        %v5064 = vpop.permute.xlu0 %5063
        %5065 = vrot.lane.b32.xlu0 %v5043, 1
        %v5066 = vpop.permute.xlu0 %5065
        %5067 = vrot.lane.b32.xlu0 %v5044, 1
        %v5068 = vpop.permute.xlu0 %5067
        %v5069 = vpack.c.bf16 %v5064, %v5062
        %v5070 = vpack.c.bf16 %v5068, %v5066
        %5071 = vst [vmem:[#allocation2 + $0x10] sm:$0xff] %v5069
        %5072 = vst [vmem:[#allocation2 + $0x18] sm:$0xff] %v5070
        %v5073 = vpack.c.bf16 %v5042, %v5041
        %v5074 = vpack.c.bf16 %v5044, %v5043
        %5075 = vst [vmem:[#allocation2 + $0x20] sm:$0xff] %v5073
        %5076 = vst [vmem:[#allocation2 + $0x28] sm:$0xff] %v5074
        %5077 = vrot.lane.b32.xlu0 %v5041, 127
        %v5078 = vpop.permute.xlu0 %5077
        %5079 = vrot.lane.b32.xlu0 %v5042, 127
        %v5080 = vpop.permute.xlu0 %5079
        %5081 = vrot.lane.b32.xlu0 %v5043, 127
        %v5082 = vpop.permute.xlu0 %5081
        %5083 = vrot.lane.b32.xlu0 %v5044, 127
        %v5084 = vpop.permute.xlu0 %5083
        %v5085 = vpack.c.bf16 %v5080, %v5078
        %v5086 = vpack.c.bf16 %v5084, %v5082
        %5087 = vst [vmem:[#allocation2 + $0x30] sm:$0xff] %v5085
        %5088 = vst [vmem:[#allocation2 + $0x38] sm:$0xff] %v5086
        %5089 = vrot.lane.b32.xlu0 %v5041, 126
        %v5090 = vpop.permute.xlu0 %5089
        %5091 = vrot.lane.b32.xlu0 %v5042, 126
        %v5092 = vpop.permute.xlu0 %5091
        %5093 = vrot.lane.b32.xlu0 %v5043, 126
        %v5094 = vpop.permute.xlu0 %5093
        %5095 = vrot.lane.b32.xlu0 %v5044, 126
        %v5096 = vpop.permute.xlu0 %5095
        %v5097 = vpack.c.bf16 %v5092, %v5090
        %v5098 = vpack.c.bf16 %v5096, %v5094
        %5099 = vst [vmem:[#allocation2 + $0x40] sm:$0xff] %v5097
        %5100 = vst [vmem:[#allocation2 + $0x48] sm:$0xff] %v5098
        %s5101 = scalar_lea.vmem %s4, 640
        %v5102 = vld [vmem:[%s5101] sm:$0xff]
        %v5103 = vld [vmem:[%s5101 + $0x8] sm:$0xff]
        %v5104 = vld [vmem:[%s5101 + $0x10] sm:$0xff]
        %v5105 = vld [vmem:[%s5101 + $0x18] sm:$0xff]
        %v5106 = vld [vmem:[%s5101 + $0x20] sm:$0xff]
        %v5107 = vld [vmem:[%s5101 + $0x28] sm:$0xff]
        %v5108 = vld [vmem:[%s5101 + $0x30] sm:$0xff]
        %v5109 = vld [vmem:[%s5101 + $0x38] sm:$0xff]
        %v5110 = vld [vmem:[#allocation2] sm:$0xff]
        %v5111 = vld [vmem:[#allocation2 + $0x8] sm:$0xff]
        %v5112 = vld [vmem:[#allocation2 + $0x10] sm:$0xff]
        %v5113 = vld [vmem:[#allocation2 + $0x18] sm:$0xff]
        %v5114 = vld [vmem:[#allocation2 + $0x20] sm:$0xff]
        %v5115 = vld [vmem:[#allocation2 + $0x28] sm:$0xff]
        %v5116 = vld [vmem:[#allocation2 + $0x30] sm:$0xff]
        %v5117 = vld [vmem:[#allocation2 + $0x38] sm:$0xff]
        %v5118 = vld [vmem:[#allocation2 + $0x40] sm:$0xff]
        %v5119 = vld [vmem:[#allocation2 + $0x48] sm:$0xff]
        %s5120 = scalar_lea.vmem %s5, 640
        %v5121 = vld [vmem:[%s5120] sm:$0xff]
        %v5122 = vld [vmem:[%s5120 + $0x8] sm:$0xff]
        %v5123 = vld [vmem:[%s5120 + $0x10] sm:$0xff]
        %v5124 = vld [vmem:[%s5120 + $0x18] sm:$0xff]
        %v5125 = vld [vmem:[%s5120 + $0x20] sm:$0xff]
        %v5126 = vld [vmem:[%s5120 + $0x28] sm:$0xff]
        %v5127 = vld [vmem:[%s5120 + $0x30] sm:$0xff]
        %v5128 = vld [vmem:[%s5120 + $0x38] sm:$0xff]
        %5130 = vset.pattern.permute.xlu0 0
        %5131 = vperm.xlu0 %5130, %v5121
        %v5132 = vpop.permute.xlu0 %5131
        %5135 = vset.pattern.permute.xlu0 0
        %5136 = vperm.xlu0 %5135, %v5122
        %v5137 = vpop.permute.xlu0 %5136
        %5140 = vset.pattern.permute.xlu0 0
        %5141 = vperm.xlu0 %5140, %v5123
        %v5142 = vpop.permute.xlu0 %5141
        %5145 = vset.pattern.permute.xlu0 0
        %5146 = vperm.xlu0 %5145, %v5124
        %v5147 = vpop.permute.xlu0 %5146
        %5150 = vset.pattern.permute.xlu0 0
        %5151 = vperm.xlu0 %5150, %v5125
        %v5152 = vpop.permute.xlu0 %5151
        %5155 = vset.pattern.permute.xlu0 0
        %5156 = vperm.xlu0 %5155, %v5126
        %v5157 = vpop.permute.xlu0 %5156
        %5160 = vset.pattern.permute.xlu0 0
        %5161 = vperm.xlu0 %5160, %v5127
        %v5162 = vpop.permute.xlu0 %5161
        %5165 = vset.pattern.permute.xlu0 0
        %5166 = vperm.xlu0 %5165, %v5128
        %v5167 = vpop.permute.xlu0 %5166
        %v5177 = vunpack.c.l.b16 %v5102
        %v5178 = vunpack.c.h.b16 %v5102
        %v5179 = vunpack.c.l.b16 %v5103
        %v5180 = vunpack.c.h.b16 %v5103
        %v5181 = vunpack.c.l.b16 %v5104
        %v5182 = vunpack.c.h.b16 %v5104
        %v5183 = vunpack.c.l.b16 %v5105
        %v5184 = vunpack.c.h.b16 %v5105
        %v5185 = vunpack.c.l.b16 %v5106
        %v5186 = vunpack.c.h.b16 %v5106
        %v5187 = vunpack.c.l.b16 %v5107
        %v5188 = vunpack.c.h.b16 %v5107
        %v5189 = vunpack.c.l.b16 %v5108
        %v5190 = vunpack.c.h.b16 %v5108
        %v5191 = vunpack.c.l.b16 %v5109
        %v5192 = vunpack.c.h.b16 %v5109
        %v5193 = vpack.c.b16 %v5179, %v5177
        %v5194 = vpack.c.b16 %v5180, %v5178
        %v5195 = vpack.c.b16 %v5183, %v5181
        %v5196 = vpack.c.b16 %v5184, %v5182
        %v5197 = vpack.c.b16 %v5187, %v5185
        %v5198 = vpack.c.b16 %v5188, %v5186
        %v5199 = vpack.c.b16 %v5191, %v5189
        %v5200 = vpack.c.b16 %v5192, %v5190
        %v5206 = vsel %vm690, %v5194, 0
        %v5209 = vsel %vm690, %v5196, 0
        %v5212 = vsel %vm690, %v5198, 0
        %v5215 = vsel %vm690, %v5200, 0
        %5217 = vmatprep.subr.bf16.mxu0 0
        %5218 = vmatpush1.bf16.msra.mxu0 %v5110
        %5219 = vmatprep.subr.bf16.mxu0 0
        %5220 = vmatpush1.bf16.msra.mxu0 %v5111
        %5221 = vmatprep.subr.bf16.mxu0 0
        %5222 = vmatpush1.bf16.msra.mxu0 %v5112
        %5223 = vmatprep.subr.bf16.mxu0 0
        %5224 = vmatpush1.bf16.msra.mxu0 %v5113
        %5225 = vmatprep.subr.bf16.mxu0 0
        %5226 = vmatpush1.bf16.msra.mxu0 %v5114
        %5227 = vmatprep.subr.bf16.mxu0 0
        %5228 = vmatpush1.bf16.msra.mxu0 %v5115
        %5229 = vmatprep.subr.bf16.mxu0 0
        %5230 = vmatpush1.bf16.msra.mxu0 %v5116
        %5231 = vmatprep.subr.bf16.mxu0 0
        %5232 = vmatpush1.bf16.msra.mxu0 %v5117
        %5233 = vmatprep.subr.bf16.mxu0 0
        %5234 = vmatpush1.bf16.msra.mxu0 %v5118
        %5235 = vmatprep.subr.bf16.mxu0 0
        %5236 = vmatpush1.bf16.msra.mxu0 %v5119
        %5237 = vmatprep.subr.bf16.mxu0 0
        %5238 = vmatpush1.bf16.msra.mxu0 0
        %5239 = vmatprep.subr.bf16.mxu0 0
        %5240 = vmatpush1.bf16.msra.mxu0 0
        %5241 = vmatprep.subr.bf16.mxu0 0
        %5242 = vmatpush1.bf16.msra.mxu0 0
        %5243 = vmatprep.subr.bf16.mxu0 0
        %5244 = vmatpush1.bf16.msra.mxu0 0
        %5245 = vmatprep.subr.bf16.mxu0 0
        %5246 = vmatpush1.bf16.msra.mxu0 0
        %5247 = vmatprep.subr.bf16.mxu0 0
        %5248 = vmatpush1.bf16.msra.mxu0 0
        %5249 = vmatprep.mubr.bf16.mxu0 %v5206
        %5250 = vmatmul.mubr.bf16.gmra.mrb[0].mxu0 %v5193
        %v5251 = vpop.f32.mrb[0].mxu0
        %v5252 = vadd.f32 %v5132, %v5251
        %v5253 = vpop.f32.mrb[0].mxu0
        %v5254 = vpop.f32.mrb[0].mxu0
        %v5255 = vadd.f32 %v5137, %v5254
        %v5256 = vpop.f32.mrb[0].mxu0
        %5257 = vmatprep.mubr.bf16.mxu0 %v5209
        %5258 = vmatmul.mubr.bf16.gmra.mrb[0].mxu0 %v5195
        %v5259 = vpop.f32.mrb[0].mxu0
        %v5260 = vadd.f32 %v5142, %v5259
        %v5261 = vpop.f32.mrb[0].mxu0
        %v5262 = vpop.f32.mrb[0].mxu0
        %v5263 = vadd.f32 %v5147, %v5262
        %v5264 = vpop.f32.mrb[0].mxu0
        %5265 = vmatprep.mubr.bf16.mxu0 %v5212
        %5266 = vmatmul.mubr.bf16.gmra.mrb[0].mxu0 %v5197
        %v5267 = vpop.f32.mrb[0].mxu0
        %v5268 = vadd.f32 %v5152, %v5267
        %v5269 = vpop.f32.mrb[0].mxu0
        %v5270 = vpop.f32.mrb[0].mxu0
        %v5271 = vadd.f32 %v5157, %v5270
        %v5272 = vpop.f32.mrb[0].mxu0
        %5273 = vmatprep.mubr.bf16.mxu0 %v5215
        %5274 = vmatmul.mubr.bf16.gmra.mrb[0].mxu0 %v5199
        %v5275 = vpop.f32.mrb[0].mxu0
        %v5276 = vadd.f32 %v5162, %v5275
        %v5277 = vpop.f32.mrb[0].mxu0
        %v5278 = vpop.f32.mrb[0].mxu0
        %v5279 = vadd.f32 %v5167, %v5278
        %v5280 = vpop.f32.mrb[0].mxu0
        %5281 = vdwg.mxu0
        %v5282 = vtanh.pop %v5252
        %v5283 = vtanh.pop %v5255
        %v5284 = vtanh.pop %v5260
        %v5285 = vtanh.pop %v5263
        %v5286 = vxor.u32 %v5268, 2147483648
        %v5287 = vxor.u32 %v5271, 2147483648
        %v5288 = vxor.u32 %v5276, 2147483648
        %v5289 = vxor.u32 %v5279, 2147483648
        %v5290 = vmul.f32 %v5286, 1.442695
        %v5291 = vpow.pop %v5290
        %v5292 = vmul.f32 %v5287, 1.442695
        %v5293 = vpow.pop %v5292
        %v5294 = vmul.f32 %v5288, 1.442695
        %v5295 = vpow.pop %v5294
        %v5296 = vmul.f32 %v5289, 1.442695
        %v5297 = vpow.pop %v5296
        %v5298 = vadd.f32 %v5291, 1.0
        %v5299 = vadd.f32 %v5293, 1.0
        %v5300 = vadd.f32 %v5295, 1.0
        %v5301 = vadd.f32 %v5297, 1.0
        %v5302 = vrcp.pop %v5298
        %v5303 = vmul.f32 1.0, %v5302
        %v5304 = vrcp.pop %v5299
        %v5305 = vmul.f32 1.0, %v5304
        %v5306 = vrcp.pop %v5300
        %v5307 = vmul.f32 1.0, %v5306
        %v5308 = vrcp.pop %v5301
        %v5309 = vmul.f32 1.0, %v5308
        %v5310 = vmul.f32 %v5282, %v5303
        %v5311 = vmul.f32 %v5283, %v5305
        %v5312 = vmul.f32 %v5284, %v5307
        %v5313 = vmul.f32 %v5285, %v5309
        %s5314 = scalar_lea.vmem %s6, 256
        %v5315 = vld [vmem:[%s5314] sm:$0xf]
        %v5316 = vld [vmem:[%s5314 + $0x4] sm:$0xf]
        %v5317 = vld [vmem:[%s5314 + $0x8] sm:$0xf]
        %v5318 = vld [vmem:[%s5314 + $0xc] sm:$0xf]
        %v5319 = vld [vmem:[%s5314 + $0x10] sm:$0xf]
        %v5320 = vld [vmem:[%s5314 + $0x14] sm:$0xf]
        %v5321 = vld [vmem:[%s5314 + $0x18] sm:$0xf]
        %v5322 = vld [vmem:[%s5314 + $0x1c] sm:$0xf]
        %v5323 = vpack.c.bf16 %v5311, %v5310
        %v5324 = vpack.c.bf16 %v5313, %v5312
        %s5325 = scalar_lea.vmem %s7, 512
        %v5326 = vld [vmem:[%s5325] sm:$0xff]
        %v5327 = vld [vmem:[%s5325 + $0x8] sm:$0xff]
        %v5328 = vld [vmem:[%s5325 + $0x10] sm:$0xff]
        %v5329 = vld [vmem:[%s5325 + $0x18] sm:$0xff]
        %v5330 = vld [vmem:[%s5325 + $0x20] sm:$0xff]
        %v5331 = vld [vmem:[%s5325 + $0x28] sm:$0xff]
        %v5332 = vld [vmem:[%s5325 + $0x30] sm:$0xff]
        %v5333 = vld [vmem:[%s5325 + $0x38] sm:$0xff]
        %5335 = vset.pattern.permute.xlu0 0
        %5336 = vperm.xlu0 %5335, %v5326
        %v5337 = vpop.permute.xlu0 %5336
        %5340 = vset.pattern.permute.xlu0 0
        %5341 = vperm.xlu0 %5340, %v5327
        %v5342 = vpop.permute.xlu0 %5341
        %5345 = vset.pattern.permute.xlu0 0
        %5346 = vperm.xlu0 %5345, %v5328
        %v5347 = vpop.permute.xlu0 %5346
        %5350 = vset.pattern.permute.xlu0 0
        %5351 = vperm.xlu0 %5350, %v5329
        %v5352 = vpop.permute.xlu0 %5351
        %5355 = vset.pattern.permute.xlu0 0
        %5356 = vperm.xlu0 %5355, %v5330
        %v5357 = vpop.permute.xlu0 %5356
        %5360 = vset.pattern.permute.xlu0 0
        %5361 = vperm.xlu0 %5360, %v5331
        %v5362 = vpop.permute.xlu0 %5361
        %5365 = vset.pattern.permute.xlu0 0
        %5366 = vperm.xlu0 %5365, %v5332
        %v5367 = vpop.permute.xlu0 %5366
        %5370 = vset.pattern.permute.xlu0 0
        %5371 = vperm.xlu0 %5370, %v5333
        %v5372 = vpop.permute.xlu0 %5371
        %v5382 = vunpack.c.l.b16 %v5315
        %v5383 = vunpack.c.l.b16 %v5316
        %v5384 = vunpack.c.l.b16 %v5317
        %v5385 = vunpack.c.l.b16 %v5318
        %v5386 = vunpack.c.l.b16 %v5319
        %v5387 = vunpack.c.l.b16 %v5320
        %v5388 = vunpack.c.l.b16 %v5321
        %v5389 = vunpack.c.l.b16 %v5322
        %v5390 = vpack.c.b16 %v5383, %v5382
        %v5391 = vpack.c.b16 %v5385, %v5384
        %v5392 = vpack.c.b16 %v5387, %v5386
        %v5393 = vpack.c.b16 %v5389, %v5388
        %v5395 = vsel %vm690, %v5390, 0
        %v5398 = vsel %vm690, %v5391, 0
        %v5401 = vsel %vm690, %v5392, 0
        %v5404 = vsel %vm690, %v5393, 0
        %5406 = vmatprep.subr.bf16.mxu0 0
        %5407 = vmatpush1.bf16.msra.mxu0 %v5323
        %5408 = vmatprep.subr.bf16.mxu0 0
        %5409 = vmatpush1.bf16.msra.mxu0 %v5324
        %5410 = vmatprep.subr.bf16.mxu0 0
        %5411 = vmatpush1.bf16.msra.mxu0 0
        %5412 = vmatprep.subr.bf16.mxu0 0
        %5413 = vmatpush1.bf16.msra.mxu0 0
        %5414 = vmatprep.subr.bf16.mxu0 0
        %5415 = vmatpush1.bf16.msra.mxu0 0
        %5416 = vmatprep.subr.bf16.mxu0 0
        %5417 = vmatpush1.bf16.msra.mxu0 0
        %5418 = vmatprep.subr.bf16.mxu0 0
        %5419 = vmatpush1.bf16.msra.mxu0 0
        %5420 = vmatprep.subr.bf16.mxu0 0
        %5421 = vmatpush1.bf16.msra.mxu0 0
        %5422 = vmatprep.subr.bf16.mxu0 0
        %5423 = vmatpush1.bf16.msra.mxu0 0
        %5424 = vmatprep.subr.bf16.mxu0 0
        %5425 = vmatpush1.bf16.msra.mxu0 0
        %5426 = vmatprep.subr.bf16.mxu0 0
        %5427 = vmatpush1.bf16.msra.mxu0 0
        %5428 = vmatprep.subr.bf16.mxu0 0
        %5429 = vmatpush1.bf16.msra.mxu0 0
        %5430 = vmatprep.subr.bf16.mxu0 0
        %5431 = vmatpush1.bf16.msra.mxu0 0
        %5432 = vmatprep.subr.bf16.mxu0 0
        %5433 = vmatpush1.bf16.msra.mxu0 0
        %5434 = vmatprep.subr.bf16.mxu0 0
        %5435 = vmatpush1.bf16.msra.mxu0 0
        %5436 = vmatprep.subr.bf16.mxu0 0
        %5437 = vmatpush1.bf16.msra.mxu0 0
        %5438 = vmatprep.mubr.bf16.mxu0 0
        %5439 = vmatmul.mubr.bf16.gmra.mrb[0].mxu0 %v5395
        %v5440 = vpop.f32.mrb[0].mxu0
        %v5441 = vadd.f32 %v5337, %v5440
        %v5442 = vpop.f32.mrb[0].mxu0
        %v5443 = vpop.f32.mrb[0].mxu0
        %v5444 = vadd.f32 %v5342, %v5443
        %v5445 = vpop.f32.mrb[0].mxu0
        %5446 = vmatprep.mubr.bf16.mxu0 0
        %5447 = vmatmul.mubr.bf16.gmra.mrb[0].mxu0 %v5398
        %v5448 = vpop.f32.mrb[0].mxu0
        %v5449 = vadd.f32 %v5347, %v5448
        %v5450 = vpop.f32.mrb[0].mxu0
        %v5451 = vpop.f32.mrb[0].mxu0
        %v5452 = vadd.f32 %v5352, %v5451
        %v5453 = vpop.f32.mrb[0].mxu0
        %5454 = vmatprep.mubr.bf16.mxu0 0
        %5455 = vmatmul.mubr.bf16.gmra.mrb[0].mxu0 %v5401
        %v5456 = vpop.f32.mrb[0].mxu0
        %v5457 = vadd.f32 %v5357, %v5456
        %v5458 = vpop.f32.mrb[0].mxu0
        %v5459 = vpop.f32.mrb[0].mxu0
        %v5460 = vadd.f32 %v5362, %v5459
        %v5461 = vpop.f32.mrb[0].mxu0
        %5462 = vmatprep.mubr.bf16.mxu0 0
        %5463 = vmatmul.mubr.bf16.gmra.mrb[0].mxu0 %v5404
        %v5464 = vpop.f32.mrb[0].mxu0
        %v5465 = vadd.f32 %v5367, %v5464
        %v5466 = vpop.f32.mrb[0].mxu0
        %v5467 = vpop.f32.mrb[0].mxu0
        %v5468 = vadd.f32 %v5372, %v5467
        %v5469 = vpop.f32.mrb[0].mxu0
        %5470 = vdwg.mxu0
        %v5471 = vadd.f32 %v5041, %v5441
        %v5472 = vadd.f32 %v5042, %v5444
        %v5473 = vadd.f32 %v5043, %v5449
        %v5474 = vadd.f32 %v5044, %v5452
        %v5475 = vmul.f32 %v5471, %v530
        %v5476 = vmul.f32 %v5472, %v530
        %v5477 = vmul.f32 %v5473, %v530
        %v5478 = vmul.f32 %v5474, %v530
        %v5479 = vadd.f32 %v5045, %v5457
        %v5480 = vadd.f32 %v5046, %v5460
        %v5481 = vadd.f32 %v5047, %v5465
        %v5482 = vadd.f32 %v5048, %v5468
        %5483 = vrot.lane.b32.xlu0 %v5475, 2
        %v5484 = vpop.permute.xlu0 %5483
        %5485 = vrot.lane.b32.xlu0 %v5476, 2
        %v5486 = vpop.permute.xlu0 %5485
        %5487 = vrot.lane.b32.xlu0 %v5477, 2
        %v5488 = vpop.permute.xlu0 %5487
        %5489 = vrot.lane.b32.xlu0 %v5478, 2
        %v5490 = vpop.permute.xlu0 %5489
        %v5491 = vpack.c.bf16 %v5486, %v5484
        %v5492 = vpack.c.bf16 %v5490, %v5488
        %5493 = vst [vmem:[#allocation2] sm:$0xff] %v5491
        %5494 = vst [vmem:[#allocation2 + $0x8] sm:$0xff] %v5492
        %5495 = vrot.lane.b32.xlu0 %v5475, 1
        %v5496 = vpop.permute.xlu0 %5495
        %5497 = vrot.lane.b32.xlu0 %v5476, 1
        %v5498 = vpop.permute.xlu0 %5497
        %5499 = vrot.lane.b32.xlu0 %v5477, 1
        %v5500 = vpop.permute.xlu0 %5499
        %5501 = vrot.lane.b32.xlu0 %v5478, 1
        %v5502 = vpop.permute.xlu0 %5501
        %v5503 = vpack.c.bf16 %v5498, %v5496
        %v5504 = vpack.c.bf16 %v5502, %v5500
        %5505 = vst [vmem:[#allocation2 + $0x10] sm:$0xff] %v5503
        %5506 = vst [vmem:[#allocation2 + $0x18] sm:$0xff] %v5504
        %v5507 = vpack.c.bf16 %v5476, %v5475
        %v5508 = vpack.c.bf16 %v5478, %v5477
        %5509 = vst [vmem:[#allocation2 + $0x20] sm:$0xff] %v5507
        %5510 = vst [vmem:[#allocation2 + $0x28] sm:$0xff] %v5508
        %5511 = vrot.lane.b32.xlu0 %v5475, 127
        %v5512 = vpop.permute.xlu0 %5511
        %5513 = vrot.lane.b32.xlu0 %v5476, 127
        %v5514 = vpop.permute.xlu0 %5513
        %5515 = vrot.lane.b32.xlu0 %v5477, 127
        %v5516 = vpop.permute.xlu0 %5515
        %5517 = vrot.lane.b32.xlu0 %v5478, 127
        %v5518 = vpop.permute.xlu0 %5517
        %v5519 = vpack.c.bf16 %v5514, %v5512
        %v5520 = vpack.c.bf16 %v5518, %v5516
        %5521 = vst [vmem:[#allocation2 + $0x30] sm:$0xff] %v5519
        %5522 = vst [vmem:[#allocation2 + $0x38] sm:$0xff] %v5520
        %5523 = vrot.lane.b32.xlu0 %v5475, 126
        %v5524 = vpop.permute.xlu0 %5523
        %5525 = vrot.lane.b32.xlu0 %v5476, 126
        %v5526 = vpop.permute.xlu0 %5525
        %5527 = vrot.lane.b32.xlu0 %v5477, 126
        %v5528 = vpop.permute.xlu0 %5527
        %5529 = vrot.lane.b32.xlu0 %v5478, 126
        %v5530 = vpop.permute.xlu0 %5529
        %v5531 = vpack.c.bf16 %v5526, %v5524
        %v5532 = vpack.c.bf16 %v5530, %v5528
        %5533 = vst [vmem:[#allocation2 + $0x40] sm:$0xff] %v5531
        %5534 = vst [vmem:[#allocation2 + $0x48] sm:$0xff] %v5532
        %s5535 = scalar_lea.vmem %s4, 704
        %v5536 = vld [vmem:[%s5535] sm:$0xff]
        %v5537 = vld [vmem:[%s5535 + $0x8] sm:$0xff]
        %v5538 = vld [vmem:[%s5535 + $0x10] sm:$0xff]
        %v5539 = vld [vmem:[%s5535 + $0x18] sm:$0xff]
        %v5540 = vld [vmem:[%s5535 + $0x20] sm:$0xff]
        %v5541 = vld [vmem:[%s5535 + $0x28] sm:$0xff]
        %v5542 = vld [vmem:[%s5535 + $0x30] sm:$0xff]
        %v5543 = vld [vmem:[%s5535 + $0x38] sm:$0xff]
        %v5544 = vld [vmem:[#allocation2] sm:$0xff]
        %v5545 = vld [vmem:[#allocation2 + $0x8] sm:$0xff]
        %v5546 = vld [vmem:[#allocation2 + $0x10] sm:$0xff]
        %v5547 = vld [vmem:[#allocation2 + $0x18] sm:$0xff]
        %v5548 = vld [vmem:[#allocation2 + $0x20] sm:$0xff]
        %v5549 = vld [vmem:[#allocation2 + $0x28] sm:$0xff]
        %v5550 = vld [vmem:[#allocation2 + $0x30] sm:$0xff]
        %v5551 = vld [vmem:[#allocation2 + $0x38] sm:$0xff]
        %v5552 = vld [vmem:[#allocation2 + $0x40] sm:$0xff]
        %v5553 = vld [vmem:[#allocation2 + $0x48] sm:$0xff]
        %s5554 = scalar_lea.vmem %s5, 704
        %v5555 = vld [vmem:[%s5554] sm:$0xff]
        %v5556 = vld [vmem:[%s5554 + $0x8] sm:$0xff]
        %v5557 = vld [vmem:[%s5554 + $0x10] sm:$0xff]
        %v5558 = vld [vmem:[%s5554 + $0x18] sm:$0xff]
        %v5559 = vld [vmem:[%s5554 + $0x20] sm:$0xff]
        %v5560 = vld [vmem:[%s5554 + $0x28] sm:$0xff]
        %v5561 = vld [vmem:[%s5554 + $0x30] sm:$0xff]
        %v5562 = vld [vmem:[%s5554 + $0x38] sm:$0xff]
        %5564 = vset.pattern.permute.xlu0 0
        %5565 = vperm.xlu0 %5564, %v5555
        %v5566 = vpop.permute.xlu0 %5565
        %5569 = vset.pattern.permute.xlu0 0
        %5570 = vperm.xlu0 %5569, %v5556
        %v5571 = vpop.permute.xlu0 %5570
        %5574 = vset.pattern.permute.xlu0 0
        %5575 = vperm.xlu0 %5574, %v5557
        %v5576 = vpop.permute.xlu0 %5575
        %5579 = vset.pattern.permute.xlu0 0
        %5580 = vperm.xlu0 %5579, %v5558
        %v5581 = vpop.permute.xlu0 %5580
        %5584 = vset.pattern.permute.xlu0 0
        %5585 = vperm.xlu0 %5584, %v5559
        %v5586 = vpop.permute.xlu0 %5585
        %5589 = vset.pattern.permute.xlu0 0
        %5590 = vperm.xlu0 %5589, %v5560
        %v5591 = vpop.permute.xlu0 %5590
        %5594 = vset.pattern.permute.xlu0 0
        %5595 = vperm.xlu0 %5594, %v5561
        %v5596 = vpop.permute.xlu0 %5595
        %5599 = vset.pattern.permute.xlu0 0
        %5600 = vperm.xlu0 %5599, %v5562
        %v5601 = vpop.permute.xlu0 %5600
        %v5611 = vunpack.c.l.b16 %v5536
        %v5612 = vunpack.c.h.b16 %v5536
        %v5613 = vunpack.c.l.b16 %v5537
        %v5614 = vunpack.c.h.b16 %v5537
        %v5615 = vunpack.c.l.b16 %v5538
        %v5616 = vunpack.c.h.b16 %v5538
        %v5617 = vunpack.c.l.b16 %v5539
        %v5618 = vunpack.c.h.b16 %v5539
        %v5619 = vunpack.c.l.b16 %v5540
        %v5620 = vunpack.c.h.b16 %v5540
        %v5621 = vunpack.c.l.b16 %v5541
        %v5622 = vunpack.c.h.b16 %v5541
        %v5623 = vunpack.c.l.b16 %v5542
        %v5624 = vunpack.c.h.b16 %v5542
        %v5625 = vunpack.c.l.b16 %v5543
        %v5626 = vunpack.c.h.b16 %v5543
        %v5627 = vpack.c.b16 %v5613, %v5611
        %v5628 = vpack.c.b16 %v5614, %v5612
        %v5629 = vpack.c.b16 %v5617, %v5615
        %v5630 = vpack.c.b16 %v5618, %v5616
        %v5631 = vpack.c.b16 %v5621, %v5619
        %v5632 = vpack.c.b16 %v5622, %v5620
        %v5633 = vpack.c.b16 %v5625, %v5623
        %v5634 = vpack.c.b16 %v5626, %v5624
        %v5640 = vsel %vm690, %v5628, 0
        %v5643 = vsel %vm690, %v5630, 0
        %v5646 = vsel %vm690, %v5632, 0
        %v5649 = vsel %vm690, %v5634, 0
        %5651 = vmatprep.subr.bf16.mxu0 0
        %5652 = vmatpush1.bf16.msra.mxu0 %v5544
        %5653 = vmatprep.subr.bf16.mxu0 0
        %5654 = vmatpush1.bf16.msra.mxu0 %v5545
        %5655 = vmatprep.subr.bf16.mxu0 0
        %5656 = vmatpush1.bf16.msra.mxu0 %v5546
        %5657 = vmatprep.subr.bf16.mxu0 0
        %5658 = vmatpush1.bf16.msra.mxu0 %v5547
        %5659 = vmatprep.subr.bf16.mxu0 0
        %5660 = vmatpush1.bf16.msra.mxu0 %v5548
        %5661 = vmatprep.subr.bf16.mxu0 0
        %5662 = vmatpush1.bf16.msra.mxu0 %v5549
        %5663 = vmatprep.subr.bf16.mxu0 0
        %5664 = vmatpush1.bf16.msra.mxu0 %v5550
        %5665 = vmatprep.subr.bf16.mxu0 0
        %5666 = vmatpush1.bf16.msra.mxu0 %v5551
        %5667 = vmatprep.subr.bf16.mxu0 0
        %5668 = vmatpush1.bf16.msra.mxu0 %v5552
        %5669 = vmatprep.subr.bf16.mxu0 0
        %5670 = vmatpush1.bf16.msra.mxu0 %v5553
        %5671 = vmatprep.subr.bf16.mxu0 0
        %5672 = vmatpush1.bf16.msra.mxu0 0
        %5673 = vmatprep.subr.bf16.mxu0 0
        %5674 = vmatpush1.bf16.msra.mxu0 0
        %5675 = vmatprep.subr.bf16.mxu0 0
        %5676 = vmatpush1.bf16.msra.mxu0 0
        %5677 = vmatprep.subr.bf16.mxu0 0
        %5678 = vmatpush1.bf16.msra.mxu0 0
        %5679 = vmatprep.subr.bf16.mxu0 0
        %5680 = vmatpush1.bf16.msra.mxu0 0
        %5681 = vmatprep.subr.bf16.mxu0 0
        %5682 = vmatpush1.bf16.msra.mxu0 0
        %5683 = vmatprep.mubr.bf16.mxu0 %v5640
        %5684 = vmatmul.mubr.bf16.gmra.mrb[0].mxu0 %v5627
        %v5685 = vpop.f32.mrb[0].mxu0
        %v5686 = vadd.f32 %v5566, %v5685
        %v5687 = vpop.f32.mrb[0].mxu0
        %v5688 = vpop.f32.mrb[0].mxu0
        %v5689 = vadd.f32 %v5571, %v5688
        %v5690 = vpop.f32.mrb[0].mxu0
        %5691 = vmatprep.mubr.bf16.mxu0 %v5643
        %5692 = vmatmul.mubr.bf16.gmra.mrb[0].mxu0 %v5629
        %v5693 = vpop.f32.mrb[0].mxu0
        %v5694 = vadd.f32 %v5576, %v5693
        %v5695 = vpop.f32.mrb[0].mxu0
        %v5696 = vpop.f32.mrb[0].mxu0
        %v5697 = vadd.f32 %v5581, %v5696
        %v5698 = vpop.f32.mrb[0].mxu0
        %5699 = vmatprep.mubr.bf16.mxu0 %v5646
        %5700 = vmatmul.mubr.bf16.gmra.mrb[0].mxu0 %v5631
        %v5701 = vpop.f32.mrb[0].mxu0
        %v5702 = vadd.f32 %v5586, %v5701
        %v5703 = vpop.f32.mrb[0].mxu0
        %v5704 = vpop.f32.mrb[0].mxu0
        %v5705 = vadd.f32 %v5591, %v5704
        %v5706 = vpop.f32.mrb[0].mxu0
        %5707 = vmatprep.mubr.bf16.mxu0 %v5649
        %5708 = vmatmul.mubr.bf16.gmra.mrb[0].mxu0 %v5633
        %v5709 = vpop.f32.mrb[0].mxu0
        %v5710 = vadd.f32 %v5596, %v5709
        %v5711 = vpop.f32.mrb[0].mxu0
        %v5712 = vpop.f32.mrb[0].mxu0
        %v5713 = vadd.f32 %v5601, %v5712
        %v5714 = vpop.f32.mrb[0].mxu0
        %5715 = vdwg.mxu0
        %v5716 = vtanh.pop %v5686
        %v5717 = vtanh.pop %v5689
        %v5718 = vtanh.pop %v5694
        %v5719 = vtanh.pop %v5697
        %v5720 = vxor.u32 %v5702, 2147483648
        %v5721 = vxor.u32 %v5705, 2147483648
        %v5722 = vxor.u32 %v5710, 2147483648
        %v5723 = vxor.u32 %v5713, 2147483648
        %v5724 = vmul.f32 %v5720, 1.442695
        %v5725 = vpow.pop %v5724
        %v5726 = vmul.f32 %v5721, 1.442695
        %v5727 = vpow.pop %v5726
        %v5728 = vmul.f32 %v5722, 1.442695
        %v5729 = vpow.pop %v5728
        %v5730 = vmul.f32 %v5723, 1.442695
        %v5731 = vpow.pop %v5730
        %v5732 = vadd.f32 %v5725, 1.0
        %v5733 = vadd.f32 %v5727, 1.0
        %v5734 = vadd.f32 %v5729, 1.0
        %v5735 = vadd.f32 %v5731, 1.0
        %v5736 = vrcp.pop %v5732
        %v5737 = vmul.f32 1.0, %v5736
        %v5738 = vrcp.pop %v5733
        %v5739 = vmul.f32 1.0, %v5738
        %v5740 = vrcp.pop %v5734
        %v5741 = vmul.f32 1.0, %v5740
        %v5742 = vrcp.pop %v5735
        %v5743 = vmul.f32 1.0, %v5742
        %v5744 = vmul.f32 %v5716, %v5737
        %v5745 = vmul.f32 %v5717, %v5739
        %v5746 = vmul.f32 %v5718, %v5741
        %v5747 = vmul.f32 %v5719, %v5743
        %s5748 = scalar_lea.vmem %s8, 32
        %v5749 = vld [vmem:[%s5748] sm:$0xf]
        %v5750 = vld [vmem:[%s5748 + $0x4] sm:$0xf]
        %v5751 = vld [vmem:[%s5748 + $0x8] sm:$0xf]
        %v5752 = vld [vmem:[%s5748 + $0xc] sm:$0xf]
        %v5753 = vpack.c.bf16 %v5745, %v5744
        %v5754 = vpack.c.bf16 %v5747, %v5746
        %s5755 = scalar_lea.vmem %s9, 64
        %v5756 = vld [vmem:[%s5755] sm:$0xff]
        %v5757 = vld [vmem:[%s5755 + $0x8] sm:$0xff]
        %v5758 = vld [vmem:[%s5755 + $0x10] sm:$0xff]
        %v5759 = vld [vmem:[%s5755 + $0x18] sm:$0xff]
        %5761 = vset.pattern.permute.xlu0 0
        %5762 = vperm.xlu0 %5761, %v5756
        %v5763 = vpop.permute.xlu0 %5762
        %5766 = vset.pattern.permute.xlu0 0
        %5767 = vperm.xlu0 %5766, %v5757
        %v5768 = vpop.permute.xlu0 %5767
        %5771 = vset.pattern.permute.xlu0 0
        %5772 = vperm.xlu0 %5771, %v5758
        %v5773 = vpop.permute.xlu0 %5772
        %5776 = vset.pattern.permute.xlu0 0
        %5777 = vperm.xlu0 %5776, %v5759
        %v5778 = vpop.permute.xlu0 %5777
        %v5784 = vunpack.c.l.b16 %v5749
        %v5785 = vunpack.c.l.b16 %v5750
        %v5786 = vunpack.c.l.b16 %v5751
        %v5787 = vunpack.c.l.b16 %v5752
        %v5788 = vpack.c.b16 %v5785, %v5784
        %v5789 = vpack.c.b16 %v5787, %v5786
        %v5791 = vsel %vm690, %v5788, 0
        %v5794 = vsel %vm690, %v5789, 0
        %5796 = vmatprep.subr.bf16.mxu0 0
        %5797 = vmatpush1.bf16.msra.mxu0 %v5753
        %5798 = vmatprep.subr.bf16.mxu0 0
        %5799 = vmatpush1.bf16.msra.mxu0 %v5754
        %5800 = vmatprep.subr.bf16.mxu0 0
        %5801 = vmatpush1.bf16.msra.mxu0 0
        %5802 = vmatprep.subr.bf16.mxu0 0
        %5803 = vmatpush1.bf16.msra.mxu0 0
        %5804 = vmatprep.subr.bf16.mxu0 0
        %5805 = vmatpush1.bf16.msra.mxu0 0
        %5806 = vmatprep.subr.bf16.mxu0 0
        %5807 = vmatpush1.bf16.msra.mxu0 0
        %5808 = vmatprep.subr.bf16.mxu0 0
        %5809 = vmatpush1.bf16.msra.mxu0 0
        %5810 = vmatprep.subr.bf16.mxu0 0
        %5811 = vmatpush1.bf16.msra.mxu0 0
        %5812 = vmatprep.subr.bf16.mxu0 0
        %5813 = vmatpush1.bf16.msra.mxu0 0
        %5814 = vmatprep.subr.bf16.mxu0 0
        %5815 = vmatpush1.bf16.msra.mxu0 0
        %5816 = vmatprep.subr.bf16.mxu0 0
        %5817 = vmatpush1.bf16.msra.mxu0 0
        %5818 = vmatprep.subr.bf16.mxu0 0
        %5819 = vmatpush1.bf16.msra.mxu0 0
        %5820 = vmatprep.subr.bf16.mxu0 0
        %5821 = vmatpush1.bf16.msra.mxu0 0
        %5822 = vmatprep.subr.bf16.mxu0 0
        %5823 = vmatpush1.bf16.msra.mxu0 0
        %5824 = vmatprep.subr.bf16.mxu0 0
        %5825 = vmatpush1.bf16.msra.mxu0 0
        %5826 = vmatprep.subr.bf16.mxu0 0
        %5827 = vmatpush1.bf16.msra.mxu0 0
        %5828 = vmatprep.mubr.bf16.mxu0 0
        %5829 = vmatmul.mubr.bf16.gmra.mrb[0].mxu0 %v5791
        %v5830 = vpop.f32.mrb[0].mxu0
        %v5831 = vadd.f32 %v5763, %v5830
        %v5832 = vpop.f32.mrb[0].mxu0
        %v5833 = vpop.f32.mrb[0].mxu0
        %v5834 = vadd.f32 %v5768, %v5833
        %v5835 = vpop.f32.mrb[0].mxu0
        %5836 = vmatprep.mubr.bf16.mxu0 0
        %5837 = vmatmul.mubr.bf16.gmra.mrb[0].mxu0 %v5794
        %v5838 = vpop.f32.mrb[0].mxu0
        %v5839 = vadd.f32 %v5773, %v5838
        %v5840 = vpop.f32.mrb[0].mxu0
        %v5841 = vpop.f32.mrb[0].mxu0
        %v5842 = vadd.f32 %v5778, %v5841
        %v5843 = vpop.f32.mrb[0].mxu0
        %5844 = vdwg.mxu0
        %v5845 = vadd.f32 %v5479, %v5831
        %v5846 = vadd.f32 %v5480, %v5834
        %v5847 = vadd.f32 %v5481, %v5839
        %v5848 = vadd.f32 %v5482, %v5842
        %s5849 = scalar_lea.vmem %s10, 2
        %v5850 = vld [vmem:[%s5849] sm:$0x1]
        %v5851 = vmul.f32 %v5845, %v530
        %v5852 = vmul.f32 %v5846, %v530
        %v5853 = vmul.f32 %v5847, %v530
        %v5854 = vmul.f32 %v5848, %v530
        %v5855 = vpack.c.bf16 %v5852, %v5851
        %v5856 = vpack.c.bf16 %v5854, %v5853
        %s5857 = scalar_lea.vmem %s11, 4
        %v5858 = vld [vmem:[%s5857] sm:$0x3]
        %5860 = vset.pattern.permute.xlu0 0
        %5861 = vperm.xlu0 %5860, %v5858
        %v5862 = vpop.permute.xlu0 %5861
        %v5865 = vsel %vm690, %v5850, 0
        %5867 = vmatprep.subr.bf16.mxu0 0
        %5868 = vmatpush1.bf16.msra.mxu0 %v5855
        %5869 = vmatprep.subr.bf16.mxu0 0
        %5870 = vmatpush1.bf16.msra.mxu0 %v5856
        %5871 = vmatprep.subr.bf16.mxu0 0
        %5872 = vmatpush1.bf16.msra.mxu0 0
        %5873 = vmatprep.subr.bf16.mxu0 0
        %5874 = vmatpush1.bf16.msra.mxu0 0
        %5875 = vmatprep.subr.bf16.mxu0 0
        %5876 = vmatpush1.bf16.msra.mxu0 0
        %5877 = vmatprep.subr.bf16.mxu0 0
        %5878 = vmatpush1.bf16.msra.mxu0 0
        %5879 = vmatprep.subr.bf16.mxu0 0
        %5880 = vmatpush1.bf16.msra.mxu0 0
        %5881 = vmatprep.subr.bf16.mxu0 0
        %5882 = vmatpush1.bf16.msra.mxu0 0
        %5883 = vmatprep.subr.bf16.mxu0 0
        %5884 = vmatpush1.bf16.msra.mxu0 0
        %5885 = vmatprep.subr.bf16.mxu0 0
        %5886 = vmatpush1.bf16.msra.mxu0 0
        %5887 = vmatprep.subr.bf16.mxu0 0
        %5888 = vmatpush1.bf16.msra.mxu0 0
        %5889 = vmatprep.subr.bf16.mxu0 0
        %5890 = vmatpush1.bf16.msra.mxu0 0
        %5891 = vmatprep.subr.bf16.mxu0 0
        %5892 = vmatpush1.bf16.msra.mxu0 0
        %5893 = vmatprep.subr.bf16.mxu0 0
        %5894 = vmatpush1.bf16.msra.mxu0 0
        %5895 = vmatprep.subr.bf16.mxu0 0
        %5896 = vmatpush1.bf16.msra.mxu0 0
        %5897 = vmatprep.subr.bf16.mxu0 0
        %5898 = vmatpush1.bf16.msra.mxu0 0
        %5899 = vmatprep.mubr.bf16.mxu0 0
        %5900 = vmatmul.mubr.bf16.gmra.mrb[0].mxu0 %v5865
        %v5901 = vpop.f32.mrb[0].mxu0
        %v5902 = vadd.f32 %v5862, %v5901
        %v5903 = vpop.f32.mrb[0].mxu0
        %v5904 = vpop.f32.mrb[0].mxu0
        %v5905 = vpop.f32.mrb[0].mxu0
        %5906 = vdwg.mxu0
        %v5907 = vmul.f32 %v5902, %v530
        %v5908 = vmul.f32 %v2253, %v530
        %v5909 = vadd.f32 %v5907, %v5908
        %s5910 = scalar_lea.vmem %s2, 48
        %v5911 = vld [vmem:[%s5910] sm:$0xf]
        %v5912 = vld [vmem:[%s5910 + $0x4] sm:$0xf]
        %v5913 = vld [vmem:[%s5910 + $0x8] sm:$0xf]
        %v5914 = vld [vmem:[%s5910 + $0xc] sm:$0xf]
        %v5915 = vpack.c.bf16 %v5909, %v5909
        %s5916 = scalar_lea.vmem %s3, 96
        %v5917 = vld [vmem:[%s5916] sm:$0xff]
        %v5918 = vld [vmem:[%s5916 + $0x8] sm:$0xff]
        %v5919 = vld [vmem:[%s5916 + $0x10] sm:$0xff]
        %v5920 = vld [vmem:[%s5916 + $0x18] sm:$0xff]
        %5922 = vset.pattern.permute.xlu0 0
        %5923 = vperm.xlu0 %5922, %v5917
        %v5924 = vpop.permute.xlu0 %5923
        %5927 = vset.pattern.permute.xlu0 0
        %5928 = vperm.xlu0 %5927, %v5918
        %v5929 = vpop.permute.xlu0 %5928
        %5932 = vset.pattern.permute.xlu0 0
        %5933 = vperm.xlu0 %5932, %v5919
        %v5934 = vpop.permute.xlu0 %5933
        %5937 = vset.pattern.permute.xlu0 0
        %5938 = vperm.xlu0 %5937, %v5920
        %v5939 = vpop.permute.xlu0 %5938
        %v5945 = vunpack.c.l.b16 %v5911
        %v5946 = vunpack.c.l.b16 %v5912
        %v5947 = vunpack.c.l.b16 %v5913
        %v5948 = vunpack.c.l.b16 %v5914
        %v5949 = vpack.c.b16 %v5946, %v5945
        %v5950 = vpack.c.b16 %v5948, %v5947
        %v5952 = vsel %vm466, %v5949, 0
        %v5955 = vsel %vm466, %v5950, 0
        %v5958 = vsel %vm473, %v5915, 0
        %5960 = vmatprep.subr.bf16.mxu0 0
        %5961 = vmatpush1.bf16.msra.mxu0 %v5958
        %5962 = vmatprep.subr.bf16.mxu0 0
        %5963 = vmatpush1.bf16.msra.mxu0 0
        %5964 = vmatprep.subr.bf16.mxu0 0
        %5965 = vmatpush1.bf16.msra.mxu0 0
        %5966 = vmatprep.subr.bf16.mxu0 0
        %5967 = vmatpush1.bf16.msra.mxu0 0
        %5968 = vmatprep.subr.bf16.mxu0 0
        %5969 = vmatpush1.bf16.msra.mxu0 0
        %5970 = vmatprep.subr.bf16.mxu0 0
        %5971 = vmatpush1.bf16.msra.mxu0 0
        %5972 = vmatprep.subr.bf16.mxu0 0
        %5973 = vmatpush1.bf16.msra.mxu0 0
        %5974 = vmatprep.subr.bf16.mxu0 0
        %5975 = vmatpush1.bf16.msra.mxu0 0
        %5976 = vmatprep.subr.bf16.mxu0 0
        %5977 = vmatpush1.bf16.msra.mxu0 0
        %5978 = vmatprep.subr.bf16.mxu0 0
        %5979 = vmatpush1.bf16.msra.mxu0 0
        %5980 = vmatprep.subr.bf16.mxu0 0
        %5981 = vmatpush1.bf16.msra.mxu0 0
        %5982 = vmatprep.subr.bf16.mxu0 0
        %5983 = vmatpush1.bf16.msra.mxu0 0
        %5984 = vmatprep.subr.bf16.mxu0 0
        %5985 = vmatpush1.bf16.msra.mxu0 0
        %5986 = vmatprep.subr.bf16.mxu0 0
        %5987 = vmatpush1.bf16.msra.mxu0 0
        %5988 = vmatprep.subr.bf16.mxu0 0
        %5989 = vmatpush1.bf16.msra.mxu0 0
        %5990 = vmatprep.subr.bf16.mxu0 0
        %5991 = vmatpush1.bf16.msra.mxu0 0
        %5992 = vmatprep.mubr.bf16.mxu0 0
        %5993 = vmatmul.mubr.bf16.gmra.mrb[0].mxu0 %v5952
        %v5994 = vpop.f32.mrb[0].mxu0
        %v5995 = vadd.f32 %v5924, %v5994
        %v5996 = vpop.f32.mrb[0].mxu0
        %v5997 = vpop.f32.mrb[0].mxu0
        %v5998 = vadd.f32 %v5929, %v5997
        %v5999 = vpop.f32.mrb[0].mxu0
        %6000 = vmatprep.mubr.bf16.mxu0 0
        %6001 = vmatmul.mubr.bf16.gmra.mrb[0].mxu0 %v5955
        %v6002 = vpop.f32.mrb[0].mxu0
        %v6003 = vadd.f32 %v5934, %v6002
        %v6004 = vpop.f32.mrb[0].mxu0
        %v6005 = vpop.f32.mrb[0].mxu0
        %v6006 = vadd.f32 %v5939, %v6005
        %v6007 = vpop.f32.mrb[0].mxu0
        %6008 = vdwg.mxu0
        %v6009 = vmul.f32 %v5995, %v530
        %v6010 = vmul.f32 %v5998, %v530
        %v6011 = vmul.f32 %v6003, %v530
        %v6012 = vmul.f32 %v6006, %v530
        %6013 = vrot.lane.b32.xlu0 %v6009, 2
        %v6014 = vpop.permute.xlu0 %6013
        %6015 = vrot.lane.b32.xlu0 %v6010, 2
        %v6016 = vpop.permute.xlu0 %6015
        %6017 = vrot.lane.b32.xlu0 %v6011, 2
        %v6018 = vpop.permute.xlu0 %6017
        %6019 = vrot.lane.b32.xlu0 %v6012, 2
        %v6020 = vpop.permute.xlu0 %6019
        %v6021 = vpack.c.bf16 %v6016, %v6014
        %v6022 = vpack.c.bf16 %v6020, %v6018
        %6023 = vst [vmem:[#allocation2] sm:$0xff] %v6021
        %6024 = vst [vmem:[#allocation2 + $0x8] sm:$0xff] %v6022
        %6025 = vrot.lane.b32.xlu0 %v6009, 1
        %v6026 = vpop.permute.xlu0 %6025
        %6027 = vrot.lane.b32.xlu0 %v6010, 1
        %v6028 = vpop.permute.xlu0 %6027
        %6029 = vrot.lane.b32.xlu0 %v6011, 1
        %v6030 = vpop.permute.xlu0 %6029
        %6031 = vrot.lane.b32.xlu0 %v6012, 1
        %v6032 = vpop.permute.xlu0 %6031
        %v6033 = vpack.c.bf16 %v6028, %v6026
        %v6034 = vpack.c.bf16 %v6032, %v6030
        %6035 = vst [vmem:[#allocation2 + $0x10] sm:$0xff] %v6033
        %6036 = vst [vmem:[#allocation2 + $0x18] sm:$0xff] %v6034
        %v6037 = vpack.c.bf16 %v6010, %v6009
        %v6038 = vpack.c.bf16 %v6012, %v6011
        %6039 = vst [vmem:[#allocation2 + $0x20] sm:$0xff] %v6037
        %6040 = vst [vmem:[#allocation2 + $0x28] sm:$0xff] %v6038
        %6041 = vrot.lane.b32.xlu0 %v6009, 127
        %v6042 = vpop.permute.xlu0 %6041
        %6043 = vrot.lane.b32.xlu0 %v6010, 127
        %v6044 = vpop.permute.xlu0 %6043
        %6045 = vrot.lane.b32.xlu0 %v6011, 127
        %v6046 = vpop.permute.xlu0 %6045
        %6047 = vrot.lane.b32.xlu0 %v6012, 127
        %v6048 = vpop.permute.xlu0 %6047
        %v6049 = vpack.c.bf16 %v6044, %v6042
        %v6050 = vpack.c.bf16 %v6048, %v6046
        %6051 = vst [vmem:[#allocation2 + $0x30] sm:$0xff] %v6049
        %6052 = vst [vmem:[#allocation2 + $0x38] sm:$0xff] %v6050
        %6053 = vrot.lane.b32.xlu0 %v6009, 126
        %v6054 = vpop.permute.xlu0 %6053
        %6055 = vrot.lane.b32.xlu0 %v6010, 126
        %v6056 = vpop.permute.xlu0 %6055
        %6057 = vrot.lane.b32.xlu0 %v6011, 126
        %v6058 = vpop.permute.xlu0 %6057
        %6059 = vrot.lane.b32.xlu0 %v6012, 126
        %v6060 = vpop.permute.xlu0 %6059
        %v6061 = vpack.c.bf16 %v6056, %v6054
        %v6062 = vpack.c.bf16 %v6060, %v6058
        %6063 = vst [vmem:[#allocation2 + $0x40] sm:$0xff] %v6061
        %6064 = vst [vmem:[#allocation2 + $0x48] sm:$0xff] %v6062
        %s6065 = scalar_lea.vmem %s4, 768
        %v6066 = vld [vmem:[%s6065] sm:$0xff]
        %v6067 = vld [vmem:[%s6065 + $0x8] sm:$0xff]
        %v6068 = vld [vmem:[%s6065 + $0x10] sm:$0xff]
        %v6069 = vld [vmem:[%s6065 + $0x18] sm:$0xff]
        %v6070 = vld [vmem:[%s6065 + $0x20] sm:$0xff]
        %v6071 = vld [vmem:[%s6065 + $0x28] sm:$0xff]
        %v6072 = vld [vmem:[%s6065 + $0x30] sm:$0xff]
        %v6073 = vld [vmem:[%s6065 + $0x38] sm:$0xff]
        %v6074 = vld [vmem:[#allocation2] sm:$0xff]
        %v6075 = vld [vmem:[#allocation2 + $0x8] sm:$0xff]
        %v6076 = vld [vmem:[#allocation2 + $0x10] sm:$0xff]
        %v6077 = vld [vmem:[#allocation2 + $0x18] sm:$0xff]
        %v6078 = vld [vmem:[#allocation2 + $0x20] sm:$0xff]
        %v6079 = vld [vmem:[#allocation2 + $0x28] sm:$0xff]
        %v6080 = vld [vmem:[#allocation2 + $0x30] sm:$0xff]
        %v6081 = vld [vmem:[#allocation2 + $0x38] sm:$0xff]
        %v6082 = vld [vmem:[#allocation2 + $0x40] sm:$0xff]
        %v6083 = vld [vmem:[#allocation2 + $0x48] sm:$0xff]
        %s6084 = scalar_lea.vmem %s5, 768
        %v6085 = vld [vmem:[%s6084] sm:$0xff]
        %v6086 = vld [vmem:[%s6084 + $0x8] sm:$0xff]
        %v6087 = vld [vmem:[%s6084 + $0x10] sm:$0xff]
        %v6088 = vld [vmem:[%s6084 + $0x18] sm:$0xff]
        %v6089 = vld [vmem:[%s6084 + $0x20] sm:$0xff]
        %v6090 = vld [vmem:[%s6084 + $0x28] sm:$0xff]
        %v6091 = vld [vmem:[%s6084 + $0x30] sm:$0xff]
        %v6092 = vld [vmem:[%s6084 + $0x38] sm:$0xff]
        %6094 = vset.pattern.permute.xlu0 0
        %6095 = vperm.xlu0 %6094, %v6085
        %v6096 = vpop.permute.xlu0 %6095
        %6099 = vset.pattern.permute.xlu0 0
        %6100 = vperm.xlu0 %6099, %v6086
        %v6101 = vpop.permute.xlu0 %6100
        %6104 = vset.pattern.permute.xlu0 0
        %6105 = vperm.xlu0 %6104, %v6087
        %v6106 = vpop.permute.xlu0 %6105
        %6109 = vset.pattern.permute.xlu0 0
        %6110 = vperm.xlu0 %6109, %v6088
        %v6111 = vpop.permute.xlu0 %6110
        %6114 = vset.pattern.permute.xlu0 0
        %6115 = vperm.xlu0 %6114, %v6089
        %v6116 = vpop.permute.xlu0 %6115
        %6119 = vset.pattern.permute.xlu0 0
        %6120 = vperm.xlu0 %6119, %v6090
        %v6121 = vpop.permute.xlu0 %6120
        %6124 = vset.pattern.permute.xlu0 0
        %6125 = vperm.xlu0 %6124, %v6091
        %v6126 = vpop.permute.xlu0 %6125
        %6129 = vset.pattern.permute.xlu0 0
        %6130 = vperm.xlu0 %6129, %v6092
        %v6131 = vpop.permute.xlu0 %6130
        %v6141 = vunpack.c.l.b16 %v6066
        %v6142 = vunpack.c.h.b16 %v6066
        %v6143 = vunpack.c.l.b16 %v6067
        %v6144 = vunpack.c.h.b16 %v6067
        %v6145 = vunpack.c.l.b16 %v6068
        %v6146 = vunpack.c.h.b16 %v6068
        %v6147 = vunpack.c.l.b16 %v6069
        %v6148 = vunpack.c.h.b16 %v6069
        %v6149 = vunpack.c.l.b16 %v6070
        %v6150 = vunpack.c.h.b16 %v6070
        %v6151 = vunpack.c.l.b16 %v6071
        %v6152 = vunpack.c.h.b16 %v6071
        %v6153 = vunpack.c.l.b16 %v6072
        %v6154 = vunpack.c.h.b16 %v6072
        %v6155 = vunpack.c.l.b16 %v6073
        %v6156 = vunpack.c.h.b16 %v6073
        %v6157 = vpack.c.b16 %v6143, %v6141
        %v6158 = vpack.c.b16 %v6144, %v6142
        %v6159 = vpack.c.b16 %v6147, %v6145
        %v6160 = vpack.c.b16 %v6148, %v6146
        %v6161 = vpack.c.b16 %v6151, %v6149
        %v6162 = vpack.c.b16 %v6152, %v6150
        %v6163 = vpack.c.b16 %v6155, %v6153
        %v6164 = vpack.c.b16 %v6156, %v6154
        %v6170 = vsel %vm690, %v6158, 0
        %v6173 = vsel %vm690, %v6160, 0
        %v6176 = vsel %vm690, %v6162, 0
        %v6179 = vsel %vm690, %v6164, 0
        %6181 = vmatprep.subr.bf16.mxu0 0
        %6182 = vmatpush1.bf16.msra.mxu0 %v6074
        %6183 = vmatprep.subr.bf16.mxu0 0
        %6184 = vmatpush1.bf16.msra.mxu0 %v6075
        %6185 = vmatprep.subr.bf16.mxu0 0
        %6186 = vmatpush1.bf16.msra.mxu0 %v6076
        %6187 = vmatprep.subr.bf16.mxu0 0
        %6188 = vmatpush1.bf16.msra.mxu0 %v6077
        %6189 = vmatprep.subr.bf16.mxu0 0
        %6190 = vmatpush1.bf16.msra.mxu0 %v6078
        %6191 = vmatprep.subr.bf16.mxu0 0
        %6192 = vmatpush1.bf16.msra.mxu0 %v6079
        %6193 = vmatprep.subr.bf16.mxu0 0
        %6194 = vmatpush1.bf16.msra.mxu0 %v6080
        %6195 = vmatprep.subr.bf16.mxu0 0
        %6196 = vmatpush1.bf16.msra.mxu0 %v6081
        %6197 = vmatprep.subr.bf16.mxu0 0
        %6198 = vmatpush1.bf16.msra.mxu0 %v6082
        %6199 = vmatprep.subr.bf16.mxu0 0
        %6200 = vmatpush1.bf16.msra.mxu0 %v6083
        %6201 = vmatprep.subr.bf16.mxu0 0
        %6202 = vmatpush1.bf16.msra.mxu0 0
        %6203 = vmatprep.subr.bf16.mxu0 0
        %6204 = vmatpush1.bf16.msra.mxu0 0
        %6205 = vmatprep.subr.bf16.mxu0 0
        %6206 = vmatpush1.bf16.msra.mxu0 0
        %6207 = vmatprep.subr.bf16.mxu0 0
        %6208 = vmatpush1.bf16.msra.mxu0 0
        %6209 = vmatprep.subr.bf16.mxu0 0
        %6210 = vmatpush1.bf16.msra.mxu0 0
        %6211 = vmatprep.subr.bf16.mxu0 0
        %6212 = vmatpush1.bf16.msra.mxu0 0
        %6213 = vmatprep.mubr.bf16.mxu0 %v6170
        %6214 = vmatmul.mubr.bf16.gmra.mrb[0].mxu0 %v6157
        %v6215 = vpop.f32.mrb[0].mxu0
        %v6216 = vadd.f32 %v6096, %v6215
        %v6217 = vpop.f32.mrb[0].mxu0
        %v6218 = vpop.f32.mrb[0].mxu0
        %v6219 = vadd.f32 %v6101, %v6218
        %v6220 = vpop.f32.mrb[0].mxu0
        %6221 = vmatprep.mubr.bf16.mxu0 %v6173
        %6222 = vmatmul.mubr.bf16.gmra.mrb[0].mxu0 %v6159
        %v6223 = vpop.f32.mrb[0].mxu0
        %v6224 = vadd.f32 %v6106, %v6223
        %v6225 = vpop.f32.mrb[0].mxu0
        %v6226 = vpop.f32.mrb[0].mxu0
        %v6227 = vadd.f32 %v6111, %v6226
        %v6228 = vpop.f32.mrb[0].mxu0
        %6229 = vmatprep.mubr.bf16.mxu0 %v6176
        %6230 = vmatmul.mubr.bf16.gmra.mrb[0].mxu0 %v6161
        %v6231 = vpop.f32.mrb[0].mxu0
        %v6232 = vadd.f32 %v6116, %v6231
        %v6233 = vpop.f32.mrb[0].mxu0
        %v6234 = vpop.f32.mrb[0].mxu0
        %v6235 = vadd.f32 %v6121, %v6234
        %v6236 = vpop.f32.mrb[0].mxu0
        %6237 = vmatprep.mubr.bf16.mxu0 %v6179
        %6238 = vmatmul.mubr.bf16.gmra.mrb[0].mxu0 %v6163
        %v6239 = vpop.f32.mrb[0].mxu0
        %v6240 = vadd.f32 %v6126, %v6239
        %v6241 = vpop.f32.mrb[0].mxu0
        %v6242 = vpop.f32.mrb[0].mxu0
        %v6243 = vadd.f32 %v6131, %v6242
        %v6244 = vpop.f32.mrb[0].mxu0
        %6245 = vdwg.mxu0
        %v6246 = vtanh.pop %v6216
        %v6247 = vtanh.pop %v6219
        %v6248 = vtanh.pop %v6224
        %v6249 = vtanh.pop %v6227
        %v6250 = vxor.u32 %v6232, 2147483648
        %v6251 = vxor.u32 %v6235, 2147483648
        %v6252 = vxor.u32 %v6240, 2147483648
        %v6253 = vxor.u32 %v6243, 2147483648
        %v6254 = vmul.f32 %v6250, 1.442695
        %v6255 = vpow.pop %v6254
        %v6256 = vmul.f32 %v6251, 1.442695
        %v6257 = vpow.pop %v6256
        %v6258 = vmul.f32 %v6252, 1.442695
        %v6259 = vpow.pop %v6258
        %v6260 = vmul.f32 %v6253, 1.442695
        %v6261 = vpow.pop %v6260
        %v6262 = vadd.f32 %v6255, 1.0
        %v6263 = vadd.f32 %v6257, 1.0
        %v6264 = vadd.f32 %v6259, 1.0
        %v6265 = vadd.f32 %v6261, 1.0
        %v6266 = vrcp.pop %v6262
        %v6267 = vmul.f32 1.0, %v6266
        %v6268 = vrcp.pop %v6263
        %v6269 = vmul.f32 1.0, %v6268
        %v6270 = vrcp.pop %v6264
        %v6271 = vmul.f32 1.0, %v6270
        %v6272 = vrcp.pop %v6265
        %v6273 = vmul.f32 1.0, %v6272
        %v6274 = vmul.f32 %v6246, %v6267
        %v6275 = vmul.f32 %v6247, %v6269
        %v6276 = vmul.f32 %v6248, %v6271
        %v6277 = vmul.f32 %v6249, %v6273
        %s6278 = scalar_lea.vmem %s6, 288
        %v6279 = vld [vmem:[%s6278] sm:$0xf]
        %v6280 = vld [vmem:[%s6278 + $0x4] sm:$0xf]
        %v6281 = vld [vmem:[%s6278 + $0x8] sm:$0xf]
        %v6282 = vld [vmem:[%s6278 + $0xc] sm:$0xf]
        %v6283 = vld [vmem:[%s6278 + $0x10] sm:$0xf]
        %v6284 = vld [vmem:[%s6278 + $0x14] sm:$0xf]
        %v6285 = vld [vmem:[%s6278 + $0x18] sm:$0xf]
        %v6286 = vld [vmem:[%s6278 + $0x1c] sm:$0xf]
        %v6287 = vpack.c.bf16 %v6275, %v6274
        %v6288 = vpack.c.bf16 %v6277, %v6276
        %s6289 = scalar_lea.vmem %s7, 576
        %v6290 = vld [vmem:[%s6289] sm:$0xff]
        %v6291 = vld [vmem:[%s6289 + $0x8] sm:$0xff]
        %v6292 = vld [vmem:[%s6289 + $0x10] sm:$0xff]
        %v6293 = vld [vmem:[%s6289 + $0x18] sm:$0xff]
        %v6294 = vld [vmem:[%s6289 + $0x20] sm:$0xff]
        %v6295 = vld [vmem:[%s6289 + $0x28] sm:$0xff]
        %v6296 = vld [vmem:[%s6289 + $0x30] sm:$0xff]
        %v6297 = vld [vmem:[%s6289 + $0x38] sm:$0xff]
        %6299 = vset.pattern.permute.xlu0 0
        %6300 = vperm.xlu0 %6299, %v6290
        %v6301 = vpop.permute.xlu0 %6300
        %6304 = vset.pattern.permute.xlu0 0
        %6305 = vperm.xlu0 %6304, %v6291
        %v6306 = vpop.permute.xlu0 %6305
        %6309 = vset.pattern.permute.xlu0 0
        %6310 = vperm.xlu0 %6309, %v6292
        %v6311 = vpop.permute.xlu0 %6310
        %6314 = vset.pattern.permute.xlu0 0
        %6315 = vperm.xlu0 %6314, %v6293
        %v6316 = vpop.permute.xlu0 %6315
        %6319 = vset.pattern.permute.xlu0 0
        %6320 = vperm.xlu0 %6319, %v6294
        %v6321 = vpop.permute.xlu0 %6320
        %6324 = vset.pattern.permute.xlu0 0
        %6325 = vperm.xlu0 %6324, %v6295
        %v6326 = vpop.permute.xlu0 %6325
        %6329 = vset.pattern.permute.xlu0 0
        %6330 = vperm.xlu0 %6329, %v6296
        %v6331 = vpop.permute.xlu0 %6330
        %6334 = vset.pattern.permute.xlu0 0
        %6335 = vperm.xlu0 %6334, %v6297
        %v6336 = vpop.permute.xlu0 %6335
        %v6346 = vunpack.c.l.b16 %v6279
        %v6347 = vunpack.c.l.b16 %v6280
        %v6348 = vunpack.c.l.b16 %v6281
        %v6349 = vunpack.c.l.b16 %v6282
        %v6350 = vunpack.c.l.b16 %v6283
        %v6351 = vunpack.c.l.b16 %v6284
        %v6352 = vunpack.c.l.b16 %v6285
        %v6353 = vunpack.c.l.b16 %v6286
        %v6354 = vpack.c.b16 %v6347, %v6346
        %v6355 = vpack.c.b16 %v6349, %v6348
        %v6356 = vpack.c.b16 %v6351, %v6350
        %v6357 = vpack.c.b16 %v6353, %v6352
        %v6359 = vsel %vm690, %v6354, 0
        %v6362 = vsel %vm690, %v6355, 0
        %v6365 = vsel %vm690, %v6356, 0
        %v6368 = vsel %vm690, %v6357, 0
        %6370 = vmatprep.subr.bf16.mxu0 0
        %6371 = vmatpush1.bf16.msra.mxu0 %v6287
        %6372 = vmatprep.subr.bf16.mxu0 0
        %6373 = vmatpush1.bf16.msra.mxu0 %v6288
        %6374 = vmatprep.subr.bf16.mxu0 0
        %6375 = vmatpush1.bf16.msra.mxu0 0
        %6376 = vmatprep.subr.bf16.mxu0 0
        %6377 = vmatpush1.bf16.msra.mxu0 0
        %6378 = vmatprep.subr.bf16.mxu0 0
        %6379 = vmatpush1.bf16.msra.mxu0 0
        %6380 = vmatprep.subr.bf16.mxu0 0
        %6381 = vmatpush1.bf16.msra.mxu0 0
        %6382 = vmatprep.subr.bf16.mxu0 0
        %6383 = vmatpush1.bf16.msra.mxu0 0
        %6384 = vmatprep.subr.bf16.mxu0 0
        %6385 = vmatpush1.bf16.msra.mxu0 0
        %6386 = vmatprep.subr.bf16.mxu0 0
        %6387 = vmatpush1.bf16.msra.mxu0 0
        %6388 = vmatprep.subr.bf16.mxu0 0
        %6389 = vmatpush1.bf16.msra.mxu0 0
        %6390 = vmatprep.subr.bf16.mxu0 0
        %6391 = vmatpush1.bf16.msra.mxu0 0
        %6392 = vmatprep.subr.bf16.mxu0 0
        %6393 = vmatpush1.bf16.msra.mxu0 0
        %6394 = vmatprep.subr.bf16.mxu0 0
        %6395 = vmatpush1.bf16.msra.mxu0 0
        %6396 = vmatprep.subr.bf16.mxu0 0
        %6397 = vmatpush1.bf16.msra.mxu0 0
        %6398 = vmatprep.subr.bf16.mxu0 0
        %6399 = vmatpush1.bf16.msra.mxu0 0
        %6400 = vmatprep.subr.bf16.mxu0 0
        %6401 = vmatpush1.bf16.msra.mxu0 0
        %6402 = vmatprep.mubr.bf16.mxu0 0
        %6403 = vmatmul.mubr.bf16.gmra.mrb[0].mxu0 %v6359
        %v6404 = vpop.f32.mrb[0].mxu0
        %v6405 = vadd.f32 %v6301, %v6404
        %v6406 = vpop.f32.mrb[0].mxu0
        %v6407 = vpop.f32.mrb[0].mxu0
        %v6408 = vadd.f32 %v6306, %v6407
        %v6409 = vpop.f32.mrb[0].mxu0
        %6410 = vmatprep.mubr.bf16.mxu0 0
        %6411 = vmatmul.mubr.bf16.gmra.mrb[0].mxu0 %v6362
        %v6412 = vpop.f32.mrb[0].mxu0
        %v6413 = vadd.f32 %v6311, %v6412
        %v6414 = vpop.f32.mrb[0].mxu0
        %v6415 = vpop.f32.mrb[0].mxu0
        %v6416 = vadd.f32 %v6316, %v6415
        %v6417 = vpop.f32.mrb[0].mxu0
        %6418 = vmatprep.mubr.bf16.mxu0 0
        %6419 = vmatmul.mubr.bf16.gmra.mrb[0].mxu0 %v6365
        %v6420 = vpop.f32.mrb[0].mxu0
        %v6421 = vadd.f32 %v6321, %v6420
        %v6422 = vpop.f32.mrb[0].mxu0
        %v6423 = vpop.f32.mrb[0].mxu0
        %v6424 = vadd.f32 %v6326, %v6423
        %v6425 = vpop.f32.mrb[0].mxu0
        %6426 = vmatprep.mubr.bf16.mxu0 0
        %6427 = vmatmul.mubr.bf16.gmra.mrb[0].mxu0 %v6368
        %v6428 = vpop.f32.mrb[0].mxu0
        %v6429 = vadd.f32 %v6331, %v6428
        %v6430 = vpop.f32.mrb[0].mxu0
        %v6431 = vpop.f32.mrb[0].mxu0
        %v6432 = vadd.f32 %v6336, %v6431
        %v6433 = vpop.f32.mrb[0].mxu0
        %6434 = vdwg.mxu0
        %v6435 = vadd.f32 %v6009, %v6405
        %v6436 = vadd.f32 %v6010, %v6408
        %v6437 = vadd.f32 %v6011, %v6413
        %v6438 = vadd.f32 %v6012, %v6416
        %v6439 = vmul.f32 %v6435, %v530
        %v6440 = vmul.f32 %v6436, %v530
        %v6441 = vmul.f32 %v6437, %v530
        %v6442 = vmul.f32 %v6438, %v530
        %6443 = vrot.lane.b32.xlu0 %v6439, 2
        %v6444 = vpop.permute.xlu0 %6443
        %6445 = vrot.lane.b32.xlu0 %v6440, 2
        %v6446 = vpop.permute.xlu0 %6445
        %6447 = vrot.lane.b32.xlu0 %v6441, 2
        %v6448 = vpop.permute.xlu0 %6447
        %6449 = vrot.lane.b32.xlu0 %v6442, 2
        %v6450 = vpop.permute.xlu0 %6449
        %v6451 = vpack.c.bf16 %v6446, %v6444
        %v6452 = vpack.c.bf16 %v6450, %v6448
        %6453 = vst [vmem:[#allocation2] sm:$0xff] %v6451
        %6454 = vst [vmem:[#allocation2 + $0x8] sm:$0xff] %v6452
        %6455 = vrot.lane.b32.xlu0 %v6439, 1
        %v6456 = vpop.permute.xlu0 %6455
        %6457 = vrot.lane.b32.xlu0 %v6440, 1
        %v6458 = vpop.permute.xlu0 %6457
        %6459 = vrot.lane.b32.xlu0 %v6441, 1
        %v6460 = vpop.permute.xlu0 %6459
        %6461 = vrot.lane.b32.xlu0 %v6442, 1
        %v6462 = vpop.permute.xlu0 %6461
        %v6463 = vpack.c.bf16 %v6458, %v6456
        %v6464 = vpack.c.bf16 %v6462, %v6460
        %6465 = vst [vmem:[#allocation2 + $0x10] sm:$0xff] %v6463
        %6466 = vst [vmem:[#allocation2 + $0x18] sm:$0xff] %v6464
        %v6467 = vpack.c.bf16 %v6440, %v6439
        %v6468 = vpack.c.bf16 %v6442, %v6441
        %6469 = vst [vmem:[#allocation2 + $0x20] sm:$0xff] %v6467
        %6470 = vst [vmem:[#allocation2 + $0x28] sm:$0xff] %v6468
        %6471 = vrot.lane.b32.xlu0 %v6439, 127
        %v6472 = vpop.permute.xlu0 %6471
        %6473 = vrot.lane.b32.xlu0 %v6440, 127
        %v6474 = vpop.permute.xlu0 %6473
        %6475 = vrot.lane.b32.xlu0 %v6441, 127
        %v6476 = vpop.permute.xlu0 %6475
        %6477 = vrot.lane.b32.xlu0 %v6442, 127
        %v6478 = vpop.permute.xlu0 %6477
        %v6479 = vpack.c.bf16 %v6474, %v6472
        %v6480 = vpack.c.bf16 %v6478, %v6476
        %6481 = vst [vmem:[#allocation2 + $0x30] sm:$0xff] %v6479
        %6482 = vst [vmem:[#allocation2 + $0x38] sm:$0xff] %v6480
        %6483 = vrot.lane.b32.xlu0 %v6439, 126
        %v6484 = vpop.permute.xlu0 %6483
        %6485 = vrot.lane.b32.xlu0 %v6440, 126
        %v6486 = vpop.permute.xlu0 %6485
        %6487 = vrot.lane.b32.xlu0 %v6441, 126
        %v6488 = vpop.permute.xlu0 %6487
        %6489 = vrot.lane.b32.xlu0 %v6442, 126
        %v6490 = vpop.permute.xlu0 %6489
        %v6491 = vpack.c.bf16 %v6486, %v6484
        %v6492 = vpack.c.bf16 %v6490, %v6488
        %6493 = vst [vmem:[#allocation2 + $0x40] sm:$0xff] %v6491
        %6494 = vst [vmem:[#allocation2 + $0x48] sm:$0xff] %v6492
        %s6495 = scalar_lea.vmem %s4, 832
        %v6496 = vld [vmem:[%s6495] sm:$0xff]
        %v6497 = vld [vmem:[%s6495 + $0x8] sm:$0xff]
        %v6498 = vld [vmem:[%s6495 + $0x10] sm:$0xff]
        %v6499 = vld [vmem:[%s6495 + $0x18] sm:$0xff]
        %v6500 = vld [vmem:[%s6495 + $0x20] sm:$0xff]
        %v6501 = vld [vmem:[%s6495 + $0x28] sm:$0xff]
        %v6502 = vld [vmem:[%s6495 + $0x30] sm:$0xff]
        %v6503 = vld [vmem:[%s6495 + $0x38] sm:$0xff]
        %v6504 = vld [vmem:[#allocation2] sm:$0xff]
        %v6505 = vld [vmem:[#allocation2 + $0x8] sm:$0xff]
        %v6506 = vld [vmem:[#allocation2 + $0x10] sm:$0xff]
        %v6507 = vld [vmem:[#allocation2 + $0x18] sm:$0xff]
        %v6508 = vld [vmem:[#allocation2 + $0x20] sm:$0xff]
        %v6509 = vld [vmem:[#allocation2 + $0x28] sm:$0xff]
        %v6510 = vld [vmem:[#allocation2 + $0x30] sm:$0xff]
        %v6511 = vld [vmem:[#allocation2 + $0x38] sm:$0xff]
        %v6512 = vld [vmem:[#allocation2 + $0x40] sm:$0xff]
        %v6513 = vld [vmem:[#allocation2 + $0x48] sm:$0xff]
        %s6514 = scalar_lea.vmem %s5, 832
        %v6515 = vld [vmem:[%s6514] sm:$0xff]
        %v6516 = vld [vmem:[%s6514 + $0x8] sm:$0xff]
        %v6517 = vld [vmem:[%s6514 + $0x10] sm:$0xff]
        %v6518 = vld [vmem:[%s6514 + $0x18] sm:$0xff]
        %v6519 = vld [vmem:[%s6514 + $0x20] sm:$0xff]
        %v6520 = vld [vmem:[%s6514 + $0x28] sm:$0xff]
        %v6521 = vld [vmem:[%s6514 + $0x30] sm:$0xff]
        %v6522 = vld [vmem:[%s6514 + $0x38] sm:$0xff]
        %6524 = vset.pattern.permute.xlu0 0
        %6525 = vperm.xlu0 %6524, %v6515
        %v6526 = vpop.permute.xlu0 %6525
        %6529 = vset.pattern.permute.xlu0 0
        %6530 = vperm.xlu0 %6529, %v6516
        %v6531 = vpop.permute.xlu0 %6530
        %6534 = vset.pattern.permute.xlu0 0
        %6535 = vperm.xlu0 %6534, %v6517
        %v6536 = vpop.permute.xlu0 %6535
        %6539 = vset.pattern.permute.xlu0 0
        %6540 = vperm.xlu0 %6539, %v6518
        %v6541 = vpop.permute.xlu0 %6540
        %6544 = vset.pattern.permute.xlu0 0
        %6545 = vperm.xlu0 %6544, %v6519
        %v6546 = vpop.permute.xlu0 %6545
        %6549 = vset.pattern.permute.xlu0 0
        %6550 = vperm.xlu0 %6549, %v6520
        %v6551 = vpop.permute.xlu0 %6550
        %6554 = vset.pattern.permute.xlu0 0
        %6555 = vperm.xlu0 %6554, %v6521
        %v6556 = vpop.permute.xlu0 %6555
        %6559 = vset.pattern.permute.xlu0 0
        %6560 = vperm.xlu0 %6559, %v6522
        %v6561 = vpop.permute.xlu0 %6560
        %v6571 = vunpack.c.l.b16 %v6496
        %v6572 = vunpack.c.h.b16 %v6496
        %v6573 = vunpack.c.l.b16 %v6497
        %v6574 = vunpack.c.h.b16 %v6497
        %v6575 = vunpack.c.l.b16 %v6498
        %v6576 = vunpack.c.h.b16 %v6498
        %v6577 = vunpack.c.l.b16 %v6499
        %v6578 = vunpack.c.h.b16 %v6499
        %v6579 = vunpack.c.l.b16 %v6500
        %v6580 = vunpack.c.h.b16 %v6500
        %v6581 = vunpack.c.l.b16 %v6501
        %v6582 = vunpack.c.h.b16 %v6501
        %v6583 = vunpack.c.l.b16 %v6502
        %v6584 = vunpack.c.h.b16 %v6502
        %v6585 = vunpack.c.l.b16 %v6503
        %v6586 = vunpack.c.h.b16 %v6503
        %v6587 = vpack.c.b16 %v6573, %v6571
        %v6588 = vpack.c.b16 %v6574, %v6572
        %v6589 = vpack.c.b16 %v6577, %v6575
        %v6590 = vpack.c.b16 %v6578, %v6576
        %v6591 = vpack.c.b16 %v6581, %v6579
        %v6592 = vpack.c.b16 %v6582, %v6580
        %v6593 = vpack.c.b16 %v6585, %v6583
        %v6594 = vpack.c.b16 %v6586, %v6584
        %v6600 = vsel %vm690, %v6588, 0
        %v6603 = vsel %vm690, %v6590, 0
        %v6606 = vsel %vm690, %v6592, 0
        %v6609 = vsel %vm690, %v6594, 0
        %6611 = vmatprep.subr.bf16.mxu0 0
        %6612 = vmatpush1.bf16.msra.mxu0 %v6504
        %6613 = vmatprep.subr.bf16.mxu0 0
        %6614 = vmatpush1.bf16.msra.mxu0 %v6505
        %6615 = vmatprep.subr.bf16.mxu0 0
        %6616 = vmatpush1.bf16.msra.mxu0 %v6506
        %6617 = vmatprep.subr.bf16.mxu0 0
        %6618 = vmatpush1.bf16.msra.mxu0 %v6507
        %6619 = vmatprep.subr.bf16.mxu0 0
        %6620 = vmatpush1.bf16.msra.mxu0 %v6508
        %6621 = vmatprep.subr.bf16.mxu0 0
        %6622 = vmatpush1.bf16.msra.mxu0 %v6509
        %6623 = vmatprep.subr.bf16.mxu0 0
        %6624 = vmatpush1.bf16.msra.mxu0 %v6510
        %6625 = vmatprep.subr.bf16.mxu0 0
        %6626 = vmatpush1.bf16.msra.mxu0 %v6511
        %6627 = vmatprep.subr.bf16.mxu0 0
        %6628 = vmatpush1.bf16.msra.mxu0 %v6512
        %6629 = vmatprep.subr.bf16.mxu0 0
        %6630 = vmatpush1.bf16.msra.mxu0 %v6513
        %6631 = vmatprep.subr.bf16.mxu0 0
        %6632 = vmatpush1.bf16.msra.mxu0 0
        %6633 = vmatprep.subr.bf16.mxu0 0
        %6634 = vmatpush1.bf16.msra.mxu0 0
        %6635 = vmatprep.subr.bf16.mxu0 0
        %6636 = vmatpush1.bf16.msra.mxu0 0
        %6637 = vmatprep.subr.bf16.mxu0 0
        %6638 = vmatpush1.bf16.msra.mxu0 0
        %6639 = vmatprep.subr.bf16.mxu0 0
        %6640 = vmatpush1.bf16.msra.mxu0 0
        %6641 = vmatprep.subr.bf16.mxu0 0
        %6642 = vmatpush1.bf16.msra.mxu0 0
        %6643 = vmatprep.mubr.bf16.mxu0 %v6600
        %6644 = vmatmul.mubr.bf16.gmra.mrb[0].mxu0 %v6587
        %v6645 = vpop.f32.mrb[0].mxu0
        %v6646 = vadd.f32 %v6526, %v6645
        %v6647 = vpop.f32.mrb[0].mxu0
        %v6648 = vpop.f32.mrb[0].mxu0
        %v6649 = vadd.f32 %v6531, %v6648
        %v6650 = vpop.f32.mrb[0].mxu0
        %6651 = vmatprep.mubr.bf16.mxu0 %v6603
        %6652 = vmatmul.mubr.bf16.gmra.mrb[0].mxu0 %v6589
        %v6653 = vpop.f32.mrb[0].mxu0
        %v6654 = vadd.f32 %v6536, %v6653
        %v6655 = vpop.f32.mrb[0].mxu0
        %v6656 = vpop.f32.mrb[0].mxu0
        %v6657 = vadd.f32 %v6541, %v6656
        %v6658 = vpop.f32.mrb[0].mxu0
        %6659 = vmatprep.mubr.bf16.mxu0 %v6606
        %6660 = vmatmul.mubr.bf16.gmra.mrb[0].mxu0 %v6591
        %v6661 = vpop.f32.mrb[0].mxu0
        %v6662 = vadd.f32 %v6546, %v6661
        %v6663 = vpop.f32.mrb[0].mxu0
        %v6664 = vpop.f32.mrb[0].mxu0
        %v6665 = vadd.f32 %v6551, %v6664
        %v6666 = vpop.f32.mrb[0].mxu0
        %6667 = vmatprep.mubr.bf16.mxu0 %v6609
        %6668 = vmatmul.mubr.bf16.gmra.mrb[0].mxu0 %v6593
        %v6669 = vpop.f32.mrb[0].mxu0
        %v6670 = vadd.f32 %v6556, %v6669
        %v6671 = vpop.f32.mrb[0].mxu0
        %v6672 = vpop.f32.mrb[0].mxu0
        %v6673 = vadd.f32 %v6561, %v6672
        %v6674 = vpop.f32.mrb[0].mxu0
        %6675 = vdwg.mxu0
        %v6676 = vtanh.pop %v6646
        %v6677 = vtanh.pop %v6649
        %v6678 = vtanh.pop %v6654
        %v6679 = vtanh.pop %v6657
        %v6680 = vxor.u32 %v6662, 2147483648
        %v6681 = vxor.u32 %v6665, 2147483648
        %v6682 = vxor.u32 %v6670, 2147483648
        %v6683 = vxor.u32 %v6673, 2147483648
        %v6684 = vmul.f32 %v6680, 1.442695
        %v6685 = vpow.pop %v6684
        %v6686 = vmul.f32 %v6681, 1.442695
        %v6687 = vpow.pop %v6686
        %v6688 = vmul.f32 %v6682, 1.442695
        %v6689 = vpow.pop %v6688
        %v6690 = vmul.f32 %v6683, 1.442695
        %v6691 = vpow.pop %v6690
        %v6692 = vadd.f32 %v6685, 1.0
        %v6693 = vadd.f32 %v6687, 1.0
        %v6694 = vadd.f32 %v6689, 1.0
        %v6695 = vadd.f32 %v6691, 1.0
        %v6696 = vrcp.pop %v6692
        %v6697 = vmul.f32 1.0, %v6696
        %v6698 = vrcp.pop %v6693
        %v6699 = vmul.f32 1.0, %v6698
        %v6700 = vrcp.pop %v6694
        %v6701 = vmul.f32 1.0, %v6700
        %v6702 = vrcp.pop %v6695
        %v6703 = vmul.f32 1.0, %v6702
        %v6704 = vmul.f32 %v6676, %v6697
        %v6705 = vmul.f32 %v6677, %v6699
        %v6706 = vmul.f32 %v6678, %v6701
        %v6707 = vmul.f32 %v6679, %v6703
        %s6708 = scalar_lea.vmem %s6, 320
        %v6709 = vld [vmem:[%s6708] sm:$0xf]
        %v6710 = vld [vmem:[%s6708 + $0x4] sm:$0xf]
        %v6711 = vld [vmem:[%s6708 + $0x8] sm:$0xf]
        %v6712 = vld [vmem:[%s6708 + $0xc] sm:$0xf]
        %v6713 = vld [vmem:[%s6708 + $0x10] sm:$0xf]
        %v6714 = vld [vmem:[%s6708 + $0x14] sm:$0xf]
        %v6715 = vld [vmem:[%s6708 + $0x18] sm:$0xf]
        %v6716 = vld [vmem:[%s6708 + $0x1c] sm:$0xf]
        %v6717 = vpack.c.bf16 %v6705, %v6704
        %v6718 = vpack.c.bf16 %v6707, %v6706
        %s6719 = scalar_lea.vmem %s7, 640
        %v6720 = vld [vmem:[%s6719] sm:$0xff]
        %v6721 = vld [vmem:[%s6719 + $0x8] sm:$0xff]
        %v6722 = vld [vmem:[%s6719 + $0x10] sm:$0xff]
        %v6723 = vld [vmem:[%s6719 + $0x18] sm:$0xff]
        %v6724 = vld [vmem:[%s6719 + $0x20] sm:$0xff]
        %v6725 = vld [vmem:[%s6719 + $0x28] sm:$0xff]
        %v6726 = vld [vmem:[%s6719 + $0x30] sm:$0xff]
        %v6727 = vld [vmem:[%s6719 + $0x38] sm:$0xff]
        %6729 = vset.pattern.permute.xlu0 0
        %6730 = vperm.xlu0 %6729, %v6720
        %v6731 = vpop.permute.xlu0 %6730
        %6734 = vset.pattern.permute.xlu0 0
        %6735 = vperm.xlu0 %6734, %v6721
        %v6736 = vpop.permute.xlu0 %6735
        %6739 = vset.pattern.permute.xlu0 0
        %6740 = vperm.xlu0 %6739, %v6722
        %v6741 = vpop.permute.xlu0 %6740
        %6744 = vset.pattern.permute.xlu0 0
        %6745 = vperm.xlu0 %6744, %v6723
        %v6746 = vpop.permute.xlu0 %6745
        %6749 = vset.pattern.permute.xlu0 0
        %6750 = vperm.xlu0 %6749, %v6724
        %v6751 = vpop.permute.xlu0 %6750
        %6754 = vset.pattern.permute.xlu0 0
        %6755 = vperm.xlu0 %6754, %v6725
        %v6756 = vpop.permute.xlu0 %6755
        %6759 = vset.pattern.permute.xlu0 0
        %6760 = vperm.xlu0 %6759, %v6726
        %v6761 = vpop.permute.xlu0 %6760
        %6764 = vset.pattern.permute.xlu0 0
        %6765 = vperm.xlu0 %6764, %v6727
        %v6766 = vpop.permute.xlu0 %6765
        %v6776 = vunpack.c.l.b16 %v6709
        %v6777 = vunpack.c.l.b16 %v6710
        %v6778 = vunpack.c.l.b16 %v6711
        %v6779 = vunpack.c.l.b16 %v6712
        %v6780 = vunpack.c.l.b16 %v6713
        %v6781 = vunpack.c.l.b16 %v6714
        %v6782 = vunpack.c.l.b16 %v6715
        %v6783 = vunpack.c.l.b16 %v6716
        %v6784 = vpack.c.b16 %v6777, %v6776
        %v6785 = vpack.c.b16 %v6779, %v6778
        %v6786 = vpack.c.b16 %v6781, %v6780
        %v6787 = vpack.c.b16 %v6783, %v6782
        %v6789 = vsel %vm690, %v6784, 0
        %v6792 = vsel %vm690, %v6785, 0
        %v6795 = vsel %vm690, %v6786, 0
        %v6798 = vsel %vm690, %v6787, 0
        %6800 = vmatprep.subr.bf16.mxu0 0
        %6801 = vmatpush1.bf16.msra.mxu0 %v6717
        %6802 = vmatprep.subr.bf16.mxu0 0
        %6803 = vmatpush1.bf16.msra.mxu0 %v6718
        %6804 = vmatprep.subr.bf16.mxu0 0
        %6805 = vmatpush1.bf16.msra.mxu0 0
        %6806 = vmatprep.subr.bf16.mxu0 0
        %6807 = vmatpush1.bf16.msra.mxu0 0
        %6808 = vmatprep.subr.bf16.mxu0 0
        %6809 = vmatpush1.bf16.msra.mxu0 0
        %6810 = vmatprep.subr.bf16.mxu0 0
        %6811 = vmatpush1.bf16.msra.mxu0 0
        %6812 = vmatprep.subr.bf16.mxu0 0
        %6813 = vmatpush1.bf16.msra.mxu0 0
        %6814 = vmatprep.subr.bf16.mxu0 0
        %6815 = vmatpush1.bf16.msra.mxu0 0
        %6816 = vmatprep.subr.bf16.mxu0 0
        %6817 = vmatpush1.bf16.msra.mxu0 0
        %6818 = vmatprep.subr.bf16.mxu0 0
        %6819 = vmatpush1.bf16.msra.mxu0 0
        %6820 = vmatprep.subr.bf16.mxu0 0
        %6821 = vmatpush1.bf16.msra.mxu0 0
        %6822 = vmatprep.subr.bf16.mxu0 0
        %6823 = vmatpush1.bf16.msra.mxu0 0
        %6824 = vmatprep.subr.bf16.mxu0 0
        %6825 = vmatpush1.bf16.msra.mxu0 0
        %6826 = vmatprep.subr.bf16.mxu0 0
        %6827 = vmatpush1.bf16.msra.mxu0 0
        %6828 = vmatprep.subr.bf16.mxu0 0
        %6829 = vmatpush1.bf16.msra.mxu0 0
        %6830 = vmatprep.subr.bf16.mxu0 0
        %6831 = vmatpush1.bf16.msra.mxu0 0
        %6832 = vmatprep.mubr.bf16.mxu0 0
        %6833 = vmatmul.mubr.bf16.gmra.mrb[0].mxu0 %v6789
        %v6834 = vpop.f32.mrb[0].mxu0
        %v6835 = vadd.f32 %v6731, %v6834
        %v6836 = vpop.f32.mrb[0].mxu0
        %v6837 = vpop.f32.mrb[0].mxu0
        %v6838 = vadd.f32 %v6736, %v6837
        %v6839 = vpop.f32.mrb[0].mxu0
        %6840 = vmatprep.mubr.bf16.mxu0 0
        %6841 = vmatmul.mubr.bf16.gmra.mrb[0].mxu0 %v6792
        %v6842 = vpop.f32.mrb[0].mxu0
        %v6843 = vadd.f32 %v6741, %v6842
        %v6844 = vpop.f32.mrb[0].mxu0
        %v6845 = vpop.f32.mrb[0].mxu0
        %v6846 = vadd.f32 %v6746, %v6845
        %v6847 = vpop.f32.mrb[0].mxu0
        %6848 = vmatprep.mubr.bf16.mxu0 0
        %6849 = vmatmul.mubr.bf16.gmra.mrb[0].mxu0 %v6795
        %v6850 = vpop.f32.mrb[0].mxu0
        %v6851 = vadd.f32 %v6751, %v6850
        %v6852 = vpop.f32.mrb[0].mxu0
        %v6853 = vpop.f32.mrb[0].mxu0
        %v6854 = vadd.f32 %v6756, %v6853
        %v6855 = vpop.f32.mrb[0].mxu0
        %6856 = vmatprep.mubr.bf16.mxu0 0
        %6857 = vmatmul.mubr.bf16.gmra.mrb[0].mxu0 %v6798
        %v6858 = vpop.f32.mrb[0].mxu0
        %v6859 = vadd.f32 %v6761, %v6858
        %v6860 = vpop.f32.mrb[0].mxu0
        %v6861 = vpop.f32.mrb[0].mxu0
        %v6862 = vadd.f32 %v6766, %v6861
        %v6863 = vpop.f32.mrb[0].mxu0
        %6864 = vdwg.mxu0
        %v6865 = vadd.f32 %v6439, %v6835
        %v6866 = vadd.f32 %v6440, %v6838
        %v6867 = vadd.f32 %v6441, %v6843
        %v6868 = vadd.f32 %v6442, %v6846
        %v6869 = vmul.f32 %v6865, %v530
        %v6870 = vmul.f32 %v6866, %v530
        %v6871 = vmul.f32 %v6867, %v530
        %v6872 = vmul.f32 %v6868, %v530
        %v6873 = vadd.f32 %v6421, %v6851
        %v6874 = vadd.f32 %v6424, %v6854
        %v6875 = vadd.f32 %v6429, %v6859
        %v6876 = vadd.f32 %v6432, %v6862
        %6877 = vrot.lane.b32.xlu0 %v6869, 2
        %v6878 = vpop.permute.xlu0 %6877
        %6879 = vrot.lane.b32.xlu0 %v6870, 2
        %v6880 = vpop.permute.xlu0 %6879
        %6881 = vrot.lane.b32.xlu0 %v6871, 2
        %v6882 = vpop.permute.xlu0 %6881
        %6883 = vrot.lane.b32.xlu0 %v6872, 2
        %v6884 = vpop.permute.xlu0 %6883
        %v6885 = vpack.c.bf16 %v6880, %v6878
        %v6886 = vpack.c.bf16 %v6884, %v6882
        %6887 = vst [vmem:[#allocation2] sm:$0xff] %v6885
        %6888 = vst [vmem:[#allocation2 + $0x8] sm:$0xff] %v6886
        %6889 = vrot.lane.b32.xlu0 %v6869, 1
        %v6890 = vpop.permute.xlu0 %6889
        %6891 = vrot.lane.b32.xlu0 %v6870, 1
        %v6892 = vpop.permute.xlu0 %6891
        %6893 = vrot.lane.b32.xlu0 %v6871, 1
        %v6894 = vpop.permute.xlu0 %6893
        %6895 = vrot.lane.b32.xlu0 %v6872, 1
        %v6896 = vpop.permute.xlu0 %6895
        %v6897 = vpack.c.bf16 %v6892, %v6890
        %v6898 = vpack.c.bf16 %v6896, %v6894
        %6899 = vst [vmem:[#allocation2 + $0x10] sm:$0xff] %v6897
        %6900 = vst [vmem:[#allocation2 + $0x18] sm:$0xff] %v6898
        %v6901 = vpack.c.bf16 %v6870, %v6869
        %v6902 = vpack.c.bf16 %v6872, %v6871
        %6903 = vst [vmem:[#allocation2 + $0x20] sm:$0xff] %v6901
        %6904 = vst [vmem:[#allocation2 + $0x28] sm:$0xff] %v6902
        %6905 = vrot.lane.b32.xlu0 %v6869, 127
        %v6906 = vpop.permute.xlu0 %6905
        %6907 = vrot.lane.b32.xlu0 %v6870, 127
        %v6908 = vpop.permute.xlu0 %6907
        %6909 = vrot.lane.b32.xlu0 %v6871, 127
        %v6910 = vpop.permute.xlu0 %6909
        %6911 = vrot.lane.b32.xlu0 %v6872, 127
        %v6912 = vpop.permute.xlu0 %6911
        %v6913 = vpack.c.bf16 %v6908, %v6906
        %v6914 = vpack.c.bf16 %v6912, %v6910
        %6915 = vst [vmem:[#allocation2 + $0x30] sm:$0xff] %v6913
        %6916 = vst [vmem:[#allocation2 + $0x38] sm:$0xff] %v6914
        %6917 = vrot.lane.b32.xlu0 %v6869, 126
        %v6918 = vpop.permute.xlu0 %6917
        %6919 = vrot.lane.b32.xlu0 %v6870, 126
        %v6920 = vpop.permute.xlu0 %6919
        %6921 = vrot.lane.b32.xlu0 %v6871, 126
        %v6922 = vpop.permute.xlu0 %6921
        %6923 = vrot.lane.b32.xlu0 %v6872, 126
        %v6924 = vpop.permute.xlu0 %6923
        %v6925 = vpack.c.bf16 %v6920, %v6918
        %v6926 = vpack.c.bf16 %v6924, %v6922
        %6927 = vst [vmem:[#allocation2 + $0x40] sm:$0xff] %v6925
        %6928 = vst [vmem:[#allocation2 + $0x48] sm:$0xff] %v6926
        %s6929 = scalar_lea.vmem %s4, 896
        %v6930 = vld [vmem:[%s6929] sm:$0xff]
        %v6931 = vld [vmem:[%s6929 + $0x8] sm:$0xff]
        %v6932 = vld [vmem:[%s6929 + $0x10] sm:$0xff]
        %v6933 = vld [vmem:[%s6929 + $0x18] sm:$0xff]
        %v6934 = vld [vmem:[%s6929 + $0x20] sm:$0xff]
        %v6935 = vld [vmem:[%s6929 + $0x28] sm:$0xff]
        %v6936 = vld [vmem:[%s6929 + $0x30] sm:$0xff]
        %v6937 = vld [vmem:[%s6929 + $0x38] sm:$0xff]
        %v6938 = vld [vmem:[#allocation2] sm:$0xff]
        %v6939 = vld [vmem:[#allocation2 + $0x8] sm:$0xff]
        %v6940 = vld [vmem:[#allocation2 + $0x10] sm:$0xff]
        %v6941 = vld [vmem:[#allocation2 + $0x18] sm:$0xff]
        %v6942 = vld [vmem:[#allocation2 + $0x20] sm:$0xff]
        %v6943 = vld [vmem:[#allocation2 + $0x28] sm:$0xff]
        %v6944 = vld [vmem:[#allocation2 + $0x30] sm:$0xff]
        %v6945 = vld [vmem:[#allocation2 + $0x38] sm:$0xff]
        %v6946 = vld [vmem:[#allocation2 + $0x40] sm:$0xff]
        %v6947 = vld [vmem:[#allocation2 + $0x48] sm:$0xff]
        %s6948 = scalar_lea.vmem %s5, 896
        %v6949 = vld [vmem:[%s6948] sm:$0xff]
        %v6950 = vld [vmem:[%s6948 + $0x8] sm:$0xff]
        %v6951 = vld [vmem:[%s6948 + $0x10] sm:$0xff]
        %v6952 = vld [vmem:[%s6948 + $0x18] sm:$0xff]
        %v6953 = vld [vmem:[%s6948 + $0x20] sm:$0xff]
        %v6954 = vld [vmem:[%s6948 + $0x28] sm:$0xff]
        %v6955 = vld [vmem:[%s6948 + $0x30] sm:$0xff]
        %v6956 = vld [vmem:[%s6948 + $0x38] sm:$0xff]
        %6958 = vset.pattern.permute.xlu0 0
        %6959 = vperm.xlu0 %6958, %v6949
        %v6960 = vpop.permute.xlu0 %6959
        %6963 = vset.pattern.permute.xlu0 0
        %6964 = vperm.xlu0 %6963, %v6950
        %v6965 = vpop.permute.xlu0 %6964
        %6968 = vset.pattern.permute.xlu0 0
        %6969 = vperm.xlu0 %6968, %v6951
        %v6970 = vpop.permute.xlu0 %6969
        %6973 = vset.pattern.permute.xlu0 0
        %6974 = vperm.xlu0 %6973, %v6952
        %v6975 = vpop.permute.xlu0 %6974
        %6978 = vset.pattern.permute.xlu0 0
        %6979 = vperm.xlu0 %6978, %v6953
        %v6980 = vpop.permute.xlu0 %6979
        %6983 = vset.pattern.permute.xlu0 0
        %6984 = vperm.xlu0 %6983, %v6954
        %v6985 = vpop.permute.xlu0 %6984
        %6988 = vset.pattern.permute.xlu0 0
        %6989 = vperm.xlu0 %6988, %v6955
        %v6990 = vpop.permute.xlu0 %6989
        %6993 = vset.pattern.permute.xlu0 0
        %6994 = vperm.xlu0 %6993, %v6956
        %v6995 = vpop.permute.xlu0 %6994
        %v7005 = vunpack.c.l.b16 %v6930
        %v7006 = vunpack.c.h.b16 %v6930
        %v7007 = vunpack.c.l.b16 %v6931
        %v7008 = vunpack.c.h.b16 %v6931
        %v7009 = vunpack.c.l.b16 %v6932
        %v7010 = vunpack.c.h.b16 %v6932
        %v7011 = vunpack.c.l.b16 %v6933
        %v7012 = vunpack.c.h.b16 %v6933
        %v7013 = vunpack.c.l.b16 %v6934
        %v7014 = vunpack.c.h.b16 %v6934
        %v7015 = vunpack.c.l.b16 %v6935
        %v7016 = vunpack.c.h.b16 %v6935
        %v7017 = vunpack.c.l.b16 %v6936
        %v7018 = vunpack.c.h.b16 %v6936
        %v7019 = vunpack.c.l.b16 %v6937
        %v7020 = vunpack.c.h.b16 %v6937
        %v7021 = vpack.c.b16 %v7007, %v7005
        %v7022 = vpack.c.b16 %v7008, %v7006
        %v7023 = vpack.c.b16 %v7011, %v7009
        %v7024 = vpack.c.b16 %v7012, %v7010
        %v7025 = vpack.c.b16 %v7015, %v7013
        %v7026 = vpack.c.b16 %v7016, %v7014
        %v7027 = vpack.c.b16 %v7019, %v7017
        %v7028 = vpack.c.b16 %v7020, %v7018
        %v7034 = vsel %vm690, %v7022, 0
        %v7037 = vsel %vm690, %v7024, 0
        %v7040 = vsel %vm690, %v7026, 0
        %v7043 = vsel %vm690, %v7028, 0
        %7045 = vmatprep.subr.bf16.mxu0 0
        %7046 = vmatpush1.bf16.msra.mxu0 %v6938
        %7047 = vmatprep.subr.bf16.mxu0 0
        %7048 = vmatpush1.bf16.msra.mxu0 %v6939
        %7049 = vmatprep.subr.bf16.mxu0 0
        %7050 = vmatpush1.bf16.msra.mxu0 %v6940
        %7051 = vmatprep.subr.bf16.mxu0 0
        %7052 = vmatpush1.bf16.msra.mxu0 %v6941
        %7053 = vmatprep.subr.bf16.mxu0 0
        %7054 = vmatpush1.bf16.msra.mxu0 %v6942
        %7055 = vmatprep.subr.bf16.mxu0 0
        %7056 = vmatpush1.bf16.msra.mxu0 %v6943
        %7057 = vmatprep.subr.bf16.mxu0 0
        %7058 = vmatpush1.bf16.msra.mxu0 %v6944
        %7059 = vmatprep.subr.bf16.mxu0 0
        %7060 = vmatpush1.bf16.msra.mxu0 %v6945
        %7061 = vmatprep.subr.bf16.mxu0 0
        %7062 = vmatpush1.bf16.msra.mxu0 %v6946
        %7063 = vmatprep.subr.bf16.mxu0 0
        %7064 = vmatpush1.bf16.msra.mxu0 %v6947
        %7065 = vmatprep.subr.bf16.mxu0 0
        %7066 = vmatpush1.bf16.msra.mxu0 0
        %7067 = vmatprep.subr.bf16.mxu0 0
        %7068 = vmatpush1.bf16.msra.mxu0 0
        %7069 = vmatprep.subr.bf16.mxu0 0
        %7070 = vmatpush1.bf16.msra.mxu0 0
        %7071 = vmatprep.subr.bf16.mxu0 0
        %7072 = vmatpush1.bf16.msra.mxu0 0
        %7073 = vmatprep.subr.bf16.mxu0 0
        %7074 = vmatpush1.bf16.msra.mxu0 0
        %7075 = vmatprep.subr.bf16.mxu0 0
        %7076 = vmatpush1.bf16.msra.mxu0 0
        %7077 = vmatprep.mubr.bf16.mxu0 %v7034
        %7078 = vmatmul.mubr.bf16.gmra.mrb[0].mxu0 %v7021
        %v7079 = vpop.f32.mrb[0].mxu0
        %v7080 = vadd.f32 %v6960, %v7079
        %v7081 = vpop.f32.mrb[0].mxu0
        %v7082 = vpop.f32.mrb[0].mxu0
        %v7083 = vadd.f32 %v6965, %v7082
        %v7084 = vpop.f32.mrb[0].mxu0
        %7085 = vmatprep.mubr.bf16.mxu0 %v7037
        %7086 = vmatmul.mubr.bf16.gmra.mrb[0].mxu0 %v7023
        %v7087 = vpop.f32.mrb[0].mxu0
        %v7088 = vadd.f32 %v6970, %v7087
        %v7089 = vpop.f32.mrb[0].mxu0
        %v7090 = vpop.f32.mrb[0].mxu0
        %v7091 = vadd.f32 %v6975, %v7090
        %v7092 = vpop.f32.mrb[0].mxu0
        %7093 = vmatprep.mubr.bf16.mxu0 %v7040
        %7094 = vmatmul.mubr.bf16.gmra.mrb[0].mxu0 %v7025
        %v7095 = vpop.f32.mrb[0].mxu0
        %v7096 = vadd.f32 %v6980, %v7095
        %v7097 = vpop.f32.mrb[0].mxu0
        %v7098 = vpop.f32.mrb[0].mxu0
        %v7099 = vadd.f32 %v6985, %v7098
        %v7100 = vpop.f32.mrb[0].mxu0
        %7101 = vmatprep.mubr.bf16.mxu0 %v7043
        %7102 = vmatmul.mubr.bf16.gmra.mrb[0].mxu0 %v7027
        %v7103 = vpop.f32.mrb[0].mxu0
        %v7104 = vadd.f32 %v6990, %v7103
        %v7105 = vpop.f32.mrb[0].mxu0
        %v7106 = vpop.f32.mrb[0].mxu0
        %v7107 = vadd.f32 %v6995, %v7106
        %v7108 = vpop.f32.mrb[0].mxu0
        %7109 = vdwg.mxu0
        %v7110 = vtanh.pop %v7080
        %v7111 = vtanh.pop %v7083
        %v7112 = vtanh.pop %v7088
        %v7113 = vtanh.pop %v7091
        %v7114 = vxor.u32 %v7096, 2147483648
        %v7115 = vxor.u32 %v7099, 2147483648
        %v7116 = vxor.u32 %v7104, 2147483648
        %v7117 = vxor.u32 %v7107, 2147483648
        %v7118 = vmul.f32 %v7114, 1.442695
        %v7119 = vpow.pop %v7118
        %v7120 = vmul.f32 %v7115, 1.442695
        %v7121 = vpow.pop %v7120
        %v7122 = vmul.f32 %v7116, 1.442695
        %v7123 = vpow.pop %v7122
        %v7124 = vmul.f32 %v7117, 1.442695
        %v7125 = vpow.pop %v7124
        %v7126 = vadd.f32 %v7119, 1.0
        %v7127 = vadd.f32 %v7121, 1.0
        %v7128 = vadd.f32 %v7123, 1.0
        %v7129 = vadd.f32 %v7125, 1.0
        %v7130 = vrcp.pop %v7126
        %v7131 = vmul.f32 1.0, %v7130
        %v7132 = vrcp.pop %v7127
        %v7133 = vmul.f32 1.0, %v7132
        %v7134 = vrcp.pop %v7128
        %v7135 = vmul.f32 1.0, %v7134
        %v7136 = vrcp.pop %v7129
        %v7137 = vmul.f32 1.0, %v7136
        %v7138 = vmul.f32 %v7110, %v7131
        %v7139 = vmul.f32 %v7111, %v7133
        %v7140 = vmul.f32 %v7112, %v7135
        %v7141 = vmul.f32 %v7113, %v7137
        %s7142 = scalar_lea.vmem %s6, 352
        %v7143 = vld [vmem:[%s7142] sm:$0xf]
        %v7144 = vld [vmem:[%s7142 + $0x4] sm:$0xf]
        %v7145 = vld [vmem:[%s7142 + $0x8] sm:$0xf]
        %v7146 = vld [vmem:[%s7142 + $0xc] sm:$0xf]
        %v7147 = vld [vmem:[%s7142 + $0x10] sm:$0xf]
        %v7148 = vld [vmem:[%s7142 + $0x14] sm:$0xf]
        %v7149 = vld [vmem:[%s7142 + $0x18] sm:$0xf]
        %v7150 = vld [vmem:[%s7142 + $0x1c] sm:$0xf]
        %v7151 = vpack.c.bf16 %v7139, %v7138
        %v7152 = vpack.c.bf16 %v7141, %v7140
        %s7153 = scalar_lea.vmem %s7, 704
        %v7154 = vld [vmem:[%s7153] sm:$0xff]
        %v7155 = vld [vmem:[%s7153 + $0x8] sm:$0xff]
        %v7156 = vld [vmem:[%s7153 + $0x10] sm:$0xff]
        %v7157 = vld [vmem:[%s7153 + $0x18] sm:$0xff]
        %v7158 = vld [vmem:[%s7153 + $0x20] sm:$0xff]
        %v7159 = vld [vmem:[%s7153 + $0x28] sm:$0xff]
        %v7160 = vld [vmem:[%s7153 + $0x30] sm:$0xff]
        %v7161 = vld [vmem:[%s7153 + $0x38] sm:$0xff]
        %7163 = vset.pattern.permute.xlu0 0
        %7164 = vperm.xlu0 %7163, %v7154
        %v7165 = vpop.permute.xlu0 %7164
        %7168 = vset.pattern.permute.xlu0 0
        %7169 = vperm.xlu0 %7168, %v7155
        %v7170 = vpop.permute.xlu0 %7169
        %7173 = vset.pattern.permute.xlu0 0
        %7174 = vperm.xlu0 %7173, %v7156
        %v7175 = vpop.permute.xlu0 %7174
        %7178 = vset.pattern.permute.xlu0 0
        %7179 = vperm.xlu0 %7178, %v7157
        %v7180 = vpop.permute.xlu0 %7179
        %7183 = vset.pattern.permute.xlu0 0
        %7184 = vperm.xlu0 %7183, %v7158
        %v7185 = vpop.permute.xlu0 %7184
        %7188 = vset.pattern.permute.xlu0 0
        %7189 = vperm.xlu0 %7188, %v7159
        %v7190 = vpop.permute.xlu0 %7189
        %7193 = vset.pattern.permute.xlu0 0
        %7194 = vperm.xlu0 %7193, %v7160
        %v7195 = vpop.permute.xlu0 %7194
        %7198 = vset.pattern.permute.xlu0 0
        %7199 = vperm.xlu0 %7198, %v7161
        %v7200 = vpop.permute.xlu0 %7199
        %v7210 = vunpack.c.l.b16 %v7143
        %v7211 = vunpack.c.l.b16 %v7144
        %v7212 = vunpack.c.l.b16 %v7145
        %v7213 = vunpack.c.l.b16 %v7146
        %v7214 = vunpack.c.l.b16 %v7147
        %v7215 = vunpack.c.l.b16 %v7148
        %v7216 = vunpack.c.l.b16 %v7149
        %v7217 = vunpack.c.l.b16 %v7150
        %v7218 = vpack.c.b16 %v7211, %v7210
        %v7219 = vpack.c.b16 %v7213, %v7212
        %v7220 = vpack.c.b16 %v7215, %v7214
        %v7221 = vpack.c.b16 %v7217, %v7216
        %v7223 = vsel %vm690, %v7218, 0
        %v7226 = vsel %vm690, %v7219, 0
        %v7229 = vsel %vm690, %v7220, 0
        %v7232 = vsel %vm690, %v7221, 0
        %7234 = vmatprep.subr.bf16.mxu0 0
        %7235 = vmatpush1.bf16.msra.mxu0 %v7151
        %7236 = vmatprep.subr.bf16.mxu0 0
        %7237 = vmatpush1.bf16.msra.mxu0 %v7152
        %7238 = vmatprep.subr.bf16.mxu0 0
        %7239 = vmatpush1.bf16.msra.mxu0 0
        %7240 = vmatprep.subr.bf16.mxu0 0
        %7241 = vmatpush1.bf16.msra.mxu0 0
        %7242 = vmatprep.subr.bf16.mxu0 0
        %7243 = vmatpush1.bf16.msra.mxu0 0
        %7244 = vmatprep.subr.bf16.mxu0 0
        %7245 = vmatpush1.bf16.msra.mxu0 0
        %7246 = vmatprep.subr.bf16.mxu0 0
        %7247 = vmatpush1.bf16.msra.mxu0 0
        %7248 = vmatprep.subr.bf16.mxu0 0
        %7249 = vmatpush1.bf16.msra.mxu0 0
        %7250 = vmatprep.subr.bf16.mxu0 0
        %7251 = vmatpush1.bf16.msra.mxu0 0
        %7252 = vmatprep.subr.bf16.mxu0 0
        %7253 = vmatpush1.bf16.msra.mxu0 0
        %7254 = vmatprep.subr.bf16.mxu0 0
        %7255 = vmatpush1.bf16.msra.mxu0 0
        %7256 = vmatprep.subr.bf16.mxu0 0
        %7257 = vmatpush1.bf16.msra.mxu0 0
        %7258 = vmatprep.subr.bf16.mxu0 0
        %7259 = vmatpush1.bf16.msra.mxu0 0
        %7260 = vmatprep.subr.bf16.mxu0 0
        %7261 = vmatpush1.bf16.msra.mxu0 0
        %7262 = vmatprep.subr.bf16.mxu0 0
        %7263 = vmatpush1.bf16.msra.mxu0 0
        %7264 = vmatprep.subr.bf16.mxu0 0
        %7265 = vmatpush1.bf16.msra.mxu0 0
        %7266 = vmatprep.mubr.bf16.mxu0 0
        %7267 = vmatmul.mubr.bf16.gmra.mrb[0].mxu0 %v7223
        %v7268 = vpop.f32.mrb[0].mxu0
        %v7269 = vadd.f32 %v7165, %v7268
        %v7270 = vpop.f32.mrb[0].mxu0
        %v7271 = vpop.f32.mrb[0].mxu0
        %v7272 = vadd.f32 %v7170, %v7271
        %v7273 = vpop.f32.mrb[0].mxu0
        %7274 = vmatprep.mubr.bf16.mxu0 0
        %7275 = vmatmul.mubr.bf16.gmra.mrb[0].mxu0 %v7226
        %v7276 = vpop.f32.mrb[0].mxu0
        %v7277 = vadd.f32 %v7175, %v7276
        %v7278 = vpop.f32.mrb[0].mxu0
        %v7279 = vpop.f32.mrb[0].mxu0
        %v7280 = vadd.f32 %v7180, %v7279
        %v7281 = vpop.f32.mrb[0].mxu0
        %7282 = vmatprep.mubr.bf16.mxu0 0
        %7283 = vmatmul.mubr.bf16.gmra.mrb[0].mxu0 %v7229
        %v7284 = vpop.f32.mrb[0].mxu0
        %v7285 = vadd.f32 %v7185, %v7284
        %v7286 = vpop.f32.mrb[0].mxu0
        %v7287 = vpop.f32.mrb[0].mxu0
        %v7288 = vadd.f32 %v7190, %v7287
        %v7289 = vpop.f32.mrb[0].mxu0
        %7290 = vmatprep.mubr.bf16.mxu0 0
        %7291 = vmatmul.mubr.bf16.gmra.mrb[0].mxu0 %v7232
        %v7292 = vpop.f32.mrb[0].mxu0
        %v7293 = vadd.f32 %v7195, %v7292
        %v7294 = vpop.f32.mrb[0].mxu0
        %v7295 = vpop.f32.mrb[0].mxu0
        %v7296 = vadd.f32 %v7200, %v7295
        %v7297 = vpop.f32.mrb[0].mxu0
        %7298 = vdwg.mxu0
        %v7299 = vadd.f32 %v6869, %v7269
        %v7300 = vadd.f32 %v6870, %v7272
        %v7301 = vadd.f32 %v6871, %v7277
        %v7302 = vadd.f32 %v6872, %v7280
        %v7303 = vmul.f32 %v7299, %v530
        %v7304 = vmul.f32 %v7300, %v530
        %v7305 = vmul.f32 %v7301, %v530
        %v7306 = vmul.f32 %v7302, %v530
        %v7307 = vadd.f32 %v6873, %v7285
        %v7308 = vadd.f32 %v6874, %v7288
        %v7309 = vadd.f32 %v6875, %v7293
        %v7310 = vadd.f32 %v6876, %v7296
        %7311 = vrot.lane.b32.xlu0 %v7303, 2
        %v7312 = vpop.permute.xlu0 %7311
        %7313 = vrot.lane.b32.xlu0 %v7304, 2
        %v7314 = vpop.permute.xlu0 %7313
        %7315 = vrot.lane.b32.xlu0 %v7305, 2
        %v7316 = vpop.permute.xlu0 %7315
        %7317 = vrot.lane.b32.xlu0 %v7306, 2
        %v7318 = vpop.permute.xlu0 %7317
        %v7319 = vpack.c.bf16 %v7314, %v7312
        %v7320 = vpack.c.bf16 %v7318, %v7316
        %7321 = vst [vmem:[#allocation2] sm:$0xff] %v7319
        %7322 = vst [vmem:[#allocation2 + $0x8] sm:$0xff] %v7320
        %7323 = vrot.lane.b32.xlu0 %v7303, 1
        %v7324 = vpop.permute.xlu0 %7323
        %7325 = vrot.lane.b32.xlu0 %v7304, 1
        %v7326 = vpop.permute.xlu0 %7325
        %7327 = vrot.lane.b32.xlu0 %v7305, 1
        %v7328 = vpop.permute.xlu0 %7327
        %7329 = vrot.lane.b32.xlu0 %v7306, 1
        %v7330 = vpop.permute.xlu0 %7329
        %v7331 = vpack.c.bf16 %v7326, %v7324
        %v7332 = vpack.c.bf16 %v7330, %v7328
        %7333 = vst [vmem:[#allocation2 + $0x10] sm:$0xff] %v7331
        %7334 = vst [vmem:[#allocation2 + $0x18] sm:$0xff] %v7332
        %v7335 = vpack.c.bf16 %v7304, %v7303
        %v7336 = vpack.c.bf16 %v7306, %v7305
        %7337 = vst [vmem:[#allocation2 + $0x20] sm:$0xff] %v7335
        %7338 = vst [vmem:[#allocation2 + $0x28] sm:$0xff] %v7336
        %7339 = vrot.lane.b32.xlu0 %v7303, 127
        %v7340 = vpop.permute.xlu0 %7339
        %7341 = vrot.lane.b32.xlu0 %v7304, 127
        %v7342 = vpop.permute.xlu0 %7341
        %7343 = vrot.lane.b32.xlu0 %v7305, 127
        %v7344 = vpop.permute.xlu0 %7343
        %7345 = vrot.lane.b32.xlu0 %v7306, 127
        %v7346 = vpop.permute.xlu0 %7345
        %v7347 = vpack.c.bf16 %v7342, %v7340
        %v7348 = vpack.c.bf16 %v7346, %v7344
        %7349 = vst [vmem:[#allocation2 + $0x30] sm:$0xff] %v7347
        %7350 = vst [vmem:[#allocation2 + $0x38] sm:$0xff] %v7348
        %7351 = vrot.lane.b32.xlu0 %v7303, 126
        %v7352 = vpop.permute.xlu0 %7351
        %7353 = vrot.lane.b32.xlu0 %v7304, 126
        %v7354 = vpop.permute.xlu0 %7353
        %7355 = vrot.lane.b32.xlu0 %v7305, 126
        %v7356 = vpop.permute.xlu0 %7355
        %7357 = vrot.lane.b32.xlu0 %v7306, 126
        %v7358 = vpop.permute.xlu0 %7357
        %v7359 = vpack.c.bf16 %v7354, %v7352
        %v7360 = vpack.c.bf16 %v7358, %v7356
        %7361 = vst [vmem:[#allocation2 + $0x40] sm:$0xff] %v7359
        %7362 = vst [vmem:[#allocation2 + $0x48] sm:$0xff] %v7360
        %s7363 = scalar_lea.vmem %s4, 960
        %v7364 = vld [vmem:[%s7363] sm:$0xff]
        %v7365 = vld [vmem:[%s7363 + $0x8] sm:$0xff]
        %v7366 = vld [vmem:[%s7363 + $0x10] sm:$0xff]
        %v7367 = vld [vmem:[%s7363 + $0x18] sm:$0xff]
        %v7368 = vld [vmem:[%s7363 + $0x20] sm:$0xff]
        %v7369 = vld [vmem:[%s7363 + $0x28] sm:$0xff]
        %v7370 = vld [vmem:[%s7363 + $0x30] sm:$0xff]
        %v7371 = vld [vmem:[%s7363 + $0x38] sm:$0xff]
        %v7372 = vld [vmem:[#allocation2] sm:$0xff]
        %v7373 = vld [vmem:[#allocation2 + $0x8] sm:$0xff]
        %v7374 = vld [vmem:[#allocation2 + $0x10] sm:$0xff]
        %v7375 = vld [vmem:[#allocation2 + $0x18] sm:$0xff]
        %v7376 = vld [vmem:[#allocation2 + $0x20] sm:$0xff]
        %v7377 = vld [vmem:[#allocation2 + $0x28] sm:$0xff]
        %v7378 = vld [vmem:[#allocation2 + $0x30] sm:$0xff]
        %v7379 = vld [vmem:[#allocation2 + $0x38] sm:$0xff]
        %v7380 = vld [vmem:[#allocation2 + $0x40] sm:$0xff]
        %v7381 = vld [vmem:[#allocation2 + $0x48] sm:$0xff]
        %s7382 = scalar_lea.vmem %s5, 960
        %v7383 = vld [vmem:[%s7382] sm:$0xff]
        %v7384 = vld [vmem:[%s7382 + $0x8] sm:$0xff]
        %v7385 = vld [vmem:[%s7382 + $0x10] sm:$0xff]
        %v7386 = vld [vmem:[%s7382 + $0x18] sm:$0xff]
        %v7387 = vld [vmem:[%s7382 + $0x20] sm:$0xff]
        %v7388 = vld [vmem:[%s7382 + $0x28] sm:$0xff]
        %v7389 = vld [vmem:[%s7382 + $0x30] sm:$0xff]
        %v7390 = vld [vmem:[%s7382 + $0x38] sm:$0xff]
        %7392 = vset.pattern.permute.xlu0 0
        %7393 = vperm.xlu0 %7392, %v7383
        %v7394 = vpop.permute.xlu0 %7393
        %7397 = vset.pattern.permute.xlu0 0
        %7398 = vperm.xlu0 %7397, %v7384
        %v7399 = vpop.permute.xlu0 %7398
        %7402 = vset.pattern.permute.xlu0 0
        %7403 = vperm.xlu0 %7402, %v7385
        %v7404 = vpop.permute.xlu0 %7403
        %7407 = vset.pattern.permute.xlu0 0
        %7408 = vperm.xlu0 %7407, %v7386
        %v7409 = vpop.permute.xlu0 %7408
        %7412 = vset.pattern.permute.xlu0 0
        %7413 = vperm.xlu0 %7412, %v7387
        %v7414 = vpop.permute.xlu0 %7413
        %7417 = vset.pattern.permute.xlu0 0
        %7418 = vperm.xlu0 %7417, %v7388
        %v7419 = vpop.permute.xlu0 %7418
        %7422 = vset.pattern.permute.xlu0 0
        %7423 = vperm.xlu0 %7422, %v7389
        %v7424 = vpop.permute.xlu0 %7423
        %7427 = vset.pattern.permute.xlu0 0
        %7428 = vperm.xlu0 %7427, %v7390
        %v7429 = vpop.permute.xlu0 %7428
        %v7439 = vunpack.c.l.b16 %v7364
        %v7440 = vunpack.c.h.b16 %v7364
        %v7441 = vunpack.c.l.b16 %v7365
        %v7442 = vunpack.c.h.b16 %v7365
        %v7443 = vunpack.c.l.b16 %v7366
        %v7444 = vunpack.c.h.b16 %v7366
        %v7445 = vunpack.c.l.b16 %v7367
        %v7446 = vunpack.c.h.b16 %v7367
        %v7447 = vunpack.c.l.b16 %v7368
        %v7448 = vunpack.c.h.b16 %v7368
        %v7449 = vunpack.c.l.b16 %v7369
        %v7450 = vunpack.c.h.b16 %v7369
        %v7451 = vunpack.c.l.b16 %v7370
        %v7452 = vunpack.c.h.b16 %v7370
        %v7453 = vunpack.c.l.b16 %v7371
        %v7454 = vunpack.c.h.b16 %v7371
        %v7455 = vpack.c.b16 %v7441, %v7439
        %v7456 = vpack.c.b16 %v7442, %v7440
        %v7457 = vpack.c.b16 %v7445, %v7443
        %v7458 = vpack.c.b16 %v7446, %v7444
        %v7459 = vpack.c.b16 %v7449, %v7447
        %v7460 = vpack.c.b16 %v7450, %v7448
        %v7461 = vpack.c.b16 %v7453, %v7451
        %v7462 = vpack.c.b16 %v7454, %v7452
        %v7468 = vsel %vm690, %v7456, 0
        %v7471 = vsel %vm690, %v7458, 0
        %v7474 = vsel %vm690, %v7460, 0
        %v7477 = vsel %vm690, %v7462, 0
        %7479 = vmatprep.subr.bf16.mxu0 0
        %7480 = vmatpush1.bf16.msra.mxu0 %v7372
        %7481 = vmatprep.subr.bf16.mxu0 0
        %7482 = vmatpush1.bf16.msra.mxu0 %v7373
        %7483 = vmatprep.subr.bf16.mxu0 0
        %7484 = vmatpush1.bf16.msra.mxu0 %v7374
        %7485 = vmatprep.subr.bf16.mxu0 0
        %7486 = vmatpush1.bf16.msra.mxu0 %v7375
        %7487 = vmatprep.subr.bf16.mxu0 0
        %7488 = vmatpush1.bf16.msra.mxu0 %v7376
        %7489 = vmatprep.subr.bf16.mxu0 0
        %7490 = vmatpush1.bf16.msra.mxu0 %v7377
        %7491 = vmatprep.subr.bf16.mxu0 0
        %7492 = vmatpush1.bf16.msra.mxu0 %v7378
        %7493 = vmatprep.subr.bf16.mxu0 0
        %7494 = vmatpush1.bf16.msra.mxu0 %v7379
        %7495 = vmatprep.subr.bf16.mxu0 0
        %7496 = vmatpush1.bf16.msra.mxu0 %v7380
        %7497 = vmatprep.subr.bf16.mxu0 0
        %7498 = vmatpush1.bf16.msra.mxu0 %v7381
        %7499 = vmatprep.subr.bf16.mxu0 0
        %7500 = vmatpush1.bf16.msra.mxu0 0
        %7501 = vmatprep.subr.bf16.mxu0 0
        %7502 = vmatpush1.bf16.msra.mxu0 0
        %7503 = vmatprep.subr.bf16.mxu0 0
        %7504 = vmatpush1.bf16.msra.mxu0 0
        %7505 = vmatprep.subr.bf16.mxu0 0
        %7506 = vmatpush1.bf16.msra.mxu0 0
        %7507 = vmatprep.subr.bf16.mxu0 0
        %7508 = vmatpush1.bf16.msra.mxu0 0
        %7509 = vmatprep.subr.bf16.mxu0 0
        %7510 = vmatpush1.bf16.msra.mxu0 0
        %7511 = vmatprep.mubr.bf16.mxu0 %v7468
        %7512 = vmatmul.mubr.bf16.gmra.mrb[0].mxu0 %v7455
        %v7513 = vpop.f32.mrb[0].mxu0
        %v7514 = vadd.f32 %v7394, %v7513
        %v7515 = vpop.f32.mrb[0].mxu0
        %v7516 = vpop.f32.mrb[0].mxu0
        %v7517 = vadd.f32 %v7399, %v7516
        %v7518 = vpop.f32.mrb[0].mxu0
        %7519 = vmatprep.mubr.bf16.mxu0 %v7471
        %7520 = vmatmul.mubr.bf16.gmra.mrb[0].mxu0 %v7457
        %v7521 = vpop.f32.mrb[0].mxu0
        %v7522 = vadd.f32 %v7404, %v7521
        %v7523 = vpop.f32.mrb[0].mxu0
        %v7524 = vpop.f32.mrb[0].mxu0
        %v7525 = vadd.f32 %v7409, %v7524
        %v7526 = vpop.f32.mrb[0].mxu0
        %7527 = vmatprep.mubr.bf16.mxu0 %v7474
        %7528 = vmatmul.mubr.bf16.gmra.mrb[0].mxu0 %v7459
        %v7529 = vpop.f32.mrb[0].mxu0
        %v7530 = vadd.f32 %v7414, %v7529
        %v7531 = vpop.f32.mrb[0].mxu0
        %v7532 = vpop.f32.mrb[0].mxu0
        %v7533 = vadd.f32 %v7419, %v7532
        %v7534 = vpop.f32.mrb[0].mxu0
        %7535 = vmatprep.mubr.bf16.mxu0 %v7477
        %7536 = vmatmul.mubr.bf16.gmra.mrb[0].mxu0 %v7461
        %v7537 = vpop.f32.mrb[0].mxu0
        %v7538 = vadd.f32 %v7424, %v7537
        %v7539 = vpop.f32.mrb[0].mxu0
        %v7540 = vpop.f32.mrb[0].mxu0
        %v7541 = vadd.f32 %v7429, %v7540
        %v7542 = vpop.f32.mrb[0].mxu0
        %7543 = vdwg.mxu0
        %v7544 = vtanh.pop %v7514
        %v7545 = vtanh.pop %v7517
        %v7546 = vtanh.pop %v7522
        %v7547 = vtanh.pop %v7525
        %v7548 = vxor.u32 %v7530, 2147483648
        %v7549 = vxor.u32 %v7533, 2147483648
        %v7550 = vxor.u32 %v7538, 2147483648
        %v7551 = vxor.u32 %v7541, 2147483648
        %v7552 = vmul.f32 %v7548, 1.442695
        %v7553 = vpow.pop %v7552
        %v7554 = vmul.f32 %v7549, 1.442695
        %v7555 = vpow.pop %v7554
        %v7556 = vmul.f32 %v7550, 1.442695
        %v7557 = vpow.pop %v7556
        %v7558 = vmul.f32 %v7551, 1.442695
        %v7559 = vpow.pop %v7558
        %v7560 = vadd.f32 %v7553, 1.0
        %v7561 = vadd.f32 %v7555, 1.0
        %v7562 = vadd.f32 %v7557, 1.0
        %v7563 = vadd.f32 %v7559, 1.0
        %v7564 = vrcp.pop %v7560
        %v7565 = vmul.f32 1.0, %v7564
        %v7566 = vrcp.pop %v7561
        %v7567 = vmul.f32 1.0, %v7566
        %v7568 = vrcp.pop %v7562
        %v7569 = vmul.f32 1.0, %v7568
        %v7570 = vrcp.pop %v7563
        %v7571 = vmul.f32 1.0, %v7570
        %v7572 = vmul.f32 %v7544, %v7565
        %v7573 = vmul.f32 %v7545, %v7567
        %v7574 = vmul.f32 %v7546, %v7569
        %v7575 = vmul.f32 %v7547, %v7571
        %s7576 = scalar_lea.vmem %s8, 48
        %v7577 = vld [vmem:[%s7576] sm:$0xf]
        %v7578 = vld [vmem:[%s7576 + $0x4] sm:$0xf]
        %v7579 = vld [vmem:[%s7576 + $0x8] sm:$0xf]
        %v7580 = vld [vmem:[%s7576 + $0xc] sm:$0xf]
        %v7581 = vpack.c.bf16 %v7573, %v7572
        %v7582 = vpack.c.bf16 %v7575, %v7574
        %s7583 = scalar_lea.vmem %s9, 96
        %v7584 = vld [vmem:[%s7583] sm:$0xff]
        %v7585 = vld [vmem:[%s7583 + $0x8] sm:$0xff]
        %v7586 = vld [vmem:[%s7583 + $0x10] sm:$0xff]
        %v7587 = vld [vmem:[%s7583 + $0x18] sm:$0xff]
        %7589 = vset.pattern.permute.xlu0 0
        %7590 = vperm.xlu0 %7589, %v7584
        %v7591 = vpop.permute.xlu0 %7590
        %7594 = vset.pattern.permute.xlu0 0
        %7595 = vperm.xlu0 %7594, %v7585
        %v7596 = vpop.permute.xlu0 %7595
        %7599 = vset.pattern.permute.xlu0 0
        %7600 = vperm.xlu0 %7599, %v7586
        %v7601 = vpop.permute.xlu0 %7600
        %7604 = vset.pattern.permute.xlu0 0
        %7605 = vperm.xlu0 %7604, %v7587
        %v7606 = vpop.permute.xlu0 %7605
        %v7612 = vunpack.c.l.b16 %v7577
        %v7613 = vunpack.c.l.b16 %v7578
        %v7614 = vunpack.c.l.b16 %v7579
        %v7615 = vunpack.c.l.b16 %v7580
        %v7616 = vpack.c.b16 %v7613, %v7612
        %v7617 = vpack.c.b16 %v7615, %v7614
        %v7619 = vsel %vm690, %v7616, 0
        %v7622 = vsel %vm690, %v7617, 0
        %7624 = vmatprep.subr.bf16.mxu0 0
        %7625 = vmatpush1.bf16.msra.mxu0 %v7581
        %7626 = vmatprep.subr.bf16.mxu0 0
        %7627 = vmatpush1.bf16.msra.mxu0 %v7582
        %7628 = vmatprep.subr.bf16.mxu0 0
        %7629 = vmatpush1.bf16.msra.mxu0 0
        %7630 = vmatprep.subr.bf16.mxu0 0
        %7631 = vmatpush1.bf16.msra.mxu0 0
        %7632 = vmatprep.subr.bf16.mxu0 0
        %7633 = vmatpush1.bf16.msra.mxu0 0
        %7634 = vmatprep.subr.bf16.mxu0 0
        %7635 = vmatpush1.bf16.msra.mxu0 0
        %7636 = vmatprep.subr.bf16.mxu0 0
        %7637 = vmatpush1.bf16.msra.mxu0 0
        %7638 = vmatprep.subr.bf16.mxu0 0
        %7639 = vmatpush1.bf16.msra.mxu0 0
        %7640 = vmatprep.subr.bf16.mxu0 0
        %7641 = vmatpush1.bf16.msra.mxu0 0
        %7642 = vmatprep.subr.bf16.mxu0 0
        %7643 = vmatpush1.bf16.msra.mxu0 0
        %7644 = vmatprep.subr.bf16.mxu0 0
        %7645 = vmatpush1.bf16.msra.mxu0 0
        %7646 = vmatprep.subr.bf16.mxu0 0
        %7647 = vmatpush1.bf16.msra.mxu0 0
        %7648 = vmatprep.subr.bf16.mxu0 0
        %7649 = vmatpush1.bf16.msra.mxu0 0
        %7650 = vmatprep.subr.bf16.mxu0 0
        %7651 = vmatpush1.bf16.msra.mxu0 0
        %7652 = vmatprep.subr.bf16.mxu0 0
        %7653 = vmatpush1.bf16.msra.mxu0 0
        %7654 = vmatprep.subr.bf16.mxu0 0
        %7655 = vmatpush1.bf16.msra.mxu0 0
        %7656 = vmatprep.mubr.bf16.mxu0 0
        %7657 = vmatmul.mubr.bf16.gmra.mrb[0].mxu0 %v7619
        %v7658 = vpop.f32.mrb[0].mxu0
        %v7659 = vadd.f32 %v7591, %v7658
        %v7660 = vpop.f32.mrb[0].mxu0
        %v7661 = vpop.f32.mrb[0].mxu0
        %v7662 = vadd.f32 %v7596, %v7661
        %v7663 = vpop.f32.mrb[0].mxu0
        %7664 = vmatprep.mubr.bf16.mxu0 0
        %7665 = vmatmul.mubr.bf16.gmra.mrb[0].mxu0 %v7622
        %v7666 = vpop.f32.mrb[0].mxu0
        %v7667 = vadd.f32 %v7601, %v7666
        %v7668 = vpop.f32.mrb[0].mxu0
        %v7669 = vpop.f32.mrb[0].mxu0
        %v7670 = vadd.f32 %v7606, %v7669
        %v7671 = vpop.f32.mrb[0].mxu0
        %7672 = vdwg.mxu0
        %v7673 = vadd.f32 %v7307, %v7659
        %v7674 = vadd.f32 %v7308, %v7662
        %v7675 = vadd.f32 %v7309, %v7667
        %v7676 = vadd.f32 %v7310, %v7670
        %s7677 = scalar_lea.vmem %s10, 3
        %v7678 = vld [vmem:[%s7677] sm:$0x1]
        %v7679 = vmul.f32 %v7673, %v530
        %v7680 = vmul.f32 %v7674, %v530
        %v7681 = vmul.f32 %v7675, %v530
        %v7682 = vmul.f32 %v7676, %v530
        %v7683 = vpack.c.bf16 %v7680, %v7679
        %v7684 = vpack.c.bf16 %v7682, %v7681
        %s7685 = scalar_lea.vmem %s11, 6
        %v7686 = vld [vmem:[%s7685] sm:$0x3]
        %7688 = vset.pattern.permute.xlu0 0
        %7689 = vperm.xlu0 %7688, %v7686
        %v7690 = vpop.permute.xlu0 %7689
        %v7693 = vsel %vm690, %v7678, 0
        %7695 = vmatprep.subr.bf16.mxu0 0
        %7696 = vmatpush1.bf16.msra.mxu0 %v7683
        %7697 = vmatprep.subr.bf16.mxu0 0
        %7698 = vmatpush1.bf16.msra.mxu0 %v7684
        %7699 = vmatprep.subr.bf16.mxu0 0
        %7700 = vmatpush1.bf16.msra.mxu0 0
        %7701 = vmatprep.subr.bf16.mxu0 0
        %7702 = vmatpush1.bf16.msra.mxu0 0
        %7703 = vmatprep.subr.bf16.mxu0 0
        %7704 = vmatpush1.bf16.msra.mxu0 0
        %7705 = vmatprep.subr.bf16.mxu0 0
        %7706 = vmatpush1.bf16.msra.mxu0 0
        %7707 = vmatprep.subr.bf16.mxu0 0
        %7708 = vmatpush1.bf16.msra.mxu0 0
        %7709 = vmatprep.subr.bf16.mxu0 0
        %7710 = vmatpush1.bf16.msra.mxu0 0
        %7711 = vmatprep.subr.bf16.mxu0 0
        %7712 = vmatpush1.bf16.msra.mxu0 0
        %7713 = vmatprep.subr.bf16.mxu0 0
        %7714 = vmatpush1.bf16.msra.mxu0 0
        %7715 = vmatprep.subr.bf16.mxu0 0
        %7716 = vmatpush1.bf16.msra.mxu0 0
        %7717 = vmatprep.subr.bf16.mxu0 0
        %7718 = vmatpush1.bf16.msra.mxu0 0
        %7719 = vmatprep.subr.bf16.mxu0 0
        %7720 = vmatpush1.bf16.msra.mxu0 0
        %7721 = vmatprep.subr.bf16.mxu0 0
        %7722 = vmatpush1.bf16.msra.mxu0 0
        %7723 = vmatprep.subr.bf16.mxu0 0
        %7724 = vmatpush1.bf16.msra.mxu0 0
        %7725 = vmatprep.subr.bf16.mxu0 0
        %7726 = vmatpush1.bf16.msra.mxu0 0
        %7727 = vmatprep.mubr.bf16.mxu0 0
        %7728 = vmatmul.mubr.bf16.gmra.mrb[0].mxu0 %v7693
        %v7729 = vpop.f32.mrb[0].mxu0
        %v7730 = vadd.f32 %v7690, %v7729
        %v7731 = vpop.f32.mrb[0].mxu0
        %v7732 = vpop.f32.mrb[0].mxu0
        %v7733 = vpop.f32.mrb[0].mxu0
        %7734 = vdwg.mxu0
        %v7735 = vmul.f32 %v7730, %v530
        %v7736 = vmul.f32 %v4081, %v530
        %v7737 = vadd.f32 %v7735, %v7736
        %7738 = vst [vmem:[%s415] sm:$0x3] %v7737
        %7739 = vst [vmem:[%s415 + $0x2] sm:$0x3] %v5909
        %s7740 = sand.u32 %s296, 1
        %s7741 = scalar_lea.sflag [#allocation4], %s7740
        %s7742 = sand.u32 %s296, 1
        %s7743 = smul.addr %s7742, 4
        %s7744 = scalar_lea.vmem [#allocation3], %s7743
        // Predicated region
        $region69: #{residual_coupling_block.1} parent=67 // pred_check
          %p7745 = pneg %p306
        $region70: #{residual_coupling_block.1} parent=67 // pred_check_branch
          %7747 = sbr.rel (%p7745) target = $region72
        $region71: #{residual_coupling_block.1} parent=67 // pred_region
          %s7749 = ssub.s32 64, 64
          %7750 = vsyncadd %s7741, %s7749
          %s7751 = smul.addr %s26, 64
          %s7752 = scalar_lea.hbm %s12, %s7751
          %s7754 = sshll.u32 %s7744, 4
          %s7755 = int_to_ptr.vmem [resolvable:$true] %s7754
          %7757 = dma.vmem_to_hbm [thread:$0]  %s7755, 64, %s7752, %s7741
        $region72: #{residual_coupling_block.1} parent=67 // pred_fallthru
          _
      $region68: #{residual_coupling_block.1} parent=5 // pred_fallthru
        _
      %p7758 = scmp.le.s32.totalorder 2, %s21
      // Predicated region
      $region73: #{residual_coupling_block.1} parent=5 // pred_check
        %p7759 = pneg %p7758
      $region74: #{residual_coupling_block.1} parent=5 // pred_check_branch
        %7761 = sbr.rel (%p7759) target = $region76
      $region75: #{residual_coupling_block.1} parent=5 // pred_region
        %s7762 = ssub.s32 %s21, 2
        // Predicated region
        $region77: #{residual_coupling_block.1} parent=75 // pred_check
          %p7763 = pneg %p312
        $region78: #{residual_coupling_block.1} parent=75 // pred_check_branch
          %7765 = sbr.rel (%p7763) target = $region80
        $region79: #{residual_coupling_block.1} parent=75 // pred_region
          %s7766 = sand.u32 %s297, 1
          %s7767 = scalar_lea.sflag [#allocation4], %s7766
          %s7768 = sand.u32 %s297, 1
          %s7769 = smul.addr %s7768, 4
          %s7770 = scalar_lea.vmem [#allocation3], %s7769
          %7771 = dma.done %s7767, 64
        $region80: #{residual_coupling_block.1} parent=75 // pred_fallthru
          _
      $region76: #{residual_coupling_block.1} parent=5 // pred_fallthru
        _
    $region6: #{residual_coupling_block.1} parent=1 // loop_footer
      %s25 = sadd.s32 1, %s21
    $region7: #{residual_coupling_block.1} parent=1 // loop_footer_branch
      %20 = sbr.rel target = $region3
    $region8: #{residual_coupling_block.1} parent=1 // loop_exit
      _
    %7772 = vsyncpa [#allocation4], 1
    %s7773 = scalar_lea.sflag [#allocation4], 1
    %7774 = vsyncpa %s7773, 1

</llo_original>
